<compile_context>
chip_gen: v7x
topology: tpu7x:2x2x1
jax: 0.10.0
libtpu: 0.0.40
codegen_flags: <defaults>
</compile_context>

<pallas_src>
import functools

import jax
import jax.numpy as jnp
from jax.experimental import pallas as pl
from jax.experimental.pallas import tpu as pltpu

_VMEM_LIMIT_BYTES = 32 * 1024 * 1024
_ACT_DTYPE = jnp.bfloat16          # storage dtype for intermediate activations


# ----------------------------------------------------------------------------
# Small helpers
# ----------------------------------------------------------------------------
def _round_up(x, m):
    return (x + m - 1) // m * m


def _pick_block(size, unit, max_block):
    """Pad `size` up to a multiple of `unit`; pick the largest block <= max_block
    that is a multiple of `unit` and divides the padded size."""
    padded = _round_up(max(size, unit), unit)
    block = unit
    t = unit
    while t <= min(max_block, padded):
        if padded % t == 0:
            block = t
        t += unit
    return padded, block


# ----------------------------------------------------------------------------
# Pallas kernels
# ----------------------------------------------------------------------------
def _matmul_kernel(a_ref, b_ref, bias_ref, o_ref, acc_ref, *, fuse_bias, fuse_tanh):
    k = pl.program_id(2)

    @pl.when(k == 0)
    def _():
        acc_ref[...] = jnp.zeros_like(acc_ref)

    acc_ref[...] += jnp.dot(a_ref[...], b_ref[...],
                            preferred_element_type=jnp.float32)

    @pl.when(k == pl.num_programs(2) - 1)
    def _():
        y = acc_ref[...]
        if fuse_bias:
            y = y + bias_ref[...]
        if fuse_tanh:
            y = jnp.tanh(y)
        o_ref[...] = y.astype(o_ref.dtype)


def _matmul_stats_kernel(a_ref, b_ref, o_ref, psum_ref, pssq_ref, acc_ref):
    """GEMM with BatchNorm statistics fused into the epilogue.

    psum/pssq hold per-(i, j)-tile partial column sums, written as 8 identical
    sublane rows so the stats blocks stay (8, 128)-aligned (no masked stores).
    """
    k = pl.program_id(2)

    @pl.when(k == 0)
    def _():
        acc_ref[...] = jnp.zeros_like(acc_ref)

    acc_ref[...] += jnp.dot(a_ref[...], b_ref[...],
                            preferred_element_type=jnp.float32)

    @pl.when(k == pl.num_programs(2) - 1)
    def _():
        y = acc_ref[...]
        o_ref[...] = y.astype(o_ref.dtype)
        ps = jnp.sum(y, axis=0, keepdims=True)
        ss = jnp.sum(y * y, axis=0, keepdims=True)
        psum_ref[...] = jnp.broadcast_to(ps, psum_ref.shape)
        pssq_ref[...] = jnp.broadcast_to(ss, pssq_ref.shape)


def _bn_apply_kernel(x_ref, scale_ref, shift_ref, o_ref, *, relu):
    y = x_ref[...].astype(jnp.float32) * scale_ref[...] + shift_ref[...]
    if relu:
        y = jnp.maximum(y, 0.0)
    o_ref[...] = y.astype(o_ref.dtype)


def _bn_apply_res_kernel(x_ref, scale_ref, shift_ref, res_ref, o_ref):
    # BN (no relu) + fused residual skip connection.
    y = (x_ref[...].astype(jnp.float32) * scale_ref[...] + shift_ref[...]
         + res_ref[...].astype(jnp.float32))
    o_ref[...] = y.astype(o_ref.dtype)


# ----------------------------------------------------------------------------
# Tiled bf16 GEMM (fp32 accumulate), optional fused epilogues
# ----------------------------------------------------------------------------
def pallas_matmul(a, b, *, bias=None, tanh=False, compute_stats=False,
                  out_dtype=jnp.float32):
    """a: [M, Ka], b: [Kb, N] -> [M, N] (out_dtype).  Operands cast to bf16.

    If compute_stats: returns (out, col_sum, col_ssq) where col_sum / col_ssq
    are fp32 [N] per-output-channel sums computed from the fp32 accumulator.
    """
    M, Ka = a.shape
    Kb, N = b.shape

    Mp, tm = _pick_block(M, 8, 512)
    Kp, tk = _pick_block(max(Ka, Kb), 128, 512)
    Np, tn = _pick_block(N, 128, 256)

    a = a.astype(jnp.bfloat16)
    b = b.astype(jnp.bfloat16)
    if (M, Ka) != (Mp, Kp):
        a = jnp.pad(a, ((0, Mp - M), (0, Kp - Ka)))
    if (Kb, N) != (Kp, Np):
        b = jnp.pad(b, ((0, Kp - Kb), (0, Np - N)))

    grid = (Mp // tm, Np // tn, Kp // tk)
    nmt = Mp // tm

    if compute_stats:
        out, psum, pssq = pl.pallas_call(
            _matmul_stats_kernel,
            out_shape=(jax.ShapeDtypeStruct((Mp, Np), out_dtype),
                       jax.ShapeDtypeStruct((nmt * 8, Np), jnp.float32),
                       jax.ShapeDtypeStruct((nmt * 8, Np), jnp.float32)),
            grid=grid,
            in_specs=[pl.BlockSpec((tm, tk), lambda i, j, k: (i, k)),
                      pl.BlockSpec((tk, tn), lambda i, j, k: (k, j))],
            out_specs=(pl.BlockSpec((tm, tn), lambda i, j, k: (i, j)),
                       pl.BlockSpec((8, tn), lambda i, j, k: (i, j)),
                       pl.BlockSpec((8, tn), lambda i, j, k: (i, j))),
            scratch_shapes=[pltpu.VMEM((tm, tn), jnp.float32)],
            compiler_params=pltpu.CompilerParams(
                dimension_semantics=("parallel", "parallel", "arbitrary"),
                vmem_limit_bytes=_VMEM_LIMIT_BYTES),
        )(a, b)
        # Each 8-row group holds identical replicas; take row 0 per M-tile.
        col_sum = jnp.sum(psum.reshape(nmt, 8, Np)[:, 0, :N], axis=0)
        col_ssq = jnp.sum(pssq.reshape(nmt, 8, Np)[:, 0, :N], axis=0)
        return out[:M, :N], col_sum, col_ssq

    bias_arr = jnp.zeros((1, Np), jnp.float32)
    if bias is not None:
        bias_arr = bias_arr.at[0, :N].set(bias.astype(jnp.float32))

    kernel = functools.partial(_matmul_kernel,
                               fuse_bias=bias is not None, fuse_tanh=tanh)
    out = pl.pallas_call(
        kernel,
        out_shape=jax.ShapeDtypeStruct((Mp, Np), out_dtype),
        grid=grid,
        in_specs=[pl.BlockSpec((tm, tk), lambda i, j, k: (i, k)),
                  pl.BlockSpec((tk, tn), lambda i, j, k: (k, j)),
                  pl.BlockSpec((1, tn), lambda i, j, k: (0, j))],
        out_specs=pl.BlockSpec((tm, tn), lambda i, j, k: (i, j)),
        scratch_shapes=[pltpu.VMEM((tm, tn), jnp.float32)],
        compiler_params=pltpu.CompilerParams(
            dimension_semantics=("parallel", "parallel", "arbitrary"),
            vmem_limit_bytes=_VMEM_LIMIT_BYTES),
    )(a, b, bias_arr)
    return out[:M, :N]


# ----------------------------------------------------------------------------
# BatchNorm: scale/shift precompute (tiny glue) + tiled apply pass
# ----------------------------------------------------------------------------
def _bn_scale_shift(col_sum, col_ssq, count, gamma, beta, eps=1e-5):
    mean = col_sum / count
    var = col_ssq / count - mean * mean      # biased variance (torch train mode)
    scale = gamma.astype(jnp.float32) * jax.lax.rsqrt(var + eps)
    shift = beta.astype(jnp.float32) - mean * scale
    return scale, shift


def pallas_bn_apply(x_nhwc, scale, shift, *, relu, residual=None,
                    out_dtype=_ACT_DTYPE):
    """Tiled normalize + affine (+ReLU) (+fused residual add)."""
    N, H, W, C = x_nhwc.shape
    M = N * H * W

    # Lane-pack r spatial positions per row so the last dim is >= 128.
    r = 128 // C if C < 128 else 1
    r = max(r, 1)
    if M % r != 0:
        r = 1
    rC = r * C
    Mr = M // r

    x2 = x_nhwc.reshape(Mr, rC)
    res2 = residual.reshape(Mr, rC) if residual is not None else None

    max_rows = max(64, min(4096, (2 * 1024 * 1024) // (4 * rC)))
    max_rows = max(8, (max_rows // 8) * 8)
    Mp, tr = _pick_block(Mr, 8, max_rows)
    if Mp != Mr:
        x2 = jnp.pad(x2, ((0, Mp - Mr), (0, 0)))
        if res2 is not None:
            res2 = jnp.pad(res2, ((0, Mp - Mr), (0, 0)))
    grid = (Mp // tr,)

    scale_p = jnp.tile(scale.astype(jnp.float32), r).reshape(1, rC)
    shift_p = jnp.tile(shift.astype(jnp.float32), r).reshape(1, rC)

    if res2 is None:
        kern = functools.partial(_bn_apply_kernel, relu=relu)
        args = (x2, scale_p, shift_p)
        in_specs = [pl.BlockSpec((tr, rC), lambda i: (i, 0)),
                    pl.BlockSpec((1, rC), lambda i: (0, 0)),
                    pl.BlockSpec((1, rC), lambda i: (0, 0))]
    else:
        kern = _bn_apply_res_kernel
        args = (x2, scale_p, shift_p, res2)
        in_specs = [pl.BlockSpec((tr, rC), lambda i: (i, 0)),
                    pl.BlockSpec((1, rC), lambda i: (0, 0)),
                    pl.BlockSpec((1, rC), lambda i: (0, 0)),
                    pl.BlockSpec((tr, rC), lambda i: (i, 0))]

    y = pl.pallas_call(
        kern,
        out_shape=jax.ShapeDtypeStruct((Mp, rC), out_dtype),
        grid=grid,
        in_specs=in_specs,
        out_specs=pl.BlockSpec((tr, rC), lambda i: (i, 0)),
        compiler_params=pltpu.CompilerParams(
            dimension_semantics=("parallel",),
            vmem_limit_bytes=_VMEM_LIMIT_BYTES),
    )(*args)
    if Mp != Mr:
        y = y[:Mr]
    return y.reshape(N, H, W, C)


# ----------------------------------------------------------------------------
# Convolution helpers (im2col glue in JAX, GEMM + fused epilogues in Pallas)
# ----------------------------------------------------------------------------
def _pad_hw(x_nhwc, pad, mode):
    if pad == 0:
        return x_nhwc
    widths = ((0, 0), (pad, pad), (pad, pad), (0, 0))
    if mode == "reflect":
        return jnp.pad(x_nhwc, widths, mode="reflect")
    return jnp.pad(x_nhwc, widths, mode="constant")


def conv2d(x_nhwc, wmat, *, kh, kw, stride=1, pad=0, pad_mode="zero",
           bias=None, tanh=False, compute_stats=False, out_dtype=_ACT_DTYPE):
    """Matches torch.nn.Conv2d; weight pre-reshaped to (kh*kw*Cin, Cout) bf16."""
    Cout = wmat.shape[1]
    xp = _pad_hw(x_nhwc.astype(jnp.bfloat16), pad, pad_mode)
    N, Hp, Wp, Cin = xp.shape
    Ho = (Hp - kh) // stride + 1
    Wo = (Wp - kw) // stride + 1

    cols = [xp[:, i:i + Ho * stride:stride, j:j + Wo * stride:stride, :]
            for i in range(kh) for j in range(kw)]
    K = kh * kw * Cin
    Kp, _ = _pick_block(K, 128, 512)
    if Kp > K:  # fold the K-pad into the same concatenate (no extra HBM pass)
        cols.append(jnp.zeros((N, Ho, Wo, Kp - K), jnp.bfloat16))
    patches = jnp.concatenate(cols, axis=-1).reshape(N * Ho * Wo, Kp)

    if compute_stats:
        out, s, ss = pallas_matmul(patches, wmat, compute_stats=True,
                                   out_dtype=out_dtype)
        return out.reshape(N, Ho, Wo, Cout), s, ss
    out = pallas_matmul(patches, wmat, bias=bias, tanh=tanh, out_dtype=out_dtype)
    return out.reshape(N, Ho, Wo, Cout)


# Sub-pixel (phase) decomposition of ConvTranspose2d(k=3, s=2, p=1, op=1).
# out[2p+dr, 2q+dc] = sum_taps x_pad[p+dy, q+dx] . w[:, :, kh, kw]
_PHASE_TAPS = (
    ((0, 0, 1, 1),),
    ((0, 0, 1, 2), (0, 1, 1, 0)),
    ((0, 0, 2, 1), (1, 0, 0, 1)),
    ((0, 0, 2, 2), (0, 1, 2, 0), (1, 0, 0, 2), (1, 1, 0, 0)),
)


def _deconv_phase_weights(w_iohw):
    """(Cin, Cout, 3, 3) -> 4 bf16 matrices of shape (ntaps*Cin, Cout)."""
    mats = []
    for taps in _PHASE_TAPS:
        blocks = [w_iohw[:, :, a, b] for (_, _, a, b) in taps]
        mats.append(jnp.concatenate(blocks, axis=0).astype(jnp.bfloat16))
    return mats


def conv_transpose2d(x_nhwc, phase_mats, *, out_dtype=_ACT_DTYPE):
    """torch.nn.ConvTranspose2d(Cin, Cout, 3, stride=2, padding=1,
    output_padding=1, bias=False) via 4 phase GEMMs (no zero-dilation).
    Returns (y, col_sum, col_ssq) with BN stats fused into the phase GEMMs."""
    N, H, W, Cin = x_nhwc.shape
    Cout = phase_mats[0].shape[1]
    xb = jnp.pad(x_nhwc.astype(jnp.bfloat16), ((0, 0), (0, 1), (0, 1), (0, 0)))
    M = N * H * W

    outs, s_tot, ss_tot = [], 0.0, 0.0
    for taps, wmat in zip(_PHASE_TAPS, phase_mats):
        cols = [xb[:, dy:dy + H, dx:dx + W, :] for (dy, dx, _, _) in taps]
        K = len(taps) * Cin
        Kp, _ = _pick_block(K, 128, 512)
        if Kp > K:
            cols.append(jnp.zeros((N, H, W, Kp - K), jnp.bfloat16))
        patches = jnp.concatenate(cols, axis=-1).reshape(M, Kp)
        o, s, ss = pallas_matmul(patches, wmat, compute_stats=True,
                                 out_dtype=out_dtype)
        outs.append(o.reshape(N, H, W, Cout))
        s_tot = s_tot + s
        ss_tot = ss_tot + ss

    row0 = jnp.stack([outs[0], outs[1]], axis=3).reshape(N, H, 2 * W, Cout)
    row1 = jnp.stack([outs[2], outs[3]], axis=3).reshape(N, H, 2 * W, Cout)
    y = jnp.stack([row0, row1], axis=2).reshape(N, 2 * H, 2 * W, Cout)
    return y, s_tot, ss_tot


# ----------------------------------------------------------------------------
# ResnetGenerator: parameters + forward
# ----------------------------------------------------------------------------
def init_params(key, input_nc, output_nc, ngf, n_blocks):
    """Raw parameters in PyTorch layouts."""
    keys = iter(jax.random.split(key, 8 + 6 * n_blocks + 16))
    nrm = lambda k, s: 0.05 * jax.random.normal(k, s, jnp.float32)
    p = {}
    p["c0_w"] = nrm(next(keys), (ngf, input_nc, 7, 7))      # bias=False (BN)
    p["bn0_g"] = 1.0 + nrm(next(keys), (ngf,))
    p["bn0_b"] = nrm(next(keys), (ngf,))
    p["down"], ch = [], ngf
    for _ in range(2):
        p["down"].append((nrm(next(keys), (ch * 2, ch, 3, 3)),
                          1.0 + nrm(next(keys), (ch * 2,)),
                          nrm(next(keys), (ch * 2,))))
        ch *= 2
    p["blocks"] = []
    for _ in range(n_blocks):
        p["blocks"].append((nrm(next(keys), (ch, ch, 3, 3)),
                            1.0 + nrm(next(keys), (ch,)),
                            nrm(next(keys), (ch,)),
                            nrm(next(keys), (ch, ch, 3, 3)),
                            1.0 + nrm(next(keys), (ch,)),
                            nrm(next(keys), (ch,))))
    p["up"] = []
    for _ in range(2):
        p["up"].append((nrm(next(keys), (ch, ch // 2, 3, 3)),   # (Cin,Cout,3,3)
                        1.0 + nrm(next(keys), (ch // 2,)),
                        nrm(next(keys), (ch // 2,))))
        ch //= 2
    p["cF_w"] = nrm(next(keys), (output_nc, ch, 7, 7))
    p["cF_b"] = nrm(next(keys), (output_nc,))
    return p


def preprocess_params(raw):
    """One-time: reshape/cast weights to GEMM-ready bf16 matrices."""
    def conv_mat(w):
        Cout, Cin, kh, kw = w.shape
        return jnp.transpose(w, (2, 3, 1, 0)).reshape(kh * kw * Cin, Cout
                                                      ).astype(jnp.bfloat16)
    p = {}
    p["c0_w"] = conv_mat(raw["c0_w"])
    p["bn0_g"], p["bn0_b"] = raw["bn0_g"], raw["bn0_b"]
    p["down"] = [(conv_mat(w), g, b) for (w, g, b) in raw["down"]]
    p["blocks"] = [(conv_mat(w1), g1, b1, conv_mat(w2), g2, b2)
                   for (w1, g1, b1, w2, g2, b2) in raw["blocks"]]
    p["up"] = [(_deconv_phase_weights(w), g, b) for (w, g, b) in raw["up"]]
    p["cF_w"] = conv_mat(raw["cF_w"])
    p["cF_b"] = raw["cF_b"]
    return p


def resnet_generator_forward(params, x_nchw):
    # NCHW (PyTorch) -> NHWC (kernel layout).
    x = jnp.transpose(x_nchw, (0, 2, 3, 1)).astype(jnp.float32)

    # ReflectionPad2d(3) + Conv2d(input_nc, ngf, 7) + BN + ReLU
    y, s, ss = conv2d(x, params["c0_w"], kh=7, kw=7, stride=1, pad=3,
                      pad_mode="reflect", compute_stats=True)
    cnt = y.shape[0] * y.shape[1] * y.shape[2]
    sc, sh = _bn_scale_shift(s, ss, cnt, params["bn0_g"], params["bn0_b"])
    x = pallas_bn_apply(y, sc, sh, relu=True)

    # Downsampling: Conv2d(k=3, s=2, p=1) + BN + ReLU, twice.
    for (w, g, b) in params["down"]:
        y, s, ss = conv2d(x, w, kh=3, kw=3, stride=2, pad=1, pad_mode="zero",
                          compute_stats=True)
        cnt = y.shape[0] * y.shape[1] * y.shape[2]
        sc, sh = _bn_scale_shift(s, ss, cnt, g, b)
        x = pallas_bn_apply(y, sc, sh, relu=True)

    # Resnet blocks (padding_type='reflect', use_dropout=False); residual add
    # fused into the second BN apply pass.
    for (w1, g1, b1, w2, g2, b2) in params["blocks"]:
        y, s, ss = conv2d(x, w1, kh=3, kw=3, stride=1, pad=1,
                          pad_mode="reflect", compute_stats=True)
        cnt = y.shape[0] * y.shape[1] * y.shape[2]
        sc, sh = _bn_scale_shift(s, ss, cnt, g1, b1)
        y = pallas_bn_apply(y, sc, sh, relu=True)
        y, s, ss = conv2d(y, w2, kh=3, kw=3, stride=1, pad=1,
                          pad_mode="reflect", compute_stats=True)
        sc, sh = _bn_scale_shift(s, ss, cnt, g2, b2)
        x = pallas_bn_apply(y, sc, sh, relu=False, residual=x)

    # Upsampling: ConvTranspose2d(k=3, s=2, p=1, op=1) + BN + ReLU, twice.
    for (phase_mats, g, b) in params["up"]:
        y, s, ss = conv_transpose2d(x, phase_mats)
        cnt = y.shape[0] * y.shape[1] * y.shape[2]
        sc, sh = _bn_scale_shift(s, ss, cnt, g, b)
        x = pallas_bn_apply(y, sc, sh, relu=True)

    # ReflectionPad2d(3) + Conv2d(ngf, output_nc, 7, bias=True) + Tanh
    # (bias + tanh fused into the GEMM epilogue; fp32 output).
    x = conv2d(x, params["cF_w"], kh=7, kw=7, stride=1, pad=3,
               pad_mode="reflect", bias=params["cF_b"], tanh=True,
               out_dtype=jnp.float32)

    # NHWC -> NCHW to match PyTorch output convention.
    return jnp.transpose(x, (0, 3, 1, 2))


if __name__ == "__main__":
    key = jax.random.PRNGKey(0)
    k_param, k_x = jax.random.split(key)

    # Small shapes consistent with the module: spatial divisible by 4
    # (two stride-2 downsamples); reduced ngf / n_blocks for speed.
    N, input_nc, output_nc, ngf, n_blocks = 2, 3, 3, 16, 2
    H = W = 16

    raw = init_params(k_param, input_nc, output_nc, ngf, n_blocks)
    params = preprocess_params(raw)        # one-time weight prep (hoisted)
    x = jax.random.normal(k_x, (N, input_nc, H, W), jnp.float32)

    fwd = jax.jit(resnet_generator_forward)
    y = fwd(params, x)
    jax.block_until_ready(y)

    assert y.shape == (N, output_nc, H, W), y.shape
    assert jnp.all(jnp.isfinite(y))
    print("KERNEL_OK")
</pallas_src>

<mosaic_0001>
module attributes {stable_mosaic.version = 11 : i64} {
  func.func @_matmul_stats_kernel(%arg0: i32, %arg1: i32, %arg2: i32, %arg3: memref<512x256xbf16, #tpu.memory_space<vmem>>, %arg4: memref<256x128xbf16, #tpu.memory_space<vmem>>, %arg5: memref<512x128xbf16, #tpu.memory_space<vmem>>, %arg6: memref<8x128xf32, #tpu.memory_space<vmem>>, %arg7: memref<8x128xf32, #tpu.memory_space<vmem>>, %arg8: memref<512x128xf32, #tpu.memory_space<vmem>>) attributes {dimension_semantics = [#tpu.dimension_semantics<parallel>, #tpu.dimension_semantics<parallel>, #tpu.dimension_semantics<arbitrary>], iteration_bounds = array<i64: 1, 1, 1>, scalar_prefetch = 0 : i64, scratch_operands = 1 : i64, tpu.core_type = #tpu.core_type<tc>, window_params = [{transform_indices = @transform_0, window_bounds = array<i64: 512, 256>}, {transform_indices = @transform_1, window_bounds = array<i64: 256, 128>}, {transform_indices = @transform_2, window_bounds = array<i64: 512, 128>}, {transform_indices = @transform_3, window_bounds = array<i64: 8, 128>}, {transform_indices = @transform_4, window_bounds = array<i64: 8, 128>}]} {
    %c0_i32 = arith.constant 0 : i32
    %0 = arith.cmpi eq, %arg2, %c0_i32 : i32
    %1 = arith.extui %0 : i1 to i32
    %c0_i32_0 = arith.constant 0 : i32
    %2 = arith.cmpi ne, %1, %c0_i32_0 : i32
    scf.if %2 {
      %cst_10 = arith.constant 0.000000e+00 : f32
      %12 = vector.broadcast %cst_10 : f32 to vector<512x128xf32>
      %c0_11 = arith.constant 0 : index
      %c0_12 = arith.constant 0 : index
      %13 = vector.load %arg8[%c0_11, %c0_12] : memref<512x128xf32, #tpu.memory_space<vmem>>, vector<512x128xf32>
      tpu.vector_store %arg8[%c0_11, %c0_12], %12 {strides = array<i32>} : memref<512x128xf32, #tpu.memory_space<vmem>>, vector<512x128xf32>,
    } else {
    }
    %c0 = arith.constant 0 : index
    %c0_1 = arith.constant 0 : index
    %3 = vector.load %arg8[%c0, %c0_1] : memref<512x128xf32, #tpu.memory_space<vmem>>, vector<512x128xf32>
    %c0_2 = arith.constant 0 : index
    %c0_3 = arith.constant 0 : index
    %4 = vector.load %arg3[%c0_2, %c0_3] : memref<512x256xbf16, #tpu.memory_space<vmem>>, vector<512x256xbf16>
    %c0_4 = arith.constant 0 : index
    %c0_5 = arith.constant 0 : index
    %5 = vector.load %arg4[%c0_4, %c0_5] : memref<256x128xbf16, #tpu.memory_space<vmem>>, vector<256x128xbf16>
    %cst = arith.constant dense<0.000000e+00> : vector<512x128xf32>
    %6 = tpu.matmul %4, %5, %cst {dimension_numbers = #tpu.dot_dimension_numbers<[1], [0], [0], [1], [0, 0, 1, 1], [], []>} : vector<512x256xbf16>, vector<256x128xbf16>, vector<512x128xf32> -> vector<512x128xf32>
    %7 = arith.addf %3, %6 : vector<512x128xf32>
    %c0_6 = arith.constant 0 : index
    %c0_7 = arith.constant 0 : index
    %8 = vector.load %arg8[%c0_6, %c0_7] : memref<512x128xf32, #tpu.memory_space<vmem>>, vector<512x128xf32>
    tpu.vector_store %arg8[%c0_6, %c0_7], %7 {strides = array<i32>} : memref<512x128xf32, #tpu.memory_space<vmem>>, vector<512x128xf32>,
    %c0_i32_8 = arith.constant 0 : i32
    %9 = arith.cmpi eq, %arg2, %c0_i32_8 : i32
    %10 = arith.extui %9 : i1 to i32
    %c0_i32_9 = arith.constant 0 : i32
    %11 = arith.cmpi ne, %10, %c0_i32_9 : i32
    scf.if %11 {
      %c0_10 = arith.constant 0 : index
      %c0_11 = arith.constant 0 : index
      %12 = vector.load %arg8[%c0_10, %c0_11] : memref<512x128xf32, #tpu.memory_space<vmem>>, vector<512x128xf32>
      %13 = arith.truncf %12 : vector<512x128xf32> to vector<512x128xbf16>
      %c0_12 = arith.constant 0 : index
      %c0_13 = arith.constant 0 : index
      %14 = vector.load %arg5[%c0_12, %c0_13] : memref<512x128xbf16, #tpu.memory_space<vmem>>, vector<512x128xbf16>
      tpu.vector_store %arg5[%c0_12, %c0_13], %13 {strides = array<i32>} : memref<512x128xbf16, #tpu.memory_space<vmem>>, vector<512x128xbf16>,
      %cst_14 = arith.constant dense<0.000000e+00> : vector<128xf32>
      %15 = vector.multi_reduction <add>, %12, %cst_14 [0] : vector<512x128xf32> to vector<128xf32>
      %16 = vector.shape_cast %15 : vector<128xf32> to vector<1x128xf32>
      %17 = arith.mulf %12, %12 : vector<512x128xf32>
      %cst_15 = arith.constant dense<0.000000e+00> : vector<128xf32>
      %18 = vector.multi_reduction <add>, %17, %cst_15 [0] : vector<512x128xf32> to vector<128xf32>
      %19 = vector.shape_cast %18 : vector<128xf32> to vector<1x128xf32>
      %20 = vector.shape_cast %16 : vector<1x128xf32> to vector<1x128xf32>
      %21 = vector.broadcast %20 : vector<1x128xf32> to vector<8x128xf32>
      %c0_16 = arith.constant 0 : index
      %c0_17 = arith.constant 0 : index
      %22 = vector.load %arg6[%c0_16, %c0_17] : memref<8x128xf32, #tpu.memory_space<vmem>>, vector<8x128xf32>
      tpu.vector_store %arg6[%c0_16, %c0_17], %21 {strides = array<i32>} : memref<8x128xf32, #tpu.memory_space<vmem>>, vector<8x128xf32>,
      %23 = vector.shape_cast %19 : vector<1x128xf32> to vector<1x128xf32>
      %24 = vector.broadcast %23 : vector<1x128xf32> to vector<8x128xf32>
      %c0_18 = arith.constant 0 : index
      %c0_19 = arith.constant 0 : index
      %25 = vector.load %arg7[%c0_18, %c0_19] : memref<8x128xf32, #tpu.memory_space<vmem>>, vector<8x128xf32>
      tpu.vector_store %arg7[%c0_18, %c0_19], %24 {strides = array<i32>} : memref<8x128xf32, #tpu.memory_space<vmem>>, vector<8x128xf32>,
    } else {
    }
    return
  }
  func.func @transform_0(%arg0: i32, %arg1: i32, %arg2: i32) -> (i32, i32) {
    %c0_i32 = arith.constant 0 : i32
    return %arg0, %arg2 : i32, i32
  }
  func.func @transform_1(%arg0: i32, %arg1: i32, %arg2: i32) -> (i32, i32) {
    %c0_i32 = arith.constant 0 : i32
    return %arg2, %arg1 : i32, i32
  }
  func.func @transform_2(%arg0: i32, %arg1: i32, %arg2: i32) -> (i32, i32) {
    %c0_i32 = arith.constant 0 : i32
    return %arg0, %arg1 : i32, i32
  }
  func.func @transform_3(%arg0: i32, %arg1: i32, %arg2: i32) -> (i32, i32) {
    %c0_i32 = arith.constant 0 : i32
    return %arg0, %arg1 : i32, i32
  }
  func.func @transform_4(%arg0: i32, %arg1: i32, %arg2: i32) -> (i32, i32) {
    %c0_i32 = arith.constant 0 : i32
    return %arg0, %arg1 : i32, i32
  }
}

module attributes {stable_mosaic.version = 11 : i64} {
  func.func @_bn_apply_kernel(%arg0: i32, %arg1: memref<64x128xbf16, #tpu.memory_space<vmem>>, %arg2: memref<1x128xf32, #tpu.memory_space<vmem>>, %arg3: memref<1x128xf32, #tpu.memory_space<vmem>>, %arg4: memref<64x128xbf16, #tpu.memory_space<vmem>>) attributes {dimension_semantics = [#tpu.dimension_semantics<parallel>], iteration_bounds = array<i64: 1>, scalar_prefetch = 0 : i64, scratch_operands = 0 : i64, tpu.core_type = #tpu.core_type<tc>, window_params = [{transform_indices = @transform_0, window_bounds = array<i64: 64, 128>}, {pipeline_mode = #tpu.pipeline_mode<synchronous>, transform_indices = @transform_1, window_bounds = array<i64: 1, 128>}, {pipeline_mode = #tpu.pipeline_mode<synchronous>, transform_indices = @transform_2, window_bounds = array<i64: 1, 128>}, {transform_indices = @transform_3, window_bounds = array<i64: 64, 128>}]} {
    %c0 = arith.constant 0 : index
    %c0_0 = arith.constant 0 : index
    %0 = vector.load %arg1[%c0, %c0_0] : memref<64x128xbf16, #tpu.memory_space<vmem>>, vector<64x128xbf16>
    %1 = arith.extf %0 : vector<64x128xbf16> to vector<64x128xf32>
    %c0_1 = arith.constant 0 : index
    %c0_2 = arith.constant 0 : index
    %2 = vector.load %arg2[%c0_1, %c0_2] : memref<1x128xf32, #tpu.memory_space<vmem>>, vector<1x128xf32>
    %3 = vector.broadcast %2 : vector<1x128xf32> to vector<64x128xf32>
    %4 = arith.mulf %1, %3 : vector<64x128xf32>
    %c0_3 = arith.constant 0 : index
    %c0_4 = arith.constant 0 : index
    %5 = vector.load %arg3[%c0_3, %c0_4] : memref<1x128xf32, #tpu.memory_space<vmem>>, vector<1x128xf32>
    %6 = vector.broadcast %5 : vector<1x128xf32> to vector<64x128xf32>
    %7 = arith.addf %4, %6 : vector<64x128xf32>
    %cst = arith.constant 0.000000e+00 : f32
    %8 = vector.broadcast %cst : f32 to vector<64x128xf32>
    %9 = arith.maximumf %7, %8 : vector<64x128xf32>
    %10 = arith.truncf %9 : vector<64x128xf32> to vector<64x128xbf16>
    %c0_5 = arith.constant 0 : index
    %c0_6 = arith.constant 0 : index
    %11 = vector.load %arg4[%c0_5, %c0_6] : memref<64x128xbf16, #tpu.memory_space<vmem>>, vector<64x128xbf16>
    tpu.vector_store %arg4[%c0_5, %c0_6], %10 {strides = array<i32>} : memref<64x128xbf16, #tpu.memory_space<vmem>>, vector<64x128xbf16>,
    return
  }
  func.func @transform_0(%arg0: i32) -> (i32, i32) {
    %c0_i32 = arith.constant 0 : i32
    %c0_i32_0 = arith.constant 0 : i32
    return %arg0, %c0_i32 : i32, i32
  }
  func.func @transform_1(%arg0: i32) -> (i32, i32) {
    %c0_i32 = arith.constant 0 : i32
    %c0_i32_0 = arith.constant 0 : i32
    %c0_i32_1 = arith.constant 0 : i32
    return %c0_i32, %c0_i32_0 : i32, i32
  }
  func.func @transform_2(%arg0: i32) -> (i32, i32) {
    %c0_i32 = arith.constant 0 : i32
    %c0_i32_0 = arith.constant 0 : i32
    %c0_i32_1 = arith.constant 0 : i32
    return %c0_i32, %c0_i32_0 : i32, i32
  }
  func.func @transform_3(%arg0: i32) -> (i32, i32) {
    %c0_i32 = arith.constant 0 : i32
    %c0_i32_0 = arith.constant 0 : i32
    return %arg0, %c0_i32 : i32, i32
  }
}

module attributes {stable_mosaic.version = 11 : i64} {
  func.func @_matmul_stats_kernel(%arg0: i32, %arg1: i32, %arg2: i32, %arg3: memref<128x256xbf16, #tpu.memory_space<vmem>>, %arg4: memref<256x128xbf16, #tpu.memory_space<vmem>>, %arg5: memref<128x128xbf16, #tpu.memory_space<vmem>>, %arg6: memref<8x128xf32, #tpu.memory_space<vmem>>, %arg7: memref<8x128xf32, #tpu.memory_space<vmem>>, %arg8: memref<128x128xf32, #tpu.memory_space<vmem>>) attributes {dimension_semantics = [#tpu.dimension_semantics<parallel>, #tpu.dimension_semantics<parallel>, #tpu.dimension_semantics<arbitrary>], iteration_bounds = array<i64: 1, 1, 1>, scalar_prefetch = 0 : i64, scratch_operands = 1 : i64, tpu.core_type = #tpu.core_type<tc>, window_params = [{transform_indices = @transform_0, window_bounds = array<i64: 128, 256>}, {transform_indices = @transform_1, window_bounds = array<i64: 256, 128>}, {transform_indices = @transform_2, window_bounds = array<i64: 128, 128>}, {transform_indices = @transform_3, window_bounds = array<i64: 8, 128>}, {transform_indices = @transform_4, window_bounds = array<i64: 8, 128>}]} {
    %c0_i32 = arith.constant 0 : i32
    %0 = arith.cmpi eq, %arg2, %c0_i32 : i32
    %1 = arith.extui %0 : i1 to i32
    %c0_i32_0 = arith.constant 0 : i32
    %2 = arith.cmpi ne, %1, %c0_i32_0 : i32
    scf.if %2 {
      %cst_10 = arith.constant 0.000000e+00 : f32
      %12 = vector.broadcast %cst_10 : f32 to vector<128x128xf32>
      %c0_11 = arith.constant 0 : index
      %c0_12 = arith.constant 0 : index
      %13 = vector.load %arg8[%c0_11, %c0_12] : memref<128x128xf32, #tpu.memory_space<vmem>>, vector<128x128xf32>
      tpu.vector_store %arg8[%c0_11, %c0_12], %12 {strides = array<i32>} : memref<128x128xf32, #tpu.memory_space<vmem>>, vector<128x128xf32>,
    } else {
    }
    %c0 = arith.constant 0 : index
    %c0_1 = arith.constant 0 : index
    %3 = vector.load %arg8[%c0, %c0_1] : memref<128x128xf32, #tpu.memory_space<vmem>>, vector<128x128xf32>
    %c0_2 = arith.constant 0 : index
    %c0_3 = arith.constant 0 : index
    %4 = vector.load %arg3[%c0_2, %c0_3] : memref<128x256xbf16, #tpu.memory_space<vmem>>, vector<128x256xbf16>
    %c0_4 = arith.constant 0 : index
    %c0_5 = arith.constant 0 : index
    %5 = vector.load %arg4[%c0_4, %c0_5] : memref<256x128xbf16, #tpu.memory_space<vmem>>, vector<256x128xbf16>
    %cst = arith.constant dense<0.000000e+00> : vector<128x128xf32>
    %6 = tpu.matmul %4, %5, %cst {dimension_numbers = #tpu.dot_dimension_numbers<[1], [0], [0], [1], [0, 0, 1, 1], [], []>} : vector<128x256xbf16>, vector<256x128xbf16>, vector<128x128xf32> -> vector<128x128xf32>
    %7 = arith.addf %3, %6 : vector<128x128xf32>
    %c0_6 = arith.constant 0 : index
    %c0_7 = arith.constant 0 : index
    %8 = vector.load %arg8[%c0_6, %c0_7] : memref<128x128xf32, #tpu.memory_space<vmem>>, vector<128x128xf32>
    tpu.vector_store %arg8[%c0_6, %c0_7], %7 {strides = array<i32>} : memref<128x128xf32, #tpu.memory_space<vmem>>, vector<128x128xf32>,
    %c0_i32_8 = arith.constant 0 : i32
    %9 = arith.cmpi eq, %arg2, %c0_i32_8 : i32
    %10 = arith.extui %9 : i1 to i32
    %c0_i32_9 = arith.constant 0 : i32
    %11 = arith.cmpi ne, %10, %c0_i32_9 : i32
    scf.if %11 {
      %c0_10 = arith.constant 0 : index
      %c0_11 = arith.constant 0 : index
      %12 = vector.load %arg8[%c0_10, %c0_11] : memref<128x128xf32, #tpu.memory_space<vmem>>, vector<128x128xf32>
      %13 = arith.truncf %12 : vector<128x128xf32> to vector<128x128xbf16>
      %c0_12 = arith.constant 0 : index
      %c0_13 = arith.constant 0 : index
      %14 = vector.load %arg5[%c0_12, %c0_13] : memref<128x128xbf16, #tpu.memory_space<vmem>>, vector<128x128xbf16>
      tpu.vector_store %arg5[%c0_12, %c0_13], %13 {strides = array<i32>} : memref<128x128xbf16, #tpu.memory_space<vmem>>, vector<128x128xbf16>,
      %cst_14 = arith.constant dense<0.000000e+00> : vector<128xf32>
      %15 = vector.multi_reduction <add>, %12, %cst_14 [0] : vector<128x128xf32> to vector<128xf32>
      %16 = vector.shape_cast %15 : vector<128xf32> to vector<1x128xf32>
      %17 = arith.mulf %12, %12 : vector<128x128xf32>
      %cst_15 = arith.constant dense<0.000000e+00> : vector<128xf32>
      %18 = vector.multi_reduction <add>, %17, %cst_15 [0] : vector<128x128xf32> to vector<128xf32>
      %19 = vector.shape_cast %18 : vector<128xf32> to vector<1x128xf32>
      %20 = vector.shape_cast %16 : vector<1x128xf32> to vector<1x128xf32>
      %21 = vector.broadcast %20 : vector<1x128xf32> to vector<8x128xf32>
      %c0_16 = arith.constant 0 : index
      %c0_17 = arith.constant 0 : index
      %22 = vector.load %arg6[%c0_16, %c0_17] : memref<8x128xf32, #tpu.memory_space<vmem>>, vector<8x128xf32>
      tpu.vector_store %arg6[%c0_16, %c0_17], %21 {strides = array<i32>} : memref<8x128xf32, #tpu.memory_space<vmem>>, vector<8x128xf32>,
      %23 = vector.shape_cast %19 : vector<1x128xf32> to vector<1x128xf32>
      %24 = vector.broadcast %23 : vector<1x128xf32> to vector<8x128xf32>
      %c0_18 = arith.constant 0 : index
      %c0_19 = arith.constant 0 : index
      %25 = vector.load %arg7[%c0_18, %c0_19] : memref<8x128xf32, #tpu.memory_space<vmem>>, vector<8x128xf32>
      tpu.vector_store %arg7[%c0_18, %c0_19], %24 {strides = array<i32>} : memref<8x128xf32, #tpu.memory_space<vmem>>, vector<8x128xf32>,
    } else {
    }
    return
  }
  func.func @transform_0(%arg0: i32, %arg1: i32, %arg2: i32) -> (i32, i32) {
    %c0_i32 = arith.constant 0 : i32
    return %arg0, %arg2 : i32, i32
  }
  func.func @transform_1(%arg0: i32, %arg1: i32, %arg2: i32) -> (i32, i32) {
    %c0_i32 = arith.constant 0 : i32
    return %arg2, %arg1 : i32, i32
  }
  func.func @transform_2(%arg0: i32, %arg1: i32, %arg2: i32) -> (i32, i32) {
    %c0_i32 = arith.constant 0 : i32
    return %arg0, %arg1 : i32, i32
  }
  func.func @transform_3(%arg0: i32, %arg1: i32, %arg2: i32) -> (i32, i32) {
    %c0_i32 = arith.constant 0 : i32
    return %arg0, %arg1 : i32, i32
  }
  func.func @transform_4(%arg0: i32, %arg1: i32, %arg2: i32) -> (i32, i32) {
    %c0_i32 = arith.constant 0 : i32
    return %arg0, %arg1 : i32, i32
  }
}

module attributes {stable_mosaic.version = 11 : i64} {
  func.func @_bn_apply_kernel(%arg0: i32, %arg1: memref<32x128xbf16, #tpu.memory_space<vmem>>, %arg2: memref<1x128xf32, #tpu.memory_space<vmem>>, %arg3: memref<1x128xf32, #tpu.memory_space<vmem>>, %arg4: memref<32x128xbf16, #tpu.memory_space<vmem>>) attributes {dimension_semantics = [#tpu.dimension_semantics<parallel>], iteration_bounds = array<i64: 1>, scalar_prefetch = 0 : i64, scratch_operands = 0 : i64, tpu.core_type = #tpu.core_type<tc>, window_params = [{transform_indices = @transform_0, window_bounds = array<i64: 32, 128>}, {pipeline_mode = #tpu.pipeline_mode<synchronous>, transform_indices = @transform_1, window_bounds = array<i64: 1, 128>}, {pipeline_mode = #tpu.pipeline_mode<synchronous>, transform_indices = @transform_2, window_bounds = array<i64: 1, 128>}, {transform_indices = @transform_3, window_bounds = array<i64: 32, 128>}]} {
    %c0 = arith.constant 0 : index
    %c0_0 = arith.constant 0 : index
    %0 = vector.load %arg1[%c0, %c0_0] : memref<32x128xbf16, #tpu.memory_space<vmem>>, vector<32x128xbf16>
    %1 = arith.extf %0 : vector<32x128xbf16> to vector<32x128xf32>
    %c0_1 = arith.constant 0 : index
    %c0_2 = arith.constant 0 : index
    %2 = vector.load %arg2[%c0_1, %c0_2] : memref<1x128xf32, #tpu.memory_space<vmem>>, vector<1x128xf32>
    %3 = vector.broadcast %2 : vector<1x128xf32> to vector<32x128xf32>
    %4 = arith.mulf %1, %3 : vector<32x128xf32>
    %c0_3 = arith.constant 0 : index
    %c0_4 = arith.constant 0 : index
    %5 = vector.load %arg3[%c0_3, %c0_4] : memref<1x128xf32, #tpu.memory_space<vmem>>, vector<1x128xf32>
    %6 = vector.broadcast %5 : vector<1x128xf32> to vector<32x128xf32>
    %7 = arith.addf %4, %6 : vector<32x128xf32>
    %cst = arith.constant 0.000000e+00 : f32
    %8 = vector.broadcast %cst : f32 to vector<32x128xf32>
    %9 = arith.maximumf %7, %8 : vector<32x128xf32>
    %10 = arith.truncf %9 : vector<32x128xf32> to vector<32x128xbf16>
    %c0_5 = arith.constant 0 : index
    %c0_6 = arith.constant 0 : index
    %11 = vector.load %arg4[%c0_5, %c0_6] : memref<32x128xbf16, #tpu.memory_space<vmem>>, vector<32x128xbf16>
    tpu.vector_store %arg4[%c0_5, %c0_6], %10 {strides = array<i32>} : memref<32x128xbf16, #tpu.memory_space<vmem>>, vector<32x128xbf16>,
    return
  }
  func.func @transform_0(%arg0: i32) -> (i32, i32) {
    %c0_i32 = arith.constant 0 : i32
    %c0_i32_0 = arith.constant 0 : i32
    return %arg0, %c0_i32 : i32, i32
  }
  func.func @transform_1(%arg0: i32) -> (i32, i32) {
    %c0_i32 = arith.constant 0 : i32
    %c0_i32_0 = arith.constant 0 : i32
    %c0_i32_1 = arith.constant 0 : i32
    return %c0_i32, %c0_i32_0 : i32, i32
  }
  func.func @transform_2(%arg0: i32) -> (i32, i32) {
    %c0_i32 = arith.constant 0 : i32
    %c0_i32_0 = arith.constant 0 : i32
    %c0_i32_1 = arith.constant 0 : i32
    return %c0_i32, %c0_i32_0 : i32, i32
  }
  func.func @transform_3(%arg0: i32) -> (i32, i32) {
    %c0_i32 = arith.constant 0 : i32
    %c0_i32_0 = arith.constant 0 : i32
    return %arg0, %c0_i32 : i32, i32
  }
}

module attributes {stable_mosaic.version = 11 : i64} {
  func.func @_matmul_stats_kernel(%arg0: i32, %arg1: i32, %arg2: i32, %arg3: memref<32x384xbf16, #tpu.memory_space<vmem>>, %arg4: memref<384x128xbf16, #tpu.memory_space<vmem>>, %arg5: memref<32x128xbf16, #tpu.memory_space<vmem>>, %arg6: memref<8x128xf32, #tpu.memory_space<vmem>>, %arg7: memref<8x128xf32, #tpu.memory_space<vmem>>, %arg8: memref<32x128xf32, #tpu.memory_space<vmem>>) attributes {dimension_semantics = [#tpu.dimension_semantics<parallel>, #tpu.dimension_semantics<parallel>, #tpu.dimension_semantics<arbitrary>], iteration_bounds = array<i64: 1, 1, 1>, scalar_prefetch = 0 : i64, scratch_operands = 1 : i64, tpu.core_type = #tpu.core_type<tc>, window_params = [{transform_indices = @transform_0, window_bounds = array<i64: 32, 384>}, {transform_indices = @transform_1, window_bounds = array<i64: 384, 128>}, {transform_indices = @transform_2, window_bounds = array<i64: 32, 128>}, {transform_indices = @transform_3, window_bounds = array<i64: 8, 128>}, {transform_indices = @transform_4, window_bounds = array<i64: 8, 128>}]} {
    %c0_i32 = arith.constant 0 : i32
    %0 = arith.cmpi eq, %arg2, %c0_i32 : i32
    %1 = arith.extui %0 : i1 to i32
    %c0_i32_0 = arith.constant 0 : i32
    %2 = arith.cmpi ne, %1, %c0_i32_0 : i32
    scf.if %2 {
      %cst_10 = arith.constant 0.000000e+00 : f32
      %12 = vector.broadcast %cst_10 : f32 to vector<32x128xf32>
      %c0_11 = arith.constant 0 : index
      %c0_12 = arith.constant 0 : index
      %13 = vector.load %arg8[%c0_11, %c0_12] : memref<32x128xf32, #tpu.memory_space<vmem>>, vector<32x128xf32>
      tpu.vector_store %arg8[%c0_11, %c0_12], %12 {strides = array<i32>} : memref<32x128xf32, #tpu.memory_space<vmem>>, vector<32x128xf32>,
    } else {
    }
    %c0 = arith.constant 0 : index
    %c0_1 = arith.constant 0 : index
    %3 = vector.load %arg8[%c0, %c0_1] : memref<32x128xf32, #tpu.memory_space<vmem>>, vector<32x128xf32>
    %c0_2 = arith.constant 0 : index
    %c0_3 = arith.constant 0 : index
    %4 = vector.load %arg3[%c0_2, %c0_3] : memref<32x384xbf16, #tpu.memory_space<vmem>>, vector<32x384xbf16>
    %c0_4 = arith.constant 0 : index
    %c0_5 = arith.constant 0 : index
    %5 = vector.load %arg4[%c0_4, %c0_5] : memref<384x128xbf16, #tpu.memory_space<vmem>>, vector<384x128xbf16>
    %cst = arith.constant dense<0.000000e+00> : vector<32x128xf32>
    %6 = tpu.matmul %4, %5, %cst {dimension_numbers = #tpu.dot_dimension_numbers<[1], [0], [0], [1], [0, 0, 1, 1], [], []>} : vector<32x384xbf16>, vector<384x128xbf16>, vector<32x128xf32> -> vector<32x128xf32>
    %7 = arith.addf %3, %6 : vector<32x128xf32>
    %c0_6 = arith.constant 0 : index
    %c0_7 = arith.constant 0 : index
    %8 = vector.load %arg8[%c0_6, %c0_7] : memref<32x128xf32, #tpu.memory_space<vmem>>, vector<32x128xf32>
    tpu.vector_store %arg8[%c0_6, %c0_7], %7 {strides = array<i32>} : memref<32x128xf32, #tpu.memory_space<vmem>>, vector<32x128xf32>,
    %c0_i32_8 = arith.constant 0 : i32
    %9 = arith.cmpi eq, %arg2, %c0_i32_8 : i32
    %10 = arith.extui %9 : i1 to i32
    %c0_i32_9 = arith.constant 0 : i32
    %11 = arith.cmpi ne, %10, %c0_i32_9 : i32
    scf.if %11 {
      %c0_10 = arith.constant 0 : index
      %c0_11 = arith.constant 0 : index
      %12 = vector.load %arg8[%c0_10, %c0_11] : memref<32x128xf32, #tpu.memory_space<vmem>>, vector<32x128xf32>
      %13 = arith.truncf %12 : vector<32x128xf32> to vector<32x128xbf16>
      %c0_12 = arith.constant 0 : index
      %c0_13 = arith.constant 0 : index
      %14 = vector.load %arg5[%c0_12, %c0_13] : memref<32x128xbf16, #tpu.memory_space<vmem>>, vector<32x128xbf16>
      tpu.vector_store %arg5[%c0_12, %c0_13], %13 {strides = array<i32>} : memref<32x128xbf16, #tpu.memory_space<vmem>>, vector<32x128xbf16>,
      %cst_14 = arith.constant dense<0.000000e+00> : vector<128xf32>
      %15 = vector.multi_reduction <add>, %12, %cst_14 [0] : vector<32x128xf32> to vector<128xf32>
      %16 = vector.shape_cast %15 : vector<128xf32> to vector<1x128xf32>
      %17 = arith.mulf %12, %12 : vector<32x128xf32>
      %cst_15 = arith.constant dense<0.000000e+00> : vector<128xf32>
      %18 = vector.multi_reduction <add>, %17, %cst_15 [0] : vector<32x128xf32> to vector<128xf32>
      %19 = vector.shape_cast %18 : vector<128xf32> to vector<1x128xf32>
      %20 = vector.shape_cast %16 : vector<1x128xf32> to vector<1x128xf32>
      %21 = vector.broadcast %20 : vector<1x128xf32> to vector<8x128xf32>
      %c0_16 = arith.constant 0 : index
      %c0_17 = arith.constant 0 : index
      %22 = vector.load %arg6[%c0_16, %c0_17] : memref<8x128xf32, #tpu.memory_space<vmem>>, vector<8x128xf32>
      tpu.vector_store %arg6[%c0_16, %c0_17], %21 {strides = array<i32>} : memref<8x128xf32, #tpu.memory_space<vmem>>, vector<8x128xf32>,
      %23 = vector.shape_cast %19 : vector<1x128xf32> to vector<1x128xf32>
      %24 = vector.broadcast %23 : vector<1x128xf32> to vector<8x128xf32>
      %c0_18 = arith.constant 0 : index
      %c0_19 = arith.constant 0 : index
      %25 = vector.load %arg7[%c0_18, %c0_19] : memref<8x128xf32, #tpu.memory_space<vmem>>, vector<8x128xf32>
      tpu.vector_store %arg7[%c0_18, %c0_19], %24 {strides = array<i32>} : memref<8x128xf32, #tpu.memory_space<vmem>>, vector<8x128xf32>,
    } else {
    }
    return
  }
  func.func @transform_0(%arg0: i32, %arg1: i32, %arg2: i32) -> (i32, i32) {
    %c0_i32 = arith.constant 0 : i32
    return %arg0, %arg2 : i32, i32
  }
  func.func @transform_1(%arg0: i32, %arg1: i32, %arg2: i32) -> (i32, i32) {
    %c0_i32 = arith.constant 0 : i32
    return %arg2, %arg1 : i32, i32
  }
  func.func @transform_2(%arg0: i32, %arg1: i32, %arg2: i32) -> (i32, i32) {
    %c0_i32 = arith.constant 0 : i32
    return %arg0, %arg1 : i32, i32
  }
  func.func @transform_3(%arg0: i32, %arg1: i32, %arg2: i32) -> (i32, i32) {
    %c0_i32 = arith.constant 0 : i32
    return %arg0, %arg1 : i32, i32
  }
  func.func @transform_4(%arg0: i32, %arg1: i32, %arg2: i32) -> (i32, i32) {
    %c0_i32 = arith.constant 0 : i32
    return %arg0, %arg1 : i32, i32
  }
}

module attributes {stable_mosaic.version = 11 : i64} {
  func.func @_bn_apply_kernel(%arg0: i32, %arg1: memref<16x128xbf16, #tpu.memory_space<vmem>>, %arg2: memref<1x128xf32, #tpu.memory_space<vmem>>, %arg3: memref<1x128xf32, #tpu.memory_space<vmem>>, %arg4: memref<16x128xbf16, #tpu.memory_space<vmem>>) attributes {dimension_semantics = [#tpu.dimension_semantics<parallel>], iteration_bounds = array<i64: 1>, scalar_prefetch = 0 : i64, scratch_operands = 0 : i64, tpu.core_type = #tpu.core_type<tc>, window_params = [{transform_indices = @transform_0, window_bounds = array<i64: 16, 128>}, {pipeline_mode = #tpu.pipeline_mode<synchronous>, transform_indices = @transform_1, window_bounds = array<i64: 1, 128>}, {pipeline_mode = #tpu.pipeline_mode<synchronous>, transform_indices = @transform_2, window_bounds = array<i64: 1, 128>}, {transform_indices = @transform_3, window_bounds = array<i64: 16, 128>}]} {
    %c0 = arith.constant 0 : index
    %c0_0 = arith.constant 0 : index
    %0 = vector.load %arg1[%c0, %c0_0] : memref<16x128xbf16, #tpu.memory_space<vmem>>, vector<16x128xbf16>
    %1 = arith.extf %0 : vector<16x128xbf16> to vector<16x128xf32>
    %c0_1 = arith.constant 0 : index
    %c0_2 = arith.constant 0 : index
    %2 = vector.load %arg2[%c0_1, %c0_2] : memref<1x128xf32, #tpu.memory_space<vmem>>, vector<1x128xf32>
    %3 = vector.broadcast %2 : vector<1x128xf32> to vector<16x128xf32>
    %4 = arith.mulf %1, %3 : vector<16x128xf32>
    %c0_3 = arith.constant 0 : index
    %c0_4 = arith.constant 0 : index
    %5 = vector.load %arg3[%c0_3, %c0_4] : memref<1x128xf32, #tpu.memory_space<vmem>>, vector<1x128xf32>
    %6 = vector.broadcast %5 : vector<1x128xf32> to vector<16x128xf32>
    %7 = arith.addf %4, %6 : vector<16x128xf32>
    %cst = arith.constant 0.000000e+00 : f32
    %8 = vector.broadcast %cst : f32 to vector<16x128xf32>
    %9 = arith.maximumf %7, %8 : vector<16x128xf32>
    %10 = arith.truncf %9 : vector<16x128xf32> to vector<16x128xbf16>
    %c0_5 = arith.constant 0 : index
    %c0_6 = arith.constant 0 : index
    %11 = vector.load %arg4[%c0_5, %c0_6] : memref<16x128xbf16, #tpu.memory_space<vmem>>, vector<16x128xbf16>
    tpu.vector_store %arg4[%c0_5, %c0_6], %10 {strides = array<i32>} : memref<16x128xbf16, #tpu.memory_space<vmem>>, vector<16x128xbf16>,
    return
  }
  func.func @transform_0(%arg0: i32) -> (i32, i32) {
    %c0_i32 = arith.constant 0 : i32
    %c0_i32_0 = arith.constant 0 : i32
    return %arg0, %c0_i32 : i32, i32
  }
  func.func @transform_1(%arg0: i32) -> (i32, i32) {
    %c0_i32 = arith.constant 0 : i32
    %c0_i32_0 = arith.constant 0 : i32
    %c0_i32_1 = arith.constant 0 : i32
    return %c0_i32, %c0_i32_0 : i32, i32
  }
  func.func @transform_2(%arg0: i32) -> (i32, i32) {
    %c0_i32 = arith.constant 0 : i32
    %c0_i32_0 = arith.constant 0 : i32
    %c0_i32_1 = arith.constant 0 : i32
    return %c0_i32, %c0_i32_0 : i32, i32
  }
  func.func @transform_3(%arg0: i32) -> (i32, i32) {
    %c0_i32 = arith.constant 0 : i32
    %c0_i32_0 = arith.constant 0 : i32
    return %arg0, %c0_i32 : i32, i32
  }
}

module attributes {stable_mosaic.version = 11 : i64} {
  func.func @_matmul_stats_kernel(%arg0: i32, %arg1: i32, %arg2: i32, %arg3: memref<32x128xbf16, #tpu.memory_space<vmem>>, %arg4: memref<128x128xbf16, #tpu.memory_space<vmem>>, %arg5: memref<32x128xbf16, #tpu.memory_space<vmem>>, %arg6: memref<8x128xf32, #tpu.memory_space<vmem>>, %arg7: memref<8x128xf32, #tpu.memory_space<vmem>>, %arg8: memref<32x128xf32, #tpu.memory_space<vmem>>) attributes {dimension_semantics = [#tpu.dimension_semantics<parallel>, #tpu.dimension_semantics<parallel>, #tpu.dimension_semantics<arbitrary>], iteration_bounds = array<i64: 1, 1, 5>, scalar_prefetch = 0 : i64, scratch_operands = 1 : i64, tpu.core_type = #tpu.core_type<tc>, window_params = [{transform_indices = @transform_0, window_bounds = array<i64: 32, 128>}, {transform_indices = @transform_1, window_bounds = array<i64: 128, 128>}, {transform_indices = @transform_2, window_bounds = array<i64: 32, 128>}, {transform_indices = @transform_3, window_bounds = array<i64: 8, 128>}, {transform_indices = @transform_4, window_bounds = array<i64: 8, 128>}]} {
    %c0_i32 = arith.constant 0 : i32
    %0 = arith.cmpi eq, %arg2, %c0_i32 : i32
    %1 = arith.extui %0 : i1 to i32
    %c0_i32_0 = arith.constant 0 : i32
    %2 = arith.cmpi ne, %1, %c0_i32_0 : i32
    scf.if %2 {
      %cst_9 = arith.constant 0.000000e+00 : f32
      %12 = vector.broadcast %cst_9 : f32 to vector<32x128xf32>
      %c0_10 = arith.constant 0 : index
      %c0_11 = arith.constant 0 : index
      %13 = vector.load %arg8[%c0_10, %c0_11] : memref<32x128xf32, #tpu.memory_space<vmem>>, vector<32x128xf32>
      tpu.vector_store %arg8[%c0_10, %c0_11], %12 {strides = array<i32>} : memref<32x128xf32, #tpu.memory_space<vmem>>, vector<32x128xf32>,
    } else {
    }
    %c0 = arith.constant 0 : index
    %c0_1 = arith.constant 0 : index
    %3 = vector.load %arg8[%c0, %c0_1] : memref<32x128xf32, #tpu.memory_space<vmem>>, vector<32x128xf32>
    %c0_2 = arith.constant 0 : index
    %c0_3 = arith.constant 0 : index
    %4 = vector.load %arg3[%c0_2, %c0_3] : memref<32x128xbf16, #tpu.memory_space<vmem>>, vector<32x128xbf16>
    %c0_4 = arith.constant 0 : index
    %c0_5 = arith.constant 0 : index
    %5 = vector.load %arg4[%c0_4, %c0_5] : memref<128x128xbf16, #tpu.memory_space<vmem>>, vector<128x128xbf16>
    %cst = arith.constant dense<0.000000e+00> : vector<32x128xf32>
    %6 = tpu.matmul %4, %5, %cst {dimension_numbers = #tpu.dot_dimension_numbers<[1], [0], [0], [1], [0, 0, 1, 1], [], []>} : vector<32x128xbf16>, vector<128x128xbf16>, vector<32x128xf32> -> vector<32x128xf32>
    %7 = arith.addf %3, %6 : vector<32x128xf32>
    %c0_6 = arith.constant 0 : index
    %c0_7 = arith.constant 0 : index
    %8 = vector.load %arg8[%c0_6, %c0_7] : memref<32x128xf32, #tpu.memory_space<vmem>>, vector<32x128xf32>
    tpu.vector_store %arg8[%c0_6, %c0_7], %7 {strides = array<i32>} : memref<32x128xf32, #tpu.memory_space<vmem>>, vector<32x128xf32>,
    %c4_i32 = arith.constant 4 : i32
    %9 = arith.cmpi eq, %arg2, %c4_i32 : i32
    %10 = arith.extui %9 : i1 to i32
    %c0_i32_8 = arith.constant 0 : i32
    %11 = arith.cmpi ne, %10, %c0_i32_8 : i32
    scf.if %11 {
      %c0_9 = arith.constant 0 : index
      %c0_10 = arith.constant 0 : index
      %12 = vector.load %arg8[%c0_9, %c0_10] : memref<32x128xf32, #tpu.memory_space<vmem>>, vector<32x128xf32>
      %13 = arith.truncf %12 : vector<32x128xf32> to vector<32x128xbf16>
      %c0_11 = arith.constant 0 : index
      %c0_12 = arith.constant 0 : index
      %14 = vector.load %arg5[%c0_11, %c0_12] : memref<32x128xbf16, #tpu.memory_space<vmem>>, vector<32x128xbf16>
      tpu.vector_store %arg5[%c0_11, %c0_12], %13 {strides = array<i32>} : memref<32x128xbf16, #tpu.memory_space<vmem>>, vector<32x128xbf16>,
      %cst_13 = arith.constant dense<0.000000e+00> : vector<128xf32>
      %15 = vector.multi_reduction <add>, %12, %cst_13 [0] : vector<32x128xf32> to vector<128xf32>
      %16 = vector.shape_cast %15 : vector<128xf32> to vector<1x128xf32>
      %17 = arith.mulf %12, %12 : vector<32x128xf32>
      %cst_14 = arith.constant dense<0.000000e+00> : vector<128xf32>
      %18 = vector.multi_reduction <add>, %17, %cst_14 [0] : vector<32x128xf32> to vector<128xf32>
      %19 = vector.shape_cast %18 : vector<128xf32> to vector<1x128xf32>
      %20 = vector.shape_cast %16 : vector<1x128xf32> to vector<1x128xf32>
      %21 = vector.broadcast %20 : vector<1x128xf32> to vector<8x128xf32>
      %c0_15 = arith.constant 0 : index
      %c0_16 = arith.constant 0 : index
      %22 = vector.load %arg6[%c0_15, %c0_16] : memref<8x128xf32, #tpu.memory_space<vmem>>, vector<8x128xf32>
      tpu.vector_store %arg6[%c0_15, %c0_16], %21 {strides = array<i32>} : memref<8x128xf32, #tpu.memory_space<vmem>>, vector<8x128xf32>,
      %23 = vector.shape_cast %19 : vector<1x128xf32> to vector<1x128xf32>
      %24 = vector.broadcast %23 : vector<1x128xf32> to vector<8x128xf32>
      %c0_17 = arith.constant 0 : index
      %c0_18 = arith.constant 0 : index
      %25 = vector.load %arg7[%c0_17, %c0_18] : memref<8x128xf32, #tpu.memory_space<vmem>>, vector<8x128xf32>
      tpu.vector_store %arg7[%c0_17, %c0_18], %24 {strides = array<i32>} : memref<8x128xf32, #tpu.memory_space<vmem>>, vector<8x128xf32>,
    } else {
    }
    return
  }
  func.func @transform_0(%arg0: i32, %arg1: i32, %arg2: i32) -> (i32, i32) {
    %c0_i32 = arith.constant 0 : i32
    return %arg0, %arg2 : i32, i32
  }
  func.func @transform_1(%arg0: i32, %arg1: i32, %arg2: i32) -> (i32, i32) {
    %c0_i32 = arith.constant 0 : i32
    return %arg2, %arg1 : i32, i32
  }
  func.func @transform_2(%arg0: i32, %arg1: i32, %arg2: i32) -> (i32, i32) {
    %c0_i32 = arith.constant 0 : i32
    return %arg0, %arg1 : i32, i32
  }
  func.func @transform_3(%arg0: i32, %arg1: i32, %arg2: i32) -> (i32, i32) {
    %c0_i32 = arith.constant 0 : i32
    return %arg0, %arg1 : i32, i32
  }
  func.func @transform_4(%arg0: i32, %arg1: i32, %arg2: i32) -> (i32, i32) {
    %c0_i32 = arith.constant 0 : i32
    return %arg0, %arg1 : i32, i32
  }
}

module attributes {stable_mosaic.version = 11 : i64} {
  func.func @_bn_apply_res_kernel(%arg0: i32, %arg1: memref<16x128xbf16, #tpu.memory_space<vmem>>, %arg2: memref<1x128xf32, #tpu.memory_space<vmem>>, %arg3: memref<1x128xf32, #tpu.memory_space<vmem>>, %arg4: memref<16x128xbf16, #tpu.memory_space<vmem>>, %arg5: memref<16x128xbf16, #tpu.memory_space<vmem>>) attributes {dimension_semantics = [#tpu.dimension_semantics<parallel>], iteration_bounds = array<i64: 1>, scalar_prefetch = 0 : i64, scratch_operands = 0 : i64, tpu.core_type = #tpu.core_type<tc>, window_params = [{transform_indices = @transform_0, window_bounds = array<i64: 16, 128>}, {pipeline_mode = #tpu.pipeline_mode<synchronous>, transform_indices = @transform_1, window_bounds = array<i64: 1, 128>}, {pipeline_mode = #tpu.pipeline_mode<synchronous>, transform_indices = @transform_2, window_bounds = array<i64: 1, 128>}, {transform_indices = @transform_3, window_bounds = array<i64: 16, 128>}, {transform_indices = @transform_4, window_bounds = array<i64: 16, 128>}]} {
    %c0 = arith.constant 0 : index
    %c0_0 = arith.constant 0 : index
    %0 = vector.load %arg1[%c0, %c0_0] : memref<16x128xbf16, #tpu.memory_space<vmem>>, vector<16x128xbf16>
    %1 = arith.extf %0 : vector<16x128xbf16> to vector<16x128xf32>
    %c0_1 = arith.constant 0 : index
    %c0_2 = arith.constant 0 : index
    %2 = vector.load %arg2[%c0_1, %c0_2] : memref<1x128xf32, #tpu.memory_space<vmem>>, vector<1x128xf32>
    %3 = vector.broadcast %2 : vector<1x128xf32> to vector<16x128xf32>
    %4 = arith.mulf %1, %3 : vector<16x128xf32>
    %c0_3 = arith.constant 0 : index
    %c0_4 = arith.constant 0 : index
    %5 = vector.load %arg3[%c0_3, %c0_4] : memref<1x128xf32, #tpu.memory_space<vmem>>, vector<1x128xf32>
    %6 = vector.broadcast %5 : vector<1x128xf32> to vector<16x128xf32>
    %7 = arith.addf %4, %6 : vector<16x128xf32>
    %c0_5 = arith.constant 0 : index
    %c0_6 = arith.constant 0 : index
    %8 = vector.load %arg4[%c0_5, %c0_6] : memref<16x128xbf16, #tpu.memory_space<vmem>>, vector<16x128xbf16>
    %9 = arith.extf %8 : vector<16x128xbf16> to vector<16x128xf32>
    %10 = arith.addf %7, %9 : vector<16x128xf32>
    %11 = arith.truncf %10 : vector<16x128xf32> to vector<16x128xbf16>
    %c0_7 = arith.constant 0 : index
    %c0_8 = arith.constant 0 : index
    %12 = vector.load %arg5[%c0_7, %c0_8] : memref<16x128xbf16, #tpu.memory_space<vmem>>, vector<16x128xbf16>
    tpu.vector_store %arg5[%c0_7, %c0_8], %11 {strides = array<i32>} : memref<16x128xbf16, #tpu.memory_space<vmem>>, vector<16x128xbf16>,
    return
  }
  func.func @transform_0(%arg0: i32) -> (i32, i32) {
    %c0_i32 = arith.constant 0 : i32
    %c0_i32_0 = arith.constant 0 : i32
    return %arg0, %c0_i32 : i32, i32
  }
  func.func @transform_1(%arg0: i32) -> (i32, i32) {
    %c0_i32 = arith.constant 0 : i32
    %c0_i32_0 = arith.constant 0 : i32
    %c0_i32_1 = arith.constant 0 : i32
    return %c0_i32, %c0_i32_0 : i32, i32
  }
  func.func @transform_2(%arg0: i32) -> (i32, i32) {
    %c0_i32 = arith.constant 0 : i32
    %c0_i32_0 = arith.constant 0 : i32
    %c0_i32_1 = arith.constant 0 : i32
    return %c0_i32, %c0_i32_0 : i32, i32
  }
  func.func @transform_3(%arg0: i32) -> (i32, i32) {
    %c0_i32 = arith.constant 0 : i32
    %c0_i32_0 = arith.constant 0 : i32
    return %arg0, %c0_i32 : i32, i32
  }
  func.func @transform_4(%arg0: i32) -> (i32, i32) {
    %c0_i32 = arith.constant 0 : i32
    %c0_i32_0 = arith.constant 0 : i32
    return %arg0, %c0_i32 : i32, i32
  }
}

module attributes {stable_mosaic.version = 11 : i64} {
  func.func @_matmul_stats_kernel(%arg0: i32, %arg1: i32, %arg2: i32, %arg3: memref<32x128xbf16, #tpu.memory_space<vmem>>, %arg4: memref<128x128xbf16, #tpu.memory_space<vmem>>, %arg5: memref<32x128xbf16, #tpu.memory_space<vmem>>, %arg6: memref<8x128xf32, #tpu.memory_space<vmem>>, %arg7: memref<8x128xf32, #tpu.memory_space<vmem>>, %arg8: memref<32x128xf32, #tpu.memory_space<vmem>>) attributes {dimension_semantics = [#tpu.dimension_semantics<parallel>, #tpu.dimension_semantics<parallel>, #tpu.dimension_semantics<arbitrary>], iteration_bounds = array<i64: 1, 1, 1>, scalar_prefetch = 0 : i64, scratch_operands = 1 : i64, tpu.core_type = #tpu.core_type<tc>, window_params = [{transform_indices = @transform_0, window_bounds = array<i64: 32, 128>}, {transform_indices = @transform_1, window_bounds = array<i64: 128, 128>}, {transform_indices = @transform_2, window_bounds = array<i64: 32, 128>}, {transform_indices = @transform_3, window_bounds = array<i64: 8, 128>}, {transform_indices = @transform_4, window_bounds = array<i64: 8, 128>}]} {
    %c0_i32 = arith.constant 0 : i32
    %0 = arith.cmpi eq, %arg2, %c0_i32 : i32
    %1 = arith.extui %0 : i1 to i32
    %c0_i32_0 = arith.constant 0 : i32
    %2 = arith.cmpi ne, %1, %c0_i32_0 : i32
    scf.if %2 {
      %cst_10 = arith.constant 0.000000e+00 : f32
      %12 = vector.broadcast %cst_10 : f32 to vector<32x128xf32>
      %c0_11 = arith.constant 0 : index
      %c0_12 = arith.constant 0 : index
      %13 = vector.load %arg8[%c0_11, %c0_12] : memref<32x128xf32, #tpu.memory_space<vmem>>, vector<32x128xf32>
      tpu.vector_store %arg8[%c0_11, %c0_12], %12 {strides = array<i32>} : memref<32x128xf32, #tpu.memory_space<vmem>>, vector<32x128xf32>,
    } else {
    }
    %c0 = arith.constant 0 : index
    %c0_1 = arith.constant 0 : index
    %3 = vector.load %arg8[%c0, %c0_1] : memref<32x128xf32, #tpu.memory_space<vmem>>, vector<32x128xf32>
    %c0_2 = arith.constant 0 : index
    %c0_3 = arith.constant 0 : index
    %4 = vector.load %arg3[%c0_2, %c0_3] : memref<32x128xbf16, #tpu.memory_space<vmem>>, vector<32x128xbf16>
    %c0_4 = arith.constant 0 : index
    %c0_5 = arith.constant 0 : index
    %5 = vector.load %arg4[%c0_4, %c0_5] : memref<128x128xbf16, #tpu.memory_space<vmem>>, vector<128x128xbf16>
    %cst = arith.constant dense<0.000000e+00> : vector<32x128xf32>
    %6 = tpu.matmul %4, %5, %cst {dimension_numbers = #tpu.dot_dimension_numbers<[1], [0], [0], [1], [0, 0, 1, 1], [], []>} : vector<32x128xbf16>, vector<128x128xbf16>, vector<32x128xf32> -> vector<32x128xf32>
    %7 = arith.addf %3, %6 : vector<32x128xf32>
    %c0_6 = arith.constant 0 : index
    %c0_7 = arith.constant 0 : index
    %8 = vector.load %arg8[%c0_6, %c0_7] : memref<32x128xf32, #tpu.memory_space<vmem>>, vector<32x128xf32>
    tpu.vector_store %arg8[%c0_6, %c0_7], %7 {strides = array<i32>} : memref<32x128xf32, #tpu.memory_space<vmem>>, vector<32x128xf32>,
    %c0_i32_8 = arith.constant 0 : i32
    %9 = arith.cmpi eq, %arg2, %c0_i32_8 : i32
    %10 = arith.extui %9 : i1 to i32
    %c0_i32_9 = arith.constant 0 : i32
    %11 = arith.cmpi ne, %10, %c0_i32_9 : i32
    scf.if %11 {
      %c0_10 = arith.constant 0 : index
      %c0_11 = arith.constant 0 : index
      %12 = vector.load %arg8[%c0_10, %c0_11] : memref<32x128xf32, #tpu.memory_space<vmem>>, vector<32x128xf32>
      %13 = arith.truncf %12 : vector<32x128xf32> to vector<32x128xbf16>
      %c0_12 = arith.constant 0 : index
      %c0_13 = arith.constant 0 : index
      %14 = vector.load %arg5[%c0_12, %c0_13] : memref<32x128xbf16, #tpu.memory_space<vmem>>, vector<32x128xbf16>
      tpu.vector_store %arg5[%c0_12, %c0_13], %13 {strides = array<i32>} : memref<32x128xbf16, #tpu.memory_space<vmem>>, vector<32x128xbf16>,
      %cst_14 = arith.constant dense<0.000000e+00> : vector<128xf32>
      %15 = vector.multi_reduction <add>, %12, %cst_14 [0] : vector<32x128xf32> to vector<128xf32>
      %16 = vector.shape_cast %15 : vector<128xf32> to vector<1x128xf32>
      %17 = arith.mulf %12, %12 : vector<32x128xf32>
      %cst_15 = arith.constant dense<0.000000e+00> : vector<128xf32>
      %18 = vector.multi_reduction <add>, %17, %cst_15 [0] : vector<32x128xf32> to vector<128xf32>
      %19 = vector.shape_cast %18 : vector<128xf32> to vector<1x128xf32>
      %20 = vector.shape_cast %16 : vector<1x128xf32> to vector<1x128xf32>
      %21 = vector.broadcast %20 : vector<1x128xf32> to vector<8x128xf32>
      %c0_16 = arith.constant 0 : index
      %c0_17 = arith.constant 0 : index
      %22 = vector.load %arg6[%c0_16, %c0_17] : memref<8x128xf32, #tpu.memory_space<vmem>>, vector<8x128xf32>
      tpu.vector_store %arg6[%c0_16, %c0_17], %21 {strides = array<i32>} : memref<8x128xf32, #tpu.memory_space<vmem>>, vector<8x128xf32>,
      %23 = vector.shape_cast %19 : vector<1x128xf32> to vector<1x128xf32>
      %24 = vector.broadcast %23 : vector<1x128xf32> to vector<8x128xf32>
      %c0_18 = arith.constant 0 : index
      %c0_19 = arith.constant 0 : index
      %25 = vector.load %arg7[%c0_18, %c0_19] : memref<8x128xf32, #tpu.memory_space<vmem>>, vector<8x128xf32>
      tpu.vector_store %arg7[%c0_18, %c0_19], %24 {strides = array<i32>} : memref<8x128xf32, #tpu.memory_space<vmem>>, vector<8x128xf32>,
    } else {
    }
    return
  }
  func.func @transform_0(%arg0: i32, %arg1: i32, %arg2: i32) -> (i32, i32) {
    %c0_i32 = arith.constant 0 : i32
    return %arg0, %arg2 : i32, i32
  }
  func.func @transform_1(%arg0: i32, %arg1: i32, %arg2: i32) -> (i32, i32) {
    %c0_i32 = arith.constant 0 : i32
    return %arg2, %arg1 : i32, i32
  }
  func.func @transform_2(%arg0: i32, %arg1: i32, %arg2: i32) -> (i32, i32) {
    %c0_i32 = arith.constant 0 : i32
    return %arg0, %arg1 : i32, i32
  }
  func.func @transform_3(%arg0: i32, %arg1: i32, %arg2: i32) -> (i32, i32) {
    %c0_i32 = arith.constant 0 : i32
    return %arg0, %arg1 : i32, i32
  }
  func.func @transform_4(%arg0: i32, %arg1: i32, %arg2: i32) -> (i32, i32) {
    %c0_i32 = arith.constant 0 : i32
    return %arg0, %arg1 : i32, i32
  }
}

module attributes {stable_mosaic.version = 11 : i64} {
  func.func @_matmul_stats_kernel(%arg0: i32, %arg1: i32, %arg2: i32, %arg3: memref<32x256xbf16, #tpu.memory_space<vmem>>, %arg4: memref<256x128xbf16, #tpu.memory_space<vmem>>, %arg5: memref<32x128xbf16, #tpu.memory_space<vmem>>, %arg6: memref<8x128xf32, #tpu.memory_space<vmem>>, %arg7: memref<8x128xf32, #tpu.memory_space<vmem>>, %arg8: memref<32x128xf32, #tpu.memory_space<vmem>>) attributes {dimension_semantics = [#tpu.dimension_semantics<parallel>, #tpu.dimension_semantics<parallel>, #tpu.dimension_semantics<arbitrary>], iteration_bounds = array<i64: 1, 1, 1>, scalar_prefetch = 0 : i64, scratch_operands = 1 : i64, tpu.core_type = #tpu.core_type<tc>, window_params = [{transform_indices = @transform_0, window_bounds = array<i64: 32, 256>}, {transform_indices = @transform_1, window_bounds = array<i64: 256, 128>}, {transform_indices = @transform_2, window_bounds = array<i64: 32, 128>}, {transform_indices = @transform_3, window_bounds = array<i64: 8, 128>}, {transform_indices = @transform_4, window_bounds = array<i64: 8, 128>}]} {
    %c0_i32 = arith.constant 0 : i32
    %0 = arith.cmpi eq, %arg2, %c0_i32 : i32
    %1 = arith.extui %0 : i1 to i32
    %c0_i32_0 = arith.constant 0 : i32
    %2 = arith.cmpi ne, %1, %c0_i32_0 : i32
    scf.if %2 {
      %cst_10 = arith.constant 0.000000e+00 : f32
      %12 = vector.broadcast %cst_10 : f32 to vector<32x128xf32>
      %c0_11 = arith.constant 0 : index
      %c0_12 = arith.constant 0 : index
      %13 = vector.load %arg8[%c0_11, %c0_12] : memref<32x128xf32, #tpu.memory_space<vmem>>, vector<32x128xf32>
      tpu.vector_store %arg8[%c0_11, %c0_12], %12 {strides = array<i32>} : memref<32x128xf32, #tpu.memory_space<vmem>>, vector<32x128xf32>,
    } else {
    }
    %c0 = arith.constant 0 : index
    %c0_1 = arith.constant 0 : index
    %3 = vector.load %arg8[%c0, %c0_1] : memref<32x128xf32, #tpu.memory_space<vmem>>, vector<32x128xf32>
    %c0_2 = arith.constant 0 : index
    %c0_3 = arith.constant 0 : index
    %4 = vector.load %arg3[%c0_2, %c0_3] : memref<32x256xbf16, #tpu.memory_space<vmem>>, vector<32x256xbf16>
    %c0_4 = arith.constant 0 : index
    %c0_5 = arith.constant 0 : index
    %5 = vector.load %arg4[%c0_4, %c0_5] : memref<256x128xbf16, #tpu.memory_space<vmem>>, vector<256x128xbf16>
    %cst = arith.constant dense<0.000000e+00> : vector<32x128xf32>
    %6 = tpu.matmul %4, %5, %cst {dimension_numbers = #tpu.dot_dimension_numbers<[1], [0], [0], [1], [0, 0, 1, 1], [], []>} : vector<32x256xbf16>, vector<256x128xbf16>, vector<32x128xf32> -> vector<32x128xf32>
    %7 = arith.addf %3, %6 : vector<32x128xf32>
    %c0_6 = arith.constant 0 : index
    %c0_7 = arith.constant 0 : index
    %8 = vector.load %arg8[%c0_6, %c0_7] : memref<32x128xf32, #tpu.memory_space<vmem>>, vector<32x128xf32>
    tpu.vector_store %arg8[%c0_6, %c0_7], %7 {strides = array<i32>} : memref<32x128xf32, #tpu.memory_space<vmem>>, vector<32x128xf32>,
    %c0_i32_8 = arith.constant 0 : i32
    %9 = arith.cmpi eq, %arg2, %c0_i32_8 : i32
    %10 = arith.extui %9 : i1 to i32
    %c0_i32_9 = arith.constant 0 : i32
    %11 = arith.cmpi ne, %10, %c0_i32_9 : i32
    scf.if %11 {
      %c0_10 = arith.constant 0 : index
      %c0_11 = arith.constant 0 : index
      %12 = vector.load %arg8[%c0_10, %c0_11] : memref<32x128xf32, #tpu.memory_space<vmem>>, vector<32x128xf32>
      %13 = arith.truncf %12 : vector<32x128xf32> to vector<32x128xbf16>
      %c0_12 = arith.constant 0 : index
      %c0_13 = arith.constant 0 : index
      %14 = vector.load %arg5[%c0_12, %c0_13] : memref<32x128xbf16, #tpu.memory_space<vmem>>, vector<32x128xbf16>
      tpu.vector_store %arg5[%c0_12, %c0_13], %13 {strides = array<i32>} : memref<32x128xbf16, #tpu.memory_space<vmem>>, vector<32x128xbf16>,
      %cst_14 = arith.constant dense<0.000000e+00> : vector<128xf32>
      %15 = vector.multi_reduction <add>, %12, %cst_14 [0] : vector<32x128xf32> to vector<128xf32>
      %16 = vector.shape_cast %15 : vector<128xf32> to vector<1x128xf32>
      %17 = arith.mulf %12, %12 : vector<32x128xf32>
      %cst_15 = arith.constant dense<0.000000e+00> : vector<128xf32>
      %18 = vector.multi_reduction <add>, %17, %cst_15 [0] : vector<32x128xf32> to vector<128xf32>
      %19 = vector.shape_cast %18 : vector<128xf32> to vector<1x128xf32>
      %20 = vector.shape_cast %16 : vector<1x128xf32> to vector<1x128xf32>
      %21 = vector.broadcast %20 : vector<1x128xf32> to vector<8x128xf32>
      %c0_16 = arith.constant 0 : index
      %c0_17 = arith.constant 0 : index
      %22 = vector.load %arg6[%c0_16, %c0_17] : memref<8x128xf32, #tpu.memory_space<vmem>>, vector<8x128xf32>
      tpu.vector_store %arg6[%c0_16, %c0_17], %21 {strides = array<i32>} : memref<8x128xf32, #tpu.memory_space<vmem>>, vector<8x128xf32>,
      %23 = vector.shape_cast %19 : vector<1x128xf32> to vector<1x128xf32>
      %24 = vector.broadcast %23 : vector<1x128xf32> to vector<8x128xf32>
      %c0_18 = arith.constant 0 : index
      %c0_19 = arith.constant 0 : index
      %25 = vector.load %arg7[%c0_18, %c0_19] : memref<8x128xf32, #tpu.memory_space<vmem>>, vector<8x128xf32>
      tpu.vector_store %arg7[%c0_18, %c0_19], %24 {strides = array<i32>} : memref<8x128xf32, #tpu.memory_space<vmem>>, vector<8x128xf32>,
    } else {
    }
    return
  }
  func.func @transform_0(%arg0: i32, %arg1: i32, %arg2: i32) -> (i32, i32) {
    %c0_i32 = arith.constant 0 : i32
    return %arg0, %arg2 : i32, i32
  }
  func.func @transform_1(%arg0: i32, %arg1: i32, %arg2: i32) -> (i32, i32) {
    %c0_i32 = arith.constant 0 : i32
    return %arg2, %arg1 : i32, i32
  }
  func.func @transform_2(%arg0: i32, %arg1: i32, %arg2: i32) -> (i32, i32) {
    %c0_i32 = arith.constant 0 : i32
    return %arg0, %arg1 : i32, i32
  }
  func.func @transform_3(%arg0: i32, %arg1: i32, %arg2: i32) -> (i32, i32) {
    %c0_i32 = arith.constant 0 : i32
    return %arg0, %arg1 : i32, i32
  }
  func.func @transform_4(%arg0: i32, %arg1: i32, %arg2: i32) -> (i32, i32) {
    %c0_i32 = arith.constant 0 : i32
    return %arg0, %arg1 : i32, i32
  }
}

module attributes {stable_mosaic.version = 11 : i64} {
  func.func @_matmul_stats_kernel(%arg0: i32, %arg1: i32, %arg2: i32, %arg3: memref<128x128xbf16, #tpu.memory_space<vmem>>, %arg4: memref<128x128xbf16, #tpu.memory_space<vmem>>, %arg5: memref<128x128xbf16, #tpu.memory_space<vmem>>, %arg6: memref<8x128xf32, #tpu.memory_space<vmem>>, %arg7: memref<8x128xf32, #tpu.memory_space<vmem>>, %arg8: memref<128x128xf32, #tpu.memory_space<vmem>>) attributes {dimension_semantics = [#tpu.dimension_semantics<parallel>, #tpu.dimension_semantics<parallel>, #tpu.dimension_semantics<arbitrary>], iteration_bounds = array<i64: 1, 1, 1>, scalar_prefetch = 0 : i64, scratch_operands = 1 : i64, tpu.core_type = #tpu.core_type<tc>, window_params = [{transform_indices = @transform_0, window_bounds = array<i64: 128, 128>}, {transform_indices = @transform_1, window_bounds = array<i64: 128, 128>}, {transform_indices = @transform_2, window_bounds = array<i64: 128, 128>}, {transform_indices = @transform_3, window_bounds = array<i64: 8, 128>}, {transform_indices = @transform_4, window_bounds = array<i64: 8, 128>}]} {
    %c0_i32 = arith.constant 0 : i32
    %0 = arith.cmpi eq, %arg2, %c0_i32 : i32
    %1 = arith.extui %0 : i1 to i32
    %c0_i32_0 = arith.constant 0 : i32
    %2 = arith.cmpi ne, %1, %c0_i32_0 : i32
    scf.if %2 {
      %cst_10 = arith.constant 0.000000e+00 : f32
      %12 = vector.broadcast %cst_10 : f32 to vector<128x128xf32>
      %c0_11 = arith.constant 0 : index
      %c0_12 = arith.constant 0 : index
      %13 = vector.load %arg8[%c0_11, %c0_12] : memref<128x128xf32, #tpu.memory_space<vmem>>, vector<128x128xf32>
      tpu.vector_store %arg8[%c0_11, %c0_12], %12 {strides = array<i32>} : memref<128x128xf32, #tpu.memory_space<vmem>>, vector<128x128xf32>,
    } else {
    }
    %c0 = arith.constant 0 : index
    %c0_1 = arith.constant 0 : index
    %3 = vector.load %arg8[%c0, %c0_1] : memref<128x128xf32, #tpu.memory_space<vmem>>, vector<128x128xf32>
    %c0_2 = arith.constant 0 : index
    %c0_3 = arith.constant 0 : index
    %4 = vector.load %arg3[%c0_2, %c0_3] : memref<128x128xbf16, #tpu.memory_space<vmem>>, vector<128x128xbf16>
    %c0_4 = arith.constant 0 : index
    %c0_5 = arith.constant 0 : index
    %5 = vector.load %arg4[%c0_4, %c0_5] : memref<128x128xbf16, #tpu.memory_space<vmem>>, vector<128x128xbf16>
    %cst = arith.constant dense<0.000000e+00> : vector<128x128xf32>
    %6 = tpu.matmul %4, %5, %cst {dimension_numbers = #tpu.dot_dimension_numbers<[1], [0], [0], [1], [0, 0, 1, 1], [], []>} : vector<128x128xbf16>, vector<128x128xbf16>, vector<128x128xf32> -> vector<128x128xf32>
    %7 = arith.addf %3, %6 : vector<128x128xf32>
    %c0_6 = arith.constant 0 : index
    %c0_7 = arith.constant 0 : index
    %8 = vector.load %arg8[%c0_6, %c0_7] : memref<128x128xf32, #tpu.memory_space<vmem>>, vector<128x128xf32>
    tpu.vector_store %arg8[%c0_6, %c0_7], %7 {strides = array<i32>} : memref<128x128xf32, #tpu.memory_space<vmem>>, vector<128x128xf32>,
    %c0_i32_8 = arith.constant 0 : i32
    %9 = arith.cmpi eq, %arg2, %c0_i32_8 : i32
    %10 = arith.extui %9 : i1 to i32
    %c0_i32_9 = arith.constant 0 : i32
    %11 = arith.cmpi ne, %10, %c0_i32_9 : i32
    scf.if %11 {
      %c0_10 = arith.constant 0 : index
      %c0_11 = arith.constant 0 : index
      %12 = vector.load %arg8[%c0_10, %c0_11] : memref<128x128xf32, #tpu.memory_space<vmem>>, vector<128x128xf32>
      %13 = arith.truncf %12 : vector<128x128xf32> to vector<128x128xbf16>
      %c0_12 = arith.constant 0 : index
      %c0_13 = arith.constant 0 : index
      %14 = vector.load %arg5[%c0_12, %c0_13] : memref<128x128xbf16, #tpu.memory_space<vmem>>, vector<128x128xbf16>
      tpu.vector_store %arg5[%c0_12, %c0_13], %13 {strides = array<i32>} : memref<128x128xbf16, #tpu.memory_space<vmem>>, vector<128x128xbf16>,
      %cst_14 = arith.constant dense<0.000000e+00> : vector<128xf32>
      %15 = vector.multi_reduction <add>, %12, %cst_14 [0] : vector<128x128xf32> to vector<128xf32>
      %16 = vector.shape_cast %15 : vector<128xf32> to vector<1x128xf32>
      %17 = arith.mulf %12, %12 : vector<128x128xf32>
      %cst_15 = arith.constant dense<0.000000e+00> : vector<128xf32>
      %18 = vector.multi_reduction <add>, %17, %cst_15 [0] : vector<128x128xf32> to vector<128xf32>
      %19 = vector.shape_cast %18 : vector<128xf32> to vector<1x128xf32>
      %20 = vector.shape_cast %16 : vector<1x128xf32> to vector<1x128xf32>
      %21 = vector.broadcast %20 : vector<1x128xf32> to vector<8x128xf32>
      %c0_16 = arith.constant 0 : index
      %c0_17 = arith.constant 0 : index
      %22 = vector.load %arg6[%c0_16, %c0_17] : memref<8x128xf32, #tpu.memory_space<vmem>>, vector<8x128xf32>
      tpu.vector_store %arg6[%c0_16, %c0_17], %21 {strides = array<i32>} : memref<8x128xf32, #tpu.memory_space<vmem>>, vector<8x128xf32>,
      %23 = vector.shape_cast %19 : vector<1x128xf32> to vector<1x128xf32>
      %24 = vector.broadcast %23 : vector<1x128xf32> to vector<8x128xf32>
      %c0_18 = arith.constant 0 : index
      %c0_19 = arith.constant 0 : index
      %25 = vector.load %arg7[%c0_18, %c0_19] : memref<8x128xf32, #tpu.memory_space<vmem>>, vector<8x128xf32>
      tpu.vector_store %arg7[%c0_18, %c0_19], %24 {strides = array<i32>} : memref<8x128xf32, #tpu.memory_space<vmem>>, vector<8x128xf32>,
    } else {
    }
    return
  }
  func.func @transform_0(%arg0: i32, %arg1: i32, %arg2: i32) -> (i32, i32) {
    %c0_i32 = arith.constant 0 : i32
    return %arg0, %arg2 : i32, i32
  }
  func.func @transform_1(%arg0: i32, %arg1: i32, %arg2: i32) -> (i32, i32) {
    %c0_i32 = arith.constant 0 : i32
    return %arg2, %arg1 : i32, i32
  }
  func.func @transform_2(%arg0: i32, %arg1: i32, %arg2: i32) -> (i32, i32) {
    %c0_i32 = arith.constant 0 : i32
    return %arg0, %arg1 : i32, i32
  }
  func.func @transform_3(%arg0: i32, %arg1: i32, %arg2: i32) -> (i32, i32) {
    %c0_i32 = arith.constant 0 : i32
    return %arg0, %arg1 : i32, i32
  }
  func.func @transform_4(%arg0: i32, %arg1: i32, %arg2: i32) -> (i32, i32) {
    %c0_i32 = arith.constant 0 : i32
    return %arg0, %arg1 : i32, i32
  }
}

module attributes {stable_mosaic.version = 11 : i64} {
  func.func @_matmul_kernel(%arg0: i32, %arg1: i32, %arg2: i32, %arg3: memref<512x128xbf16, #tpu.memory_space<vmem>>, %arg4: memref<128x128xbf16, #tpu.memory_space<vmem>>, %arg5: memref<1x128xf32, #tpu.memory_space<vmem>>, %arg6: memref<512x128xf32, #tpu.memory_space<vmem>>, %arg7: memref<512x128xf32, #tpu.memory_space<vmem>>) attributes {dimension_semantics = [#tpu.dimension_semantics<parallel>, #tpu.dimension_semantics<parallel>, #tpu.dimension_semantics<arbitrary>], iteration_bounds = array<i64: 1, 1, 7>, scalar_prefetch = 0 : i64, scratch_operands = 1 : i64, tpu.core_type = #tpu.core_type<tc>, window_params = [{transform_indices = @transform_0, window_bounds = array<i64: 512, 128>}, {transform_indices = @transform_1, window_bounds = array<i64: 128, 128>}, {transform_indices = @transform_2, window_bounds = array<i64: 1, 128>}, {transform_indices = @transform_3, window_bounds = array<i64: 512, 128>}]} {
    %c0_i32 = arith.constant 0 : i32
    %0 = arith.cmpi eq, %arg2, %c0_i32 : i32
    %1 = arith.extui %0 : i1 to i32
    %c0_i32_0 = arith.constant 0 : i32
    %2 = arith.cmpi ne, %1, %c0_i32_0 : i32
    scf.if %2 {
      %cst_9 = arith.constant 0.000000e+00 : f32
      %12 = vector.broadcast %cst_9 : f32 to vector<512x128xf32>
      %c0_10 = arith.constant 0 : index
      %c0_11 = arith.constant 0 : index
      %13 = vector.load %arg7[%c0_10, %c0_11] : memref<512x128xf32, #tpu.memory_space<vmem>>, vector<512x128xf32>
      tpu.vector_store %arg7[%c0_10, %c0_11], %12 {strides = array<i32>} : memref<512x128xf32, #tpu.memory_space<vmem>>, vector<512x128xf32>,
    } else {
    }
    %c0 = arith.constant 0 : index
    %c0_1 = arith.constant 0 : index
    %3 = vector.load %arg7[%c0, %c0_1] : memref<512x128xf32, #tpu.memory_space<vmem>>, vector<512x128xf32>
    %c0_2 = arith.constant 0 : index
    %c0_3 = arith.constant 0 : index
    %4 = vector.load %arg3[%c0_2, %c0_3] : memref<512x128xbf16, #tpu.memory_space<vmem>>, vector<512x128xbf16>
    %c0_4 = arith.constant 0 : index
    %c0_5 = arith.constant 0 : index
    %5 = vector.load %arg4[%c0_4, %c0_5] : memref<128x128xbf16, #tpu.memory_space<vmem>>, vector<128x128xbf16>
    %cst = arith.constant dense<0.000000e+00> : vector<512x128xf32>
    %6 = tpu.matmul %4, %5, %cst {dimension_numbers = #tpu.dot_dimension_numbers<[1], [0], [0], [1], [0, 0, 1, 1], [], []>} : vector<512x128xbf16>, vector<128x128xbf16>, vector<512x128xf32> -> vector<512x128xf32>
    %7 = arith.addf %3, %6 : vector<512x128xf32>
    %c0_6 = arith.constant 0 : index
    %c0_7 = arith.constant 0 : index
    %8 = vector.load %arg7[%c0_6, %c0_7] : memref<512x128xf32, #tpu.memory_space<vmem>>, vector<512x128xf32>
    tpu.vector_store %arg7[%c0_6, %c0_7], %7 {strides = array<i32>} : memref<512x128xf32, #tpu.memory_space<vmem>>, vector<512x128xf32>,
    %c6_i32 = arith.constant 6 : i32
    %9 = arith.cmpi eq, %arg2, %c6_i32 : i32
    %10 = arith.extui %9 : i1 to i32
    %c0_i32_8 = arith.constant 0 : i32
    %11 = arith.cmpi ne, %10, %c0_i32_8 : i32
    scf.if %11 {
      %c0_9 = arith.constant 0 : index
      %c0_10 = arith.constant 0 : index
      %12 = vector.load %arg7[%c0_9, %c0_10] : memref<512x128xf32, #tpu.memory_space<vmem>>, vector<512x128xf32>
      %c0_11 = arith.constant 0 : index
      %c0_12 = arith.constant 0 : index
      %13 = vector.load %arg5[%c0_11, %c0_12] : memref<1x128xf32, #tpu.memory_space<vmem>>, vector<1x128xf32>
      %14 = vector.broadcast %13 : vector<1x128xf32> to vector<512x128xf32>
      %15 = arith.addf %12, %14 : vector<512x128xf32>
      %16 = math.tanh %15 : vector<512x128xf32>
      %c0_13 = arith.constant 0 : index
      %c0_14 = arith.constant 0 : index
      %17 = vector.load %arg6[%c0_13, %c0_14] : memref<512x128xf32, #tpu.memory_space<vmem>>, vector<512x128xf32>
      tpu.vector_store %arg6[%c0_13, %c0_14], %16 {strides = array<i32>} : memref<512x128xf32, #tpu.memory_space<vmem>>, vector<512x128xf32>,
    } else {
    }
    return
  }
  func.func @transform_0(%arg0: i32, %arg1: i32, %arg2: i32) -> (i32, i32) {
    %c0_i32 = arith.constant 0 : i32
    return %arg0, %arg2 : i32, i32
  }
  func.func @transform_1(%arg0: i32, %arg1: i32, %arg2: i32) -> (i32, i32) {
    %c0_i32 = arith.constant 0 : i32
    return %arg2, %arg1 : i32, i32
  }
  func.func @transform_2(%arg0: i32, %arg1: i32, %arg2: i32) -> (i32, i32) {
    %c0_i32 = arith.constant 0 : i32
    %c0_i32_0 = arith.constant 0 : i32
    return %c0_i32, %arg1 : i32, i32
  }
  func.func @transform_3(%arg0: i32, %arg1: i32, %arg2: i32) -> (i32, i32) {
    %c0_i32 = arith.constant 0 : i32
    return %arg0, %arg1 : i32, i32
  }
}

</mosaic_0001>

<llo_original>
// kernel: tile.93
$region0: #{tile.93}
  #allocation0 [shape = 's32[1]{0}', space=sflag, size = 0x4, scoped, tag = 'scoped memory for tile.93']
  %s0 = inlined_call_operand.vmem [shape: f32[16], index: 0, kind: input, shape index: {}]
  %s1 = inlined_call_operand.vmem [shape: f32[8,16], index: 1, kind: output, shape index: {}]
  // Predicated region
  $region2: #{tile.93} parent=0 // pred_check
    _
  $region3: #{tile.93} parent=0 // pred_check_branch
    %3 = sbr.rel (0) target = $region5
  $region4: #{tile.93} parent=0 // pred_region
    _
  $region5: #{tile.93} parent=0 // pred_fallthru
    _
  %v4 = vld [vmem:[%s0] ss:$0 sm:$0xff]
  %5 = vst [vmem:[%s1] sm:$0xff] %v4

// kernel: tile.94
$region0: #{tile.94}
  %s0 = inlined_call_operand.vmem [shape: f32[8,16], index: 0, kind: input, shape index: {}]
  %s1 = inlined_call_operand.vmem [shape: f32[1,128], index: 1, kind: output, shape index: {}]
  $region1: #{tile.94} parent=0
    #allocation0 [shape = 'u8[4096]{0}', space=vmem, size = 0x1000, scoped, tag = 'scoped mem for output reshape']
    %v2 = vld [vmem:[%s0] sm:$0x1]
    %vm3 = vcmask 130048
    %4 = vst.msk [vmem:[#allocation0] sm:$0x1] %vm3, %v2
    %s5 = scalar_lea.vmem %s0, 7
    %v6 = vld [vmem:[%s5] sm:$0x1]
    %7 = vrot.lane.b32.xlu0 %v6, 112
    %v8 = vpop.permute.xlu0 %7
    %vm9 = vcmask 1048448
    %10 = vst.msk [vmem:[#allocation0] sm:$0x1] %vm9, %v8
    %s11 = scalar_lea.vmem %s0, 6
    %v12 = vld [vmem:[%s11] sm:$0x1]
    %13 = vrot.lane.b32.xlu0 %v12, 96
    %v14 = vpop.permute.xlu0 %13
    %vm15 = vcmask 917248
    %16 = vst.msk [vmem:[#allocation0] sm:$0x1] %vm15, %v14
    %s17 = scalar_lea.vmem %s0, 5
    %v18 = vld [vmem:[%s17] sm:$0x1]
    %19 = vrot.lane.b32.xlu0 %v18, 80
    %v20 = vpop.permute.xlu0 %19
    %vm21 = vcmask 786048
    %22 = vst.msk [vmem:[#allocation0] sm:$0x1] %vm21, %v20
    %s23 = scalar_lea.vmem %s0, 4
    %v24 = vld [vmem:[%s23] sm:$0x1]
    %25 = vrot.lane.b32.xlu0 %v24, 64
    %v26 = vpop.permute.xlu0 %25
    %vm27 = vcmask 654848
    %28 = vst.msk [vmem:[#allocation0] sm:$0x1] %vm27, %v26
    %s29 = scalar_lea.vmem %s0, 3
    %v30 = vld [vmem:[%s29] sm:$0x1]
    %31 = vrot.lane.b32.xlu0 %v30, 48
    %v32 = vpop.permute.xlu0 %31
    %vm33 = vcmask 523648
    %34 = vst.msk [vmem:[#allocation0] sm:$0x1] %vm33, %v32
    %s35 = scalar_lea.vmem %s0, 2
    %v36 = vld [vmem:[%s35] sm:$0x1]
    %37 = vrot.lane.b32.xlu0 %v36, 32
    %v38 = vpop.permute.xlu0 %37
    %vm39 = vcmask 392448
    %40 = vst.msk [vmem:[#allocation0] sm:$0x1] %vm39, %v38
    %s41 = scalar_lea.vmem %s0, 1
    %v42 = vld [vmem:[%s41] sm:$0x1]
    %43 = vrot.lane.b32.xlu0 %v42, 16
    %v44 = vpop.permute.xlu0 %43
    %vm45 = vcmask 261248
    %46 = vst.msk [vmem:[#allocation0] sm:$0x1] %vm45, %v44
    %s48 = sshllo.u32 0, 1
    %v50 = vld [vmem:[#allocation0] sm:%s48]
    %s51 = sshllo.u32 0, 1
    %52 = vst [vmem:[%s1] sm:%s51] %v50

// kernel: resnet_generator_forward.26
$region0: #{resnet_generator_forward.26}
  #allocation0 [shape = 'u32[]', space=smem, size = 0x4, offset = 0x4, fixed_abs, tag = 'smem constant byte address 0x4 - core index']
  #allocation1 [shape = 'u32[144,128]{1,0:T(1,128)}', space=vmem, size = 0x12000, scoped, tag = 'internal scratch']
  %s0 = inlined_call_operand.vmem [shape: bf16[64,128], index: 0, kind: input, shape index: {}]
  %s1 = inlined_call_operand.vmem [shape: f32[1,128], index: 1, kind: input, shape index: {}]
  %s2 = inlined_call_operand.vmem [shape: f32[1,128], index: 2, kind: input, shape index: {}]
  %s3 = inlined_call_operand.vmem [shape: bf16[64,128], index: 3, kind: output, shape index: {}]
  %s4 = sld [smem:[#allocation0]]
  $region22: #{resnet_generator_forward.26} parent=0
    _
  %s6 = ssub.s32 1, %s4
  %s7 = scalar_select 0, %s6, %s4
  // Predicated region
  $region2: #{resnet_generator_forward.26} parent=0 // pred_check
    _
  $region3: #{resnet_generator_forward.26} parent=0 // pred_check_branch
    %9 = sbr.rel (0) target = $region5
  $region4: #{resnet_generator_forward.26} parent=0 // pred_region
    _
  $region5: #{resnet_generator_forward.26} parent=0 // pred_fallthru
    _
  // Predicated region
  $region6: #{resnet_generator_forward.26} parent=0 // pred_check
    _
  $region7: #{resnet_generator_forward.26} parent=0 // pred_check_branch
    %11 = sbr.rel (0) target = $region9
  $region8: #{resnet_generator_forward.26} parent=0 // pred_region
    _
  $region9: #{resnet_generator_forward.26} parent=0 // pred_fallthru
    _
  // Predicated region
  $region10: #{resnet_generator_forward.26} parent=0 // pred_check
    _
  $region11: #{resnet_generator_forward.26} parent=0 // pred_check_branch
    %13 = sbr.rel (0) target = $region13
  $region12: #{resnet_generator_forward.26} parent=0 // pred_region
    _
  $region13: #{resnet_generator_forward.26} parent=0 // pred_fallthru
    _
  %v14 = vld [vmem:[%s0] sm:$0xf]
  %v15 = vld [vmem:[%s0 + $0x4] sm:$0xf]
  %v16 = vld [vmem:[%s0 + $0x8] sm:$0xf]
  %v17 = vld [vmem:[%s0 + $0xc] sm:$0xf]
  %v18 = vld [vmem:[%s0 + $0x10] sm:$0xf]
  %v19 = vld [vmem:[%s0 + $0x14] sm:$0xf]
  %v20 = vld [vmem:[%s0 + $0x18] sm:$0xf]
  %v21 = vld [vmem:[%s0 + $0x1c] sm:$0xf]
  %v22 = vunpack.c.l.bf16 %v14
  %v23 = vunpack.c.l.bf16 %v15
  %v24 = vunpack.c.l.bf16 %v16
  %v25 = vunpack.c.l.bf16 %v17
  %v26 = vunpack.c.l.bf16 %v18
  %v27 = vunpack.c.l.bf16 %v19
  %v28 = vunpack.c.l.bf16 %v20
  %v29 = vunpack.c.l.bf16 %v21
  %v30 = vld [vmem:[%s1] sm:$0x1]
  %v32 = vlaneseq
  %v33 = vshrl.u32 %v32, 7
  %v34 = vsub.s32 0, %v33
  %v35 = vrot.slane %v30, %v34
  %v37 = vmul.f32 %v22, %v35
  %v38 = vmul.f32 %v23, %v35
  %v39 = vmul.f32 %v24, %v35
  %v40 = vmul.f32 %v25, %v35
  %v41 = vmul.f32 %v26, %v35
  %v42 = vmul.f32 %v27, %v35
  %v43 = vmul.f32 %v28, %v35
  %v44 = vmul.f32 %v29, %v35
  %v45 = vld [vmem:[%s2] sm:$0x1]
  %v47 = vlaneseq
  %v48 = vshrl.u32 %v47, 7
  %v49 = vsub.s32 0, %v48
  %v50 = vrot.slane %v45, %v49
  %v52 = vadd.f32 %v37, %v50
  %v53 = vadd.f32 %v38, %v50
  %v54 = vadd.f32 %v39, %v50
  %v55 = vadd.f32 %v40, %v50
  %v56 = vadd.f32 %v41, %v50
  %v57 = vadd.f32 %v42, %v50
  %v58 = vadd.f32 %v43, %v50
  %v59 = vadd.f32 %v44, %v50
  %v60 = vmax.f32 %v52, 0.0
  %v61 = vmax.f32 %v53, 0.0
  %v62 = vmax.f32 %v54, 0.0
  %v63 = vmax.f32 %v55, 0.0
  %v64 = vmax.f32 %v56, 0.0
  %v65 = vmax.f32 %v57, 0.0
  %v66 = vmax.f32 %v58, 0.0
  %v67 = vmax.f32 %v59, 0.0
  %v68 = vpack.c.bf16 %v61, %v60
  %v69 = vpack.c.bf16 %v63, %v62
  %v70 = vpack.c.bf16 %v65, %v64
  %v71 = vpack.c.bf16 %v67, %v66
  %v76 = vunpack.c.l.b16 %v68
  %v77 = vunpack.c.h.b16 %v68
  %v78 = vunpack.c.l.b16 %v69
  %v79 = vunpack.c.h.b16 %v69
  %v80 = vunpack.c.l.b16 %v70
  %v81 = vunpack.c.h.b16 %v70
  %v82 = vunpack.c.l.b16 %v71
  %v83 = vunpack.c.h.b16 %v71
  %v84 = vpack.c.b16 %v76, %v76
  %v85 = vpack.c.b16 %v77, %v77
  %v86 = vpack.c.b16 %v78, %v78
  %v87 = vpack.c.b16 %v79, %v79
  %v88 = vpack.c.b16 %v80, %v80
  %v89 = vpack.c.b16 %v81, %v81
  %v90 = vpack.c.b16 %v82, %v82
  %v91 = vpack.c.b16 %v83, %v83
  %100 = vst [vmem:[%s3] sm:$0xf] %v84
  %101 = vst [vmem:[%s3 + $0x4] sm:$0xf] %v85
  %102 = vst [vmem:[%s3 + $0x8] sm:$0xf] %v86
  %103 = vst [vmem:[%s3 + $0xc] sm:$0xf] %v87
  %104 = vst [vmem:[%s3 + $0x10] sm:$0xf] %v88
  %105 = vst [vmem:[%s3 + $0x14] sm:$0xf] %v89
  %106 = vst [vmem:[%s3 + $0x18] sm:$0xf] %v90
  %107 = vst [vmem:[%s3 + $0x1c] sm:$0xf] %v91
  // Predicated region
  $region14: #{resnet_generator_forward.26} parent=0 // pred_check
    _
  $region15: #{resnet_generator_forward.26} parent=0 // pred_check_branch
    %109 = sbr.rel (0) target = $region17
  $region16: #{resnet_generator_forward.26} parent=0 // pred_region
    _
  $region17: #{resnet_generator_forward.26} parent=0 // pred_fallthru
    _
  // Predicated region
  $region18: #{resnet_generator_forward.26} parent=0 // pred_check
    _
  $region19: #{resnet_generator_forward.26} parent=0 // pred_check_branch
    %111 = sbr.rel (0) target = $region21
  $region20: #{resnet_generator_forward.26} parent=0 // pred_region
    _
  $region21: #{resnet_generator_forward.26} parent=0 // pred_fallthru
    _

// kernel: tile.103
$region0: #{tile.103}
  #allocation0 [shape = 's32[1]{0}', space=sflag, size = 0x4, scoped, tag = 'scoped memory for tile.103']
  %s0 = inlined_call_operand.vmem [shape: f32[32], index: 0, kind: input, shape index: {}]
  %s1 = inlined_call_operand.vmem [shape: f32[4,32], index: 1, kind: output, shape index: {}]
  // Predicated region
  $region2: #{tile.103} parent=0 // pred_check
    _
  $region3: #{tile.103} parent=0 // pred_check_branch
    %3 = sbr.rel (0) target = $region5
  $region4: #{tile.103} parent=0 // pred_region
    _
  $region5: #{tile.103} parent=0 // pred_fallthru
    _
  %v4 = vld [vmem:[%s0] ss:$0 sm:$0xff]
  %5 = vst [vmem:[%s1] sm:$0xf] %v4

// kernel: tile.104
$region0: #{tile.104}
  %s0 = inlined_call_operand.vmem [shape: f32[4,32], index: 0, kind: input, shape index: {}]
  %s1 = inlined_call_operand.vmem [shape: f32[1,128], index: 1, kind: output, shape index: {}]
  $region1: #{tile.104} parent=0
    #allocation0 [shape = 'u8[4096]{0}', space=vmem, size = 0x1000, scoped, tag = 'scoped mem for output reshape']
    #allocation1 [shape = 'u8[4096]{0}', space=vmem, size = 0x1000, scoped, tag = 'scoped mem for input reshape']
    %s3 = sshllo.u32 0, 4
    %v4 = vld [vmem:[%s0] sm:%s3]
    %5 = vst [vmem:[#allocation1] sm:%s3] %v4
    %v6 = vld [vmem:[#allocation1] sm:$0x1]
    %vm7 = vcmask 261120
    %8 = vst.msk [vmem:[#allocation0] sm:$0x1] %vm7, %v6
    %s9 = scalar_lea.vmem [#allocation1], 3
    %v10 = vld [vmem:[%s9] sm:$0x1]
    %11 = vrot.lane.b32.xlu0 %v10, 96
    %v12 = vpop.permute.xlu0 %11
    %vm13 = vcmask 1048320
    %14 = vst.msk [vmem:[#allocation0] sm:$0x1] %vm13, %v12
    %s15 = scalar_lea.vmem [#allocation1], 2
    %v16 = vld [vmem:[%s15] sm:$0x1]
    %17 = vrot.lane.b32.xlu0 %v16, 64
    %v18 = vpop.permute.xlu0 %17
    %vm19 = vcmask 785920
    %20 = vst.msk [vmem:[#allocation0] sm:$0x1] %vm19, %v18
    %s21 = scalar_lea.vmem [#allocation1], 1
    %v22 = vld [vmem:[%s21] sm:$0x1]
    %23 = vrot.lane.b32.xlu0 %v22, 32
    %v24 = vpop.permute.xlu0 %23
    %vm25 = vcmask 523520
    %26 = vst.msk [vmem:[#allocation0] sm:$0x1] %vm25, %v24
    %s28 = sshllo.u32 0, 1
    %v30 = vld [vmem:[#allocation0] sm:%s28]
    %s31 = sshllo.u32 0, 1
    %32 = vst [vmem:[%s1] sm:%s31] %v30

// kernel: resnet_generator_forward.25
$region0: #{resnet_generator_forward.25}
  #allocation0 [shape = 'u32[]', space=smem, size = 0x4, offset = 0x4, fixed_abs, tag = 'smem constant byte address 0x4 - core index']
  #allocation1 [shape = 'u32[144,128]{1,0:T(1,128)}', space=vmem, size = 0x12000, scoped, tag = 'internal scratch']
  #allocation2 [shape = 'f32[512,128]{1,0:T(8,128)}', space=vmem, size = 0x40000, scoped, tag = 'scratch operand']
  %s0 = inlined_call_operand.vmem [shape: bf16[512,256], index: 0, kind: input, shape index: {}]
  %s1 = inlined_call_operand.vmem [shape: bf16[256,128], index: 1, kind: input, shape index: {}]
  %s2 = inlined_call_operand.vmem [shape: bf16[512,128], index: 2, kind: output, shape index: {0}]
  %s3 = inlined_call_operand.vmem [shape: f32[8,128], index: 3, kind: output, shape index: {1}]
  %s4 = inlined_call_operand.vmem [shape: f32[8,128], index: 4, kind: output, shape index: {2}]
  %5 = xla_tuple %s2, %s3, %s4
  %s6 = sld [smem:[#allocation0]]
  $region42: #{resnet_generator_forward.25} parent=0
    _
  %s8 = ssub.s32 1, %s6
  %s9 = scalar_select 0, %s8, %s6
  // Predicated region
  $region2: #{resnet_generator_forward.25} parent=0 // pred_check
    _
  $region3: #{resnet_generator_forward.25} parent=0 // pred_check_branch
    %11 = sbr.rel (0) target = $region5
  $region4: #{resnet_generator_forward.25} parent=0 // pred_region
    _
  $region5: #{resnet_generator_forward.25} parent=0 // pred_fallthru
    _
  // Predicated region
  $region6: #{resnet_generator_forward.25} parent=0 // pred_check
    _
  $region7: #{resnet_generator_forward.25} parent=0 // pred_check_branch
    %13 = sbr.rel (0) target = $region9
  $region8: #{resnet_generator_forward.25} parent=0 // pred_region
    _
  $region9: #{resnet_generator_forward.25} parent=0 // pred_fallthru
    _
  %p15 = scmp.eq.s32.totalorder 0, 0
  // Predicated region
  $region10: #{resnet_generator_forward.25} parent=0 // pred_check
    %p16 = pneg %p15
  $region11: #{resnet_generator_forward.25} parent=0 // pred_check_branch
    %18 = sbr.rel (%p16) target = $region13
  $region12: #{resnet_generator_forward.25} parent=0 // pred_region
    %19 = vst [vmem:[#allocation2] sm:$0xff] 0.0
    %20 = vst [vmem:[#allocation2 + $0x8] sm:$0xff] 0.0
    %21 = vst [vmem:[#allocation2 + $0x10] sm:$0xff] 0.0
    %22 = vst [vmem:[#allocation2 + $0x18] sm:$0xff] 0.0
    %23 = vst [vmem:[#allocation2 + $0x20] sm:$0xff] 0.0
    %24 = vst [vmem:[#allocation2 + $0x28] sm:$0xff] 0.0
    %25 = vst [vmem:[#allocation2 + $0x30] sm:$0xff] 0.0
    %26 = vst [vmem:[#allocation2 + $0x38] sm:$0xff] 0.0
    %27 = vst [vmem:[#allocation2 + $0x40] sm:$0xff] 0.0
    %28 = vst [vmem:[#allocation2 + $0x48] sm:$0xff] 0.0
    %29 = vst [vmem:[#allocation2 + $0x50] sm:$0xff] 0.0
    %30 = vst [vmem:[#allocation2 + $0x58] sm:$0xff] 0.0
    %31 = vst [vmem:[#allocation2 + $0x60] sm:$0xff] 0.0
    %32 = vst [vmem:[#allocation2 + $0x68] sm:$0xff] 0.0
    %33 = vst [vmem:[#allocation2 + $0x70] sm:$0xff] 0.0
    %34 = vst [vmem:[#allocation2 + $0x78] sm:$0xff] 0.0
    %35 = vst [vmem:[#allocation2 + $0x80] sm:$0xff] 0.0
    %36 = vst [vmem:[#allocation2 + $0x88] sm:$0xff] 0.0
    %37 = vst [vmem:[#allocation2 + $0x90] sm:$0xff] 0.0
    %38 = vst [vmem:[#allocation2 + $0x98] sm:$0xff] 0.0
    %39 = vst [vmem:[#allocation2 + $0xa0] sm:$0xff] 0.0
    %40 = vst [vmem:[#allocation2 + $0xa8] sm:$0xff] 0.0
    %41 = vst [vmem:[#allocation2 + $0xb0] sm:$0xff] 0.0
    %42 = vst [vmem:[#allocation2 + $0xb8] sm:$0xff] 0.0
    %43 = vst [vmem:[#allocation2 + $0xc0] sm:$0xff] 0.0
    %44 = vst [vmem:[#allocation2 + $0xc8] sm:$0xff] 0.0
    %45 = vst [vmem:[#allocation2 + $0xd0] sm:$0xff] 0.0
    %46 = vst [vmem:[#allocation2 + $0xd8] sm:$0xff] 0.0
    %47 = vst [vmem:[#allocation2 + $0xe0] sm:$0xff] 0.0
    %48 = vst [vmem:[#allocation2 + $0xe8] sm:$0xff] 0.0
    %49 = vst [vmem:[#allocation2 + $0xf0] sm:$0xff] 0.0
    %50 = vst [vmem:[#allocation2 + $0xf8] sm:$0xff] 0.0
    %51 = vst [vmem:[#allocation2 + $0x100] sm:$0xff] 0.0
    %52 = vst [vmem:[#allocation2 + $0x108] sm:$0xff] 0.0
    %53 = vst [vmem:[#allocation2 + $0x110] sm:$0xff] 0.0
    %54 = vst [vmem:[#allocation2 + $0x118] sm:$0xff] 0.0
    %55 = vst [vmem:[#allocation2 + $0x120] sm:$0xff] 0.0
    %56 = vst [vmem:[#allocation2 + $0x128] sm:$0xff] 0.0
    %57 = vst [vmem:[#allocation2 + $0x130] sm:$0xff] 0.0
    %58 = vst [vmem:[#allocation2 + $0x138] sm:$0xff] 0.0
    %59 = vst [vmem:[#allocation2 + $0x140] sm:$0xff] 0.0
    %60 = vst [vmem:[#allocation2 + $0x148] sm:$0xff] 0.0
    %61 = vst [vmem:[#allocation2 + $0x150] sm:$0xff] 0.0
    %62 = vst [vmem:[#allocation2 + $0x158] sm:$0xff] 0.0
    %63 = vst [vmem:[#allocation2 + $0x160] sm:$0xff] 0.0
    %64 = vst [vmem:[#allocation2 + $0x168] sm:$0xff] 0.0
    %65 = vst [vmem:[#allocation2 + $0x170] sm:$0xff] 0.0
    %66 = vst [vmem:[#allocation2 + $0x178] sm:$0xff] 0.0
    %67 = vst [vmem:[#allocation2 + $0x180] sm:$0xff] 0.0
    %68 = vst [vmem:[#allocation2 + $0x188] sm:$0xff] 0.0
    %69 = vst [vmem:[#allocation2 + $0x190] sm:$0xff] 0.0
    %70 = vst [vmem:[#allocation2 + $0x198] sm:$0xff] 0.0
    %71 = vst [vmem:[#allocation2 + $0x1a0] sm:$0xff] 0.0
    %72 = vst [vmem:[#allocation2 + $0x1a8] sm:$0xff] 0.0
    %73 = vst [vmem:[#allocation2 + $0x1b0] sm:$0xff] 0.0
    %74 = vst [vmem:[#allocation2 + $0x1b8] sm:$0xff] 0.0
    %75 = vst [vmem:[#allocation2 + $0x1c0] sm:$0xff] 0.0
    %76 = vst [vmem:[#allocation2 + $0x1c8] sm:$0xff] 0.0
    %77 = vst [vmem:[#allocation2 + $0x1d0] sm:$0xff] 0.0
    %78 = vst [vmem:[#allocation2 + $0x1d8] sm:$0xff] 0.0
    %79 = vst [vmem:[#allocation2 + $0x1e0] sm:$0xff] 0.0
    %80 = vst [vmem:[#allocation2 + $0x1e8] sm:$0xff] 0.0
    %81 = vst [vmem:[#allocation2 + $0x1f0] sm:$0xff] 0.0
    %82 = vst [vmem:[#allocation2 + $0x1f8] sm:$0xff] 0.0
  $region13: #{resnet_generator_forward.25} parent=0 // pred_fallthru
    _
  %v83 = vld [vmem:[#allocation2] sm:$0xff]
  %v84 = vld [vmem:[#allocation2 + $0x8] sm:$0xff]
  %v85 = vld [vmem:[#allocation2 + $0x10] sm:$0xff]
  %v86 = vld [vmem:[#allocation2 + $0x18] sm:$0xff]
  %v87 = vld [vmem:[#allocation2 + $0x20] sm:$0xff]
  %v88 = vld [vmem:[#allocation2 + $0x28] sm:$0xff]
  %v89 = vld [vmem:[#allocation2 + $0x30] sm:$0xff]
  %v90 = vld [vmem:[#allocation2 + $0x38] sm:$0xff]
  %v91 = vld [vmem:[#allocation2 + $0x40] sm:$0xff]
  %v92 = vld [vmem:[#allocation2 + $0x48] sm:$0xff]
  %v93 = vld [vmem:[#allocation2 + $0x50] sm:$0xff]
  %v94 = vld [vmem:[#allocation2 + $0x58] sm:$0xff]
  %v95 = vld [vmem:[#allocation2 + $0x60] sm:$0xff]
  %v96 = vld [vmem:[#allocation2 + $0x68] sm:$0xff]
  %v97 = vld [vmem:[#allocation2 + $0x70] sm:$0xff]
  %v98 = vld [vmem:[#allocation2 + $0x78] sm:$0xff]
  %v99 = vld [vmem:[#allocation2 + $0x80] sm:$0xff]
  %v100 = vld [vmem:[#allocation2 + $0x88] sm:$0xff]
  %v101 = vld [vmem:[#allocation2 + $0x90] sm:$0xff]
  %v102 = vld [vmem:[#allocation2 + $0x98] sm:$0xff]
  %v103 = vld [vmem:[#allocation2 + $0xa0] sm:$0xff]
  %v104 = vld [vmem:[#allocation2 + $0xa8] sm:$0xff]
  %v105 = vld [vmem:[#allocation2 + $0xb0] sm:$0xff]
  %v106 = vld [vmem:[#allocation2 + $0xb8] sm:$0xff]
  %v107 = vld [vmem:[#allocation2 + $0xc0] sm:$0xff]
  %v108 = vld [vmem:[#allocation2 + $0xc8] sm:$0xff]
  %v109 = vld [vmem:[#allocation2 + $0xd0] sm:$0xff]
  %v110 = vld [vmem:[#allocation2 + $0xd8] sm:$0xff]
  %v111 = vld [vmem:[#allocation2 + $0xe0] sm:$0xff]
  %v112 = vld [vmem:[#allocation2 + $0xe8] sm:$0xff]
  %v113 = vld [vmem:[#allocation2 + $0xf0] sm:$0xff]
  %v114 = vld [vmem:[#allocation2 + $0xf8] sm:$0xff]
  %v115 = vld [vmem:[#allocation2 + $0x100] sm:$0xff]
  %v116 = vld [vmem:[#allocation2 + $0x108] sm:$0xff]
  %v117 = vld [vmem:[#allocation2 + $0x110] sm:$0xff]
  %v118 = vld [vmem:[#allocation2 + $0x118] sm:$0xff]
  %v119 = vld [vmem:[#allocation2 + $0x120] sm:$0xff]
  %v120 = vld [vmem:[#allocation2 + $0x128] sm:$0xff]
  %v121 = vld [vmem:[#allocation2 + $0x130] sm:$0xff]
  %v122 = vld [vmem:[#allocation2 + $0x138] sm:$0xff]
  %v123 = vld [vmem:[#allocation2 + $0x140] sm:$0xff]
  %v124 = vld [vmem:[#allocation2 + $0x148] sm:$0xff]
  %v125 = vld [vmem:[#allocation2 + $0x150] sm:$0xff]
  %v126 = vld [vmem:[#allocation2 + $0x158] sm:$0xff]
  %v127 = vld [vmem:[#allocation2 + $0x160] sm:$0xff]
  %v128 = vld [vmem:[#allocation2 + $0x168] sm:$0xff]
  %v129 = vld [vmem:[#allocation2 + $0x170] sm:$0xff]
  %v130 = vld [vmem:[#allocation2 + $0x178] sm:$0xff]
  %v131 = vld [vmem:[#allocation2 + $0x180] sm:$0xff]
  %v132 = vld [vmem:[#allocation2 + $0x188] sm:$0xff]
  %v133 = vld [vmem:[#allocation2 + $0x190] sm:$0xff]
  %v134 = vld [vmem:[#allocation2 + $0x198] sm:$0xff]
  %v135 = vld [vmem:[#allocation2 + $0x1a0] sm:$0xff]
  %v136 = vld [vmem:[#allocation2 + $0x1a8] sm:$0xff]
  %v137 = vld [vmem:[#allocation2 + $0x1b0] sm:$0xff]
  %v138 = vld [vmem:[#allocation2 + $0x1b8] sm:$0xff]
  %v139 = vld [vmem:[#allocation2 + $0x1c0] sm:$0xff]
  %v140 = vld [vmem:[#allocation2 + $0x1c8] sm:$0xff]
  %v141 = vld [vmem:[#allocation2 + $0x1d0] sm:$0xff]
  %v142 = vld [vmem:[#allocation2 + $0x1d8] sm:$0xff]
  %v143 = vld [vmem:[#allocation2 + $0x1e0] sm:$0xff]
  %v144 = vld [vmem:[#allocation2 + $0x1e8] sm:$0xff]
  %v145 = vld [vmem:[#allocation2 + $0x1f0] sm:$0xff]
  %v146 = vld [vmem:[#allocation2 + $0x1f8] sm:$0xff]
  %v147 = vld [vmem:[%s0] sm:$0xff]
  %v148 = vld [vmem:[%s0 + $0x8] sm:$0xff]
  %v149 = vld [vmem:[%s0 + $0x10] sm:$0xff]
  %v150 = vld [vmem:[%s0 + $0x18] sm:$0xff]
  %v151 = vld [vmem:[%s0 + $0x20] sm:$0xff]
  %v152 = vld [vmem:[%s0 + $0x28] sm:$0xff]
  %v153 = vld [vmem:[%s0 + $0x30] sm:$0xff]
  %v154 = vld [vmem:[%s0 + $0x38] sm:$0xff]
  %v155 = vld [vmem:[%s0 + $0x40] sm:$0xff]
  %v156 = vld [vmem:[%s0 + $0x48] sm:$0xff]
  %v157 = vld [vmem:[%s0 + $0x50] sm:$0xff]
  %v158 = vld [vmem:[%s0 + $0x58] sm:$0xff]
  %v159 = vld [vmem:[%s0 + $0x60] sm:$0xff]
  %v160 = vld [vmem:[%s0 + $0x68] sm:$0xff]
  %v161 = vld [vmem:[%s0 + $0x70] sm:$0xff]
  %v162 = vld [vmem:[%s0 + $0x78] sm:$0xff]
  %v163 = vld [vmem:[%s0 + $0x80] sm:$0xff]
  %v164 = vld [vmem:[%s0 + $0x88] sm:$0xff]
  %v165 = vld [vmem:[%s0 + $0x90] sm:$0xff]
  %v166 = vld [vmem:[%s0 + $0x98] sm:$0xff]
  %v167 = vld [vmem:[%s0 + $0xa0] sm:$0xff]
  %v168 = vld [vmem:[%s0 + $0xa8] sm:$0xff]
  %v169 = vld [vmem:[%s0 + $0xb0] sm:$0xff]
  %v170 = vld [vmem:[%s0 + $0xb8] sm:$0xff]
  %v171 = vld [vmem:[%s0 + $0xc0] sm:$0xff]
  %v172 = vld [vmem:[%s0 + $0xc8] sm:$0xff]
  %v173 = vld [vmem:[%s0 + $0xd0] sm:$0xff]
  %v174 = vld [vmem:[%s0 + $0xd8] sm:$0xff]
  %v175 = vld [vmem:[%s0 + $0xe0] sm:$0xff]
  %v176 = vld [vmem:[%s0 + $0xe8] sm:$0xff]
  %v177 = vld [vmem:[%s0 + $0xf0] sm:$0xff]
  %v178 = vld [vmem:[%s0 + $0xf8] sm:$0xff]
  %v179 = vld [vmem:[%s0 + $0x100] sm:$0xff]
  %v180 = vld [vmem:[%s0 + $0x108] sm:$0xff]
  %v181 = vld [vmem:[%s0 + $0x110] sm:$0xff]
  %v182 = vld [vmem:[%s0 + $0x118] sm:$0xff]
  %v183 = vld [vmem:[%s0 + $0x120] sm:$0xff]
  %v184 = vld [vmem:[%s0 + $0x128] sm:$0xff]
  %v185 = vld [vmem:[%s0 + $0x130] sm:$0xff]
  %v186 = vld [vmem:[%s0 + $0x138] sm:$0xff]
  %v187 = vld [vmem:[%s0 + $0x140] sm:$0xff]
  %v188 = vld [vmem:[%s0 + $0x148] sm:$0xff]
  %v189 = vld [vmem:[%s0 + $0x150] sm:$0xff]
  %v190 = vld [vmem:[%s0 + $0x158] sm:$0xff]
  %v191 = vld [vmem:[%s0 + $0x160] sm:$0xff]
  %v192 = vld [vmem:[%s0 + $0x168] sm:$0xff]
  %v193 = vld [vmem:[%s0 + $0x170] sm:$0xff]
  %v194 = vld [vmem:[%s0 + $0x178] sm:$0xff]
  %v195 = vld [vmem:[%s0 + $0x180] sm:$0xff]
  %v196 = vld [vmem:[%s0 + $0x188] sm:$0xff]
  %v197 = vld [vmem:[%s0 + $0x190] sm:$0xff]
  %v198 = vld [vmem:[%s0 + $0x198] sm:$0xff]
  %v199 = vld [vmem:[%s0 + $0x1a0] sm:$0xff]
  %v200 = vld [vmem:[%s0 + $0x1a8] sm:$0xff]
  %v201 = vld [vmem:[%s0 + $0x1b0] sm:$0xff]
  %v202 = vld [vmem:[%s0 + $0x1b8] sm:$0xff]
  %v203 = vld [vmem:[%s0 + $0x1c0] sm:$0xff]
  %v204 = vld [vmem:[%s0 + $0x1c8] sm:$0xff]
  %v205 = vld [vmem:[%s0 + $0x1d0] sm:$0xff]
  %v206 = vld [vmem:[%s0 + $0x1d8] sm:$0xff]
  %v207 = vld [vmem:[%s0 + $0x1e0] sm:$0xff]
  %v208 = vld [vmem:[%s0 + $0x1e8] sm:$0xff]
  %v209 = vld [vmem:[%s0 + $0x1f0] sm:$0xff]
  %v210 = vld [vmem:[%s0 + $0x1f8] sm:$0xff]
  %v211 = vld [vmem:[%s1] sm:$0xf]
  %v212 = vld [vmem:[%s1 + $0x4] sm:$0xf]
  %v213 = vld [vmem:[%s1 + $0x8] sm:$0xf]
  %v214 = vld [vmem:[%s1 + $0xc] sm:$0xf]
  %v215 = vld [vmem:[%s1 + $0x10] sm:$0xf]
  %v216 = vld [vmem:[%s1 + $0x14] sm:$0xf]
  %v217 = vld [vmem:[%s1 + $0x18] sm:$0xf]
  %v218 = vld [vmem:[%s1 + $0x1c] sm:$0xf]
  %v219 = vld [vmem:[%s1 + $0x20] sm:$0xf]
  %v220 = vld [vmem:[%s1 + $0x24] sm:$0xf]
  %v221 = vld [vmem:[%s1 + $0x28] sm:$0xf]
  %v222 = vld [vmem:[%s1 + $0x2c] sm:$0xf]
  %v223 = vld [vmem:[%s1 + $0x30] sm:$0xf]
  %v224 = vld [vmem:[%s1 + $0x34] sm:$0xf]
  %v225 = vld [vmem:[%s1 + $0x38] sm:$0xf]
  %v226 = vld [vmem:[%s1 + $0x3c] sm:$0xf]
  %v227 = vld [vmem:[%s1 + $0x40] sm:$0xf]
  %v228 = vld [vmem:[%s1 + $0x44] sm:$0xf]
  %v229 = vld [vmem:[%s1 + $0x48] sm:$0xf]
  %v230 = vld [vmem:[%s1 + $0x4c] sm:$0xf]
  %v231 = vld [vmem:[%s1 + $0x50] sm:$0xf]
  %v232 = vld [vmem:[%s1 + $0x54] sm:$0xf]
  %v233 = vld [vmem:[%s1 + $0x58] sm:$0xf]
  %v234 = vld [vmem:[%s1 + $0x5c] sm:$0xf]
  %v235 = vld [vmem:[%s1 + $0x60] sm:$0xf]
  %v236 = vld [vmem:[%s1 + $0x64] sm:$0xf]
  %v237 = vld [vmem:[%s1 + $0x68] sm:$0xf]
  %v238 = vld [vmem:[%s1 + $0x6c] sm:$0xf]
  %v239 = vld [vmem:[%s1 + $0x70] sm:$0xf]
  %v240 = vld [vmem:[%s1 + $0x74] sm:$0xf]
  %v241 = vld [vmem:[%s1 + $0x78] sm:$0xf]
  %v242 = vld [vmem:[%s1 + $0x7c] sm:$0xf]
  %v307 = vunpack.c.l.b16 %v147
  %v308 = vunpack.c.h.b16 %v147
  %v309 = vunpack.c.l.b16 %v148
  %v310 = vunpack.c.h.b16 %v148
  %v311 = vunpack.c.l.b16 %v149
  %v312 = vunpack.c.h.b16 %v149
  %v313 = vunpack.c.l.b16 %v150
  %v314 = vunpack.c.h.b16 %v150
  %v315 = vunpack.c.l.b16 %v151
  %v316 = vunpack.c.h.b16 %v151
  %v317 = vunpack.c.l.b16 %v152
  %v318 = vunpack.c.h.b16 %v152
  %v319 = vunpack.c.l.b16 %v153
  %v320 = vunpack.c.h.b16 %v153
  %v321 = vunpack.c.l.b16 %v154
  %v322 = vunpack.c.h.b16 %v154
  %v323 = vunpack.c.l.b16 %v155
  %v324 = vunpack.c.h.b16 %v155
  %v325 = vunpack.c.l.b16 %v156
  %v326 = vunpack.c.h.b16 %v156
  %v327 = vunpack.c.l.b16 %v157
  %v328 = vunpack.c.h.b16 %v157
  %v329 = vunpack.c.l.b16 %v158
  %v330 = vunpack.c.h.b16 %v158
  %v331 = vunpack.c.l.b16 %v159
  %v332 = vunpack.c.h.b16 %v159
  %v333 = vunpack.c.l.b16 %v160
  %v334 = vunpack.c.h.b16 %v160
  %v335 = vunpack.c.l.b16 %v161
  %v336 = vunpack.c.h.b16 %v161
  %v337 = vunpack.c.l.b16 %v162
  %v338 = vunpack.c.h.b16 %v162
  %v339 = vunpack.c.l.b16 %v163
  %v340 = vunpack.c.h.b16 %v163
  %v341 = vunpack.c.l.b16 %v164
  %v342 = vunpack.c.h.b16 %v164
  %v343 = vunpack.c.l.b16 %v165
  %v344 = vunpack.c.h.b16 %v165
  %v345 = vunpack.c.l.b16 %v166
  %v346 = vunpack.c.h.b16 %v166
  %v347 = vunpack.c.l.b16 %v167
  %v348 = vunpack.c.h.b16 %v167
  %v349 = vunpack.c.l.b16 %v168
  %v350 = vunpack.c.h.b16 %v168
  %v351 = vunpack.c.l.b16 %v169
  %v352 = vunpack.c.h.b16 %v169
  %v353 = vunpack.c.l.b16 %v170
  %v354 = vunpack.c.h.b16 %v170
  %v355 = vunpack.c.l.b16 %v171
  %v356 = vunpack.c.h.b16 %v171
  %v357 = vunpack.c.l.b16 %v172
  %v358 = vunpack.c.h.b16 %v172
  %v359 = vunpack.c.l.b16 %v173
  %v360 = vunpack.c.h.b16 %v173
  %v361 = vunpack.c.l.b16 %v174
  %v362 = vunpack.c.h.b16 %v174
  %v363 = vunpack.c.l.b16 %v175
  %v364 = vunpack.c.h.b16 %v175
  %v365 = vunpack.c.l.b16 %v176
  %v366 = vunpack.c.h.b16 %v176
  %v367 = vunpack.c.l.b16 %v177
  %v368 = vunpack.c.h.b16 %v177
  %v369 = vunpack.c.l.b16 %v178
  %v370 = vunpack.c.h.b16 %v178
  %v371 = vunpack.c.l.b16 %v179
  %v372 = vunpack.c.h.b16 %v179
  %v373 = vunpack.c.l.b16 %v180
  %v374 = vunpack.c.h.b16 %v180
  %v375 = vunpack.c.l.b16 %v181
  %v376 = vunpack.c.h.b16 %v181
  %v377 = vunpack.c.l.b16 %v182
  %v378 = vunpack.c.h.b16 %v182
  %v379 = vunpack.c.l.b16 %v183
  %v380 = vunpack.c.h.b16 %v183
  %v381 = vunpack.c.l.b16 %v184
  %v382 = vunpack.c.h.b16 %v184
  %v383 = vunpack.c.l.b16 %v185
  %v384 = vunpack.c.h.b16 %v185
  %v385 = vunpack.c.l.b16 %v186
  %v386 = vunpack.c.h.b16 %v186
  %v387 = vunpack.c.l.b16 %v187
  %v388 = vunpack.c.h.b16 %v187
  %v389 = vunpack.c.l.b16 %v188
  %v390 = vunpack.c.h.b16 %v188
  %v391 = vunpack.c.l.b16 %v189
  %v392 = vunpack.c.h.b16 %v189
  %v393 = vunpack.c.l.b16 %v190
  %v394 = vunpack.c.h.b16 %v190
  %v395 = vunpack.c.l.b16 %v191
  %v396 = vunpack.c.h.b16 %v191
  %v397 = vunpack.c.l.b16 %v192
  %v398 = vunpack.c.h.b16 %v192
  %v399 = vunpack.c.l.b16 %v193
  %v400 = vunpack.c.h.b16 %v193
  %v401 = vunpack.c.l.b16 %v194
  %v402 = vunpack.c.h.b16 %v194
  %v403 = vunpack.c.l.b16 %v195
  %v404 = vunpack.c.h.b16 %v195
  %v405 = vunpack.c.l.b16 %v196
  %v406 = vunpack.c.h.b16 %v196
  %v407 = vunpack.c.l.b16 %v197
  %v408 = vunpack.c.h.b16 %v197
  %v409 = vunpack.c.l.b16 %v198
  %v410 = vunpack.c.h.b16 %v198
  %v411 = vunpack.c.l.b16 %v199
  %v412 = vunpack.c.h.b16 %v199
  %v413 = vunpack.c.l.b16 %v200
  %v414 = vunpack.c.h.b16 %v200
  %v415 = vunpack.c.l.b16 %v201
  %v416 = vunpack.c.h.b16 %v201
  %v417 = vunpack.c.l.b16 %v202
  %v418 = vunpack.c.h.b16 %v202
  %v419 = vunpack.c.l.b16 %v203
  %v420 = vunpack.c.h.b16 %v203
  %v421 = vunpack.c.l.b16 %v204
  %v422 = vunpack.c.h.b16 %v204
  %v423 = vunpack.c.l.b16 %v205
  %v424 = vunpack.c.h.b16 %v205
  %v425 = vunpack.c.l.b16 %v206
  %v426 = vunpack.c.h.b16 %v206
  %v427 = vunpack.c.l.b16 %v207
  %v428 = vunpack.c.h.b16 %v207
  %v429 = vunpack.c.l.b16 %v208
  %v430 = vunpack.c.h.b16 %v208
  %v431 = vunpack.c.l.b16 %v209
  %v432 = vunpack.c.h.b16 %v209
  %v433 = vunpack.c.l.b16 %v210
  %v434 = vunpack.c.h.b16 %v210
  %v435 = vpack.c.b16 %v309, %v307
  %v436 = vpack.c.b16 %v310, %v308
  %v437 = vpack.c.b16 %v313, %v311
  %v438 = vpack.c.b16 %v314, %v312
  %v439 = vpack.c.b16 %v317, %v315
  %v440 = vpack.c.b16 %v318, %v316
  %v441 = vpack.c.b16 %v321, %v319
  %v442 = vpack.c.b16 %v322, %v320
  %v443 = vpack.c.b16 %v325, %v323
  %v444 = vpack.c.b16 %v326, %v324
  %v445 = vpack.c.b16 %v329, %v327
  %v446 = vpack.c.b16 %v330, %v328
  %v447 = vpack.c.b16 %v333, %v331
  %v448 = vpack.c.b16 %v334, %v332
  %v449 = vpack.c.b16 %v337, %v335
  %v450 = vpack.c.b16 %v338, %v336
  %v451 = vpack.c.b16 %v341, %v339
  %v452 = vpack.c.b16 %v342, %v340
  %v453 = vpack.c.b16 %v345, %v343
  %v454 = vpack.c.b16 %v346, %v344
  %v455 = vpack.c.b16 %v349, %v347
  %v456 = vpack.c.b16 %v350, %v348
  %v457 = vpack.c.b16 %v353, %v351
  %v458 = vpack.c.b16 %v354, %v352
  %v459 = vpack.c.b16 %v357, %v355
  %v460 = vpack.c.b16 %v358, %v356
  %v461 = vpack.c.b16 %v361, %v359
  %v462 = vpack.c.b16 %v362, %v360
  %v463 = vpack.c.b16 %v365, %v363
  %v464 = vpack.c.b16 %v366, %v364
  %v465 = vpack.c.b16 %v369, %v367
  %v466 = vpack.c.b16 %v370, %v368
  %v467 = vpack.c.b16 %v373, %v371
  %v468 = vpack.c.b16 %v374, %v372
  %v469 = vpack.c.b16 %v377, %v375
  %v470 = vpack.c.b16 %v378, %v376
  %v471 = vpack.c.b16 %v381, %v379
  %v472 = vpack.c.b16 %v382, %v380
  %v473 = vpack.c.b16 %v385, %v383
  %v474 = vpack.c.b16 %v386, %v384
  %v475 = vpack.c.b16 %v389, %v387
  %v476 = vpack.c.b16 %v390, %v388
  %v477 = vpack.c.b16 %v393, %v391
  %v478 = vpack.c.b16 %v394, %v392
  %v479 = vpack.c.b16 %v397, %v395
  %v480 = vpack.c.b16 %v398, %v396
  %v481 = vpack.c.b16 %v401, %v399
  %v482 = vpack.c.b16 %v402, %v400
  %v483 = vpack.c.b16 %v405, %v403
  %v484 = vpack.c.b16 %v406, %v404
  %v485 = vpack.c.b16 %v409, %v407
  %v486 = vpack.c.b16 %v410, %v408
  %v487 = vpack.c.b16 %v413, %v411
  %v488 = vpack.c.b16 %v414, %v412
  %v489 = vpack.c.b16 %v417, %v415
  %v490 = vpack.c.b16 %v418, %v416
  %v491 = vpack.c.b16 %v421, %v419
  %v492 = vpack.c.b16 %v422, %v420
  %v493 = vpack.c.b16 %v425, %v423
  %v494 = vpack.c.b16 %v426, %v424
  %v495 = vpack.c.b16 %v429, %v427
  %v496 = vpack.c.b16 %v430, %v428
  %v497 = vpack.c.b16 %v433, %v431
  %v498 = vpack.c.b16 %v434, %v432
  %v595 = vunpack.c.l.b16 %v211
  %v596 = vunpack.c.l.b16 %v212
  %v597 = vunpack.c.l.b16 %v213
  %v598 = vunpack.c.l.b16 %v214
  %v599 = vunpack.c.l.b16 %v215
  %v600 = vunpack.c.l.b16 %v216
  %v601 = vunpack.c.l.b16 %v217
  %v602 = vunpack.c.l.b16 %v218
  %v603 = vunpack.c.l.b16 %v219
  %v604 = vunpack.c.l.b16 %v220
  %v605 = vunpack.c.l.b16 %v221
  %v606 = vunpack.c.l.b16 %v222
  %v607 = vunpack.c.l.b16 %v223
  %v608 = vunpack.c.l.b16 %v224
  %v609 = vunpack.c.l.b16 %v225
  %v610 = vunpack.c.l.b16 %v226
  %v611 = vunpack.c.l.b16 %v227
  %v612 = vunpack.c.l.b16 %v228
  %v613 = vunpack.c.l.b16 %v229
  %v614 = vunpack.c.l.b16 %v230
  %v615 = vunpack.c.l.b16 %v231
  %v616 = vunpack.c.l.b16 %v232
  %v617 = vunpack.c.l.b16 %v233
  %v618 = vunpack.c.l.b16 %v234
  %v619 = vunpack.c.l.b16 %v235
  %v620 = vunpack.c.l.b16 %v236
  %v621 = vunpack.c.l.b16 %v237
  %v622 = vunpack.c.l.b16 %v238
  %v623 = vunpack.c.l.b16 %v239
  %v624 = vunpack.c.l.b16 %v240
  %v625 = vunpack.c.l.b16 %v241
  %v626 = vunpack.c.l.b16 %v242
  %v627 = vpack.c.b16 %v596, %v595
  %v628 = vpack.c.b16 %v598, %v597
  %v629 = vpack.c.b16 %v600, %v599
  %v630 = vpack.c.b16 %v602, %v601
  %v631 = vpack.c.b16 %v604, %v603
  %v632 = vpack.c.b16 %v606, %v605
  %v633 = vpack.c.b16 %v608, %v607
  %v634 = vpack.c.b16 %v610, %v609
  %v635 = vpack.c.b16 %v612, %v611
  %v636 = vpack.c.b16 %v614, %v613
  %v637 = vpack.c.b16 %v616, %v615
  %v638 = vpack.c.b16 %v618, %v617
  %v639 = vpack.c.b16 %v620, %v619
  %v640 = vpack.c.b16 %v622, %v621
  %v641 = vpack.c.b16 %v624, %v623
  %v642 = vpack.c.b16 %v626, %v625
  %659 = vmatprep.subr.bf16.mxu0 0
  %660 = vmatpush1.bf16.msra.mxu0 %v627
  %661 = vmatprep.subr.bf16.mxu0 0
  %662 = vmatpush1.bf16.msra.mxu0 %v628
  %663 = vmatprep.subr.bf16.mxu0 0
  %664 = vmatpush1.bf16.msra.mxu0 %v629
  %665 = vmatprep.subr.bf16.mxu0 0
  %666 = vmatpush1.bf16.msra.mxu0 %v630
  %667 = vmatprep.subr.bf16.mxu0 0
  %668 = vmatpush1.bf16.msra.mxu0 %v631
  %669 = vmatprep.subr.bf16.mxu0 0
  %670 = vmatpush1.bf16.msra.mxu0 %v632
  %671 = vmatprep.subr.bf16.mxu0 0
  %672 = vmatpush1.bf16.msra.mxu0 %v633
  %673 = vmatprep.subr.bf16.mxu0 0
  %674 = vmatpush1.bf16.msra.mxu0 %v634
  %675 = vmatprep.subr.bf16.mxu0 0
  %676 = vmatpush1.bf16.msra.mxu0 %v635
  %677 = vmatprep.subr.bf16.mxu0 0
  %678 = vmatpush1.bf16.msra.mxu0 %v636
  %679 = vmatprep.subr.bf16.mxu0 0
  %680 = vmatpush1.bf16.msra.mxu0 %v637
  %681 = vmatprep.subr.bf16.mxu0 0
  %682 = vmatpush1.bf16.msra.mxu0 %v638
  %683 = vmatprep.subr.bf16.mxu0 0
  %684 = vmatpush1.bf16.msra.mxu0 %v639
  %685 = vmatprep.subr.bf16.mxu0 0
  %686 = vmatpush1.bf16.msra.mxu0 %v640
  %687 = vmatprep.subr.bf16.mxu0 0
  %688 = vmatpush1.bf16.msra.mxu0 %v641
  %689 = vmatprep.subr.bf16.mxu0 0
  %690 = vmatpush1.bf16.msra.mxu0 %v642
  %691 = vmatprep.mubr.bf16.mxu0 %v436
  %692 = vmatmul.mubr.bf16.gmra.mrb[0].mxu0 %v435
  %v693 = vpop.f32.mrb[0].mxu0
  %v694 = vadd.f32 0.0, %v693
  %v695 = vpop.f32.mrb[0].mxu0
  %v696 = vpop.f32.mrb[0].mxu0
  %v697 = vadd.f32 0.0, %v696
  %v698 = vpop.f32.mrb[0].mxu0
  %699 = vmatprep.mubr.bf16.mxu0 %v438
  %700 = vmatmul.mubr.bf16.gmra.mrb[0].mxu0 %v437
  %v701 = vpop.f32.mrb[0].mxu0
  %v702 = vadd.f32 0.0, %v701
  %v703 = vpop.f32.mrb[0].mxu0
  %v704 = vpop.f32.mrb[0].mxu0
  %v705 = vadd.f32 0.0, %v704
  %v706 = vpop.f32.mrb[0].mxu0
  %707 = vmatprep.mubr.bf16.mxu0 %v440
  %708 = vmatmul.mubr.bf16.gmra.mrb[0].mxu0 %v439
  %v709 = vpop.f32.mrb[0].mxu0
  %v710 = vadd.f32 0.0, %v709
  %v711 = vpop.f32.mrb[0].mxu0
  %v712 = vpop.f32.mrb[0].mxu0
  %v713 = vadd.f32 0.0, %v712
  %v714 = vpop.f32.mrb[0].mxu0
  %715 = vmatprep.mubr.bf16.mxu0 %v442
  %716 = vmatmul.mubr.bf16.gmra.mrb[0].mxu0 %v441
  %v717 = vpop.f32.mrb[0].mxu0
  %v718 = vadd.f32 0.0, %v717
  %v719 = vpop.f32.mrb[0].mxu0
  %v720 = vpop.f32.mrb[0].mxu0
  %v721 = vadd.f32 0.0, %v720
  %v722 = vpop.f32.mrb[0].mxu0
  %723 = vmatprep.mubr.bf16.mxu0 %v444
  %724 = vmatmul.mubr.bf16.gmra.mrb[0].mxu0 %v443
  %v725 = vpop.f32.mrb[0].mxu0
  %v726 = vadd.f32 0.0, %v725
  %v727 = vpop.f32.mrb[0].mxu0
  %v728 = vpop.f32.mrb[0].mxu0
  %v729 = vadd.f32 0.0, %v728
  %v730 = vpop.f32.mrb[0].mxu0
  %731 = vmatprep.mubr.bf16.mxu0 %v446
  %732 = vmatmul.mubr.bf16.gmra.mrb[0].mxu0 %v445
  %v733 = vpop.f32.mrb[0].mxu0
  %v734 = vadd.f32 0.0, %v733
  %v735 = vpop.f32.mrb[0].mxu0
  %v736 = vpop.f32.mrb[0].mxu0
  %v737 = vadd.f32 0.0, %v736
  %v738 = vpop.f32.mrb[0].mxu0
  %739 = vmatprep.mubr.bf16.mxu0 %v448
  %740 = vmatmul.mubr.bf16.gmra.mrb[0].mxu0 %v447
  %v741 = vpop.f32.mrb[0].mxu0
  %v742 = vadd.f32 0.0, %v741
  %v743 = vpop.f32.mrb[0].mxu0
  %v744 = vpop.f32.mrb[0].mxu0
  %v745 = vadd.f32 0.0, %v744
  %v746 = vpop.f32.mrb[0].mxu0
  %747 = vmatprep.mubr.bf16.mxu0 %v450
  %748 = vmatmul.mubr.bf16.gmra.mrb[0].mxu0 %v449
  %v749 = vpop.f32.mrb[0].mxu0
  %v750 = vadd.f32 0.0, %v749
  %v751 = vpop.f32.mrb[0].mxu0
  %v752 = vpop.f32.mrb[0].mxu0
  %v753 = vadd.f32 0.0, %v752
  %v754 = vpop.f32.mrb[0].mxu0
  %755 = vmatprep.mubr.bf16.mxu0 %v452
  %756 = vmatmul.mubr.bf16.gmra.mrb[0].mxu0 %v451
  %v757 = vpop.f32.mrb[0].mxu0
  %v758 = vadd.f32 0.0, %v757
  %v759 = vpop.f32.mrb[0].mxu0
  %v760 = vpop.f32.mrb[0].mxu0
  %v761 = vadd.f32 0.0, %v760
  %v762 = vpop.f32.mrb[0].mxu0
  %763 = vmatprep.mubr.bf16.mxu0 %v454
  %764 = vmatmul.mubr.bf16.gmra.mrb[0].mxu0 %v453
  %v765 = vpop.f32.mrb[0].mxu0
  %v766 = vadd.f32 0.0, %v765
  %v767 = vpop.f32.mrb[0].mxu0
  %v768 = vpop.f32.mrb[0].mxu0
  %v769 = vadd.f32 0.0, %v768
  %v770 = vpop.f32.mrb[0].mxu0
  %771 = vmatprep.mubr.bf16.mxu0 %v456
  %772 = vmatmul.mubr.bf16.gmra.mrb[0].mxu0 %v455
  %v773 = vpop.f32.mrb[0].mxu0
  %v774 = vadd.f32 0.0, %v773
  %v775 = vpop.f32.mrb[0].mxu0
  %v776 = vpop.f32.mrb[0].mxu0
  %v777 = vadd.f32 0.0, %v776
  %v778 = vpop.f32.mrb[0].mxu0
  %779 = vmatprep.mubr.bf16.mxu0 %v458
  %780 = vmatmul.mubr.bf16.gmra.mrb[0].mxu0 %v457
  %v781 = vpop.f32.mrb[0].mxu0
  %v782 = vadd.f32 0.0, %v781
  %v783 = vpop.f32.mrb[0].mxu0
  %v784 = vpop.f32.mrb[0].mxu0
  %v785 = vadd.f32 0.0, %v784
  %v786 = vpop.f32.mrb[0].mxu0
  %787 = vmatprep.mubr.bf16.mxu0 %v460
  %788 = vmatmul.mubr.bf16.gmra.mrb[0].mxu0 %v459
  %v789 = vpop.f32.mrb[0].mxu0
  %v790 = vadd.f32 0.0, %v789
  %v791 = vpop.f32.mrb[0].mxu0
  %v792 = vpop.f32.mrb[0].mxu0
  %v793 = vadd.f32 0.0, %v792
  %v794 = vpop.f32.mrb[0].mxu0
  %795 = vmatprep.mubr.bf16.mxu0 %v462
  %796 = vmatmul.mubr.bf16.gmra.mrb[0].mxu0 %v461
  %v797 = vpop.f32.mrb[0].mxu0
  %v798 = vadd.f32 0.0, %v797
  %v799 = vpop.f32.mrb[0].mxu0
  %v800 = vpop.f32.mrb[0].mxu0
  %v801 = vadd.f32 0.0, %v800
  %v802 = vpop.f32.mrb[0].mxu0
  %803 = vmatprep.mubr.bf16.mxu0 %v464
  %804 = vmatmul.mubr.bf16.gmra.mrb[0].mxu0 %v463
  %v805 = vpop.f32.mrb[0].mxu0
  %v806 = vadd.f32 0.0, %v805
  %v807 = vpop.f32.mrb[0].mxu0
  %v808 = vpop.f32.mrb[0].mxu0
  %v809 = vadd.f32 0.0, %v808
  %v810 = vpop.f32.mrb[0].mxu0
  %811 = vmatprep.mubr.bf16.mxu0 %v466
  %812 = vmatmul.mubr.bf16.gmra.mrb[0].mxu0 %v465
  %v813 = vpop.f32.mrb[0].mxu0
  %v814 = vadd.f32 0.0, %v813
  %v815 = vpop.f32.mrb[0].mxu0
  %v816 = vpop.f32.mrb[0].mxu0
  %v817 = vadd.f32 0.0, %v816
  %v818 = vpop.f32.mrb[0].mxu0
  %819 = vmatprep.mubr.bf16.mxu0 %v468
  %820 = vmatmul.mubr.bf16.gmra.mrb[0].mxu0 %v467
  %v821 = vpop.f32.mrb[0].mxu0
  %v822 = vadd.f32 0.0, %v821
  %v823 = vpop.f32.mrb[0].mxu0
  %v824 = vpop.f32.mrb[0].mxu0
  %v825 = vadd.f32 0.0, %v824
  %v826 = vpop.f32.mrb[0].mxu0
  %827 = vmatprep.mubr.bf16.mxu0 %v470
  %828 = vmatmul.mubr.bf16.gmra.mrb[0].mxu0 %v469
  %v829 = vpop.f32.mrb[0].mxu0
  %v830 = vadd.f32 0.0, %v829
  %v831 = vpop.f32.mrb[0].mxu0
  %v832 = vpop.f32.mrb[0].mxu0
  %v833 = vadd.f32 0.0, %v832
  %v834 = vpop.f32.mrb[0].mxu0
  %835 = vmatprep.mubr.bf16.mxu0 %v472
  %836 = vmatmul.mubr.bf16.gmra.mrb[0].mxu0 %v471
  %v837 = vpop.f32.mrb[0].mxu0
  %v838 = vadd.f32 0.0, %v837
  %v839 = vpop.f32.mrb[0].mxu0
  %v840 = vpop.f32.mrb[0].mxu0
  %v841 = vadd.f32 0.0, %v840
  %v842 = vpop.f32.mrb[0].mxu0
  %843 = vmatprep.mubr.bf16.mxu0 %v474
  %844 = vmatmul.mubr.bf16.gmra.mrb[0].mxu0 %v473
  %v845 = vpop.f32.mrb[0].mxu0
  %v846 = vadd.f32 0.0, %v845
  %v847 = vpop.f32.mrb[0].mxu0
  %v848 = vpop.f32.mrb[0].mxu0
  %v849 = vadd.f32 0.0, %v848
  %v850 = vpop.f32.mrb[0].mxu0
  %851 = vmatprep.mubr.bf16.mxu0 %v476
  %852 = vmatmul.mubr.bf16.gmra.mrb[0].mxu0 %v475
  %v853 = vpop.f32.mrb[0].mxu0
  %v854 = vadd.f32 0.0, %v853
  %v855 = vpop.f32.mrb[0].mxu0
  %v856 = vpop.f32.mrb[0].mxu0
  %v857 = vadd.f32 0.0, %v856
  %v858 = vpop.f32.mrb[0].mxu0
  %859 = vmatprep.mubr.bf16.mxu0 %v478
  %860 = vmatmul.mubr.bf16.gmra.mrb[0].mxu0 %v477
  %v861 = vpop.f32.mrb[0].mxu0
  %v862 = vadd.f32 0.0, %v861
  %v863 = vpop.f32.mrb[0].mxu0
  %v864 = vpop.f32.mrb[0].mxu0
  %v865 = vadd.f32 0.0, %v864
  %v866 = vpop.f32.mrb[0].mxu0
  %867 = vmatprep.mubr.bf16.mxu0 %v480
  %868 = vmatmul.mubr.bf16.gmra.mrb[0].mxu0 %v479
  %v869 = vpop.f32.mrb[0].mxu0
  %v870 = vadd.f32 0.0, %v869
  %v871 = vpop.f32.mrb[0].mxu0
  %v872 = vpop.f32.mrb[0].mxu0
  %v873 = vadd.f32 0.0, %v872
  %v874 = vpop.f32.mrb[0].mxu0
  %875 = vmatprep.mubr.bf16.mxu0 %v482
  %876 = vmatmul.mubr.bf16.gmra.mrb[0].mxu0 %v481
  %v877 = vpop.f32.mrb[0].mxu0
  %v878 = vadd.f32 0.0, %v877
  %v879 = vpop.f32.mrb[0].mxu0
  %v880 = vpop.f32.mrb[0].mxu0
  %v881 = vadd.f32 0.0, %v880
  %v882 = vpop.f32.mrb[0].mxu0
  %883 = vmatprep.mubr.bf16.mxu0 %v484
  %884 = vmatmul.mubr.bf16.gmra.mrb[0].mxu0 %v483
  %v885 = vpop.f32.mrb[0].mxu0
  %v886 = vadd.f32 0.0, %v885
  %v887 = vpop.f32.mrb[0].mxu0
  %v888 = vpop.f32.mrb[0].mxu0
  %v889 = vadd.f32 0.0, %v888
  %v890 = vpop.f32.mrb[0].mxu0
  %891 = vmatprep.mubr.bf16.mxu0 %v486
  %892 = vmatmul.mubr.bf16.gmra.mrb[0].mxu0 %v485
  %v893 = vpop.f32.mrb[0].mxu0
  %v894 = vadd.f32 0.0, %v893
  %v895 = vpop.f32.mrb[0].mxu0
  %v896 = vpop.f32.mrb[0].mxu0
  %v897 = vadd.f32 0.0, %v896
  %v898 = vpop.f32.mrb[0].mxu0
  %899 = vmatprep.mubr.bf16.mxu0 %v488
  %900 = vmatmul.mubr.bf16.gmra.mrb[0].mxu0 %v487
  %v901 = vpop.f32.mrb[0].mxu0
  %v902 = vadd.f32 0.0, %v901
  %v903 = vpop.f32.mrb[0].mxu0
  %v904 = vpop.f32.mrb[0].mxu0
  %v905 = vadd.f32 0.0, %v904
  %v906 = vpop.f32.mrb[0].mxu0
  %907 = vmatprep.mubr.bf16.mxu0 %v490
  %908 = vmatmul.mubr.bf16.gmra.mrb[0].mxu0 %v489
  %v909 = vpop.f32.mrb[0].mxu0
  %v910 = vadd.f32 0.0, %v909
  %v911 = vpop.f32.mrb[0].mxu0
  %v912 = vpop.f32.mrb[0].mxu0
  %v913 = vadd.f32 0.0, %v912
  %v914 = vpop.f32.mrb[0].mxu0
  %915 = vmatprep.mubr.bf16.mxu0 %v492
  %916 = vmatmul.mubr.bf16.gmra.mrb[0].mxu0 %v491
  %v917 = vpop.f32.mrb[0].mxu0
  %v918 = vadd.f32 0.0, %v917
  %v919 = vpop.f32.mrb[0].mxu0
  %v920 = vpop.f32.mrb[0].mxu0
  %v921 = vadd.f32 0.0, %v920
  %v922 = vpop.f32.mrb[0].mxu0
  %923 = vmatprep.mubr.bf16.mxu0 %v494
  %924 = vmatmul.mubr.bf16.gmra.mrb[0].mxu0 %v493
  %v925 = vpop.f32.mrb[0].mxu0
  %v926 = vadd.f32 0.0, %v925
  %v927 = vpop.f32.mrb[0].mxu0
  %v928 = vpop.f32.mrb[0].mxu0
  %v929 = vadd.f32 0.0, %v928
  %v930 = vpop.f32.mrb[0].mxu0
  %931 = vmatprep.mubr.bf16.mxu0 %v496
  %932 = vmatmul.mubr.bf16.gmra.mrb[0].mxu0 %v495
  %v933 = vpop.f32.mrb[0].mxu0
  %v934 = vadd.f32 0.0, %v933
  %v935 = vpop.f32.mrb[0].mxu0
  %v936 = vpop.f32.mrb[0].mxu0
  %v937 = vadd.f32 0.0, %v936
  %v938 = vpop.f32.mrb[0].mxu0
  %939 = vmatprep.mubr.bf16.mxu0 %v498
  %940 = vmatmul.mubr.bf16.gmra.mrb[0].mxu0 %v497
  %v941 = vpop.f32.mrb[0].mxu0
  %v942 = vadd.f32 0.0, %v941
  %v943 = vpop.f32.mrb[0].mxu0
  %v944 = vpop.f32.mrb[0].mxu0
  %v945 = vadd.f32 0.0, %v944
  %v946 = vpop.f32.mrb[0].mxu0
  %947 = vdwg.mxu0
  %v948 = vadd.f32 %v83, %v694
  %v949 = vadd.f32 %v84, %v697
  %v950 = vadd.f32 %v85, %v702
  %v951 = vadd.f32 %v86, %v705
  %v952 = vadd.f32 %v87, %v710
  %v953 = vadd.f32 %v88, %v713
  %v954 = vadd.f32 %v89, %v718
  %v955 = vadd.f32 %v90, %v721
  %v956 = vadd.f32 %v91, %v726
  %v957 = vadd.f32 %v92, %v729
  %v958 = vadd.f32 %v93, %v734
  %v959 = vadd.f32 %v94, %v737
  %v960 = vadd.f32 %v95, %v742
  %v961 = vadd.f32 %v96, %v745
  %v962 = vadd.f32 %v97, %v750
  %v963 = vadd.f32 %v98, %v753
  %v964 = vadd.f32 %v99, %v758
  %v965 = vadd.f32 %v100, %v761
  %v966 = vadd.f32 %v101, %v766
  %v967 = vadd.f32 %v102, %v769
  %v968 = vadd.f32 %v103, %v774
  %v969 = vadd.f32 %v104, %v777
  %v970 = vadd.f32 %v105, %v782
  %v971 = vadd.f32 %v106, %v785
  %v972 = vadd.f32 %v107, %v790
  %v973 = vadd.f32 %v108, %v793
  %v974 = vadd.f32 %v109, %v798
  %v975 = vadd.f32 %v110, %v801
  %v976 = vadd.f32 %v111, %v806
  %v977 = vadd.f32 %v112, %v809
  %v978 = vadd.f32 %v113, %v814
  %v979 = vadd.f32 %v114, %v817
  %v980 = vadd.f32 %v115, %v822
  %v981 = vadd.f32 %v116, %v825
  %v982 = vadd.f32 %v117, %v830
  %v983 = vadd.f32 %v118, %v833
  %v984 = vadd.f32 %v119, %v838
  %v985 = vadd.f32 %v120, %v841
  %v986 = vadd.f32 %v121, %v846
  %v987 = vadd.f32 %v122, %v849
  %v988 = vadd.f32 %v123, %v854
  %v989 = vadd.f32 %v124, %v857
  %v990 = vadd.f32 %v125, %v862
  %v991 = vadd.f32 %v126, %v865
  %v992 = vadd.f32 %v127, %v870
  %v993 = vadd.f32 %v128, %v873
  %v994 = vadd.f32 %v129, %v878
  %v995 = vadd.f32 %v130, %v881
  %v996 = vadd.f32 %v131, %v886
  %v997 = vadd.f32 %v132, %v889
  %v998 = vadd.f32 %v133, %v894
  %v999 = vadd.f32 %v134, %v897
  %v1000 = vadd.f32 %v135, %v902
  %v1001 = vadd.f32 %v136, %v905
  %v1002 = vadd.f32 %v137, %v910
  %v1003 = vadd.f32 %v138, %v913
  %v1004 = vadd.f32 %v139, %v918
  %v1005 = vadd.f32 %v140, %v921
  %v1006 = vadd.f32 %v141, %v926
  %v1007 = vadd.f32 %v142, %v929
  %v1008 = vadd.f32 %v143, %v934
  %v1009 = vadd.f32 %v144, %v937
  %v1010 = vadd.f32 %v145, %v942
  %v1011 = vadd.f32 %v146, %v945
  %1012 = vst [vmem:[#allocation2] sm:$0xff] %v948
  %1013 = vst [vmem:[#allocation2 + $0x8] sm:$0xff] %v949
  %1014 = vst [vmem:[#allocation2 + $0x10] sm:$0xff] %v950
  %1015 = vst [vmem:[#allocation2 + $0x18] sm:$0xff] %v951
  %1016 = vst [vmem:[#allocation2 + $0x20] sm:$0xff] %v952
  %1017 = vst [vmem:[#allocation2 + $0x28] sm:$0xff] %v953
  %1018 = vst [vmem:[#allocation2 + $0x30] sm:$0xff] %v954
  %1019 = vst [vmem:[#allocation2 + $0x38] sm:$0xff] %v955
  %1020 = vst [vmem:[#allocation2 + $0x40] sm:$0xff] %v956
  %1021 = vst [vmem:[#allocation2 + $0x48] sm:$0xff] %v957
  %1022 = vst [vmem:[#allocation2 + $0x50] sm:$0xff] %v958
  %1023 = vst [vmem:[#allocation2 + $0x58] sm:$0xff] %v959
  %1024 = vst [vmem:[#allocation2 + $0x60] sm:$0xff] %v960
  %1025 = vst [vmem:[#allocation2 + $0x68] sm:$0xff] %v961
  %1026 = vst [vmem:[#allocation2 + $0x70] sm:$0xff] %v962
  %1027 = vst [vmem:[#allocation2 + $0x78] sm:$0xff] %v963
  %1028 = vst [vmem:[#allocation2 + $0x80] sm:$0xff] %v964
  %1029 = vst [vmem:[#allocation2 + $0x88] sm:$0xff] %v965
  %1030 = vst [vmem:[#allocation2 + $0x90] sm:$0xff] %v966
  %1031 = vst [vmem:[#allocation2 + $0x98] sm:$0xff] %v967
  %1032 = vst [vmem:[#allocation2 + $0xa0] sm:$0xff] %v968
  %1033 = vst [vmem:[#allocation2 + $0xa8] sm:$0xff] %v969
  %1034 = vst [vmem:[#allocation2 + $0xb0] sm:$0xff] %v970
  %1035 = vst [vmem:[#allocation2 + $0xb8] sm:$0xff] %v971
  %1036 = vst [vmem:[#allocation2 + $0xc0] sm:$0xff] %v972
  %1037 = vst [vmem:[#allocation2 + $0xc8] sm:$0xff] %v973
  %1038 = vst [vmem:[#allocation2 + $0xd0] sm:$0xff] %v974
  %1039 = vst [vmem:[#allocation2 + $0xd8] sm:$0xff] %v975
  %1040 = vst [vmem:[#allocation2 + $0xe0] sm:$0xff] %v976
  %1041 = vst [vmem:[#allocation2 + $0xe8] sm:$0xff] %v977
  %1042 = vst [vmem:[#allocation2 + $0xf0] sm:$0xff] %v978
  %1043 = vst [vmem:[#allocation2 + $0xf8] sm:$0xff] %v979
  %1044 = vst [vmem:[#allocation2 + $0x100] sm:$0xff] %v980
  %1045 = vst [vmem:[#allocation2 + $0x108] sm:$0xff] %v981
  %1046 = vst [vmem:[#allocation2 + $0x110] sm:$0xff] %v982
  %1047 = vst [vmem:[#allocation2 + $0x118] sm:$0xff] %v983
  %1048 = vst [vmem:[#allocation2 + $0x120] sm:$0xff] %v984
  %1049 = vst [vmem:[#allocation2 + $0x128] sm:$0xff] %v985
  %1050 = vst [vmem:[#allocation2 + $0x130] sm:$0xff] %v986
  %1051 = vst [vmem:[#allocation2 + $0x138] sm:$0xff] %v987
  %1052 = vst [vmem:[#allocation2 + $0x140] sm:$0xff] %v988
  %1053 = vst [vmem:[#allocation2 + $0x148] sm:$0xff] %v989
  %1054 = vst [vmem:[#allocation2 + $0x150] sm:$0xff] %v990
  %1055 = vst [vmem:[#allocation2 + $0x158] sm:$0xff] %v991
  %1056 = vst [vmem:[#allocation2 + $0x160] sm:$0xff] %v992
  %1057 = vst [vmem:[#allocation2 + $0x168] sm:$0xff] %v993
  %1058 = vst [vmem:[#allocation2 + $0x170] sm:$0xff] %v994
  %1059 = vst [vmem:[#allocation2 + $0x178] sm:$0xff] %v995
  %1060 = vst [vmem:[#allocation2 + $0x180] sm:$0xff] %v996
  %1061 = vst [vmem:[#allocation2 + $0x188] sm:$0xff] %v997
  %1062 = vst [vmem:[#allocation2 + $0x190] sm:$0xff] %v998
  %1063 = vst [vmem:[#allocation2 + $0x198] sm:$0xff] %v999
  %1064 = vst [vmem:[#allocation2 + $0x1a0] sm:$0xff] %v1000
  %1065 = vst [vmem:[#allocation2 + $0x1a8] sm:$0xff] %v1001
  %1066 = vst [vmem:[#allocation2 + $0x1b0] sm:$0xff] %v1002
  %1067 = vst [vmem:[#allocation2 + $0x1b8] sm:$0xff] %v1003
  %1068 = vst [vmem:[#allocation2 + $0x1c0] sm:$0xff] %v1004
  %1069 = vst [vmem:[#allocation2 + $0x1c8] sm:$0xff] %v1005
  %1070 = vst [vmem:[#allocation2 + $0x1d0] sm:$0xff] %v1006
  %1071 = vst [vmem:[#allocation2 + $0x1d8] sm:$0xff] %v1007
  %1072 = vst [vmem:[#allocation2 + $0x1e0] sm:$0xff] %v1008
  %1073 = vst [vmem:[#allocation2 + $0x1e8] sm:$0xff] %v1009
  %1074 = vst [vmem:[#allocation2 + $0x1f0] sm:$0xff] %v1010
  %1075 = vst [vmem:[#allocation2 + $0x1f8] sm:$0xff] %v1011
  // Predicated region
  $region14: #{resnet_generator_forward.25} parent=0 // pred_check
    %p1076 = pneg %p15
  $region15: #{resnet_generator_forward.25} parent=0 // pred_check_branch
    %1078 = sbr.rel (%p1076) target = $region17
  $region16: #{resnet_generator_forward.25} parent=0 // pred_region
    %v1079 = vld [vmem:[#allocation2] sm:$0xff]
    %v1080 = vld [vmem:[#allocation2 + $0x8] sm:$0xff]
    %v1081 = vld [vmem:[#allocation2 + $0x10] sm:$0xff]
    %v1082 = vld [vmem:[#allocation2 + $0x18] sm:$0xff]
    %v1083 = vld [vmem:[#allocation2 + $0x20] sm:$0xff]
    %v1084 = vld [vmem:[#allocation2 + $0x28] sm:$0xff]
    %v1085 = vld [vmem:[#allocation2 + $0x30] sm:$0xff]
    %v1086 = vld [vmem:[#allocation2 + $0x38] sm:$0xff]
    %v1087 = vld [vmem:[#allocation2 + $0x40] sm:$0xff]
    %v1088 = vld [vmem:[#allocation2 + $0x48] sm:$0xff]
    %v1089 = vld [vmem:[#allocation2 + $0x50] sm:$0xff]
    %v1090 = vld [vmem:[#allocation2 + $0x58] sm:$0xff]
    %v1091 = vld [vmem:[#allocation2 + $0x60] sm:$0xff]
    %v1092 = vld [vmem:[#allocation2 + $0x68] sm:$0xff]
    %v1093 = vld [vmem:[#allocation2 + $0x70] sm:$0xff]
    %v1094 = vld [vmem:[#allocation2 + $0x78] sm:$0xff]
    %v1095 = vld [vmem:[#allocation2 + $0x80] sm:$0xff]
    %v1096 = vld [vmem:[#allocation2 + $0x88] sm:$0xff]
    %v1097 = vld [vmem:[#allocation2 + $0x90] sm:$0xff]
    %v1098 = vld [vmem:[#allocation2 + $0x98] sm:$0xff]
    %v1099 = vld [vmem:[#allocation2 + $0xa0] sm:$0xff]
    %v1100 = vld [vmem:[#allocation2 + $0xa8] sm:$0xff]
    %v1101 = vld [vmem:[#allocation2 + $0xb0] sm:$0xff]
    %v1102 = vld [vmem:[#allocation2 + $0xb8] sm:$0xff]
    %v1103 = vld [vmem:[#allocation2 + $0xc0] sm:$0xff]
    %v1104 = vld [vmem:[#allocation2 + $0xc8] sm:$0xff]
    %v1105 = vld [vmem:[#allocation2 + $0xd0] sm:$0xff]
    %v1106 = vld [vmem:[#allocation2 + $0xd8] sm:$0xff]
    %v1107 = vld [vmem:[#allocation2 + $0xe0] sm:$0xff]
    %v1108 = vld [vmem:[#allocation2 + $0xe8] sm:$0xff]
    %v1109 = vld [vmem:[#allocation2 + $0xf0] sm:$0xff]
    %v1110 = vld [vmem:[#allocation2 + $0xf8] sm:$0xff]
    %v1111 = vld [vmem:[#allocation2 + $0x100] sm:$0xff]
    %v1112 = vld [vmem:[#allocation2 + $0x108] sm:$0xff]
    %v1113 = vld [vmem:[#allocation2 + $0x110] sm:$0xff]
    %v1114 = vld [vmem:[#allocation2 + $0x118] sm:$0xff]
    %v1115 = vld [vmem:[#allocation2 + $0x120] sm:$0xff]
    %v1116 = vld [vmem:[#allocation2 + $0x128] sm:$0xff]
    %v1117 = vld [vmem:[#allocation2 + $0x130] sm:$0xff]
    %v1118 = vld [vmem:[#allocation2 + $0x138] sm:$0xff]
    %v1119 = vld [vmem:[#allocation2 + $0x140] sm:$0xff]
    %v1120 = vld [vmem:[#allocation2 + $0x148] sm:$0xff]
    %v1121 = vld [vmem:[#allocation2 + $0x150] sm:$0xff]
    %v1122 = vld [vmem:[#allocation2 + $0x158] sm:$0xff]
    %v1123 = vld [vmem:[#allocation2 + $0x160] sm:$0xff]
    %v1124 = vld [vmem:[#allocation2 + $0x168] sm:$0xff]
    %v1125 = vld [vmem:[#allocation2 + $0x170] sm:$0xff]
    %v1126 = vld [vmem:[#allocation2 + $0x178] sm:$0xff]
    %v1127 = vld [vmem:[#allocation2 + $0x180] sm:$0xff]
    %v1128 = vld [vmem:[#allocation2 + $0x188] sm:$0xff]
    %v1129 = vld [vmem:[#allocation2 + $0x190] sm:$0xff]
    %v1130 = vld [vmem:[#allocation2 + $0x198] sm:$0xff]
    %v1131 = vld [vmem:[#allocation2 + $0x1a0] sm:$0xff]
    %v1132 = vld [vmem:[#allocation2 + $0x1a8] sm:$0xff]
    %v1133 = vld [vmem:[#allocation2 + $0x1b0] sm:$0xff]
    %v1134 = vld [vmem:[#allocation2 + $0x1b8] sm:$0xff]
    %v1135 = vld [vmem:[#allocation2 + $0x1c0] sm:$0xff]
    %v1136 = vld [vmem:[#allocation2 + $0x1c8] sm:$0xff]
    %v1137 = vld [vmem:[#allocation2 + $0x1d0] sm:$0xff]
    %v1138 = vld [vmem:[#allocation2 + $0x1d8] sm:$0xff]
    %v1139 = vld [vmem:[#allocation2 + $0x1e0] sm:$0xff]
    %v1140 = vld [vmem:[#allocation2 + $0x1e8] sm:$0xff]
    %v1141 = vld [vmem:[#allocation2 + $0x1f0] sm:$0xff]
    %v1142 = vld [vmem:[#allocation2 + $0x1f8] sm:$0xff]
    %v1143 = vpack.c.bf16 %v1080, %v1079
    %v1144 = vpack.c.bf16 %v1082, %v1081
    %v1145 = vpack.c.bf16 %v1084, %v1083
    %v1146 = vpack.c.bf16 %v1086, %v1085
    %v1147 = vpack.c.bf16 %v1088, %v1087
    %v1148 = vpack.c.bf16 %v1090, %v1089
    %v1149 = vpack.c.bf16 %v1092, %v1091
    %v1150 = vpack.c.bf16 %v1094, %v1093
    %v1151 = vpack.c.bf16 %v1096, %v1095
    %v1152 = vpack.c.bf16 %v1098, %v1097
    %v1153 = vpack.c.bf16 %v1100, %v1099
    %v1154 = vpack.c.bf16 %v1102, %v1101
    %v1155 = vpack.c.bf16 %v1104, %v1103
    %v1156 = vpack.c.bf16 %v1106, %v1105
    %v1157 = vpack.c.bf16 %v1108, %v1107
    %v1158 = vpack.c.bf16 %v1110, %v1109
    %v1159 = vpack.c.bf16 %v1112, %v1111
    %v1160 = vpack.c.bf16 %v1114, %v1113
    %v1161 = vpack.c.bf16 %v1116, %v1115
    %v1162 = vpack.c.bf16 %v1118, %v1117
    %v1163 = vpack.c.bf16 %v1120, %v1119
    %v1164 = vpack.c.bf16 %v1122, %v1121
    %v1165 = vpack.c.bf16 %v1124, %v1123
    %v1166 = vpack.c.bf16 %v1126, %v1125
    %v1167 = vpack.c.bf16 %v1128, %v1127
    %v1168 = vpack.c.bf16 %v1130, %v1129
    %v1169 = vpack.c.bf16 %v1132, %v1131
    %v1170 = vpack.c.bf16 %v1134, %v1133
    %v1171 = vpack.c.bf16 %v1136, %v1135
    %v1172 = vpack.c.bf16 %v1138, %v1137
    %v1173 = vpack.c.bf16 %v1140, %v1139
    %v1174 = vpack.c.bf16 %v1142, %v1141
    %v1207 = vunpack.c.l.b16 %v1143
    %v1208 = vunpack.c.h.b16 %v1143
    %v1209 = vunpack.c.l.b16 %v1144
    %v1210 = vunpack.c.h.b16 %v1144
    %v1211 = vunpack.c.l.b16 %v1145
    %v1212 = vunpack.c.h.b16 %v1145
    %v1213 = vunpack.c.l.b16 %v1146
    %v1214 = vunpack.c.h.b16 %v1146
    %v1215 = vunpack.c.l.b16 %v1147
    %v1216 = vunpack.c.h.b16 %v1147
    %v1217 = vunpack.c.l.b16 %v1148
    %v1218 = vunpack.c.h.b16 %v1148
    %v1219 = vunpack.c.l.b16 %v1149
    %v1220 = vunpack.c.h.b16 %v1149
    %v1221 = vunpack.c.l.b16 %v1150
    %v1222 = vunpack.c.h.b16 %v1150
    %v1223 = vunpack.c.l.b16 %v1151
    %v1224 = vunpack.c.h.b16 %v1151
    %v1225 = vunpack.c.l.b16 %v1152
    %v1226 = vunpack.c.h.b16 %v1152
    %v1227 = vunpack.c.l.b16 %v1153
    %v1228 = vunpack.c.h.b16 %v1153
    %v1229 = vunpack.c.l.b16 %v1154
    %v1230 = vunpack.c.h.b16 %v1154
    %v1231 = vunpack.c.l.b16 %v1155
    %v1232 = vunpack.c.h.b16 %v1155
    %v1233 = vunpack.c.l.b16 %v1156
    %v1234 = vunpack.c.h.b16 %v1156
    %v1235 = vunpack.c.l.b16 %v1157
    %v1236 = vunpack.c.h.b16 %v1157
    %v1237 = vunpack.c.l.b16 %v1158
    %v1238 = vunpack.c.h.b16 %v1158
    %v1239 = vunpack.c.l.b16 %v1159
    %v1240 = vunpack.c.h.b16 %v1159
    %v1241 = vunpack.c.l.b16 %v1160
    %v1242 = vunpack.c.h.b16 %v1160
    %v1243 = vunpack.c.l.b16 %v1161
    %v1244 = vunpack.c.h.b16 %v1161
    %v1245 = vunpack.c.l.b16 %v1162
    %v1246 = vunpack.c.h.b16 %v1162
    %v1247 = vunpack.c.l.b16 %v1163
    %v1248 = vunpack.c.h.b16 %v1163
    %v1249 = vunpack.c.l.b16 %v1164
    %v1250 = vunpack.c.h.b16 %v1164
    %v1251 = vunpack.c.l.b16 %v1165
    %v1252 = vunpack.c.h.b16 %v1165
    %v1253 = vunpack.c.l.b16 %v1166
    %v1254 = vunpack.c.h.b16 %v1166
    %v1255 = vunpack.c.l.b16 %v1167
    %v1256 = vunpack.c.h.b16 %v1167
    %v1257 = vunpack.c.l.b16 %v1168
    %v1258 = vunpack.c.h.b16 %v1168
    %v1259 = vunpack.c.l.b16 %v1169
    %v1260 = vunpack.c.h.b16 %v1169
    %v1261 = vunpack.c.l.b16 %v1170
    %v1262 = vunpack.c.h.b16 %v1170
    %v1263 = vunpack.c.l.b16 %v1171
    %v1264 = vunpack.c.h.b16 %v1171
    %v1265 = vunpack.c.l.b16 %v1172
    %v1266 = vunpack.c.h.b16 %v1172
    %v1267 = vunpack.c.l.b16 %v1173
    %v1268 = vunpack.c.h.b16 %v1173
    %v1269 = vunpack.c.l.b16 %v1174
    %v1270 = vunpack.c.h.b16 %v1174
    %v1271 = vpack.c.b16 %v1207, %v1207
    %v1272 = vpack.c.b16 %v1208, %v1208
    %v1273 = vpack.c.b16 %v1209, %v1209
    %v1274 = vpack.c.b16 %v1210, %v1210
    %v1275 = vpack.c.b16 %v1211, %v1211
    %v1276 = vpack.c.b16 %v1212, %v1212
    %v1277 = vpack.c.b16 %v1213, %v1213
    %v1278 = vpack.c.b16 %v1214, %v1214
    %v1279 = vpack.c.b16 %v1215, %v1215
    %v1280 = vpack.c.b16 %v1216, %v1216
    %v1281 = vpack.c.b16 %v1217, %v1217
    %v1282 = vpack.c.b16 %v1218, %v1218
    %v1283 = vpack.c.b16 %v1219, %v1219
    %v1284 = vpack.c.b16 %v1220, %v1220
    %v1285 = vpack.c.b16 %v1221, %v1221
    %v1286 = vpack.c.b16 %v1222, %v1222
    %v1287 = vpack.c.b16 %v1223, %v1223
    %v1288 = vpack.c.b16 %v1224, %v1224
    %v1289 = vpack.c.b16 %v1225, %v1225
    %v1290 = vpack.c.b16 %v1226, %v1226
    %v1291 = vpack.c.b16 %v1227, %v1227
    %v1292 = vpack.c.b16 %v1228, %v1228
    %v1293 = vpack.c.b16 %v1229, %v1229
    %v1294 = vpack.c.b16 %v1230, %v1230
    %v1295 = vpack.c.b16 %v1231, %v1231
    %v1296 = vpack.c.b16 %v1232, %v1232
    %v1297 = vpack.c.b16 %v1233, %v1233
    %v1298 = vpack.c.b16 %v1234, %v1234
    %v1299 = vpack.c.b16 %v1235, %v1235
    %v1300 = vpack.c.b16 %v1236, %v1236
    %v1301 = vpack.c.b16 %v1237, %v1237
    %v1302 = vpack.c.b16 %v1238, %v1238
    %v1303 = vpack.c.b16 %v1239, %v1239
    %v1304 = vpack.c.b16 %v1240, %v1240
    %v1305 = vpack.c.b16 %v1241, %v1241
    %v1306 = vpack.c.b16 %v1242, %v1242
    %v1307 = vpack.c.b16 %v1243, %v1243
    %v1308 = vpack.c.b16 %v1244, %v1244
    %v1309 = vpack.c.b16 %v1245, %v1245
    %v1310 = vpack.c.b16 %v1246, %v1246
    %v1311 = vpack.c.b16 %v1247, %v1247
    %v1312 = vpack.c.b16 %v1248, %v1248
    %v1313 = vpack.c.b16 %v1249, %v1249
    %v1314 = vpack.c.b16 %v1250, %v1250
    %v1315 = vpack.c.b16 %v1251, %v1251
    %v1316 = vpack.c.b16 %v1252, %v1252
    %v1317 = vpack.c.b16 %v1253, %v1253
    %v1318 = vpack.c.b16 %v1254, %v1254
    %v1319 = vpack.c.b16 %v1255, %v1255
    %v1320 = vpack.c.b16 %v1256, %v1256
    %v1321 = vpack.c.b16 %v1257, %v1257
    %v1322 = vpack.c.b16 %v1258, %v1258
    %v1323 = vpack.c.b16 %v1259, %v1259
    %v1324 = vpack.c.b16 %v1260, %v1260
    %v1325 = vpack.c.b16 %v1261, %v1261
    %v1326 = vpack.c.b16 %v1262, %v1262
    %v1327 = vpack.c.b16 %v1263, %v1263
    %v1328 = vpack.c.b16 %v1264, %v1264
    %v1329 = vpack.c.b16 %v1265, %v1265
    %v1330 = vpack.c.b16 %v1266, %v1266
    %v1331 = vpack.c.b16 %v1267, %v1267
    %v1332 = vpack.c.b16 %v1268, %v1268
    %v1333 = vpack.c.b16 %v1269, %v1269
    %v1334 = vpack.c.b16 %v1270, %v1270
    %1399 = vst [vmem:[%s2] sm:$0xf] %v1271
    %1400 = vst [vmem:[%s2 + $0x4] sm:$0xf] %v1272
    %1401 = vst [vmem:[%s2 + $0x8] sm:$0xf] %v1273
    %1402 = vst [vmem:[%s2 + $0xc] sm:$0xf] %v1274
    %1403 = vst [vmem:[%s2 + $0x10] sm:$0xf] %v1275
    %1404 = vst [vmem:[%s2 + $0x14] sm:$0xf] %v1276
    %1405 = vst [vmem:[%s2 + $0x18] sm:$0xf] %v1277
    %1406 = vst [vmem:[%s2 + $0x1c] sm:$0xf] %v1278
    %1407 = vst [vmem:[%s2 + $0x20] sm:$0xf] %v1279
    %1408 = vst [vmem:[%s2 + $0x24] sm:$0xf] %v1280
    %1409 = vst [vmem:[%s2 + $0x28] sm:$0xf] %v1281
    %1410 = vst [vmem:[%s2 + $0x2c] sm:$0xf] %v1282
    %1411 = vst [vmem:[%s2 + $0x30] sm:$0xf] %v1283
    %1412 = vst [vmem:[%s2 + $0x34] sm:$0xf] %v1284
    %1413 = vst [vmem:[%s2 + $0x38] sm:$0xf] %v1285
    %1414 = vst [vmem:[%s2 + $0x3c] sm:$0xf] %v1286
    %1415 = vst [vmem:[%s2 + $0x40] sm:$0xf] %v1287
    %1416 = vst [vmem:[%s2 + $0x44] sm:$0xf] %v1288
    %1417 = vst [vmem:[%s2 + $0x48] sm:$0xf] %v1289
    %1418 = vst [vmem:[%s2 + $0x4c] sm:$0xf] %v1290
    %1419 = vst [vmem:[%s2 + $0x50] sm:$0xf] %v1291
    %1420 = vst [vmem:[%s2 + $0x54] sm:$0xf] %v1292
    %1421 = vst [vmem:[%s2 + $0x58] sm:$0xf] %v1293
    %1422 = vst [vmem:[%s2 + $0x5c] sm:$0xf] %v1294
    %1423 = vst [vmem:[%s2 + $0x60] sm:$0xf] %v1295
    %1424 = vst [vmem:[%s2 + $0x64] sm:$0xf] %v1296
    %1425 = vst [vmem:[%s2 + $0x68] sm:$0xf] %v1297
    %1426 = vst [vmem:[%s2 + $0x6c] sm:$0xf] %v1298
    %1427 = vst [vmem:[%s2 + $0x70] sm:$0xf] %v1299
    %1428 = vst [vmem:[%s2 + $0x74] sm:$0xf] %v1300
    %1429 = vst [vmem:[%s2 + $0x78] sm:$0xf] %v1301
    %1430 = vst [vmem:[%s2 + $0x7c] sm:$0xf] %v1302
    %1431 = vst [vmem:[%s2 + $0x80] sm:$0xf] %v1303
    %1432 = vst [vmem:[%s2 + $0x84] sm:$0xf] %v1304
    %1433 = vst [vmem:[%s2 + $0x88] sm:$0xf] %v1305
    %1434 = vst [vmem:[%s2 + $0x8c] sm:$0xf] %v1306
    %1435 = vst [vmem:[%s2 + $0x90] sm:$0xf] %v1307
    %1436 = vst [vmem:[%s2 + $0x94] sm:$0xf] %v1308
    %1437 = vst [vmem:[%s2 + $0x98] sm:$0xf] %v1309
    %1438 = vst [vmem:[%s2 + $0x9c] sm:$0xf] %v1310
    %1439 = vst [vmem:[%s2 + $0xa0] sm:$0xf] %v1311
    %1440 = vst [vmem:[%s2 + $0xa4] sm:$0xf] %v1312
    %1441 = vst [vmem:[%s2 + $0xa8] sm:$0xf] %v1313
    %1442 = vst [vmem:[%s2 + $0xac] sm:$0xf] %v1314
    %1443 = vst [vmem:[%s2 + $0xb0] sm:$0xf] %v1315
    %1444 = vst [vmem:[%s2 + $0xb4] sm:$0xf] %v1316
    %1445 = vst [vmem:[%s2 + $0xb8] sm:$0xf] %v1317
    %1446 = vst [vmem:[%s2 + $0xbc] sm:$0xf] %v1318
    %1447 = vst [vmem:[%s2 + $0xc0] sm:$0xf] %v1319
    %1448 = vst [vmem:[%s2 + $0xc4] sm:$0xf] %v1320
    %1449 = vst [vmem:[%s2 + $0xc8] sm:$0xf] %v1321
    %1450 = vst [vmem:[%s2 + $0xcc] sm:$0xf] %v1322
    %1451 = vst [vmem:[%s2 + $0xd0] sm:$0xf] %v1323
    %1452 = vst [vmem:[%s2 + $0xd4] sm:$0xf] %v1324
    %1453 = vst [vmem:[%s2 + $0xd8] sm:$0xf] %v1325
    %1454 = vst [vmem:[%s2 + $0xdc] sm:$0xf] %v1326
    %1455 = vst [vmem:[%s2 + $0xe0] sm:$0xf] %v1327
    %1456 = vst [vmem:[%s2 + $0xe4] sm:$0xf] %v1328
    %1457 = vst [vmem:[%s2 + $0xe8] sm:$0xf] %v1329
    %1458 = vst [vmem:[%s2 + $0xec] sm:$0xf] %v1330
    %1459 = vst [vmem:[%s2 + $0xf0] sm:$0xf] %v1331
    %1460 = vst [vmem:[%s2 + $0xf4] sm:$0xf] %v1332
    %1461 = vst [vmem:[%s2 + $0xf8] sm:$0xf] %v1333
    %1462 = vst [vmem:[%s2 + $0xfc] sm:$0xf] %v1334
    %v1463 = vadd.f32 %v1079, %v1080
    %v1464 = vadd.f32 %v1463, %v1081
    %v1465 = vadd.f32 %v1464, %v1082
    %v1466 = vadd.f32 %v1465, %v1083
    %v1467 = vadd.f32 %v1466, %v1084
    %v1468 = vadd.f32 %v1467, %v1085
    %v1469 = vadd.f32 %v1468, %v1086
    %v1470 = vadd.f32 %v1469, %v1087
    %v1471 = vadd.f32 %v1470, %v1088
    %v1472 = vadd.f32 %v1471, %v1089
    %v1473 = vadd.f32 %v1472, %v1090
    %v1474 = vadd.f32 %v1473, %v1091
    %v1475 = vadd.f32 %v1474, %v1092
    %v1476 = vadd.f32 %v1475, %v1093
    %v1477 = vadd.f32 %v1476, %v1094
    %v1478 = vadd.f32 %v1477, %v1095
    %v1479 = vadd.f32 %v1478, %v1096
    %v1480 = vadd.f32 %v1479, %v1097
    %v1481 = vadd.f32 %v1480, %v1098
    %v1482 = vadd.f32 %v1481, %v1099
    %v1483 = vadd.f32 %v1482, %v1100
    %v1484 = vadd.f32 %v1483, %v1101
    %v1485 = vadd.f32 %v1484, %v1102
    %v1486 = vadd.f32 %v1485, %v1103
    %v1487 = vadd.f32 %v1486, %v1104
    %v1488 = vadd.f32 %v1487, %v1105
    %v1489 = vadd.f32 %v1488, %v1106
    %v1490 = vadd.f32 %v1489, %v1107
    %v1491 = vadd.f32 %v1490, %v1108
    %v1492 = vadd.f32 %v1491, %v1109
    %v1493 = vadd.f32 %v1492, %v1110
    %v1494 = vadd.f32 %v1493, %v1111
    %v1495 = vadd.f32 %v1494, %v1112
    %v1496 = vadd.f32 %v1495, %v1113
    %v1497 = vadd.f32 %v1496, %v1114
    %v1498 = vadd.f32 %v1497, %v1115
    %v1499 = vadd.f32 %v1498, %v1116
    %v1500 = vadd.f32 %v1499, %v1117
    %v1501 = vadd.f32 %v1500, %v1118
    %v1502 = vadd.f32 %v1501, %v1119
    %v1503 = vadd.f32 %v1502, %v1120
    %v1504 = vadd.f32 %v1503, %v1121
    %v1505 = vadd.f32 %v1504, %v1122
    %v1506 = vadd.f32 %v1505, %v1123
    %v1507 = vadd.f32 %v1506, %v1124
    %v1508 = vadd.f32 %v1507, %v1125
    %v1509 = vadd.f32 %v1508, %v1126
    %v1510 = vadd.f32 %v1509, %v1127
    %v1511 = vadd.f32 %v1510, %v1128
    %v1512 = vadd.f32 %v1511, %v1129
    %v1513 = vadd.f32 %v1512, %v1130
    %v1514 = vadd.f32 %v1513, %v1131
    %v1515 = vadd.f32 %v1514, %v1132
    %v1516 = vadd.f32 %v1515, %v1133
    %v1517 = vadd.f32 %v1516, %v1134
    %v1518 = vadd.f32 %v1517, %v1135
    %v1519 = vadd.f32 %v1518, %v1136
    %v1520 = vadd.f32 %v1519, %v1137
    %v1521 = vadd.f32 %v1520, %v1138
    %v1522 = vadd.f32 %v1521, %v1139
    %v1523 = vadd.f32 %v1522, %v1140
    %v1524 = vadd.f32 %v1523, %v1141
    %v1525 = vadd.f32 %v1524, %v1142
    %v1526 = vrot.slane %v1525, 4
    %v1527 = vadd.f32 %v1525, %v1526
    %v1528 = vrot.slane %v1527, 2
    %v1529 = vadd.f32 %v1527, %v1528
    %v1530 = vrot.slane %v1529, 1
    %v1531 = vadd.f32 %v1529, %v1530
    %v1532 = vmul.f32 %v1079, %v1079
    %v1533 = vmul.f32 %v1080, %v1080
    %v1534 = vmul.f32 %v1081, %v1081
    %v1535 = vmul.f32 %v1082, %v1082
    %v1536 = vmul.f32 %v1083, %v1083
    %v1537 = vmul.f32 %v1084, %v1084
    %v1538 = vmul.f32 %v1085, %v1085
    %v1539 = vmul.f32 %v1086, %v1086
    %v1540 = vmul.f32 %v1087, %v1087
    %v1541 = vmul.f32 %v1088, %v1088
    %v1542 = vmul.f32 %v1089, %v1089
    %v1543 = vmul.f32 %v1090, %v1090
    %v1544 = vmul.f32 %v1091, %v1091
    %v1545 = vmul.f32 %v1092, %v1092
    %v1546 = vmul.f32 %v1093, %v1093
    %v1547 = vmul.f32 %v1094, %v1094
    %v1548 = vmul.f32 %v1095, %v1095
    %v1549 = vmul.f32 %v1096, %v1096
    %v1550 = vmul.f32 %v1097, %v1097
    %v1551 = vmul.f32 %v1098, %v1098
    %v1552 = vmul.f32 %v1099, %v1099
    %v1553 = vmul.f32 %v1100, %v1100
    %v1554 = vmul.f32 %v1101, %v1101
    %v1555 = vmul.f32 %v1102, %v1102
    %v1556 = vmul.f32 %v1103, %v1103
    %v1557 = vmul.f32 %v1104, %v1104
    %v1558 = vmul.f32 %v1105, %v1105
    %v1559 = vmul.f32 %v1106, %v1106
    %v1560 = vmul.f32 %v1107, %v1107
    %v1561 = vmul.f32 %v1108, %v1108
    %v1562 = vmul.f32 %v1109, %v1109
    %v1563 = vmul.f32 %v1110, %v1110
    %v1564 = vmul.f32 %v1111, %v1111
    %v1565 = vmul.f32 %v1112, %v1112
    %v1566 = vmul.f32 %v1113, %v1113
    %v1567 = vmul.f32 %v1114, %v1114
    %v1568 = vmul.f32 %v1115, %v1115
    %v1569 = vmul.f32 %v1116, %v1116
    %v1570 = vmul.f32 %v1117, %v1117
    %v1571 = vmul.f32 %v1118, %v1118
    %v1572 = vmul.f32 %v1119, %v1119
    %v1573 = vmul.f32 %v1120, %v1120
    %v1574 = vmul.f32 %v1121, %v1121
    %v1575 = vmul.f32 %v1122, %v1122
    %v1576 = vmul.f32 %v1123, %v1123
    %v1577 = vmul.f32 %v1124, %v1124
    %v1578 = vmul.f32 %v1125, %v1125
    %v1579 = vmul.f32 %v1126, %v1126
    %v1580 = vmul.f32 %v1127, %v1127
    %v1581 = vmul.f32 %v1128, %v1128
    %v1582 = vmul.f32 %v1129, %v1129
    %v1583 = vmul.f32 %v1130, %v1130
    %v1584 = vmul.f32 %v1131, %v1131
    %v1585 = vmul.f32 %v1132, %v1132
    %v1586 = vmul.f32 %v1133, %v1133
    %v1587 = vmul.f32 %v1134, %v1134
    %v1588 = vmul.f32 %v1135, %v1135
    %v1589 = vmul.f32 %v1136, %v1136
    %v1590 = vmul.f32 %v1137, %v1137
    %v1591 = vmul.f32 %v1138, %v1138
    %v1592 = vmul.f32 %v1139, %v1139
    %v1593 = vmul.f32 %v1140, %v1140
    %v1594 = vmul.f32 %v1141, %v1141
    %v1595 = vmul.f32 %v1142, %v1142
    %v1596 = vadd.f32 %v1532, %v1533
    %v1597 = vadd.f32 %v1596, %v1534
    %v1598 = vadd.f32 %v1597, %v1535
    %v1599 = vadd.f32 %v1598, %v1536
    %v1600 = vadd.f32 %v1599, %v1537
    %v1601 = vadd.f32 %v1600, %v1538
    %v1602 = vadd.f32 %v1601, %v1539
    %v1603 = vadd.f32 %v1602, %v1540
    %v1604 = vadd.f32 %v1603, %v1541
    %v1605 = vadd.f32 %v1604, %v1542
    %v1606 = vadd.f32 %v1605, %v1543
    %v1607 = vadd.f32 %v1606, %v1544
    %v1608 = vadd.f32 %v1607, %v1545
    %v1609 = vadd.f32 %v1608, %v1546
    %v1610 = vadd.f32 %v1609, %v1547
    %v1611 = vadd.f32 %v1610, %v1548
    %v1612 = vadd.f32 %v1611, %v1549
    %v1613 = vadd.f32 %v1612, %v1550
    %v1614 = vadd.f32 %v1613, %v1551
    %v1615 = vadd.f32 %v1614, %v1552
    %v1616 = vadd.f32 %v1615, %v1553
    %v1617 = vadd.f32 %v1616, %v1554
    %v1618 = vadd.f32 %v1617, %v1555
    %v1619 = vadd.f32 %v1618, %v1556
    %v1620 = vadd.f32 %v1619, %v1557
    %v1621 = vadd.f32 %v1620, %v1558
    %v1622 = vadd.f32 %v1621, %v1559
    %v1623 = vadd.f32 %v1622, %v1560
    %v1624 = vadd.f32 %v1623, %v1561
    %v1625 = vadd.f32 %v1624, %v1562
    %v1626 = vadd.f32 %v1625, %v1563
    %v1627 = vadd.f32 %v1626, %v1564
    %v1628 = vadd.f32 %v1627, %v1565
    %v1629 = vadd.f32 %v1628, %v1566
    %v1630 = vadd.f32 %v1629, %v1567
    %v1631 = vadd.f32 %v1630, %v1568
    %v1632 = vadd.f32 %v1631, %v1569
    %v1633 = vadd.f32 %v1632, %v1570
    %v1634 = vadd.f32 %v1633, %v1571
    %v1635 = vadd.f32 %v1634, %v1572
    %v1636 = vadd.f32 %v1635, %v1573
    %v1637 = vadd.f32 %v1636, %v1574
    %v1638 = vadd.f32 %v1637, %v1575
    %v1639 = vadd.f32 %v1638, %v1576
    %v1640 = vadd.f32 %v1639, %v1577
    %v1641 = vadd.f32 %v1640, %v1578
    %v1642 = vadd.f32 %v1641, %v1579
    %v1643 = vadd.f32 %v1642, %v1580
    %v1644 = vadd.f32 %v1643, %v1581
    %v1645 = vadd.f32 %v1644, %v1582
    %v1646 = vadd.f32 %v1645, %v1583
    %v1647 = vadd.f32 %v1646, %v1584
    %v1648 = vadd.f32 %v1647, %v1585
    %v1649 = vadd.f32 %v1648, %v1586
    %v1650 = vadd.f32 %v1649, %v1587
    %v1651 = vadd.f32 %v1650, %v1588
    %v1652 = vadd.f32 %v1651, %v1589
    %v1653 = vadd.f32 %v1652, %v1590
    %v1654 = vadd.f32 %v1653, %v1591
    %v1655 = vadd.f32 %v1654, %v1592
    %v1656 = vadd.f32 %v1655, %v1593
    %v1657 = vadd.f32 %v1656, %v1594
    %v1658 = vadd.f32 %v1657, %v1595
    %v1659 = vrot.slane %v1658, 4
    %v1660 = vadd.f32 %v1658, %v1659
    %v1661 = vrot.slane %v1660, 2
    %v1662 = vadd.f32 %v1660, %v1661
    %v1663 = vrot.slane %v1662, 1
    %v1664 = vadd.f32 %v1662, %v1663
    %1665 = vst [vmem:[%s3] sm:$0xff] %v1531
    %1666 = vst [vmem:[%s4] sm:$0xff] %v1664
  $region17: #{resnet_generator_forward.25} parent=0 // pred_fallthru
    _
  // Predicated region
  $region18: #{resnet_generator_forward.25} parent=0 // pred_check
    _
  $region19: #{resnet_generator_forward.25} parent=0 // pred_check_branch
    %1668 = sbr.rel (0) target = $region21
  $region20: #{resnet_generator_forward.25} parent=0 // pred_region
    _
  $region21: #{resnet_generator_forward.25} parent=0 // pred_fallthru
    _
  // Predicated region
  $region22: #{resnet_generator_forward.25} parent=0 // pred_check
    _
  $region23: #{resnet_generator_forward.25} parent=0 // pred_check_branch
    %1670 = sbr.rel (0) target = $region25
  $region24: #{resnet_generator_forward.25} parent=0 // pred_region
    _
  $region25: #{resnet_generator_forward.25} parent=0 // pred_fallthru
    _
  // Predicated region
  $region26: #{resnet_generator_forward.25} parent=0 // pred_check
    _
  $region27: #{resnet_generator_forward.25} parent=0 // pred_check_branch
    %1672 = sbr.rel (0) target = $region29
  $region28: #{resnet_generator_forward.25} parent=0 // pred_region
    _
  $region29: #{resnet_generator_forward.25} parent=0 // pred_fallthru
    _
  // Predicated region
  $region30: #{resnet_generator_forward.25} parent=0 // pred_check
    _
  $region31: #{resnet_generator_forward.25} parent=0 // pred_check_branch
    %1674 = sbr.rel (0) target = $region33
  $region32: #{resnet_generator_forward.25} parent=0 // pred_region
    _
  $region33: #{resnet_generator_forward.25} parent=0 // pred_fallthru
    _
  // Predicated region
  $region34: #{resnet_generator_forward.25} parent=0 // pred_check
    _
  $region35: #{resnet_generator_forward.25} parent=0 // pred_check_branch
    %1676 = sbr.rel (0) target = $region37
  $region36: #{resnet_generator_forward.25} parent=0 // pred_region
    _
  $region37: #{resnet_generator_forward.25} parent=0 // pred_fallthru
    _
  // Predicated region
  $region38: #{resnet_generator_forward.25} parent=0 // pred_check
    _
  $region39: #{resnet_generator_forward.25} parent=0 // pred_check_branch
    %1678 = sbr.rel (0) target = $region41
  $region40: #{resnet_generator_forward.25} parent=0 // pred_region
    _
  $region41: #{resnet_generator_forward.25} parent=0 // pred_fallthru
    _

// kernel: resnet_generator_forward.28
$region0: #{resnet_generator_forward.28}
  #allocation0 [shape = 'u32[]', space=smem, size = 0x4, offset = 0x4, fixed_abs, tag = 'smem constant byte address 0x4 - core index']
  #allocation1 [shape = 'u32[144,128]{1,0:T(1,128)}', space=vmem, size = 0x12000, scoped, tag = 'internal scratch']
  %s0 = inlined_call_operand.vmem [shape: bf16[32,128], index: 0, kind: input, shape index: {}]
  %s1 = inlined_call_operand.vmem [shape: f32[1,128], index: 1, kind: input, shape index: {}]
  %s2 = inlined_call_operand.vmem [shape: f32[1,128], index: 2, kind: input, shape index: {}]
  %s3 = inlined_call_operand.vmem [shape: bf16[32,128], index: 3, kind: output, shape index: {}]
  %s4 = sld [smem:[#allocation0]]
  $region22: #{resnet_generator_forward.28} parent=0
    _
  %s6 = ssub.s32 1, %s4
  %s7 = scalar_select 0, %s6, %s4
  // Predicated region
  $region2: #{resnet_generator_forward.28} parent=0 // pred_check
    _
  $region3: #{resnet_generator_forward.28} parent=0 // pred_check_branch
    %9 = sbr.rel (0) target = $region5
  $region4: #{resnet_generator_forward.28} parent=0 // pred_region
    _
  $region5: #{resnet_generator_forward.28} parent=0 // pred_fallthru
    _
  // Predicated region
  $region6: #{resnet_generator_forward.28} parent=0 // pred_check
    _
  $region7: #{resnet_generator_forward.28} parent=0 // pred_check_branch
    %11 = sbr.rel (0) target = $region9
  $region8: #{resnet_generator_forward.28} parent=0 // pred_region
    _
  $region9: #{resnet_generator_forward.28} parent=0 // pred_fallthru
    _
  // Predicated region
  $region10: #{resnet_generator_forward.28} parent=0 // pred_check
    _
  $region11: #{resnet_generator_forward.28} parent=0 // pred_check_branch
    %13 = sbr.rel (0) target = $region13
  $region12: #{resnet_generator_forward.28} parent=0 // pred_region
    _
  $region13: #{resnet_generator_forward.28} parent=0 // pred_fallthru
    _
  %v14 = vld [vmem:[%s0] sm:$0xf]
  %v15 = vld [vmem:[%s0 + $0x4] sm:$0xf]
  %v16 = vld [vmem:[%s0 + $0x8] sm:$0xf]
  %v17 = vld [vmem:[%s0 + $0xc] sm:$0xf]
  %v18 = vunpack.c.l.bf16 %v14
  %v19 = vunpack.c.l.bf16 %v15
  %v20 = vunpack.c.l.bf16 %v16
  %v21 = vunpack.c.l.bf16 %v17
  %v22 = vld [vmem:[%s1] sm:$0x1]
  %v24 = vlaneseq
  %v25 = vshrl.u32 %v24, 7
  %v26 = vsub.s32 0, %v25
  %v27 = vrot.slane %v22, %v26
  %v29 = vmul.f32 %v18, %v27
  %v30 = vmul.f32 %v19, %v27
  %v31 = vmul.f32 %v20, %v27
  %v32 = vmul.f32 %v21, %v27
  %v33 = vld [vmem:[%s2] sm:$0x1]
  %v35 = vlaneseq
  %v36 = vshrl.u32 %v35, 7
  %v37 = vsub.s32 0, %v36
  %v38 = vrot.slane %v33, %v37
  %v40 = vadd.f32 %v29, %v38
  %v41 = vadd.f32 %v30, %v38
  %v42 = vadd.f32 %v31, %v38
  %v43 = vadd.f32 %v32, %v38
  %v44 = vmax.f32 %v40, 0.0
  %v45 = vmax.f32 %v41, 0.0
  %v46 = vmax.f32 %v42, 0.0
  %v47 = vmax.f32 %v43, 0.0
  %v48 = vpack.c.bf16 %v45, %v44
  %v49 = vpack.c.bf16 %v47, %v46
  %v52 = vunpack.c.l.b16 %v48
  %v53 = vunpack.c.h.b16 %v48
  %v54 = vunpack.c.l.b16 %v49
  %v55 = vunpack.c.h.b16 %v49
  %v56 = vpack.c.b16 %v52, %v52
  %v57 = vpack.c.b16 %v53, %v53
  %v58 = vpack.c.b16 %v54, %v54
  %v59 = vpack.c.b16 %v55, %v55
  %64 = vst [vmem:[%s3] sm:$0xf] %v56
  %65 = vst [vmem:[%s3 + $0x4] sm:$0xf] %v57
  %66 = vst [vmem:[%s3 + $0x8] sm:$0xf] %v58
  %67 = vst [vmem:[%s3 + $0xc] sm:$0xf] %v59
  // Predicated region
  $region14: #{resnet_generator_forward.28} parent=0 // pred_check
    _
  $region15: #{resnet_generator_forward.28} parent=0 // pred_check_branch
    %69 = sbr.rel (0) target = $region17
  $region16: #{resnet_generator_forward.28} parent=0 // pred_region
    _
  $region17: #{resnet_generator_forward.28} parent=0 // pred_fallthru
    _
  // Predicated region
  $region18: #{resnet_generator_forward.28} parent=0 // pred_check
    _
  $region19: #{resnet_generator_forward.28} parent=0 // pred_check_branch
    %71 = sbr.rel (0) target = $region21
  $region20: #{resnet_generator_forward.28} parent=0 // pred_region
    _
  $region21: #{resnet_generator_forward.28} parent=0 // pred_fallthru
    _

// kernel: resnet_generator_forward.27
$region0: #{resnet_generator_forward.27}
  #allocation0 [shape = 'u32[]', space=smem, size = 0x4, offset = 0x4, fixed_abs, tag = 'smem constant byte address 0x4 - core index']
  #allocation1 [shape = 'u32[144,128]{1,0:T(1,128)}', space=vmem, size = 0x12000, scoped, tag = 'internal scratch']
  #allocation2 [shape = 'f32[128,128]{1,0:T(8,128)}', space=vmem, size = 0x10000, scoped, tag = 'scratch operand']
  %s0 = inlined_call_operand.vmem [shape: bf16[128,256], index: 0, kind: input, shape index: {}]
  %s1 = inlined_call_operand.vmem [shape: bf16[256,128], index: 1, kind: input, shape index: {}]
  %s2 = inlined_call_operand.vmem [shape: bf16[128,128], index: 2, kind: output, shape index: {0}]
  %s3 = inlined_call_operand.vmem [shape: f32[8,128], index: 3, kind: output, shape index: {1}]
  %s4 = inlined_call_operand.vmem [shape: f32[8,128], index: 4, kind: output, shape index: {2}]
  %5 = xla_tuple %s2, %s3, %s4
  %s6 = sld [smem:[#allocation0]]
  $region42: #{resnet_generator_forward.27} parent=0
    _
  %s8 = ssub.s32 1, %s6
  %s9 = scalar_select 0, %s8, %s6
  // Predicated region
  $region2: #{resnet_generator_forward.27} parent=0 // pred_check
    _
  $region3: #{resnet_generator_forward.27} parent=0 // pred_check_branch
    %11 = sbr.rel (0) target = $region5
  $region4: #{resnet_generator_forward.27} parent=0 // pred_region
    _
  $region5: #{resnet_generator_forward.27} parent=0 // pred_fallthru
    _
  // Predicated region
  $region6: #{resnet_generator_forward.27} parent=0 // pred_check
    _
  $region7: #{resnet_generator_forward.27} parent=0 // pred_check_branch
    %13 = sbr.rel (0) target = $region9
  $region8: #{resnet_generator_forward.27} parent=0 // pred_region
    _
  $region9: #{resnet_generator_forward.27} parent=0 // pred_fallthru
    _
  %p15 = scmp.eq.s32.totalorder 0, 0
  // Predicated region
  $region10: #{resnet_generator_forward.27} parent=0 // pred_check
    %p16 = pneg %p15
  $region11: #{resnet_generator_forward.27} parent=0 // pred_check_branch
    %18 = sbr.rel (%p16) target = $region13
  $region12: #{resnet_generator_forward.27} parent=0 // pred_region
    %19 = vst [vmem:[#allocation2] sm:$0xff] 0.0
    %20 = vst [vmem:[#allocation2 + $0x8] sm:$0xff] 0.0
    %21 = vst [vmem:[#allocation2 + $0x10] sm:$0xff] 0.0
    %22 = vst [vmem:[#allocation2 + $0x18] sm:$0xff] 0.0
    %23 = vst [vmem:[#allocation2 + $0x20] sm:$0xff] 0.0
    %24 = vst [vmem:[#allocation2 + $0x28] sm:$0xff] 0.0
    %25 = vst [vmem:[#allocation2 + $0x30] sm:$0xff] 0.0
    %26 = vst [vmem:[#allocation2 + $0x38] sm:$0xff] 0.0
    %27 = vst [vmem:[#allocation2 + $0x40] sm:$0xff] 0.0
    %28 = vst [vmem:[#allocation2 + $0x48] sm:$0xff] 0.0
    %29 = vst [vmem:[#allocation2 + $0x50] sm:$0xff] 0.0
    %30 = vst [vmem:[#allocation2 + $0x58] sm:$0xff] 0.0
    %31 = vst [vmem:[#allocation2 + $0x60] sm:$0xff] 0.0
    %32 = vst [vmem:[#allocation2 + $0x68] sm:$0xff] 0.0
    %33 = vst [vmem:[#allocation2 + $0x70] sm:$0xff] 0.0
    %34 = vst [vmem:[#allocation2 + $0x78] sm:$0xff] 0.0
  $region13: #{resnet_generator_forward.27} parent=0 // pred_fallthru
    _
  %v35 = vld [vmem:[#allocation2] sm:$0xff]
  %v36 = vld [vmem:[#allocation2 + $0x8] sm:$0xff]
  %v37 = vld [vmem:[#allocation2 + $0x10] sm:$0xff]
  %v38 = vld [vmem:[#allocation2 + $0x18] sm:$0xff]
  %v39 = vld [vmem:[#allocation2 + $0x20] sm:$0xff]
  %v40 = vld [vmem:[#allocation2 + $0x28] sm:$0xff]
  %v41 = vld [vmem:[#allocation2 + $0x30] sm:$0xff]
  %v42 = vld [vmem:[#allocation2 + $0x38] sm:$0xff]
  %v43 = vld [vmem:[#allocation2 + $0x40] sm:$0xff]
  %v44 = vld [vmem:[#allocation2 + $0x48] sm:$0xff]
  %v45 = vld [vmem:[#allocation2 + $0x50] sm:$0xff]
  %v46 = vld [vmem:[#allocation2 + $0x58] sm:$0xff]
  %v47 = vld [vmem:[#allocation2 + $0x60] sm:$0xff]
  %v48 = vld [vmem:[#allocation2 + $0x68] sm:$0xff]
  %v49 = vld [vmem:[#allocation2 + $0x70] sm:$0xff]
  %v50 = vld [vmem:[#allocation2 + $0x78] sm:$0xff]
  %v51 = vld [vmem:[%s0] sm:$0xff]
  %v52 = vld [vmem:[%s0 + $0x8] sm:$0xff]
  %v53 = vld [vmem:[%s0 + $0x10] sm:$0xff]
  %v54 = vld [vmem:[%s0 + $0x18] sm:$0xff]
  %v55 = vld [vmem:[%s0 + $0x20] sm:$0xff]
  %v56 = vld [vmem:[%s0 + $0x28] sm:$0xff]
  %v57 = vld [vmem:[%s0 + $0x30] sm:$0xff]
  %v58 = vld [vmem:[%s0 + $0x38] sm:$0xff]
  %v59 = vld [vmem:[%s0 + $0x40] sm:$0xff]
  %v60 = vld [vmem:[%s0 + $0x48] sm:$0xff]
  %v61 = vld [vmem:[%s0 + $0x50] sm:$0xff]
  %v62 = vld [vmem:[%s0 + $0x58] sm:$0xff]
  %v63 = vld [vmem:[%s0 + $0x60] sm:$0xff]
  %v64 = vld [vmem:[%s0 + $0x68] sm:$0xff]
  %v65 = vld [vmem:[%s0 + $0x70] sm:$0xff]
  %v66 = vld [vmem:[%s0 + $0x78] sm:$0xff]
  %v67 = vld [vmem:[%s1] sm:$0xf]
  %v68 = vld [vmem:[%s1 + $0x4] sm:$0xf]
  %v69 = vld [vmem:[%s1 + $0x8] sm:$0xf]
  %v70 = vld [vmem:[%s1 + $0xc] sm:$0xf]
  %v71 = vld [vmem:[%s1 + $0x10] sm:$0xf]
  %v72 = vld [vmem:[%s1 + $0x14] sm:$0xf]
  %v73 = vld [vmem:[%s1 + $0x18] sm:$0xf]
  %v74 = vld [vmem:[%s1 + $0x1c] sm:$0xf]
  %v75 = vld [vmem:[%s1 + $0x20] sm:$0xf]
  %v76 = vld [vmem:[%s1 + $0x24] sm:$0xf]
  %v77 = vld [vmem:[%s1 + $0x28] sm:$0xf]
  %v78 = vld [vmem:[%s1 + $0x2c] sm:$0xf]
  %v79 = vld [vmem:[%s1 + $0x30] sm:$0xf]
  %v80 = vld [vmem:[%s1 + $0x34] sm:$0xf]
  %v81 = vld [vmem:[%s1 + $0x38] sm:$0xf]
  %v82 = vld [vmem:[%s1 + $0x3c] sm:$0xf]
  %v83 = vld [vmem:[%s1 + $0x40] sm:$0xf]
  %v84 = vld [vmem:[%s1 + $0x44] sm:$0xf]
  %v85 = vld [vmem:[%s1 + $0x48] sm:$0xf]
  %v86 = vld [vmem:[%s1 + $0x4c] sm:$0xf]
  %v87 = vld [vmem:[%s1 + $0x50] sm:$0xf]
  %v88 = vld [vmem:[%s1 + $0x54] sm:$0xf]
  %v89 = vld [vmem:[%s1 + $0x58] sm:$0xf]
  %v90 = vld [vmem:[%s1 + $0x5c] sm:$0xf]
  %v91 = vld [vmem:[%s1 + $0x60] sm:$0xf]
  %v92 = vld [vmem:[%s1 + $0x64] sm:$0xf]
  %v93 = vld [vmem:[%s1 + $0x68] sm:$0xf]
  %v94 = vld [vmem:[%s1 + $0x6c] sm:$0xf]
  %v95 = vld [vmem:[%s1 + $0x70] sm:$0xf]
  %v96 = vld [vmem:[%s1 + $0x74] sm:$0xf]
  %v97 = vld [vmem:[%s1 + $0x78] sm:$0xf]
  %v98 = vld [vmem:[%s1 + $0x7c] sm:$0xf]
  %v115 = vunpack.c.l.b16 %v51
  %v116 = vunpack.c.h.b16 %v51
  %v117 = vunpack.c.l.b16 %v52
  %v118 = vunpack.c.h.b16 %v52
  %v119 = vunpack.c.l.b16 %v53
  %v120 = vunpack.c.h.b16 %v53
  %v121 = vunpack.c.l.b16 %v54
  %v122 = vunpack.c.h.b16 %v54
  %v123 = vunpack.c.l.b16 %v55
  %v124 = vunpack.c.h.b16 %v55
  %v125 = vunpack.c.l.b16 %v56
  %v126 = vunpack.c.h.b16 %v56
  %v127 = vunpack.c.l.b16 %v57
  %v128 = vunpack.c.h.b16 %v57
  %v129 = vunpack.c.l.b16 %v58
  %v130 = vunpack.c.h.b16 %v58
  %v131 = vunpack.c.l.b16 %v59
  %v132 = vunpack.c.h.b16 %v59
  %v133 = vunpack.c.l.b16 %v60
  %v134 = vunpack.c.h.b16 %v60
  %v135 = vunpack.c.l.b16 %v61
  %v136 = vunpack.c.h.b16 %v61
  %v137 = vunpack.c.l.b16 %v62
  %v138 = vunpack.c.h.b16 %v62
  %v139 = vunpack.c.l.b16 %v63
  %v140 = vunpack.c.h.b16 %v63
  %v141 = vunpack.c.l.b16 %v64
  %v142 = vunpack.c.h.b16 %v64
  %v143 = vunpack.c.l.b16 %v65
  %v144 = vunpack.c.h.b16 %v65
  %v145 = vunpack.c.l.b16 %v66
  %v146 = vunpack.c.h.b16 %v66
  %v147 = vpack.c.b16 %v117, %v115
  %v148 = vpack.c.b16 %v118, %v116
  %v149 = vpack.c.b16 %v121, %v119
  %v150 = vpack.c.b16 %v122, %v120
  %v151 = vpack.c.b16 %v125, %v123
  %v152 = vpack.c.b16 %v126, %v124
  %v153 = vpack.c.b16 %v129, %v127
  %v154 = vpack.c.b16 %v130, %v128
  %v155 = vpack.c.b16 %v133, %v131
  %v156 = vpack.c.b16 %v134, %v132
  %v157 = vpack.c.b16 %v137, %v135
  %v158 = vpack.c.b16 %v138, %v136
  %v159 = vpack.c.b16 %v141, %v139
  %v160 = vpack.c.b16 %v142, %v140
  %v161 = vpack.c.b16 %v145, %v143
  %v162 = vpack.c.b16 %v146, %v144
  %v211 = vunpack.c.l.b16 %v67
  %v212 = vunpack.c.l.b16 %v68
  %v213 = vunpack.c.l.b16 %v69
  %v214 = vunpack.c.l.b16 %v70
  %v215 = vunpack.c.l.b16 %v71
  %v216 = vunpack.c.l.b16 %v72
  %v217 = vunpack.c.l.b16 %v73
  %v218 = vunpack.c.l.b16 %v74
  %v219 = vunpack.c.l.b16 %v75
  %v220 = vunpack.c.l.b16 %v76
  %v221 = vunpack.c.l.b16 %v77
  %v222 = vunpack.c.l.b16 %v78
  %v223 = vunpack.c.l.b16 %v79
  %v224 = vunpack.c.l.b16 %v80
  %v225 = vunpack.c.l.b16 %v81
  %v226 = vunpack.c.l.b16 %v82
  %v227 = vunpack.c.l.b16 %v83
  %v228 = vunpack.c.l.b16 %v84
  %v229 = vunpack.c.l.b16 %v85
  %v230 = vunpack.c.l.b16 %v86
  %v231 = vunpack.c.l.b16 %v87
  %v232 = vunpack.c.l.b16 %v88
  %v233 = vunpack.c.l.b16 %v89
  %v234 = vunpack.c.l.b16 %v90
  %v235 = vunpack.c.l.b16 %v91
  %v236 = vunpack.c.l.b16 %v92
  %v237 = vunpack.c.l.b16 %v93
  %v238 = vunpack.c.l.b16 %v94
  %v239 = vunpack.c.l.b16 %v95
  %v240 = vunpack.c.l.b16 %v96
  %v241 = vunpack.c.l.b16 %v97
  %v242 = vunpack.c.l.b16 %v98
  %v243 = vpack.c.b16 %v212, %v211
  %v244 = vpack.c.b16 %v214, %v213
  %v245 = vpack.c.b16 %v216, %v215
  %v246 = vpack.c.b16 %v218, %v217
  %v247 = vpack.c.b16 %v220, %v219
  %v248 = vpack.c.b16 %v222, %v221
  %v249 = vpack.c.b16 %v224, %v223
  %v250 = vpack.c.b16 %v226, %v225
  %v251 = vpack.c.b16 %v228, %v227
  %v252 = vpack.c.b16 %v230, %v229
  %v253 = vpack.c.b16 %v232, %v231
  %v254 = vpack.c.b16 %v234, %v233
  %v255 = vpack.c.b16 %v236, %v235
  %v256 = vpack.c.b16 %v238, %v237
  %v257 = vpack.c.b16 %v240, %v239
  %v258 = vpack.c.b16 %v242, %v241
  %275 = vmatprep.subr.bf16.mxu0 0
  %276 = vmatpush1.bf16.msra.mxu0 %v243
  %277 = vmatprep.subr.bf16.mxu0 0
  %278 = vmatpush1.bf16.msra.mxu0 %v244
  %279 = vmatprep.subr.bf16.mxu0 0
  %280 = vmatpush1.bf16.msra.mxu0 %v245
  %281 = vmatprep.subr.bf16.mxu0 0
  %282 = vmatpush1.bf16.msra.mxu0 %v246
  %283 = vmatprep.subr.bf16.mxu0 0
  %284 = vmatpush1.bf16.msra.mxu0 %v247
  %285 = vmatprep.subr.bf16.mxu0 0
  %286 = vmatpush1.bf16.msra.mxu0 %v248
  %287 = vmatprep.subr.bf16.mxu0 0
  %288 = vmatpush1.bf16.msra.mxu0 %v249
  %289 = vmatprep.subr.bf16.mxu0 0
  %290 = vmatpush1.bf16.msra.mxu0 %v250
  %291 = vmatprep.subr.bf16.mxu0 0
  %292 = vmatpush1.bf16.msra.mxu0 %v251
  %293 = vmatprep.subr.bf16.mxu0 0
  %294 = vmatpush1.bf16.msra.mxu0 %v252
  %295 = vmatprep.subr.bf16.mxu0 0
  %296 = vmatpush1.bf16.msra.mxu0 %v253
  %297 = vmatprep.subr.bf16.mxu0 0
  %298 = vmatpush1.bf16.msra.mxu0 %v254
  %299 = vmatprep.subr.bf16.mxu0 0
  %300 = vmatpush1.bf16.msra.mxu0 %v255
  %301 = vmatprep.subr.bf16.mxu0 0
  %302 = vmatpush1.bf16.msra.mxu0 %v256
  %303 = vmatprep.subr.bf16.mxu0 0
  %304 = vmatpush1.bf16.msra.mxu0 %v257
  %305 = vmatprep.subr.bf16.mxu0 0
  %306 = vmatpush1.bf16.msra.mxu0 %v258
  %307 = vmatprep.mubr.bf16.mxu0 %v148
  %308 = vmatmul.mubr.bf16.gmra.mrb[0].mxu0 %v147
  %v309 = vpop.f32.mrb[0].mxu0
  %v310 = vadd.f32 0.0, %v309
  %v311 = vpop.f32.mrb[0].mxu0
  %v312 = vpop.f32.mrb[0].mxu0
  %v313 = vadd.f32 0.0, %v312
  %v314 = vpop.f32.mrb[0].mxu0
  %315 = vmatprep.mubr.bf16.mxu0 %v150
  %316 = vmatmul.mubr.bf16.gmra.mrb[0].mxu0 %v149
  %v317 = vpop.f32.mrb[0].mxu0
  %v318 = vadd.f32 0.0, %v317
  %v319 = vpop.f32.mrb[0].mxu0
  %v320 = vpop.f32.mrb[0].mxu0
  %v321 = vadd.f32 0.0, %v320
  %v322 = vpop.f32.mrb[0].mxu0
  %323 = vmatprep.mubr.bf16.mxu0 %v152
  %324 = vmatmul.mubr.bf16.gmra.mrb[0].mxu0 %v151
  %v325 = vpop.f32.mrb[0].mxu0
  %v326 = vadd.f32 0.0, %v325
  %v327 = vpop.f32.mrb[0].mxu0
  %v328 = vpop.f32.mrb[0].mxu0
  %v329 = vadd.f32 0.0, %v328
  %v330 = vpop.f32.mrb[0].mxu0
  %331 = vmatprep.mubr.bf16.mxu0 %v154
  %332 = vmatmul.mubr.bf16.gmra.mrb[0].mxu0 %v153
  %v333 = vpop.f32.mrb[0].mxu0
  %v334 = vadd.f32 0.0, %v333
  %v335 = vpop.f32.mrb[0].mxu0
  %v336 = vpop.f32.mrb[0].mxu0
  %v337 = vadd.f32 0.0, %v336
  %v338 = vpop.f32.mrb[0].mxu0
  %339 = vmatprep.mubr.bf16.mxu0 %v156
  %340 = vmatmul.mubr.bf16.gmra.mrb[0].mxu0 %v155
  %v341 = vpop.f32.mrb[0].mxu0
  %v342 = vadd.f32 0.0, %v341
  %v343 = vpop.f32.mrb[0].mxu0
  %v344 = vpop.f32.mrb[0].mxu0
  %v345 = vadd.f32 0.0, %v344
  %v346 = vpop.f32.mrb[0].mxu0
  %347 = vmatprep.mubr.bf16.mxu0 %v158
  %348 = vmatmul.mubr.bf16.gmra.mrb[0].mxu0 %v157
  %v349 = vpop.f32.mrb[0].mxu0
  %v350 = vadd.f32 0.0, %v349
  %v351 = vpop.f32.mrb[0].mxu0
  %v352 = vpop.f32.mrb[0].mxu0
  %v353 = vadd.f32 0.0, %v352
  %v354 = vpop.f32.mrb[0].mxu0
  %355 = vmatprep.mubr.bf16.mxu0 %v160
  %356 = vmatmul.mubr.bf16.gmra.mrb[0].mxu0 %v159
  %v357 = vpop.f32.mrb[0].mxu0
  %v358 = vadd.f32 0.0, %v357
  %v359 = vpop.f32.mrb[0].mxu0
  %v360 = vpop.f32.mrb[0].mxu0
  %v361 = vadd.f32 0.0, %v360
  %v362 = vpop.f32.mrb[0].mxu0
  %363 = vmatprep.mubr.bf16.mxu0 %v162
  %364 = vmatmul.mubr.bf16.gmra.mrb[0].mxu0 %v161
  %v365 = vpop.f32.mrb[0].mxu0
  %v366 = vadd.f32 0.0, %v365
  %v367 = vpop.f32.mrb[0].mxu0
  %v368 = vpop.f32.mrb[0].mxu0
  %v369 = vadd.f32 0.0, %v368
  %v370 = vpop.f32.mrb[0].mxu0
  %371 = vdwg.mxu0
  %v372 = vadd.f32 %v35, %v310
  %v373 = vadd.f32 %v36, %v313
  %v374 = vadd.f32 %v37, %v318
  %v375 = vadd.f32 %v38, %v321
  %v376 = vadd.f32 %v39, %v326
  %v377 = vadd.f32 %v40, %v329
  %v378 = vadd.f32 %v41, %v334
  %v379 = vadd.f32 %v42, %v337
  %v380 = vadd.f32 %v43, %v342
  %v381 = vadd.f32 %v44, %v345
  %v382 = vadd.f32 %v45, %v350
  %v383 = vadd.f32 %v46, %v353
  %v384 = vadd.f32 %v47, %v358
  %v385 = vadd.f32 %v48, %v361
  %v386 = vadd.f32 %v49, %v366
  %v387 = vadd.f32 %v50, %v369
  %388 = vst [vmem:[#allocation2] sm:$0xff] %v372
  %389 = vst [vmem:[#allocation2 + $0x8] sm:$0xff] %v373
  %390 = vst [vmem:[#allocation2 + $0x10] sm:$0xff] %v374
  %391 = vst [vmem:[#allocation2 + $0x18] sm:$0xff] %v375
  %392 = vst [vmem:[#allocation2 + $0x20] sm:$0xff] %v376
  %393 = vst [vmem:[#allocation2 + $0x28] sm:$0xff] %v377
  %394 = vst [vmem:[#allocation2 + $0x30] sm:$0xff] %v378
  %395 = vst [vmem:[#allocation2 + $0x38] sm:$0xff] %v379
  %396 = vst [vmem:[#allocation2 + $0x40] sm:$0xff] %v380
  %397 = vst [vmem:[#allocation2 + $0x48] sm:$0xff] %v381
  %398 = vst [vmem:[#allocation2 + $0x50] sm:$0xff] %v382
  %399 = vst [vmem:[#allocation2 + $0x58] sm:$0xff] %v383
  %400 = vst [vmem:[#allocation2 + $0x60] sm:$0xff] %v384
  %401 = vst [vmem:[#allocation2 + $0x68] sm:$0xff] %v385
  %402 = vst [vmem:[#allocation2 + $0x70] sm:$0xff] %v386
  %403 = vst [vmem:[#allocation2 + $0x78] sm:$0xff] %v387
  // Predicated region
  $region14: #{resnet_generator_forward.27} parent=0 // pred_check
    %p404 = pneg %p15
  $region15: #{resnet_generator_forward.27} parent=0 // pred_check_branch
    %406 = sbr.rel (%p404) target = $region17
  $region16: #{resnet_generator_forward.27} parent=0 // pred_region
    %v407 = vld [vmem:[#allocation2] sm:$0xff]
    %v408 = vld [vmem:[#allocation2 + $0x8] sm:$0xff]
    %v409 = vld [vmem:[#allocation2 + $0x10] sm:$0xff]
    %v410 = vld [vmem:[#allocation2 + $0x18] sm:$0xff]
    %v411 = vld [vmem:[#allocation2 + $0x20] sm:$0xff]
    %v412 = vld [vmem:[#allocation2 + $0x28] sm:$0xff]
    %v413 = vld [vmem:[#allocation2 + $0x30] sm:$0xff]
    %v414 = vld [vmem:[#allocation2 + $0x38] sm:$0xff]
    %v415 = vld [vmem:[#allocation2 + $0x40] sm:$0xff]
    %v416 = vld [vmem:[#allocation2 + $0x48] sm:$0xff]
    %v417 = vld [vmem:[#allocation2 + $0x50] sm:$0xff]
    %v418 = vld [vmem:[#allocation2 + $0x58] sm:$0xff]
    %v419 = vld [vmem:[#allocation2 + $0x60] sm:$0xff]
    %v420 = vld [vmem:[#allocation2 + $0x68] sm:$0xff]
    %v421 = vld [vmem:[#allocation2 + $0x70] sm:$0xff]
    %v422 = vld [vmem:[#allocation2 + $0x78] sm:$0xff]
    %v423 = vpack.c.bf16 %v408, %v407
    %v424 = vpack.c.bf16 %v410, %v409
    %v425 = vpack.c.bf16 %v412, %v411
    %v426 = vpack.c.bf16 %v414, %v413
    %v427 = vpack.c.bf16 %v416, %v415
    %v428 = vpack.c.bf16 %v418, %v417
    %v429 = vpack.c.bf16 %v420, %v419
    %v430 = vpack.c.bf16 %v422, %v421
    %v439 = vunpack.c.l.b16 %v423
    %v440 = vunpack.c.h.b16 %v423
    %v441 = vunpack.c.l.b16 %v424
    %v442 = vunpack.c.h.b16 %v424
    %v443 = vunpack.c.l.b16 %v425
    %v444 = vunpack.c.h.b16 %v425
    %v445 = vunpack.c.l.b16 %v426
    %v446 = vunpack.c.h.b16 %v426
    %v447 = vunpack.c.l.b16 %v427
    %v448 = vunpack.c.h.b16 %v427
    %v449 = vunpack.c.l.b16 %v428
    %v450 = vunpack.c.h.b16 %v428
    %v451 = vunpack.c.l.b16 %v429
    %v452 = vunpack.c.h.b16 %v429
    %v453 = vunpack.c.l.b16 %v430
    %v454 = vunpack.c.h.b16 %v430
    %v455 = vpack.c.b16 %v439, %v439
    %v456 = vpack.c.b16 %v440, %v440
    %v457 = vpack.c.b16 %v441, %v441
    %v458 = vpack.c.b16 %v442, %v442
    %v459 = vpack.c.b16 %v443, %v443
    %v460 = vpack.c.b16 %v444, %v444
    %v461 = vpack.c.b16 %v445, %v445
    %v462 = vpack.c.b16 %v446, %v446
    %v463 = vpack.c.b16 %v447, %v447
    %v464 = vpack.c.b16 %v448, %v448
    %v465 = vpack.c.b16 %v449, %v449
    %v466 = vpack.c.b16 %v450, %v450
    %v467 = vpack.c.b16 %v451, %v451
    %v468 = vpack.c.b16 %v452, %v452
    %v469 = vpack.c.b16 %v453, %v453
    %v470 = vpack.c.b16 %v454, %v454
    %487 = vst [vmem:[%s2] sm:$0xf] %v455
    %488 = vst [vmem:[%s2 + $0x4] sm:$0xf] %v456
    %489 = vst [vmem:[%s2 + $0x8] sm:$0xf] %v457
    %490 = vst [vmem:[%s2 + $0xc] sm:$0xf] %v458
    %491 = vst [vmem:[%s2 + $0x10] sm:$0xf] %v459
    %492 = vst [vmem:[%s2 + $0x14] sm:$0xf] %v460
    %493 = vst [vmem:[%s2 + $0x18] sm:$0xf] %v461
    %494 = vst [vmem:[%s2 + $0x1c] sm:$0xf] %v462
    %495 = vst [vmem:[%s2 + $0x20] sm:$0xf] %v463
    %496 = vst [vmem:[%s2 + $0x24] sm:$0xf] %v464
    %497 = vst [vmem:[%s2 + $0x28] sm:$0xf] %v465
    %498 = vst [vmem:[%s2 + $0x2c] sm:$0xf] %v466
    %499 = vst [vmem:[%s2 + $0x30] sm:$0xf] %v467
    %500 = vst [vmem:[%s2 + $0x34] sm:$0xf] %v468
    %501 = vst [vmem:[%s2 + $0x38] sm:$0xf] %v469
    %502 = vst [vmem:[%s2 + $0x3c] sm:$0xf] %v470
    %v503 = vadd.f32 %v407, %v408
    %v504 = vadd.f32 %v503, %v409
    %v505 = vadd.f32 %v504, %v410
    %v506 = vadd.f32 %v505, %v411
    %v507 = vadd.f32 %v506, %v412
    %v508 = vadd.f32 %v507, %v413
    %v509 = vadd.f32 %v508, %v414
    %v510 = vadd.f32 %v509, %v415
    %v511 = vadd.f32 %v510, %v416
    %v512 = vadd.f32 %v511, %v417
    %v513 = vadd.f32 %v512, %v418
    %v514 = vadd.f32 %v513, %v419
    %v515 = vadd.f32 %v514, %v420
    %v516 = vadd.f32 %v515, %v421
    %v517 = vadd.f32 %v516, %v422
    %v518 = vrot.slane %v517, 4
    %v519 = vadd.f32 %v517, %v518
    %v520 = vrot.slane %v519, 2
    %v521 = vadd.f32 %v519, %v520
    %v522 = vrot.slane %v521, 1
    %v523 = vadd.f32 %v521, %v522
    %v524 = vmul.f32 %v407, %v407
    %v525 = vmul.f32 %v408, %v408
    %v526 = vmul.f32 %v409, %v409
    %v527 = vmul.f32 %v410, %v410
    %v528 = vmul.f32 %v411, %v411
    %v529 = vmul.f32 %v412, %v412
    %v530 = vmul.f32 %v413, %v413
    %v531 = vmul.f32 %v414, %v414
    %v532 = vmul.f32 %v415, %v415
    %v533 = vmul.f32 %v416, %v416
    %v534 = vmul.f32 %v417, %v417
    %v535 = vmul.f32 %v418, %v418
    %v536 = vmul.f32 %v419, %v419
    %v537 = vmul.f32 %v420, %v420
    %v538 = vmul.f32 %v421, %v421
    %v539 = vmul.f32 %v422, %v422
    %v540 = vadd.f32 %v524, %v525
    %v541 = vadd.f32 %v540, %v526
    %v542 = vadd.f32 %v541, %v527
    %v543 = vadd.f32 %v542, %v528
    %v544 = vadd.f32 %v543, %v529
    %v545 = vadd.f32 %v544, %v530
    %v546 = vadd.f32 %v545, %v531
    %v547 = vadd.f32 %v546, %v532
    %v548 = vadd.f32 %v547, %v533
    %v549 = vadd.f32 %v548, %v534
    %v550 = vadd.f32 %v549, %v535
    %v551 = vadd.f32 %v550, %v536
    %v552 = vadd.f32 %v551, %v537
    %v553 = vadd.f32 %v552, %v538
    %v554 = vadd.f32 %v553, %v539
    %v555 = vrot.slane %v554, 4
    %v556 = vadd.f32 %v554, %v555
    %v557 = vrot.slane %v556, 2
    %v558 = vadd.f32 %v556, %v557
    %v559 = vrot.slane %v558, 1
    %v560 = vadd.f32 %v558, %v559
    %561 = vst [vmem:[%s3] sm:$0xff] %v523
    %562 = vst [vmem:[%s4] sm:$0xff] %v560
  $region17: #{resnet_generator_forward.27} parent=0 // pred_fallthru
    _
  // Predicated region
  $region18: #{resnet_generator_forward.27} parent=0 // pred_check
    _
  $region19: #{resnet_generator_forward.27} parent=0 // pred_check_branch
    %564 = sbr.rel (0) target = $region21
  $region20: #{resnet_generator_forward.27} parent=0 // pred_region
    _
  $region21: #{resnet_generator_forward.27} parent=0 // pred_fallthru
    _
  // Predicated region
  $region22: #{resnet_generator_forward.27} parent=0 // pred_check
    _
  $region23: #{resnet_generator_forward.27} parent=0 // pred_check_branch
    %566 = sbr.rel (0) target = $region25
  $region24: #{resnet_generator_forward.27} parent=0 // pred_region
    _
  $region25: #{resnet_generator_forward.27} parent=0 // pred_fallthru
    _
  // Predicated region
  $region26: #{resnet_generator_forward.27} parent=0 // pred_check
    _
  $region27: #{resnet_generator_forward.27} parent=0 // pred_check_branch
    %568 = sbr.rel (0) target = $region29
  $region28: #{resnet_generator_forward.27} parent=0 // pred_region
    _
  $region29: #{resnet_generator_forward.27} parent=0 // pred_fallthru
    _
  // Predicated region
  $region30: #{resnet_generator_forward.27} parent=0 // pred_check
    _
  $region31: #{resnet_generator_forward.27} parent=0 // pred_check_branch
    %570 = sbr.rel (0) target = $region33
  $region32: #{resnet_generator_forward.27} parent=0 // pred_region
    _
  $region33: #{resnet_generator_forward.27} parent=0 // pred_fallthru
    _
  // Predicated region
  $region34: #{resnet_generator_forward.27} parent=0 // pred_check
    _
  $region35: #{resnet_generator_forward.27} parent=0 // pred_check_branch
    %572 = sbr.rel (0) target = $region37
  $region36: #{resnet_generator_forward.27} parent=0 // pred_region
    _
  $region37: #{resnet_generator_forward.27} parent=0 // pred_fallthru
    _
  // Predicated region
  $region38: #{resnet_generator_forward.27} parent=0 // pred_check
    _
  $region39: #{resnet_generator_forward.27} parent=0 // pred_check_branch
    %574 = sbr.rel (0) target = $region41
  $region40: #{resnet_generator_forward.27} parent=0 // pred_region
    _
  $region41: #{resnet_generator_forward.27} parent=0 // pred_fallthru
    _

// kernel: tile.113
$region0: #{tile.113}
  #allocation0 [shape = 's32[1]{0}', space=sflag, size = 0x4, scoped, tag = 'scoped memory for tile.113']
  %s0 = inlined_call_operand.vmem [shape: f32[64], index: 0, kind: input, shape index: {}]
  %s1 = inlined_call_operand.vmem [shape: f32[2,64], index: 1, kind: output, shape index: {}]
  // Predicated region
  $region2: #{tile.113} parent=0 // pred_check
    _
  $region3: #{tile.113} parent=0 // pred_check_branch
    %3 = sbr.rel (0) target = $region5
  $region4: #{tile.113} parent=0 // pred_region
    _
  $region5: #{tile.113} parent=0 // pred_fallthru
    _
  %v4 = vld [vmem:[%s0] ss:$0 sm:$0xff]
  %5 = vst [vmem:[%s1] sm:$0x3] %v4

// kernel: tile.114
$region0: #{tile.114}
  %s0 = inlined_call_operand.vmem [shape: f32[2,64], index: 0, kind: input, shape index: {}]
  %s1 = inlined_call_operand.vmem [shape: f32[1,128], index: 1, kind: output, shape index: {}]
  $region1: #{tile.114} parent=0
    #allocation0 [shape = 'u8[4096]{0}', space=vmem, size = 0x1000, scoped, tag = 'scoped mem for output reshape']
    #allocation1 [shape = 'u8[4096]{0}', space=vmem, size = 0x1000, scoped, tag = 'scoped mem for input reshape']
    %s3 = sshllo.u32 0, 2
    %v4 = vld [vmem:[%s0] sm:%s3]
    %5 = vst [vmem:[#allocation1] sm:%s3] %v4
    %v6 = vld [vmem:[#allocation1] sm:$0x1]
    %vm7 = vcmask 523264
    %8 = vst.msk [vmem:[#allocation0] sm:$0x1] %vm7, %v6
    %s9 = scalar_lea.vmem [#allocation1], 1
    %v10 = vld [vmem:[%s9] sm:$0x1]
    %11 = vrot.lane.b32.xlu0 %v10, 64
    %v12 = vpop.permute.xlu0 %11
    %vm13 = vcmask 1048064
    %14 = vst.msk [vmem:[#allocation0] sm:$0x1] %vm13, %v12
    %s16 = sshllo.u32 0, 1
    %v18 = vld [vmem:[#allocation0] sm:%s16]
    %s19 = sshllo.u32 0, 1
    %20 = vst [vmem:[%s1] sm:%s19] %v18

// kernel: resnet_generator_forward.30
$region0: #{resnet_generator_forward.30}
  #allocation0 [shape = 'u32[]', space=smem, size = 0x4, offset = 0x4, fixed_abs, tag = 'smem constant byte address 0x4 - core index']
  #allocation1 [shape = 'u32[144,128]{1,0:T(1,128)}', space=vmem, size = 0x12000, scoped, tag = 'internal scratch']
  %s0 = inlined_call_operand.vmem [shape: bf16[16,128], index: 0, kind: input, shape index: {}]
  %s1 = inlined_call_operand.vmem [shape: f32[1,128], index: 1, kind: input, shape index: {}]
  %s2 = inlined_call_operand.vmem [shape: f32[1,128], index: 2, kind: input, shape index: {}]
  %s3 = inlined_call_operand.vmem [shape: bf16[16,128], index: 3, kind: output, shape index: {}]
  %s4 = sld [smem:[#allocation0]]
  $region22: #{resnet_generator_forward.30} parent=0
    _
  %s6 = ssub.s32 1, %s4
  %s7 = scalar_select 0, %s6, %s4
  // Predicated region
  $region2: #{resnet_generator_forward.30} parent=0 // pred_check
    _
  $region3: #{resnet_generator_forward.30} parent=0 // pred_check_branch
    %9 = sbr.rel (0) target = $region5
  $region4: #{resnet_generator_forward.30} parent=0 // pred_region
    _
  $region5: #{resnet_generator_forward.30} parent=0 // pred_fallthru
    _
  // Predicated region
  $region6: #{resnet_generator_forward.30} parent=0 // pred_check
    _
  $region7: #{resnet_generator_forward.30} parent=0 // pred_check_branch
    %11 = sbr.rel (0) target = $region9
  $region8: #{resnet_generator_forward.30} parent=0 // pred_region
    _
  $region9: #{resnet_generator_forward.30} parent=0 // pred_fallthru
    _
  // Predicated region
  $region10: #{resnet_generator_forward.30} parent=0 // pred_check
    _
  $region11: #{resnet_generator_forward.30} parent=0 // pred_check_branch
    %13 = sbr.rel (0) target = $region13
  $region12: #{resnet_generator_forward.30} parent=0 // pred_region
    _
  $region13: #{resnet_generator_forward.30} parent=0 // pred_fallthru
    _
  %v14 = vld [vmem:[%s0] sm:$0xf]
  %v15 = vld [vmem:[%s0 + $0x4] sm:$0xf]
  %v16 = vunpack.c.l.bf16 %v14
  %v17 = vunpack.c.l.bf16 %v15
  %v18 = vld [vmem:[%s1] sm:$0x1]
  %v20 = vlaneseq
  %v21 = vshrl.u32 %v20, 7
  %v22 = vsub.s32 0, %v21
  %v23 = vrot.slane %v18, %v22
  %v25 = vmul.f32 %v16, %v23
  %v26 = vmul.f32 %v17, %v23
  %v27 = vld [vmem:[%s2] sm:$0x1]
  %v29 = vlaneseq
  %v30 = vshrl.u32 %v29, 7
  %v31 = vsub.s32 0, %v30
  %v32 = vrot.slane %v27, %v31
  %v34 = vadd.f32 %v25, %v32
  %v35 = vadd.f32 %v26, %v32
  %v36 = vmax.f32 %v34, 0.0
  %v37 = vmax.f32 %v35, 0.0
  %v38 = vpack.c.bf16 %v37, %v36
  %v40 = vunpack.c.l.b16 %v38
  %v41 = vunpack.c.h.b16 %v38
  %v42 = vpack.c.b16 %v40, %v40
  %v43 = vpack.c.b16 %v41, %v41
  %46 = vst [vmem:[%s3] sm:$0xf] %v42
  %47 = vst [vmem:[%s3 + $0x4] sm:$0xf] %v43
  // Predicated region
  $region14: #{resnet_generator_forward.30} parent=0 // pred_check
    _
  $region15: #{resnet_generator_forward.30} parent=0 // pred_check_branch
    %49 = sbr.rel (0) target = $region17
  $region16: #{resnet_generator_forward.30} parent=0 // pred_region
    _
  $region17: #{resnet_generator_forward.30} parent=0 // pred_fallthru
    _
  // Predicated region
  $region18: #{resnet_generator_forward.30} parent=0 // pred_check
    _
  $region19: #{resnet_generator_forward.30} parent=0 // pred_check_branch
    %51 = sbr.rel (0) target = $region21
  $region20: #{resnet_generator_forward.30} parent=0 // pred_region
    _
  $region21: #{resnet_generator_forward.30} parent=0 // pred_fallthru
    _

// kernel: resnet_generator_forward.29
$region0: #{resnet_generator_forward.29}
  #allocation0 [shape = 'u32[]', space=smem, size = 0x4, offset = 0x4, fixed_abs, tag = 'smem constant byte address 0x4 - core index']
  #allocation1 [shape = 'u32[144,128]{1,0:T(1,128)}', space=vmem, size = 0x12000, scoped, tag = 'internal scratch']
  #allocation2 [shape = 'f32[32,128]{1,0:T(8,128)}', space=vmem, size = 0x4000, scoped, tag = 'scratch operand']
  %s0 = inlined_call_operand.vmem [shape: bf16[32,384], index: 0, kind: input, shape index: {}]
  %s1 = inlined_call_operand.vmem [shape: bf16[384,128], index: 1, kind: input, shape index: {}]
  %s2 = inlined_call_operand.vmem [shape: bf16[32,128], index: 2, kind: output, shape index: {0}]
  %s3 = inlined_call_operand.vmem [shape: f32[8,128], index: 3, kind: output, shape index: {1}]
  %s4 = inlined_call_operand.vmem [shape: f32[8,128], index: 4, kind: output, shape index: {2}]
  %5 = xla_tuple %s2, %s3, %s4
  %s6 = sld [smem:[#allocation0]]
  $region42: #{resnet_generator_forward.29} parent=0
    _
  %s8 = ssub.s32 1, %s6
  %s9 = scalar_select 0, %s8, %s6
  // Predicated region
  $region2: #{resnet_generator_forward.29} parent=0 // pred_check
    _
  $region3: #{resnet_generator_forward.29} parent=0 // pred_check_branch
    %11 = sbr.rel (0) target = $region5
  $region4: #{resnet_generator_forward.29} parent=0 // pred_region
    _
  $region5: #{resnet_generator_forward.29} parent=0 // pred_fallthru
    _
  // Predicated region
  $region6: #{resnet_generator_forward.29} parent=0 // pred_check
    _
  $region7: #{resnet_generator_forward.29} parent=0 // pred_check_branch
    %13 = sbr.rel (0) target = $region9
  $region8: #{resnet_generator_forward.29} parent=0 // pred_region
    _
  $region9: #{resnet_generator_forward.29} parent=0 // pred_fallthru
    _
  %p15 = scmp.eq.s32.totalorder 0, 0
  // Predicated region
  $region10: #{resnet_generator_forward.29} parent=0 // pred_check
    %p16 = pneg %p15
  $region11: #{resnet_generator_forward.29} parent=0 // pred_check_branch
    %18 = sbr.rel (%p16) target = $region13
  $region12: #{resnet_generator_forward.29} parent=0 // pred_region
    %19 = vst [vmem:[#allocation2] sm:$0xff] 0.0
    %20 = vst [vmem:[#allocation2 + $0x8] sm:$0xff] 0.0
    %21 = vst [vmem:[#allocation2 + $0x10] sm:$0xff] 0.0
    %22 = vst [vmem:[#allocation2 + $0x18] sm:$0xff] 0.0
  $region13: #{resnet_generator_forward.29} parent=0 // pred_fallthru
    _
  %v23 = vld [vmem:[#allocation2] sm:$0xff]
  %v24 = vld [vmem:[#allocation2 + $0x8] sm:$0xff]
  %v25 = vld [vmem:[#allocation2 + $0x10] sm:$0xff]
  %v26 = vld [vmem:[#allocation2 + $0x18] sm:$0xff]
  %v27 = vld [vmem:[%s0] sm:$0xff]
  %v28 = vld [vmem:[%s0 + $0x8] sm:$0xf]
  %v29 = vld [vmem:[%s0 + $0xc] sm:$0xff]
  %v30 = vld [vmem:[%s0 + $0x14] sm:$0xf]
  %v31 = vld [vmem:[%s0 + $0x18] sm:$0xff]
  %v32 = vld [vmem:[%s0 + $0x20] sm:$0xf]
  %v33 = vld [vmem:[%s0 + $0x24] sm:$0xff]
  %v34 = vld [vmem:[%s0 + $0x2c] sm:$0xf]
  %v35 = vld [vmem:[%s1] sm:$0xf]
  %v36 = vld [vmem:[%s1 + $0x4] sm:$0xf]
  %v37 = vld [vmem:[%s1 + $0x8] sm:$0xf]
  %v38 = vld [vmem:[%s1 + $0xc] sm:$0xf]
  %v39 = vld [vmem:[%s1 + $0x10] sm:$0xf]
  %v40 = vld [vmem:[%s1 + $0x14] sm:$0xf]
  %v41 = vld [vmem:[%s1 + $0x18] sm:$0xf]
  %v42 = vld [vmem:[%s1 + $0x1c] sm:$0xf]
  %v43 = vld [vmem:[%s1 + $0x20] sm:$0xf]
  %v44 = vld [vmem:[%s1 + $0x24] sm:$0xf]
  %v45 = vld [vmem:[%s1 + $0x28] sm:$0xf]
  %v46 = vld [vmem:[%s1 + $0x2c] sm:$0xf]
  %v47 = vld [vmem:[%s1 + $0x30] sm:$0xf]
  %v48 = vld [vmem:[%s1 + $0x34] sm:$0xf]
  %v49 = vld [vmem:[%s1 + $0x38] sm:$0xf]
  %v50 = vld [vmem:[%s1 + $0x3c] sm:$0xf]
  %v51 = vld [vmem:[%s1 + $0x40] sm:$0xf]
  %v52 = vld [vmem:[%s1 + $0x44] sm:$0xf]
  %v53 = vld [vmem:[%s1 + $0x48] sm:$0xf]
  %v54 = vld [vmem:[%s1 + $0x4c] sm:$0xf]
  %v55 = vld [vmem:[%s1 + $0x50] sm:$0xf]
  %v56 = vld [vmem:[%s1 + $0x54] sm:$0xf]
  %v57 = vld [vmem:[%s1 + $0x58] sm:$0xf]
  %v58 = vld [vmem:[%s1 + $0x5c] sm:$0xf]
  %v59 = vld [vmem:[%s1 + $0x60] sm:$0xf]
  %v60 = vld [vmem:[%s1 + $0x64] sm:$0xf]
  %v61 = vld [vmem:[%s1 + $0x68] sm:$0xf]
  %v62 = vld [vmem:[%s1 + $0x6c] sm:$0xf]
  %v63 = vld [vmem:[%s1 + $0x70] sm:$0xf]
  %v64 = vld [vmem:[%s1 + $0x74] sm:$0xf]
  %v65 = vld [vmem:[%s1 + $0x78] sm:$0xf]
  %v66 = vld [vmem:[%s1 + $0x7c] sm:$0xf]
  %v67 = vld [vmem:[%s1 + $0x80] sm:$0xf]
  %v68 = vld [vmem:[%s1 + $0x84] sm:$0xf]
  %v69 = vld [vmem:[%s1 + $0x88] sm:$0xf]
  %v70 = vld [vmem:[%s1 + $0x8c] sm:$0xf]
  %v71 = vld [vmem:[%s1 + $0x90] sm:$0xf]
  %v72 = vld [vmem:[%s1 + $0x94] sm:$0xf]
  %v73 = vld [vmem:[%s1 + $0x98] sm:$0xf]
  %v74 = vld [vmem:[%s1 + $0x9c] sm:$0xf]
  %v75 = vld [vmem:[%s1 + $0xa0] sm:$0xf]
  %v76 = vld [vmem:[%s1 + $0xa4] sm:$0xf]
  %v77 = vld [vmem:[%s1 + $0xa8] sm:$0xf]
  %v78 = vld [vmem:[%s1 + $0xac] sm:$0xf]
  %v79 = vld [vmem:[%s1 + $0xb0] sm:$0xf]
  %v80 = vld [vmem:[%s1 + $0xb4] sm:$0xf]
  %v81 = vld [vmem:[%s1 + $0xb8] sm:$0xf]
  %v82 = vld [vmem:[%s1 + $0xbc] sm:$0xf]
  %v91 = vunpack.c.l.b16 %v27
  %v92 = vunpack.c.h.b16 %v27
  %v93 = vunpack.c.l.b16 %v28
  %v94 = vunpack.c.l.b16 %v29
  %v95 = vunpack.c.h.b16 %v29
  %v96 = vunpack.c.l.b16 %v30
  %v97 = vunpack.c.l.b16 %v31
  %v98 = vunpack.c.h.b16 %v31
  %v99 = vunpack.c.l.b16 %v32
  %v100 = vunpack.c.l.b16 %v33
  %v101 = vunpack.c.h.b16 %v33
  %v102 = vunpack.c.l.b16 %v34
  %v103 = vpack.c.b16 %v94, %v91
  %v104 = vpack.c.b16 %v95, %v92
  %v105 = vpack.c.b16 %v96, %v93
  %v106 = vpack.c.b16 %v100, %v97
  %v107 = vpack.c.b16 %v101, %v98
  %v108 = vpack.c.b16 %v102, %v99
  %v163 = vunpack.c.l.b16 %v35
  %v164 = vunpack.c.l.b16 %v36
  %v165 = vunpack.c.l.b16 %v37
  %v166 = vunpack.c.l.b16 %v38
  %v167 = vunpack.c.l.b16 %v39
  %v168 = vunpack.c.l.b16 %v40
  %v169 = vunpack.c.l.b16 %v41
  %v170 = vunpack.c.l.b16 %v42
  %v171 = vunpack.c.l.b16 %v43
  %v172 = vunpack.c.l.b16 %v44
  %v173 = vunpack.c.l.b16 %v45
  %v174 = vunpack.c.l.b16 %v46
  %v175 = vunpack.c.l.b16 %v47
  %v176 = vunpack.c.l.b16 %v48
  %v177 = vunpack.c.l.b16 %v49
  %v178 = vunpack.c.l.b16 %v50
  %v179 = vunpack.c.l.b16 %v51
  %v180 = vunpack.c.l.b16 %v52
  %v181 = vunpack.c.l.b16 %v53
  %v182 = vunpack.c.l.b16 %v54
  %v183 = vunpack.c.l.b16 %v55
  %v184 = vunpack.c.l.b16 %v56
  %v185 = vunpack.c.l.b16 %v57
  %v186 = vunpack.c.l.b16 %v58
  %v187 = vunpack.c.l.b16 %v59
  %v188 = vunpack.c.l.b16 %v60
  %v189 = vunpack.c.l.b16 %v61
  %v190 = vunpack.c.l.b16 %v62
  %v191 = vunpack.c.l.b16 %v63
  %v192 = vunpack.c.l.b16 %v64
  %v193 = vunpack.c.l.b16 %v65
  %v194 = vunpack.c.l.b16 %v66
  %v195 = vunpack.c.l.b16 %v67
  %v196 = vunpack.c.l.b16 %v68
  %v197 = vunpack.c.l.b16 %v69
  %v198 = vunpack.c.l.b16 %v70
  %v199 = vunpack.c.l.b16 %v71
  %v200 = vunpack.c.l.b16 %v72
  %v201 = vunpack.c.l.b16 %v73
  %v202 = vunpack.c.l.b16 %v74
  %v203 = vunpack.c.l.b16 %v75
  %v204 = vunpack.c.l.b16 %v76
  %v205 = vunpack.c.l.b16 %v77
  %v206 = vunpack.c.l.b16 %v78
  %v207 = vunpack.c.l.b16 %v79
  %v208 = vunpack.c.l.b16 %v80
  %v209 = vunpack.c.l.b16 %v81
  %v210 = vunpack.c.l.b16 %v82
  %v211 = vpack.c.b16 %v164, %v163
  %v212 = vpack.c.b16 %v166, %v165
  %v213 = vpack.c.b16 %v168, %v167
  %v214 = vpack.c.b16 %v170, %v169
  %v215 = vpack.c.b16 %v172, %v171
  %v216 = vpack.c.b16 %v174, %v173
  %v217 = vpack.c.b16 %v176, %v175
  %v218 = vpack.c.b16 %v178, %v177
  %v219 = vpack.c.b16 %v180, %v179
  %v220 = vpack.c.b16 %v182, %v181
  %v221 = vpack.c.b16 %v184, %v183
  %v222 = vpack.c.b16 %v186, %v185
  %v223 = vpack.c.b16 %v188, %v187
  %v224 = vpack.c.b16 %v190, %v189
  %v225 = vpack.c.b16 %v192, %v191
  %v226 = vpack.c.b16 %v194, %v193
  %v227 = vpack.c.b16 %v196, %v195
  %v228 = vpack.c.b16 %v198, %v197
  %v229 = vpack.c.b16 %v200, %v199
  %v230 = vpack.c.b16 %v202, %v201
  %v231 = vpack.c.b16 %v204, %v203
  %v232 = vpack.c.b16 %v206, %v205
  %v233 = vpack.c.b16 %v208, %v207
  %v234 = vpack.c.b16 %v210, %v209
  %259 = vmatprep.subr.bf16.mxu0 0
  %260 = vmatpush1.bf16.msra.mxu0 %v211
  %261 = vmatprep.subr.bf16.mxu0 0
  %262 = vmatpush1.bf16.msra.mxu0 %v212
  %263 = vmatprep.subr.bf16.mxu0 0
  %264 = vmatpush1.bf16.msra.mxu0 %v213
  %265 = vmatprep.subr.bf16.mxu0 0
  %266 = vmatpush1.bf16.msra.mxu0 %v214
  %267 = vmatprep.subr.bf16.mxu0 0
  %268 = vmatpush1.bf16.msra.mxu0 %v215
  %269 = vmatprep.subr.bf16.mxu0 0
  %270 = vmatpush1.bf16.msra.mxu0 %v216
  %271 = vmatprep.subr.bf16.mxu0 0
  %272 = vmatpush1.bf16.msra.mxu0 %v217
  %273 = vmatprep.subr.bf16.mxu0 0
  %274 = vmatpush1.bf16.msra.mxu0 %v218
  %275 = vmatprep.subr.bf16.mxu0 0
  %276 = vmatpush1.bf16.msra.mxu0 %v219
  %277 = vmatprep.subr.bf16.mxu0 0
  %278 = vmatpush1.bf16.msra.mxu0 %v220
  %279 = vmatprep.subr.bf16.mxu0 0
  %280 = vmatpush1.bf16.msra.mxu0 %v221
  %281 = vmatprep.subr.bf16.mxu0 0
  %282 = vmatpush1.bf16.msra.mxu0 %v222
  %283 = vmatprep.subr.bf16.mxu0 0
  %284 = vmatpush1.bf16.msra.mxu0 %v223
  %285 = vmatprep.subr.bf16.mxu0 0
  %286 = vmatpush1.bf16.msra.mxu0 %v224
  %287 = vmatprep.subr.bf16.mxu0 0
  %288 = vmatpush1.bf16.msra.mxu0 %v225
  %289 = vmatprep.subr.bf16.mxu0 0
  %290 = vmatpush1.bf16.msra.mxu0 %v226
  %291 = vmatprep.mubr.bf16.mxu0 %v104
  %292 = vmatmul.mubr.bf16.gmra.mrb[0].mxu0 %v103
  %v293 = vpop.f32.mrb[0].mxu0
  %v294 = vadd.f32 0.0, %v293
  %v295 = vpop.f32.mrb[0].mxu0
  %v296 = vpop.f32.mrb[0].mxu0
  %v297 = vadd.f32 0.0, %v296
  %v298 = vpop.f32.mrb[0].mxu0
  %299 = vmatprep.mubr.bf16.mxu0 %v107
  %300 = vmatmul.mubr.bf16.gmra.mrb[0].mxu0 %v106
  %v301 = vpop.f32.mrb[0].mxu0
  %v302 = vadd.f32 0.0, %v301
  %v303 = vpop.f32.mrb[0].mxu0
  %v304 = vpop.f32.mrb[0].mxu0
  %v305 = vadd.f32 0.0, %v304
  %v306 = vpop.f32.mrb[0].mxu0
  %307 = vdwg.mxu0
  %308 = vmatprep.subr.bf16.mxu0 0
  %309 = vmatpush1.bf16.msra.mxu0 %v227
  %310 = vmatprep.subr.bf16.mxu0 0
  %311 = vmatpush1.bf16.msra.mxu0 %v228
  %312 = vmatprep.subr.bf16.mxu0 0
  %313 = vmatpush1.bf16.msra.mxu0 %v229
  %314 = vmatprep.subr.bf16.mxu0 0
  %315 = vmatpush1.bf16.msra.mxu0 %v230
  %316 = vmatprep.subr.bf16.mxu0 0
  %317 = vmatpush1.bf16.msra.mxu0 %v231
  %318 = vmatprep.subr.bf16.mxu0 0
  %319 = vmatpush1.bf16.msra.mxu0 %v232
  %320 = vmatprep.subr.bf16.mxu0 0
  %321 = vmatpush1.bf16.msra.mxu0 %v233
  %322 = vmatprep.subr.bf16.mxu0 0
  %323 = vmatpush1.bf16.msra.mxu0 %v234
  %324 = vmatprep.subr.bf16.mxu0 0
  %325 = vmatpush1.bf16.msra.mxu0 0
  %326 = vmatprep.subr.bf16.mxu0 0
  %327 = vmatpush1.bf16.msra.mxu0 0
  %328 = vmatprep.subr.bf16.mxu0 0
  %329 = vmatpush1.bf16.msra.mxu0 0
  %330 = vmatprep.subr.bf16.mxu0 0
  %331 = vmatpush1.bf16.msra.mxu0 0
  %332 = vmatprep.subr.bf16.mxu0 0
  %333 = vmatpush1.bf16.msra.mxu0 0
  %334 = vmatprep.subr.bf16.mxu0 0
  %335 = vmatpush1.bf16.msra.mxu0 0
  %336 = vmatprep.subr.bf16.mxu0 0
  %337 = vmatpush1.bf16.msra.mxu0 0
  %338 = vmatprep.subr.bf16.mxu0 0
  %339 = vmatpush1.bf16.msra.mxu0 0
  %340 = vmatprep.mubr.bf16.mxu0 0
  %341 = vmatmul.mubr.bf16.gmra.mrb[0].mxu0 %v105
  %v342 = vpop.f32.mrb[0].mxu0
  %v343 = vadd.f32 %v294, %v342
  %v344 = vpop.f32.mrb[0].mxu0
  %v345 = vpop.f32.mrb[0].mxu0
  %v346 = vadd.f32 %v297, %v345
  %v347 = vpop.f32.mrb[0].mxu0
  %348 = vmatprep.mubr.bf16.mxu0 0
  %349 = vmatmul.mubr.bf16.gmra.mrb[0].mxu0 %v108
  %v350 = vpop.f32.mrb[0].mxu0
  %v351 = vadd.f32 %v302, %v350
  %v352 = vpop.f32.mrb[0].mxu0
  %v353 = vpop.f32.mrb[0].mxu0
  %v354 = vadd.f32 %v305, %v353
  %v355 = vpop.f32.mrb[0].mxu0
  %356 = vdwg.mxu0
  %v357 = vadd.f32 %v23, %v343
  %v358 = vadd.f32 %v24, %v346
  %v359 = vadd.f32 %v25, %v351
  %v360 = vadd.f32 %v26, %v354
  %361 = vst [vmem:[#allocation2] sm:$0xff] %v357
  %362 = vst [vmem:[#allocation2 + $0x8] sm:$0xff] %v358
  %363 = vst [vmem:[#allocation2 + $0x10] sm:$0xff] %v359
  %364 = vst [vmem:[#allocation2 + $0x18] sm:$0xff] %v360
  // Predicated region
  $region14: #{resnet_generator_forward.29} parent=0 // pred_check
    %p365 = pneg %p15
  $region15: #{resnet_generator_forward.29} parent=0 // pred_check_branch
    %367 = sbr.rel (%p365) target = $region17
  $region16: #{resnet_generator_forward.29} parent=0 // pred_region
    %v368 = vld [vmem:[#allocation2] sm:$0xff]
    %v369 = vld [vmem:[#allocation2 + $0x8] sm:$0xff]
    %v370 = vld [vmem:[#allocation2 + $0x10] sm:$0xff]
    %v371 = vld [vmem:[#allocation2 + $0x18] sm:$0xff]
    %v372 = vpack.c.bf16 %v369, %v368
    %v373 = vpack.c.bf16 %v371, %v370
    %v376 = vunpack.c.l.b16 %v372
    %v377 = vunpack.c.h.b16 %v372
    %v378 = vunpack.c.l.b16 %v373
    %v379 = vunpack.c.h.b16 %v373
    %v380 = vpack.c.b16 %v376, %v376
    %v381 = vpack.c.b16 %v377, %v377
    %v382 = vpack.c.b16 %v378, %v378
    %v383 = vpack.c.b16 %v379, %v379
    %388 = vst [vmem:[%s2] sm:$0xf] %v380
    %389 = vst [vmem:[%s2 + $0x4] sm:$0xf] %v381
    %390 = vst [vmem:[%s2 + $0x8] sm:$0xf] %v382
    %391 = vst [vmem:[%s2 + $0xc] sm:$0xf] %v383
    %v392 = vadd.f32 %v368, %v369
    %v393 = vadd.f32 %v392, %v370
    %v394 = vadd.f32 %v393, %v371
    %v395 = vrot.slane %v394, 4
    %v396 = vadd.f32 %v394, %v395
    %v397 = vrot.slane %v396, 2
    %v398 = vadd.f32 %v396, %v397
    %v399 = vrot.slane %v398, 1
    %v400 = vadd.f32 %v398, %v399
    %v401 = vmul.f32 %v368, %v368
    %v402 = vmul.f32 %v369, %v369
    %v403 = vmul.f32 %v370, %v370
    %v404 = vmul.f32 %v371, %v371
    %v405 = vadd.f32 %v401, %v402
    %v406 = vadd.f32 %v405, %v403
    %v407 = vadd.f32 %v406, %v404
    %v408 = vrot.slane %v407, 4
    %v409 = vadd.f32 %v407, %v408
    %v410 = vrot.slane %v409, 2
    %v411 = vadd.f32 %v409, %v410
    %v412 = vrot.slane %v411, 1
    %v413 = vadd.f32 %v411, %v412
    %414 = vst [vmem:[%s3] sm:$0xff] %v400
    %415 = vst [vmem:[%s4] sm:$0xff] %v413
  $region17: #{resnet_generator_forward.29} parent=0 // pred_fallthru
    _
  // Predicated region
  $region18: #{resnet_generator_forward.29} parent=0 // pred_check
    _
  $region19: #{resnet_generator_forward.29} parent=0 // pred_check_branch
    %417 = sbr.rel (0) target = $region21
  $region20: #{resnet_generator_forward.29} parent=0 // pred_region
    _
  $region21: #{resnet_generator_forward.29} parent=0 // pred_fallthru
    _
  // Predicated region
  $region22: #{resnet_generator_forward.29} parent=0 // pred_check
    _
  $region23: #{resnet_generator_forward.29} parent=0 // pred_check_branch
    %419 = sbr.rel (0) target = $region25
  $region24: #{resnet_generator_forward.29} parent=0 // pred_region
    _
  $region25: #{resnet_generator_forward.29} parent=0 // pred_fallthru
    _
  // Predicated region
  $region26: #{resnet_generator_forward.29} parent=0 // pred_check
    _
  $region27: #{resnet_generator_forward.29} parent=0 // pred_check_branch
    %421 = sbr.rel (0) target = $region29
  $region28: #{resnet_generator_forward.29} parent=0 // pred_region
    _
  $region29: #{resnet_generator_forward.29} parent=0 // pred_fallthru
    _
  // Predicated region
  $region30: #{resnet_generator_forward.29} parent=0 // pred_check
    _
  $region31: #{resnet_generator_forward.29} parent=0 // pred_check_branch
    %423 = sbr.rel (0) target = $region33
  $region32: #{resnet_generator_forward.29} parent=0 // pred_region
    _
  $region33: #{resnet_generator_forward.29} parent=0 // pred_fallthru
    _
  // Predicated region
  $region34: #{resnet_generator_forward.29} parent=0 // pred_check
    _
  $region35: #{resnet_generator_forward.29} parent=0 // pred_check_branch
    %425 = sbr.rel (0) target = $region37
  $region36: #{resnet_generator_forward.29} parent=0 // pred_region
    _
  $region37: #{resnet_generator_forward.29} parent=0 // pred_fallthru
    _
  // Predicated region
  $region38: #{resnet_generator_forward.29} parent=0 // pred_check
    _
  $region39: #{resnet_generator_forward.29} parent=0 // pred_check_branch
    %427 = sbr.rel (0) target = $region41
  $region40: #{resnet_generator_forward.29} parent=0 // pred_region
    _
  $region41: #{resnet_generator_forward.29} parent=0 // pred_fallthru
    _

// kernel: resnet_generator_forward.31
$region0: #{resnet_generator_forward.31}
  #allocation0 [shape = 'u32[]', space=smem, size = 0x4, offset = 0x4, fixed_abs, tag = 'smem constant byte address 0x4 - core index']
  #allocation1 [shape = 'u32[144,128]{1,0:T(1,128)}', space=vmem, size = 0x12000, scoped, tag = 'internal scratch']
  #allocation2 [shape = 'f32[32,128]{1,0:T(8,128)}', space=vmem, size = 0x4000, scoped, tag = 'scratch operand']
  %s0 = inlined_call_operand.vmem [shape: bf16[32,640], index: 0, kind: input, shape index: {}]
  %s1 = inlined_call_operand.vmem [shape: bf16[640,128], index: 1, kind: input, shape index: {}]
  %s2 = inlined_call_operand.vmem [shape: bf16[32,128], index: 2, kind: output, shape index: {0}]
  %s3 = inlined_call_operand.vmem [shape: f32[8,128], index: 3, kind: output, shape index: {1}]
  %s4 = inlined_call_operand.vmem [shape: f32[8,128], index: 4, kind: output, shape index: {2}]
  %5 = xla_tuple %s2, %s3, %s4
  %s6 = sld [smem:[#allocation0]]
  $region106: #{resnet_generator_forward.31} parent=0
    _
  %s8 = ssub.s32 1, %s6
  %s9 = scalar_select 0, %s8, %s6
  $region1: #{resnet_generator_forward.31} parent=0
    #allocation3 [shape = 'u8[16384]{0}', space=vmem, size = 0x4000, scoped, tag = 'input window, operand 0']
    loop: start=0, step=1, limit=7
    $region2: #{resnet_generator_forward.31} parent=1 // loop_pre_header
      _
    $region3: #{resnet_generator_forward.31} parent=1 // loop_header
      %s11 = sphi 0, %s15
      %p12 = scmp.ge.s32.totalorder %s11, 7
      %s18 = sphi 0, %s37
      %s19 = sphi 0, %s33
      %s20 = sphi 0, %s29
      %s21 = sphi 0, %s18
      %s22 = sphi 0, %s19
      %s23 = sphi 0, %s20
      %s24 = sphi 0, %s21
      %s25 = sphi 0, %s22
      %s26 = sphi 0, %s23
      %s42 = sphi 0, %s44
      %s45 = sphi 0, %s42
      %s46 = sphi 0, %s45
      %s62 = sphi 0, %s46
      %s70 = sphi 0, %s72
      %s73 = sphi 0, %s70
      %s74 = sphi 0, %s73
      %s90 = sphi 0, %s74
      %s98 = sphi 0, %s100
      %s101 = sphi 0, %s98
      %s102 = sphi 0, %s101
      %s118 = sphi 0, %s102
      %s126 = sphi 0, %s128
      %s129 = sphi 0, %s126
      %s130 = sphi 0, %s129
      %s146 = sphi 0, %s130
      %s154 = sphi 0, %s156
      %s157 = sphi 0, %s154
      %s158 = sphi 0, %s157
      %s174 = sphi 0, %s158
    $region4: #{resnet_generator_forward.31} parent=1 // loop_header_branch
      %14 = sbr.rel (%p12) target = $region8
    $region5: #{resnet_generator_forward.31} parent=1 // loop_body
      %s16 = ssub.s32 %s11, 1
      %s17 = ssub.s32 %s11, 2
      %s27 = sadd.s32 1, %s20
      %p28 = scmp.ge.s32.totalorder %s27, 5
      %s29 = scalar_select %p28, 0, %s27
      %s30 = sadd.s32 1, %s19
      %s31 = scalar_select %p28, %s30, %s19
      %p32 = scmp.ge.s32.totalorder %s31, 1
      %s33 = scalar_select %p32, 0, %s31
      %s34 = sadd.s32 1, %s18
      %s35 = scalar_select %p32, %s34, %s18
      %p36 = scmp.ge.s32.totalorder %s35, 1
      %s37 = scalar_select %p36, 0, %s35
      %s38 = ssub.s32 %s18, %s37
      %s39 = ssub.s32 %s20, %s29
      %s40 = sor.u32 %s38, %s39
      %p41 = scmp.eq.s32.totalorder %s40, 0
      %s43 = sadd.s32 %s42, 1
      %s44 = scalar_select %p41, %s42, %s43
      %p47 = pneg %p41
      %p48 = scmp.eq.s32.totalorder %s11, 4
      %p49 = por %p47, %p48
      %p50 = scmp.ne.s32.totalorder %s42, %s45
      %p51 = scmp.eq.s32.totalorder %s11, 0
      %p52 = por %p50, %p51
      %p53 = scmp.ne.s32.totalorder %s42, %s45
      %p54 = scmp.eq.s32.totalorder %s16, 4
      %p55 = por %p53, %p54
      %p56 = scmp.ne.s32.totalorder %s45, %s46
      %p57 = scmp.eq.s32.totalorder %s16, 0
      %p58 = por %p56, %p57
      %p59 = scmp.ne.s32.totalorder %s45, %s46
      %p60 = scmp.eq.s32.totalorder %s17, 4
      %p61 = por %p59, %p60
      %p63 = scmp.ne.s32.totalorder %s46, %s62
      %p64 = scmp.eq.s32.totalorder %s17, 0
      %p65 = por %p63, %p64
      %s66 = ssub.s32 %s20, %s29
      %s67 = ssub.s32 %s19, %s33
      %s68 = sor.u32 %s66, %s67
      %p69 = scmp.eq.s32.totalorder %s68, 0
      %s71 = sadd.s32 %s70, 1
      %s72 = scalar_select %p69, %s70, %s71
      %p75 = pneg %p69
      %p76 = scmp.eq.s32.totalorder %s11, 4
      %p77 = por %p75, %p76
      %p78 = scmp.ne.s32.totalorder %s70, %s73
      %p79 = scmp.eq.s32.totalorder %s11, 0
      %p80 = por %p78, %p79
      %p81 = scmp.ne.s32.totalorder %s70, %s73
      %p82 = scmp.eq.s32.totalorder %s16, 4
      %p83 = por %p81, %p82
      %p84 = scmp.ne.s32.totalorder %s73, %s74
      %p85 = scmp.eq.s32.totalorder %s16, 0
      %p86 = por %p84, %p85
      %p87 = scmp.ne.s32.totalorder %s73, %s74
      %p88 = scmp.eq.s32.totalorder %s17, 4
      %p89 = por %p87, %p88
      %p91 = scmp.ne.s32.totalorder %s74, %s90
      %p92 = scmp.eq.s32.totalorder %s17, 0
      %p93 = por %p91, %p92
      %s94 = ssub.s32 %s18, %s37
      %s95 = ssub.s32 %s19, %s33
      %s96 = sor.u32 %s94, %s95
      %p97 = scmp.eq.s32.totalorder %s96, 0
      %s99 = sadd.s32 %s98, 1
      %s100 = scalar_select %p97, %s98, %s99
      %p103 = pneg %p97
      %p104 = scmp.eq.s32.totalorder %s11, 4
      %p105 = por %p103, %p104
      %p106 = scmp.ne.s32.totalorder %s98, %s101
      %p107 = scmp.eq.s32.totalorder %s11, 0
      %p108 = por %p106, %p107
      %p109 = scmp.ne.s32.totalorder %s98, %s101
      %p110 = scmp.eq.s32.totalorder %s16, 4
      %p111 = por %p109, %p110
      %p112 = scmp.ne.s32.totalorder %s101, %s102
      %p113 = scmp.eq.s32.totalorder %s16, 0
      %p114 = por %p112, %p113
      %p115 = scmp.ne.s32.totalorder %s101, %s102
      %p116 = scmp.eq.s32.totalorder %s17, 4
      %p117 = por %p115, %p116
      %p119 = scmp.ne.s32.totalorder %s102, %s118
      %p120 = scmp.eq.s32.totalorder %s17, 0
      %p121 = por %p119, %p120
      %s122 = ssub.s32 %s18, %s37
      %s123 = ssub.s32 %s19, %s33
      %s124 = sor.u32 %s122, %s123
      %p125 = scmp.eq.s32.totalorder %s124, 0
      %s127 = sadd.s32 %s126, 1
      %s128 = scalar_select %p125, %s126, %s127
      %p131 = pneg %p125
      %p132 = scmp.eq.s32.totalorder %s11, 4
      %p133 = por %p131, %p132
      %p134 = scmp.ne.s32.totalorder %s126, %s129
      %p135 = scmp.eq.s32.totalorder %s11, 0
      %p136 = por %p134, %p135
      %p137 = scmp.ne.s32.totalorder %s126, %s129
      %p138 = scmp.eq.s32.totalorder %s16, 4
      %p139 = por %p137, %p138
      %p140 = scmp.ne.s32.totalorder %s129, %s130
      %p141 = scmp.eq.s32.totalorder %s16, 0
      %p142 = por %p140, %p141
      %p143 = scmp.ne.s32.totalorder %s129, %s130
      %p144 = scmp.eq.s32.totalorder %s17, 4
      %p145 = por %p143, %p144
      %p147 = scmp.ne.s32.totalorder %s130, %s146
      %p148 = scmp.eq.s32.totalorder %s17, 0
      %p149 = por %p147, %p148
      %s150 = ssub.s32 %s18, %s37
      %s151 = ssub.s32 %s19, %s33
      %s152 = sor.u32 %s150, %s151
      %p153 = scmp.eq.s32.totalorder %s152, 0
      %s155 = sadd.s32 %s154, 1
      %s156 = scalar_select %p153, %s154, %s155
      %p159 = pneg %p153
      %p160 = scmp.eq.s32.totalorder %s11, 4
      %p161 = por %p159, %p160
      %p162 = scmp.ne.s32.totalorder %s154, %s157
      %p163 = scmp.eq.s32.totalorder %s11, 0
      %p164 = por %p162, %p163
      %p165 = scmp.ne.s32.totalorder %s154, %s157
      %p166 = scmp.eq.s32.totalorder %s16, 4
      %p167 = por %p165, %p166
      %p168 = scmp.ne.s32.totalorder %s157, %s158
      %p169 = scmp.eq.s32.totalorder %s16, 0
      %p170 = por %p168, %p169
      %p171 = scmp.ne.s32.totalorder %s157, %s158
      %p172 = scmp.eq.s32.totalorder %s17, 4
      %p173 = por %p171, %p172
      %p175 = scmp.ne.s32.totalorder %s158, %s174
      %p176 = scmp.eq.s32.totalorder %s17, 0
      %p177 = por %p175, %p176
      %p178 = scmp.le.s32.totalorder 1, %s11
      %p179 = scmp.lt.s32.totalorder %s11, 6
      %p180 = pnand %p178, %p179
      %p181 = pneg %p180
      // Predicated region
      $region9: #{resnet_generator_forward.31} parent=5 // pred_check
        _
      $region10: #{resnet_generator_forward.31} parent=5 // pred_check_branch
        %183 = sbr.rel (%p180) target = $region12
      $region11: #{resnet_generator_forward.31} parent=5 // pred_region
        %s184 = ssub.s32 %s11, 1
      $region12: #{resnet_generator_forward.31} parent=5 // pred_fallthru
        _
      %p185 = scmp.lt.s32.totalorder %s11, 5
      // Predicated region
      $region13: #{resnet_generator_forward.31} parent=5 // pred_check
        %p186 = pneg %p185
      $region14: #{resnet_generator_forward.31} parent=5 // pred_check_branch
        %188 = sbr.rel (%p186) target = $region16
      $region15: #{resnet_generator_forward.31} parent=5 // pred_region
        // Predicated region
        $region17: #{resnet_generator_forward.31} parent=15 // pred_check
          %p189 = pneg %p52
        $region18: #{resnet_generator_forward.31} parent=15 // pred_check_branch
          %191 = sbr.rel (%p189) target = $region20
        $region19: #{resnet_generator_forward.31} parent=15 // pred_region
          %s192 = sand.u32 %s42, 1
          %s193 = sand.u32 %s42, 1
          %s194 = smul.addr %s193, 16
          %s195 = scalar_lea.vmem [#allocation3], %s194
          %s196 = smul.u32 4, %s18
          %s197 = smul.addr %s196, 5
          %s198 = sadd.s32 %s20, %s197
          %s199 = smul.addr %s198, 4
          %s200 = scalar_lea.vmem %s0, %s199
          // Predicated region
          $region21: #{resnet_generator_forward.31} parent=19 // pred_check
            _
          $region22: #{resnet_generator_forward.31} parent=19 // pred_check_branch
            %202 = sbr.rel (0) target = $region24
          $region23: #{resnet_generator_forward.31} parent=19 // pred_region
            // Predicated region
            $region25: #{resnet_generator_forward.31} parent=23 // pred_check
              _
            $region26: #{resnet_generator_forward.31} parent=23 // pred_check_branch
              %204 = sbr.rel target = $region28
            $region27: #{resnet_generator_forward.31} parent=23 // pred_region
              // Predicated region
              $region40: #{resnet_generator_forward.31} parent=27 // pred_check
                _
              $region41: #{resnet_generator_forward.31} parent=27 // pred_check_branch
                %225 = sbr.rel (0) target = $region43
              $region42: #{resnet_generator_forward.31} parent=27 // pred_region
                loop: start=0, step=1, limit=1
                $region44: #{resnet_generator_forward.31} parent=42 // loop_pre_header
                  _
                $region45: #{resnet_generator_forward.31} parent=42 // loop_header
                  %s227 = sphi 0, %s231
                  %p228 = scmp.ge.s32.totalorder %s227, 1
                  %s232 = sphi %s200, %s200
                  %s233 = sphi %s195, %s195
                $region46: #{resnet_generator_forward.31} parent=42 // loop_header_branch
                  %230 = sbr.rel (%p228) target = $region50
                $region47: #{resnet_generator_forward.31} parent=42 // loop_body
                  _
                $region48: #{resnet_generator_forward.31} parent=42 // loop_footer
                  %s231 = sadd.s32 1, %s227
                $region49: #{resnet_generator_forward.31} parent=42 // loop_footer_branch
                  %226 = sbr.rel target = $region45
                $region50: #{resnet_generator_forward.31} parent=42 // loop_exit
                  _
                loop: start=0, step=1, limit=1
                $region51: #{resnet_generator_forward.31} parent=42 // loop_pre_header
                  _
                $region52: #{resnet_generator_forward.31} parent=42 // loop_header
                  %s236 = sphi 0, %s240
                  %p237 = scmp.ge.s32.totalorder %s236, 1
                  %s241 = sphi %s200, %s200
                  %s242 = sphi %s195, %s195
                $region53: #{resnet_generator_forward.31} parent=42 // loop_header_branch
                  %239 = sbr.rel (%p237) target = $region57
                $region54: #{resnet_generator_forward.31} parent=42 // loop_body
                  %v243 = vld [vmem:[%s241] sm:$0xf]
                  %244 = vst [vmem:[%s242] sm:$0xf] %v243
                  %v245 = vld [vmem:[%s241 + $0x14] sm:$0xf]
                  %246 = vst [vmem:[%s242 + $0x4] sm:$0xf] %v245
                  %v247 = vld [vmem:[%s241 + $0x28] sm:$0xf]
                  %248 = vst [vmem:[%s242 + $0x8] sm:$0xf] %v247
                  %v249 = vld [vmem:[%s241 + $0x3c] sm:$0xf]
                  %250 = vst [vmem:[%s242 + $0xc] sm:$0xf] %v249
                $region55: #{resnet_generator_forward.31} parent=42 // loop_footer
                  %s240 = sadd.s32 1, %s236
                $region56: #{resnet_generator_forward.31} parent=42 // loop_footer_branch
                  %235 = sbr.rel target = $region52
                $region57: #{resnet_generator_forward.31} parent=42 // loop_exit
                  _
              $region43: #{resnet_generator_forward.31} parent=27 // pred_fallthru
                _
            $region28: #{resnet_generator_forward.31} parent=23 // pred_fallthru
              _
            // Predicated region
            $region29: #{resnet_generator_forward.31} parent=23 // pred_check
              _
            $region30: #{resnet_generator_forward.31} parent=23 // pred_check_branch
              %206 = sbr.rel (0) target = $region32
            $region31: #{resnet_generator_forward.31} parent=23 // pred_region
              loop: start=0, step=1, limit=1
              $region33: #{resnet_generator_forward.31} parent=31 // loop_pre_header
                _
              $region34: #{resnet_generator_forward.31} parent=31 // loop_header
                %s209 = sphi 0, %s213
                %p210 = scmp.ge.s32.totalorder %s209, 1
                %s214 = sphi %s200, %s200
                %s215 = sphi %s195, %s195
              $region35: #{resnet_generator_forward.31} parent=31 // loop_header_branch
                %212 = sbr.rel (%p210) target = $region39
              $region36: #{resnet_generator_forward.31} parent=31 // loop_body
                %v216 = vld [vmem:[%s214] sm:$0xf]
                %217 = vst [vmem:[%s215] sm:$0xf] %v216
                %v218 = vld [vmem:[%s214 + $0x14] sm:$0xf]
                %219 = vst [vmem:[%s215 + $0x4] sm:$0xf] %v218
                %v220 = vld [vmem:[%s214 + $0x28] sm:$0xf]
                %221 = vst [vmem:[%s215 + $0x8] sm:$0xf] %v220
                %v222 = vld [vmem:[%s214 + $0x3c] sm:$0xf]
                %223 = vst [vmem:[%s215 + $0xc] sm:$0xf] %v222
              $region37: #{resnet_generator_forward.31} parent=31 // loop_footer
                %s213 = sadd.s32 1, %s209
              $region38: #{resnet_generator_forward.31} parent=31 // loop_footer_branch
                %208 = sbr.rel target = $region34
              $region39: #{resnet_generator_forward.31} parent=31 // loop_exit
                _
            $region32: #{resnet_generator_forward.31} parent=23 // pred_fallthru
              _
          $region24: #{resnet_generator_forward.31} parent=19 // pred_fallthru
            _
          %251 = vnop
        $region20: #{resnet_generator_forward.31} parent=15 // pred_fallthru
          _
        // Predicated region
        $region58: #{resnet_generator_forward.31} parent=15 // pred_check
          %p252 = pneg %p80
        $region59: #{resnet_generator_forward.31} parent=15 // pred_check_branch
          %254 = sbr.rel (%p252) target = $region61
        $region60: #{resnet_generator_forward.31} parent=15 // pred_region
          %s255 = smul.u32 16, %s20
          %p256 = scmp.lt.s32.totalorder %s255, 79
          %s257 = scalar_select %p256, %s255, 79
          %p258 = scmp.lt.s32.totalorder %s19, 0
          %s259 = scalar_select %p258, %s19, 0
          %s260 = sadd.s32 %s259, %s257
          %s261 = smul.addr %s260, 4
          %s262 = scalar_lea.vmem %s1, %s261
          %s263 = smul.u32 16, %s20
        $region61: #{resnet_generator_forward.31} parent=15 // pred_fallthru
          _
      $region16: #{resnet_generator_forward.31} parent=5 // pred_fallthru
        _
      %p264 = scmp.le.s32.totalorder 1, %s11
      %p265 = scmp.lt.s32.totalorder %s11, 6
      %p266 = pnand %p264, %p265
      %p267 = pneg %p266
      // Predicated region
      $region62: #{resnet_generator_forward.31} parent=5 // pred_check
        _
      $region63: #{resnet_generator_forward.31} parent=5 // pred_check_branch
        %269 = sbr.rel (%p266) target = $region65
      $region64: #{resnet_generator_forward.31} parent=5 // pred_region
        %s270 = ssub.s32 %s11, 1
        %s271 = sand.u32 %s45, 1
        %s272 = sand.u32 %s45, 1
        %s273 = smul.addr %s272, 16
        %s274 = scalar_lea.vmem [#allocation3], %s273
        // Predicated region
        $region66: #{resnet_generator_forward.31} parent=64 // pred_check
          %p275 = pneg %p58
        $region67: #{resnet_generator_forward.31} parent=64 // pred_check_branch
          %277 = sbr.rel (%p275) target = $region69
        $region68: #{resnet_generator_forward.31} parent=64 // pred_region
          _
        $region69: #{resnet_generator_forward.31} parent=64 // pred_fallthru
          _
        %s278 = sand.u32 %s45, 1
        %s279 = sand.u32 %s45, 1
        %s280 = smul.addr %s279, 16
        %s281 = scalar_lea.vmem [#allocation3], %s280
        %p282 = pneg %p58
        %p283 = pneg %p55
        %s284 = smul.u32 16, %s23
        %p285 = scmp.lt.s32.totalorder %s284, 79
        %s286 = scalar_select %p285, %s284, 79
        %p287 = scmp.lt.s32.totalorder %s22, 0
        %s288 = scalar_select %p287, %s22, 0
        %s289 = sadd.s32 %s288, %s286
        %s290 = smul.addr %s289, 4
        %s291 = scalar_lea.vmem %s1, %s290
        %p292 = pneg %p86
        %p293 = pneg %p83
        %p294 = pneg %p114
        %p295 = pneg %p111
        %s296 = smul.u32 4, %s21
        %p297 = scmp.lt.s32.totalorder %s296, 3
        %s298 = scalar_select %p297, %s296, 3
        %p299 = scmp.lt.s32.totalorder %s22, 0
        %s300 = scalar_select %p299, %s22, 0
        %s301 = sadd.s32 %s300, %s298
        %s302 = smul.addr %s301, 4
        %s303 = scalar_lea.vmem %s2, %s302
        %p304 = pneg %p142
        %p305 = pneg %p139
        %p306 = scmp.lt.s32.totalorder %s21, 0
        %s307 = scalar_select %p306, %s21, 0
        %p308 = scmp.lt.s32.totalorder %s22, 0
        %s309 = scalar_select %p308, %s22, 0
        %s310 = sadd.s32 %s309, %s307
        %s311 = smul.addr %s310, 8
        %s312 = scalar_lea.vmem %s3, %s311
        %p313 = pneg %p170
        %p314 = pneg %p167
        %p315 = scmp.lt.s32.totalorder %s21, 0
        %s316 = scalar_select %p315, %s21, 0
        %p317 = scmp.lt.s32.totalorder %s22, 0
        %s318 = scalar_select %p317, %s22, 0
        %s319 = sadd.s32 %s318, %s316
        %s320 = smul.addr %s319, 8
        %s321 = scalar_lea.vmem %s4, %s320
        %s322 = smul.u32 4, %s21
        %s323 = smul.u32 16, %s23
        %p324 = scmp.lt.s32.totalorder %s323, 79
        %s325 = scalar_select %p324, %s323, 79
        %p326 = scmp.lt.s32.totalorder %s22, 0
        %s327 = scalar_select %p326, %s22, 0
        %s328 = sadd.s32 %s327, %s325
        %s329 = smul.addr %s328, 4
        %s330 = scalar_lea.vmem %s1, %s329
        %s331 = smul.u32 16, %s23
        %s332 = smul.u32 4, %s21
        %p333 = scmp.lt.s32.totalorder %s332, 3
        %s334 = scalar_select %p333, %s332, 3
        %p335 = scmp.lt.s32.totalorder %s22, 0
        %s336 = scalar_select %p335, %s22, 0
        %s337 = sadd.s32 %s336, %s334
        %s338 = smul.addr %s337, 4
        %s339 = scalar_lea.vmem %s2, %s338
        %s340 = smul.u32 4, %s21
        %p341 = scmp.lt.s32.totalorder %s21, 0
        %s342 = scalar_select %p341, %s21, 0
        %p343 = scmp.lt.s32.totalorder %s22, 0
        %s344 = scalar_select %p343, %s22, 0
        %s345 = sadd.s32 %s344, %s342
        %s346 = smul.addr %s345, 8
        %s347 = scalar_lea.vmem %s3, %s346
        %p348 = scmp.lt.s32.totalorder %s21, 0
        %s349 = scalar_select %p348, %s21, 0
        %p350 = scmp.lt.s32.totalorder %s22, 0
        %s351 = scalar_select %p350, %s22, 0
        %s352 = sadd.s32 %s351, %s349
        %s353 = smul.addr %s352, 8
        %s354 = scalar_lea.vmem %s4, %s353
        %p356 = scmp.eq.s32.totalorder %s23, 0
        // Predicated region
        $region70: #{resnet_generator_forward.31} parent=64 // pred_check
          %p357 = pneg %p356
        $region71: #{resnet_generator_forward.31} parent=64 // pred_check_branch
          %359 = sbr.rel (%p357) target = $region73
        $region72: #{resnet_generator_forward.31} parent=64 // pred_region
          %360 = vst [vmem:[#allocation2] sm:$0xff] 0.0
          %361 = vst [vmem:[#allocation2 + $0x8] sm:$0xff] 0.0
          %362 = vst [vmem:[#allocation2 + $0x10] sm:$0xff] 0.0
          %363 = vst [vmem:[#allocation2 + $0x18] sm:$0xff] 0.0
        $region73: #{resnet_generator_forward.31} parent=64 // pred_fallthru
          _
        %v364 = vld [vmem:[#allocation2] sm:$0xff]
        %v365 = vld [vmem:[#allocation2 + $0x8] sm:$0xff]
        %v366 = vld [vmem:[#allocation2 + $0x10] sm:$0xff]
        %v367 = vld [vmem:[#allocation2 + $0x18] sm:$0xff]
        %v368 = vld [vmem:[%s274] sm:$0xf]
        %v369 = vld [vmem:[%s274 + $0x4] sm:$0xf]
        %v370 = vld [vmem:[%s274 + $0x8] sm:$0xf]
        %v371 = vld [vmem:[%s274 + $0xc] sm:$0xf]
        %v372 = vld [vmem:[%s330] sm:$0xf]
        %v373 = vld [vmem:[%s330 + $0x4] sm:$0xf]
        %v374 = vld [vmem:[%s330 + $0x8] sm:$0xf]
        %v375 = vld [vmem:[%s330 + $0xc] sm:$0xf]
        %v376 = vld [vmem:[%s330 + $0x10] sm:$0xf]
        %v377 = vld [vmem:[%s330 + $0x14] sm:$0xf]
        %v378 = vld [vmem:[%s330 + $0x18] sm:$0xf]
        %v379 = vld [vmem:[%s330 + $0x1c] sm:$0xf]
        %v380 = vld [vmem:[%s330 + $0x20] sm:$0xf]
        %v381 = vld [vmem:[%s330 + $0x24] sm:$0xf]
        %v382 = vld [vmem:[%s330 + $0x28] sm:$0xf]
        %v383 = vld [vmem:[%s330 + $0x2c] sm:$0xf]
        %v384 = vld [vmem:[%s330 + $0x30] sm:$0xf]
        %v385 = vld [vmem:[%s330 + $0x34] sm:$0xf]
        %v386 = vld [vmem:[%s330 + $0x38] sm:$0xf]
        %v387 = vld [vmem:[%s330 + $0x3c] sm:$0xf]
        %v392 = vunpack.c.l.b16 %v368
        %v393 = vunpack.c.l.b16 %v369
        %v394 = vunpack.c.l.b16 %v370
        %v395 = vunpack.c.l.b16 %v371
        %v396 = vpack.c.b16 %v393, %v392
        %v397 = vpack.c.b16 %v395, %v394
        %v416 = vunpack.c.l.b16 %v372
        %v417 = vunpack.c.l.b16 %v373
        %v418 = vunpack.c.l.b16 %v374
        %v419 = vunpack.c.l.b16 %v375
        %v420 = vunpack.c.l.b16 %v376
        %v421 = vunpack.c.l.b16 %v377
        %v422 = vunpack.c.l.b16 %v378
        %v423 = vunpack.c.l.b16 %v379
        %v424 = vunpack.c.l.b16 %v380
        %v425 = vunpack.c.l.b16 %v381
        %v426 = vunpack.c.l.b16 %v382
        %v427 = vunpack.c.l.b16 %v383
        %v428 = vunpack.c.l.b16 %v384
        %v429 = vunpack.c.l.b16 %v385
        %v430 = vunpack.c.l.b16 %v386
        %v431 = vunpack.c.l.b16 %v387
        %v432 = vpack.c.b16 %v417, %v416
        %v433 = vpack.c.b16 %v419, %v418
        %v434 = vpack.c.b16 %v421, %v420
        %v435 = vpack.c.b16 %v423, %v422
        %v436 = vpack.c.b16 %v425, %v424
        %v437 = vpack.c.b16 %v427, %v426
        %v438 = vpack.c.b16 %v429, %v428
        %v439 = vpack.c.b16 %v431, %v430
        %448 = vmatprep.subr.bf16.mxu0 0
        %449 = vmatpush1.bf16.msra.mxu0 %v432
        %450 = vmatprep.subr.bf16.mxu0 0
        %451 = vmatpush1.bf16.msra.mxu0 %v433
        %452 = vmatprep.subr.bf16.mxu0 0
        %453 = vmatpush1.bf16.msra.mxu0 %v434
        %454 = vmatprep.subr.bf16.mxu0 0
        %455 = vmatpush1.bf16.msra.mxu0 %v435
        %456 = vmatprep.subr.bf16.mxu0 0
        %457 = vmatpush1.bf16.msra.mxu0 %v436
        %458 = vmatprep.subr.bf16.mxu0 0
        %459 = vmatpush1.bf16.msra.mxu0 %v437
        %460 = vmatprep.subr.bf16.mxu0 0
        %461 = vmatpush1.bf16.msra.mxu0 %v438
        %462 = vmatprep.subr.bf16.mxu0 0
        %463 = vmatpush1.bf16.msra.mxu0 %v439
        %464 = vmatprep.subr.bf16.mxu0 0
        %465 = vmatpush1.bf16.msra.mxu0 0
        %466 = vmatprep.subr.bf16.mxu0 0
        %467 = vmatpush1.bf16.msra.mxu0 0
        %468 = vmatprep.subr.bf16.mxu0 0
        %469 = vmatpush1.bf16.msra.mxu0 0
        %470 = vmatprep.subr.bf16.mxu0 0
        %471 = vmatpush1.bf16.msra.mxu0 0
        %472 = vmatprep.subr.bf16.mxu0 0
        %473 = vmatpush1.bf16.msra.mxu0 0
        %474 = vmatprep.subr.bf16.mxu0 0
        %475 = vmatpush1.bf16.msra.mxu0 0
        %476 = vmatprep.subr.bf16.mxu0 0
        %477 = vmatpush1.bf16.msra.mxu0 0
        %478 = vmatprep.subr.bf16.mxu0 0
        %479 = vmatpush1.bf16.msra.mxu0 0
        %480 = vmatprep.mubr.bf16.mxu0 0
        %481 = vmatmul.mubr.bf16.gmra.mrb[0].mxu0 %v396
        %v482 = vpop.f32.mrb[0].mxu0
        %v483 = vadd.f32 0.0, %v482
        %v484 = vpop.f32.mrb[0].mxu0
        %v485 = vpop.f32.mrb[0].mxu0
        %v486 = vadd.f32 0.0, %v485
        %v487 = vpop.f32.mrb[0].mxu0
        %488 = vmatprep.mubr.bf16.mxu0 0
        %489 = vmatmul.mubr.bf16.gmra.mrb[0].mxu0 %v397
        %v490 = vpop.f32.mrb[0].mxu0
        %v491 = vadd.f32 0.0, %v490
        %v492 = vpop.f32.mrb[0].mxu0
        %v493 = vpop.f32.mrb[0].mxu0
        %v494 = vadd.f32 0.0, %v493
        %v495 = vpop.f32.mrb[0].mxu0
        %496 = vdwg.mxu0
        %v497 = vadd.f32 %v364, %v483
        %v498 = vadd.f32 %v365, %v486
        %v499 = vadd.f32 %v366, %v491
        %v500 = vadd.f32 %v367, %v494
        %501 = vst [vmem:[#allocation2] sm:$0xff] %v497
        %502 = vst [vmem:[#allocation2 + $0x8] sm:$0xff] %v498
        %503 = vst [vmem:[#allocation2 + $0x10] sm:$0xff] %v499
        %504 = vst [vmem:[#allocation2 + $0x18] sm:$0xff] %v500
        %p505 = scmp.eq.s32.totalorder %s23, 4
        // Predicated region
        $region74: #{resnet_generator_forward.31} parent=64 // pred_check
          %p506 = pneg %p505
        $region75: #{resnet_generator_forward.31} parent=64 // pred_check_branch
          %508 = sbr.rel (%p506) target = $region77
        $region76: #{resnet_generator_forward.31} parent=64 // pred_region
          %v509 = vld [vmem:[#allocation2] sm:$0xff]
          %v510 = vld [vmem:[#allocation2 + $0x8] sm:$0xff]
          %v511 = vld [vmem:[#allocation2 + $0x10] sm:$0xff]
          %v512 = vld [vmem:[#allocation2 + $0x18] sm:$0xff]
          %v513 = vpack.c.bf16 %v510, %v509
          %v514 = vpack.c.bf16 %v512, %v511
          %v517 = vunpack.c.l.b16 %v513
          %v518 = vunpack.c.h.b16 %v513
          %v519 = vunpack.c.l.b16 %v514
          %v520 = vunpack.c.h.b16 %v514
          %v521 = vpack.c.b16 %v517, %v517
          %v522 = vpack.c.b16 %v518, %v518
          %v523 = vpack.c.b16 %v519, %v519
          %v524 = vpack.c.b16 %v520, %v520
          %529 = vst [vmem:[%s339] sm:$0xf] %v521
          %530 = vst [vmem:[%s339 + $0x4] sm:$0xf] %v522
          %531 = vst [vmem:[%s339 + $0x8] sm:$0xf] %v523
          %532 = vst [vmem:[%s339 + $0xc] sm:$0xf] %v524
          %v533 = vadd.f32 %v509, %v510
          %v534 = vadd.f32 %v533, %v511
          %v535 = vadd.f32 %v534, %v512
          %v536 = vrot.slane %v535, 4
          %v537 = vadd.f32 %v535, %v536
          %v538 = vrot.slane %v537, 2
          %v539 = vadd.f32 %v537, %v538
          %v540 = vrot.slane %v539, 1
          %v541 = vadd.f32 %v539, %v540
          %v542 = vmul.f32 %v509, %v509
          %v543 = vmul.f32 %v510, %v510
          %v544 = vmul.f32 %v511, %v511
          %v545 = vmul.f32 %v512, %v512
          %v546 = vadd.f32 %v542, %v543
          %v547 = vadd.f32 %v546, %v544
          %v548 = vadd.f32 %v547, %v545
          %v549 = vrot.slane %v548, 4
          %v550 = vadd.f32 %v548, %v549
          %v551 = vrot.slane %v550, 2
          %v552 = vadd.f32 %v550, %v551
          %v553 = vrot.slane %v552, 1
          %v554 = vadd.f32 %v552, %v553
          %555 = vst [vmem:[%s347] sm:$0xff] %v541
          %556 = vst [vmem:[%s354] sm:$0xff] %v554
        $region77: #{resnet_generator_forward.31} parent=64 // pred_fallthru
          _
        %s557 = smul.u32 4, %s21
        %p558 = scmp.lt.s32.totalorder %s557, 3
        %s559 = scalar_select %p558, %s557, 3
        %p560 = scmp.lt.s32.totalorder %s22, 0
        %s561 = scalar_select %p560, %s22, 0
        %s562 = sadd.s32 %s561, %s559
        %s563 = smul.addr %s562, 4
        %s564 = scalar_lea.vmem %s2, %s563
        %p565 = scmp.lt.s32.totalorder %s21, 0
        %s566 = scalar_select %p565, %s21, 0
        %p567 = scmp.lt.s32.totalorder %s22, 0
        %s568 = scalar_select %p567, %s22, 0
        %s569 = sadd.s32 %s568, %s566
        %s570 = smul.addr %s569, 8
        %s571 = scalar_lea.vmem %s3, %s570
        %p572 = scmp.lt.s32.totalorder %s21, 0
        %s573 = scalar_select %p572, %s21, 0
        %p574 = scmp.lt.s32.totalorder %s22, 0
        %s575 = scalar_select %p574, %s22, 0
        %s576 = sadd.s32 %s575, %s573
        %s577 = smul.addr %s576, 8
        %s578 = scalar_lea.vmem %s4, %s577
        // Predicated region
        $region78: #{resnet_generator_forward.31} parent=64 // pred_check
          %p579 = pneg %p111
        $region79: #{resnet_generator_forward.31} parent=64 // pred_check_branch
          %581 = sbr.rel (%p579) target = $region81
        $region80: #{resnet_generator_forward.31} parent=64 // pred_region
          %s582 = smul.u32 4, %s21
        $region81: #{resnet_generator_forward.31} parent=64 // pred_fallthru
          _
        // Predicated region
        $region82: #{resnet_generator_forward.31} parent=64 // pred_check
          %p583 = pneg %p139
        $region83: #{resnet_generator_forward.31} parent=64 // pred_check_branch
          %585 = sbr.rel (%p583) target = $region85
        $region84: #{resnet_generator_forward.31} parent=64 // pred_region
          _
        $region85: #{resnet_generator_forward.31} parent=64 // pred_fallthru
          _
        // Predicated region
        $region86: #{resnet_generator_forward.31} parent=64 // pred_check
          %p586 = pneg %p167
        $region87: #{resnet_generator_forward.31} parent=64 // pred_check_branch
          %588 = sbr.rel (%p586) target = $region89
        $region88: #{resnet_generator_forward.31} parent=64 // pred_region
          _
        $region89: #{resnet_generator_forward.31} parent=64 // pred_fallthru
          _
        // Predicated region
        $region90: #{resnet_generator_forward.31} parent=64 // pred_check
          %p589 = pneg %p111
        $region91: #{resnet_generator_forward.31} parent=64 // pred_check_branch
          %591 = sbr.rel (%p589) target = $region93
        $region92: #{resnet_generator_forward.31} parent=64 // pred_region
          %s592 = smul.u32 4, %s21
          %p593 = scmp.lt.s32.totalorder %s592, 3
          %s594 = scalar_select %p593, %s592, 3
          %p595 = scmp.lt.s32.totalorder %s22, 0
          %s596 = scalar_select %p595, %s22, 0
          %s597 = sadd.s32 %s596, %s594
          %s598 = smul.addr %s597, 4
          %s599 = scalar_lea.vmem %s2, %s598
        $region93: #{resnet_generator_forward.31} parent=64 // pred_fallthru
          _
        // Predicated region
        $region94: #{resnet_generator_forward.31} parent=64 // pred_check
          %p600 = pneg %p139
        $region95: #{resnet_generator_forward.31} parent=64 // pred_check_branch
          %602 = sbr.rel (%p600) target = $region97
        $region96: #{resnet_generator_forward.31} parent=64 // pred_region
          %p603 = scmp.lt.s32.totalorder %s21, 0
          %s604 = scalar_select %p603, %s21, 0
          %p605 = scmp.lt.s32.totalorder %s22, 0
          %s606 = scalar_select %p605, %s22, 0
          %s607 = sadd.s32 %s606, %s604
          %s608 = smul.addr %s607, 8
          %s609 = scalar_lea.vmem %s3, %s608
        $region97: #{resnet_generator_forward.31} parent=64 // pred_fallthru
          _
        // Predicated region
        $region98: #{resnet_generator_forward.31} parent=64 // pred_check
          %p610 = pneg %p167
        $region99: #{resnet_generator_forward.31} parent=64 // pred_check_branch
          %612 = sbr.rel (%p610) target = $region101
        $region100: #{resnet_generator_forward.31} parent=64 // pred_region
          %p613 = scmp.lt.s32.totalorder %s21, 0
          %s614 = scalar_select %p613, %s21, 0
          %p615 = scmp.lt.s32.totalorder %s22, 0
          %s616 = scalar_select %p615, %s22, 0
          %s617 = sadd.s32 %s616, %s614
          %s618 = smul.addr %s617, 8
          %s619 = scalar_lea.vmem %s4, %s618
        $region101: #{resnet_generator_forward.31} parent=64 // pred_fallthru
          _
      $region65: #{resnet_generator_forward.31} parent=5 // pred_fallthru
        _
      %p620 = scmp.le.s32.totalorder 2, %s11
      // Predicated region
      $region102: #{resnet_generator_forward.31} parent=5 // pred_check
        %p621 = pneg %p620
      $region103: #{resnet_generator_forward.31} parent=5 // pred_check_branch
        %623 = sbr.rel (%p621) target = $region105
      $region104: #{resnet_generator_forward.31} parent=5 // pred_region
        %s624 = ssub.s32 %s11, 2
      $region105: #{resnet_generator_forward.31} parent=5 // pred_fallthru
        _
    $region6: #{resnet_generator_forward.31} parent=1 // loop_footer
      %s15 = sadd.s32 1, %s11
    $region7: #{resnet_generator_forward.31} parent=1 // loop_footer_branch
      %10 = sbr.rel target = $region3
    $region8: #{resnet_generator_forward.31} parent=1 // loop_exit
      _

// kernel: resnet_generator_forward.34
$region0: #{resnet_generator_forward.34}
  #allocation0 [shape = 'u32[]', space=smem, size = 0x4, offset = 0x4, fixed_abs, tag = 'smem constant byte address 0x4 - core index']
  #allocation1 [shape = 'u32[144,128]{1,0:T(1,128)}', space=vmem, size = 0x12000, scoped, tag = 'internal scratch']
  %s0 = inlined_call_operand.vmem [shape: bf16[16,128], index: 0, kind: input, shape index: {}]
  %s1 = inlined_call_operand.vmem [shape: f32[1,128], index: 1, kind: input, shape index: {}]
  %s2 = inlined_call_operand.vmem [shape: f32[1,128], index: 2, kind: input, shape index: {}]
  %s3 = inlined_call_operand.vmem [shape: bf16[16,128], index: 3, kind: input, shape index: {}]
  %s4 = inlined_call_operand.vmem [shape: bf16[16,128], index: 4, kind: output, shape index: {}]
  %s5 = sld [smem:[#allocation0]]
  $region26: #{resnet_generator_forward.34} parent=0
    _
  %s7 = ssub.s32 1, %s5
  %s8 = scalar_select 0, %s7, %s5
  // Predicated region
  $region2: #{resnet_generator_forward.34} parent=0 // pred_check
    _
  $region3: #{resnet_generator_forward.34} parent=0 // pred_check_branch
    %10 = sbr.rel (0) target = $region5
  $region4: #{resnet_generator_forward.34} parent=0 // pred_region
    _
  $region5: #{resnet_generator_forward.34} parent=0 // pred_fallthru
    _
  // Predicated region
  $region6: #{resnet_generator_forward.34} parent=0 // pred_check
    _
  $region7: #{resnet_generator_forward.34} parent=0 // pred_check_branch
    %12 = sbr.rel (0) target = $region9
  $region8: #{resnet_generator_forward.34} parent=0 // pred_region
    _
  $region9: #{resnet_generator_forward.34} parent=0 // pred_fallthru
    _
  // Predicated region
  $region10: #{resnet_generator_forward.34} parent=0 // pred_check
    _
  $region11: #{resnet_generator_forward.34} parent=0 // pred_check_branch
    %14 = sbr.rel (0) target = $region13
  $region12: #{resnet_generator_forward.34} parent=0 // pred_region
    _
  $region13: #{resnet_generator_forward.34} parent=0 // pred_fallthru
    _
  // Predicated region
  $region14: #{resnet_generator_forward.34} parent=0 // pred_check
    _
  $region15: #{resnet_generator_forward.34} parent=0 // pred_check_branch
    %16 = sbr.rel (0) target = $region17
  $region16: #{resnet_generator_forward.34} parent=0 // pred_region
    _
  $region17: #{resnet_generator_forward.34} parent=0 // pred_fallthru
    _
  %v17 = vld [vmem:[%s0] sm:$0xf]
  %v18 = vld [vmem:[%s0 + $0x4] sm:$0xf]
  %v19 = vunpack.c.l.bf16 %v17
  %v20 = vunpack.c.l.bf16 %v18
  %v21 = vld [vmem:[%s1] sm:$0x1]
  %v23 = vlaneseq
  %v24 = vshrl.u32 %v23, 7
  %v25 = vsub.s32 0, %v24
  %v26 = vrot.slane %v21, %v25
  %v28 = vmul.f32 %v19, %v26
  %v29 = vmul.f32 %v20, %v26
  %v30 = vld [vmem:[%s2] sm:$0x1]
  %v32 = vlaneseq
  %v33 = vshrl.u32 %v32, 7
  %v34 = vsub.s32 0, %v33
  %v35 = vrot.slane %v30, %v34
  %v37 = vadd.f32 %v28, %v35
  %v38 = vadd.f32 %v29, %v35
  %v39 = vld [vmem:[%s3] sm:$0xf]
  %v40 = vld [vmem:[%s3 + $0x4] sm:$0xf]
  %v41 = vunpack.c.l.bf16 %v39
  %v42 = vunpack.c.l.bf16 %v40
  %v43 = vadd.f32 %v37, %v41
  %v44 = vadd.f32 %v38, %v42
  %v45 = vpack.c.bf16 %v44, %v43
  %v47 = vunpack.c.l.b16 %v45
  %v48 = vunpack.c.h.b16 %v45
  %v49 = vpack.c.b16 %v47, %v47
  %v50 = vpack.c.b16 %v48, %v48
  %53 = vst [vmem:[%s4] sm:$0xf] %v49
  %54 = vst [vmem:[%s4 + $0x4] sm:$0xf] %v50
  // Predicated region
  $region18: #{resnet_generator_forward.34} parent=0 // pred_check
    _
  $region19: #{resnet_generator_forward.34} parent=0 // pred_check_branch
    %56 = sbr.rel (0) target = $region21
  $region20: #{resnet_generator_forward.34} parent=0 // pred_region
    _
  $region21: #{resnet_generator_forward.34} parent=0 // pred_fallthru
    _
  // Predicated region
  $region22: #{resnet_generator_forward.34} parent=0 // pred_check
    _
  $region23: #{resnet_generator_forward.34} parent=0 // pred_check_branch
    %58 = sbr.rel (0) target = $region25
  $region24: #{resnet_generator_forward.34} parent=0 // pred_region
    _
  $region25: #{resnet_generator_forward.34} parent=0 // pred_fallthru
    _

// kernel: resnet_generator_forward.40
$region0: #{resnet_generator_forward.40}
  #allocation0 [shape = 'u32[]', space=smem, size = 0x4, offset = 0x4, fixed_abs, tag = 'smem constant byte address 0x4 - core index']
  #allocation1 [shape = 'u32[144,128]{1,0:T(1,128)}', space=vmem, size = 0x12000, scoped, tag = 'internal scratch']
  #allocation2 [shape = 'f32[32,128]{1,0:T(8,128)}', space=vmem, size = 0x4000, scoped, tag = 'scratch operand']
  %s0 = inlined_call_operand.vmem [shape: bf16[32,128], index: 0, kind: input, shape index: {}]
  %s1 = inlined_call_operand.vmem [shape: bf16[128,128], index: 1, kind: input, shape index: {}]
  %s2 = inlined_call_operand.vmem [shape: bf16[32,128], index: 2, kind: output, shape index: {0}]
  %s3 = inlined_call_operand.vmem [shape: f32[8,128], index: 3, kind: output, shape index: {1}]
  %s4 = inlined_call_operand.vmem [shape: f32[8,128], index: 4, kind: output, shape index: {2}]
  %5 = xla_tuple %s2, %s3, %s4
  %s6 = sld [smem:[#allocation0]]
  $region42: #{resnet_generator_forward.40} parent=0
    _
  %s8 = ssub.s32 1, %s6
  %s9 = scalar_select 0, %s8, %s6
  // Predicated region
  $region2: #{resnet_generator_forward.40} parent=0 // pred_check
    _
  $region3: #{resnet_generator_forward.40} parent=0 // pred_check_branch
    %11 = sbr.rel (0) target = $region5
  $region4: #{resnet_generator_forward.40} parent=0 // pred_region
    _
  $region5: #{resnet_generator_forward.40} parent=0 // pred_fallthru
    _
  // Predicated region
  $region6: #{resnet_generator_forward.40} parent=0 // pred_check
    _
  $region7: #{resnet_generator_forward.40} parent=0 // pred_check_branch
    %13 = sbr.rel (0) target = $region9
  $region8: #{resnet_generator_forward.40} parent=0 // pred_region
    _
  $region9: #{resnet_generator_forward.40} parent=0 // pred_fallthru
    _
  %p15 = scmp.eq.s32.totalorder 0, 0
  // Predicated region
  $region10: #{resnet_generator_forward.40} parent=0 // pred_check
    %p16 = pneg %p15
  $region11: #{resnet_generator_forward.40} parent=0 // pred_check_branch
    %18 = sbr.rel (%p16) target = $region13
  $region12: #{resnet_generator_forward.40} parent=0 // pred_region
    %19 = vst [vmem:[#allocation2] sm:$0xff] 0.0
    %20 = vst [vmem:[#allocation2 + $0x8] sm:$0xff] 0.0
    %21 = vst [vmem:[#allocation2 + $0x10] sm:$0xff] 0.0
    %22 = vst [vmem:[#allocation2 + $0x18] sm:$0xff] 0.0
  $region13: #{resnet_generator_forward.40} parent=0 // pred_fallthru
    _
  %v23 = vld [vmem:[#allocation2] sm:$0xff]
  %v24 = vld [vmem:[#allocation2 + $0x8] sm:$0xff]
  %v25 = vld [vmem:[#allocation2 + $0x10] sm:$0xff]
  %v26 = vld [vmem:[#allocation2 + $0x18] sm:$0xff]
  %v27 = vld [vmem:[%s0] sm:$0xf]
  %v28 = vld [vmem:[%s0 + $0x4] sm:$0xf]
  %v29 = vld [vmem:[%s0 + $0x8] sm:$0xf]
  %v30 = vld [vmem:[%s0 + $0xc] sm:$0xf]
  %v31 = vld [vmem:[%s1] sm:$0xf]
  %v32 = vld [vmem:[%s1 + $0x4] sm:$0xf]
  %v33 = vld [vmem:[%s1 + $0x8] sm:$0xf]
  %v34 = vld [vmem:[%s1 + $0xc] sm:$0xf]
  %v35 = vld [vmem:[%s1 + $0x10] sm:$0xf]
  %v36 = vld [vmem:[%s1 + $0x14] sm:$0xf]
  %v37 = vld [vmem:[%s1 + $0x18] sm:$0xf]
  %v38 = vld [vmem:[%s1 + $0x1c] sm:$0xf]
  %v39 = vld [vmem:[%s1 + $0x20] sm:$0xf]
  %v40 = vld [vmem:[%s1 + $0x24] sm:$0xf]
  %v41 = vld [vmem:[%s1 + $0x28] sm:$0xf]
  %v42 = vld [vmem:[%s1 + $0x2c] sm:$0xf]
  %v43 = vld [vmem:[%s1 + $0x30] sm:$0xf]
  %v44 = vld [vmem:[%s1 + $0x34] sm:$0xf]
  %v45 = vld [vmem:[%s1 + $0x38] sm:$0xf]
  %v46 = vld [vmem:[%s1 + $0x3c] sm:$0xf]
  %v51 = vunpack.c.l.b16 %v27
  %v52 = vunpack.c.l.b16 %v28
  %v53 = vunpack.c.l.b16 %v29
  %v54 = vunpack.c.l.b16 %v30
  %v55 = vpack.c.b16 %v52, %v51
  %v56 = vpack.c.b16 %v54, %v53
  %v75 = vunpack.c.l.b16 %v31
  %v76 = vunpack.c.l.b16 %v32
  %v77 = vunpack.c.l.b16 %v33
  %v78 = vunpack.c.l.b16 %v34
  %v79 = vunpack.c.l.b16 %v35
  %v80 = vunpack.c.l.b16 %v36
  %v81 = vunpack.c.l.b16 %v37
  %v82 = vunpack.c.l.b16 %v38
  %v83 = vunpack.c.l.b16 %v39
  %v84 = vunpack.c.l.b16 %v40
  %v85 = vunpack.c.l.b16 %v41
  %v86 = vunpack.c.l.b16 %v42
  %v87 = vunpack.c.l.b16 %v43
  %v88 = vunpack.c.l.b16 %v44
  %v89 = vunpack.c.l.b16 %v45
  %v90 = vunpack.c.l.b16 %v46
  %v91 = vpack.c.b16 %v76, %v75
  %v92 = vpack.c.b16 %v78, %v77
  %v93 = vpack.c.b16 %v80, %v79
  %v94 = vpack.c.b16 %v82, %v81
  %v95 = vpack.c.b16 %v84, %v83
  %v96 = vpack.c.b16 %v86, %v85
  %v97 = vpack.c.b16 %v88, %v87
  %v98 = vpack.c.b16 %v90, %v89
  %107 = vmatprep.subr.bf16.mxu0 0
  %108 = vmatpush1.bf16.msra.mxu0 %v91
  %109 = vmatprep.subr.bf16.mxu0 0
  %110 = vmatpush1.bf16.msra.mxu0 %v92
  %111 = vmatprep.subr.bf16.mxu0 0
  %112 = vmatpush1.bf16.msra.mxu0 %v93
  %113 = vmatprep.subr.bf16.mxu0 0
  %114 = vmatpush1.bf16.msra.mxu0 %v94
  %115 = vmatprep.subr.bf16.mxu0 0
  %116 = vmatpush1.bf16.msra.mxu0 %v95
  %117 = vmatprep.subr.bf16.mxu0 0
  %118 = vmatpush1.bf16.msra.mxu0 %v96
  %119 = vmatprep.subr.bf16.mxu0 0
  %120 = vmatpush1.bf16.msra.mxu0 %v97
  %121 = vmatprep.subr.bf16.mxu0 0
  %122 = vmatpush1.bf16.msra.mxu0 %v98
  %123 = vmatprep.subr.bf16.mxu0 0
  %124 = vmatpush1.bf16.msra.mxu0 0
  %125 = vmatprep.subr.bf16.mxu0 0
  %126 = vmatpush1.bf16.msra.mxu0 0
  %127 = vmatprep.subr.bf16.mxu0 0
  %128 = vmatpush1.bf16.msra.mxu0 0
  %129 = vmatprep.subr.bf16.mxu0 0
  %130 = vmatpush1.bf16.msra.mxu0 0
  %131 = vmatprep.subr.bf16.mxu0 0
  %132 = vmatpush1.bf16.msra.mxu0 0
  %133 = vmatprep.subr.bf16.mxu0 0
  %134 = vmatpush1.bf16.msra.mxu0 0
  %135 = vmatprep.subr.bf16.mxu0 0
  %136 = vmatpush1.bf16.msra.mxu0 0
  %137 = vmatprep.subr.bf16.mxu0 0
  %138 = vmatpush1.bf16.msra.mxu0 0
  %139 = vmatprep.mubr.bf16.mxu0 0
  %140 = vmatmul.mubr.bf16.gmra.mrb[0].mxu0 %v55
  %v141 = vpop.f32.mrb[0].mxu0
  %v142 = vadd.f32 0.0, %v141
  %v143 = vpop.f32.mrb[0].mxu0
  %v144 = vpop.f32.mrb[0].mxu0
  %v145 = vadd.f32 0.0, %v144
  %v146 = vpop.f32.mrb[0].mxu0
  %147 = vmatprep.mubr.bf16.mxu0 0
  %148 = vmatmul.mubr.bf16.gmra.mrb[0].mxu0 %v56
  %v149 = vpop.f32.mrb[0].mxu0
  %v150 = vadd.f32 0.0, %v149
  %v151 = vpop.f32.mrb[0].mxu0
  %v152 = vpop.f32.mrb[0].mxu0
  %v153 = vadd.f32 0.0, %v152
  %v154 = vpop.f32.mrb[0].mxu0
  %155 = vdwg.mxu0
  %v156 = vadd.f32 %v23, %v142
  %v157 = vadd.f32 %v24, %v145
  %v158 = vadd.f32 %v25, %v150
  %v159 = vadd.f32 %v26, %v153
  %160 = vst [vmem:[#allocation2] sm:$0xff] %v156
  %161 = vst [vmem:[#allocation2 + $0x8] sm:$0xff] %v157
  %162 = vst [vmem:[#allocation2 + $0x10] sm:$0xff] %v158
  %163 = vst [vmem:[#allocation2 + $0x18] sm:$0xff] %v159
  // Predicated region
  $region14: #{resnet_generator_forward.40} parent=0 // pred_check
    %p164 = pneg %p15
  $region15: #{resnet_generator_forward.40} parent=0 // pred_check_branch
    %166 = sbr.rel (%p164) target = $region17
  $region16: #{resnet_generator_forward.40} parent=0 // pred_region
    %v167 = vld [vmem:[#allocation2] sm:$0xff]
    %v168 = vld [vmem:[#allocation2 + $0x8] sm:$0xff]
    %v169 = vld [vmem:[#allocation2 + $0x10] sm:$0xff]
    %v170 = vld [vmem:[#allocation2 + $0x18] sm:$0xff]
    %v171 = vpack.c.bf16 %v168, %v167
    %v172 = vpack.c.bf16 %v170, %v169
    %v175 = vunpack.c.l.b16 %v171
    %v176 = vunpack.c.h.b16 %v171
    %v177 = vunpack.c.l.b16 %v172
    %v178 = vunpack.c.h.b16 %v172
    %v179 = vpack.c.b16 %v175, %v175
    %v180 = vpack.c.b16 %v176, %v176
    %v181 = vpack.c.b16 %v177, %v177
    %v182 = vpack.c.b16 %v178, %v178
    %187 = vst [vmem:[%s2] sm:$0xf] %v179
    %188 = vst [vmem:[%s2 + $0x4] sm:$0xf] %v180
    %189 = vst [vmem:[%s2 + $0x8] sm:$0xf] %v181
    %190 = vst [vmem:[%s2 + $0xc] sm:$0xf] %v182
    %v191 = vadd.f32 %v167, %v168
    %v192 = vadd.f32 %v191, %v169
    %v193 = vadd.f32 %v192, %v170
    %v194 = vrot.slane %v193, 4
    %v195 = vadd.f32 %v193, %v194
    %v196 = vrot.slane %v195, 2
    %v197 = vadd.f32 %v195, %v196
    %v198 = vrot.slane %v197, 1
    %v199 = vadd.f32 %v197, %v198
    %v200 = vmul.f32 %v167, %v167
    %v201 = vmul.f32 %v168, %v168
    %v202 = vmul.f32 %v169, %v169
    %v203 = vmul.f32 %v170, %v170
    %v204 = vadd.f32 %v200, %v201
    %v205 = vadd.f32 %v204, %v202
    %v206 = vadd.f32 %v205, %v203
    %v207 = vrot.slane %v206, 4
    %v208 = vadd.f32 %v206, %v207
    %v209 = vrot.slane %v208, 2
    %v210 = vadd.f32 %v208, %v209
    %v211 = vrot.slane %v210, 1
    %v212 = vadd.f32 %v210, %v211
    %213 = vst [vmem:[%s3] sm:$0xff] %v199
    %214 = vst [vmem:[%s4] sm:$0xff] %v212
  $region17: #{resnet_generator_forward.40} parent=0 // pred_fallthru
    _
  // Predicated region
  $region18: #{resnet_generator_forward.40} parent=0 // pred_check
    _
  $region19: #{resnet_generator_forward.40} parent=0 // pred_check_branch
    %216 = sbr.rel (0) target = $region21
  $region20: #{resnet_generator_forward.40} parent=0 // pred_region
    _
  $region21: #{resnet_generator_forward.40} parent=0 // pred_fallthru
    _
  // Predicated region
  $region22: #{resnet_generator_forward.40} parent=0 // pred_check
    _
  $region23: #{resnet_generator_forward.40} parent=0 // pred_check_branch
    %218 = sbr.rel (0) target = $region25
  $region24: #{resnet_generator_forward.40} parent=0 // pred_region
    _
  $region25: #{resnet_generator_forward.40} parent=0 // pred_fallthru
    _
  // Predicated region
  $region26: #{resnet_generator_forward.40} parent=0 // pred_check
    _
  $region27: #{resnet_generator_forward.40} parent=0 // pred_check_branch
    %220 = sbr.rel (0) target = $region29
  $region28: #{resnet_generator_forward.40} parent=0 // pred_region
    _
  $region29: #{resnet_generator_forward.40} parent=0 // pred_fallthru
    _
  // Predicated region
  $region30: #{resnet_generator_forward.40} parent=0 // pred_check
    _
  $region31: #{resnet_generator_forward.40} parent=0 // pred_check_branch
    %222 = sbr.rel (0) target = $region33
  $region32: #{resnet_generator_forward.40} parent=0 // pred_region
    _
  $region33: #{resnet_generator_forward.40} parent=0 // pred_fallthru
    _
  // Predicated region
  $region34: #{resnet_generator_forward.40} parent=0 // pred_check
    _
  $region35: #{resnet_generator_forward.40} parent=0 // pred_check_branch
    %224 = sbr.rel (0) target = $region37
  $region36: #{resnet_generator_forward.40} parent=0 // pred_region
    _
  $region37: #{resnet_generator_forward.40} parent=0 // pred_fallthru
    _
  // Predicated region
  $region38: #{resnet_generator_forward.40} parent=0 // pred_check
    _
  $region39: #{resnet_generator_forward.40} parent=0 // pred_check_branch
    %226 = sbr.rel (0) target = $region41
  $region40: #{resnet_generator_forward.40} parent=0 // pred_region
    _
  $region41: #{resnet_generator_forward.40} parent=0 // pred_fallthru
    _

// kernel: resnet_generator_forward.42
$region0: #{resnet_generator_forward.42}
  #allocation0 [shape = 'u32[]', space=smem, size = 0x4, offset = 0x4, fixed_abs, tag = 'smem constant byte address 0x4 - core index']
  #allocation1 [shape = 'u32[144,128]{1,0:T(1,128)}', space=vmem, size = 0x12000, scoped, tag = 'internal scratch']
  #allocation2 [shape = 'f32[32,128]{1,0:T(8,128)}', space=vmem, size = 0x4000, scoped, tag = 'scratch operand']
  %s0 = inlined_call_operand.vmem [shape: bf16[32,256], index: 0, kind: input, shape index: {}]
  %s1 = inlined_call_operand.vmem [shape: bf16[256,128], index: 1, kind: input, shape index: {}]
  %s2 = inlined_call_operand.vmem [shape: bf16[32,128], index: 2, kind: output, shape index: {0}]
  %s3 = inlined_call_operand.vmem [shape: f32[8,128], index: 3, kind: output, shape index: {1}]
  %s4 = inlined_call_operand.vmem [shape: f32[8,128], index: 4, kind: output, shape index: {2}]
  %5 = xla_tuple %s2, %s3, %s4
  %s6 = sld [smem:[#allocation0]]
  $region42: #{resnet_generator_forward.42} parent=0
    _
  %s8 = ssub.s32 1, %s6
  %s9 = scalar_select 0, %s8, %s6
  // Predicated region
  $region2: #{resnet_generator_forward.42} parent=0 // pred_check
    _
  $region3: #{resnet_generator_forward.42} parent=0 // pred_check_branch
    %11 = sbr.rel (0) target = $region5
  $region4: #{resnet_generator_forward.42} parent=0 // pred_region
    _
  $region5: #{resnet_generator_forward.42} parent=0 // pred_fallthru
    _
  // Predicated region
  $region6: #{resnet_generator_forward.42} parent=0 // pred_check
    _
  $region7: #{resnet_generator_forward.42} parent=0 // pred_check_branch
    %13 = sbr.rel (0) target = $region9
  $region8: #{resnet_generator_forward.42} parent=0 // pred_region
    _
  $region9: #{resnet_generator_forward.42} parent=0 // pred_fallthru
    _
  %p15 = scmp.eq.s32.totalorder 0, 0
  // Predicated region
  $region10: #{resnet_generator_forward.42} parent=0 // pred_check
    %p16 = pneg %p15
  $region11: #{resnet_generator_forward.42} parent=0 // pred_check_branch
    %18 = sbr.rel (%p16) target = $region13
  $region12: #{resnet_generator_forward.42} parent=0 // pred_region
    %19 = vst [vmem:[#allocation2] sm:$0xff] 0.0
    %20 = vst [vmem:[#allocation2 + $0x8] sm:$0xff] 0.0
    %21 = vst [vmem:[#allocation2 + $0x10] sm:$0xff] 0.0
    %22 = vst [vmem:[#allocation2 + $0x18] sm:$0xff] 0.0
  $region13: #{resnet_generator_forward.42} parent=0 // pred_fallthru
    _
  %v23 = vld [vmem:[#allocation2] sm:$0xff]
  %v24 = vld [vmem:[#allocation2 + $0x8] sm:$0xff]
  %v25 = vld [vmem:[#allocation2 + $0x10] sm:$0xff]
  %v26 = vld [vmem:[#allocation2 + $0x18] sm:$0xff]
  %v27 = vld [vmem:[%s0] sm:$0xff]
  %v28 = vld [vmem:[%s0 + $0x8] sm:$0xff]
  %v29 = vld [vmem:[%s0 + $0x10] sm:$0xff]
  %v30 = vld [vmem:[%s0 + $0x18] sm:$0xff]
  %v31 = vld [vmem:[%s1] sm:$0xf]
  %v32 = vld [vmem:[%s1 + $0x4] sm:$0xf]
  %v33 = vld [vmem:[%s1 + $0x8] sm:$0xf]
  %v34 = vld [vmem:[%s1 + $0xc] sm:$0xf]
  %v35 = vld [vmem:[%s1 + $0x10] sm:$0xf]
  %v36 = vld [vmem:[%s1 + $0x14] sm:$0xf]
  %v37 = vld [vmem:[%s1 + $0x18] sm:$0xf]
  %v38 = vld [vmem:[%s1 + $0x1c] sm:$0xf]
  %v39 = vld [vmem:[%s1 + $0x20] sm:$0xf]
  %v40 = vld [vmem:[%s1 + $0x24] sm:$0xf]
  %v41 = vld [vmem:[%s1 + $0x28] sm:$0xf]
  %v42 = vld [vmem:[%s1 + $0x2c] sm:$0xf]
  %v43 = vld [vmem:[%s1 + $0x30] sm:$0xf]
  %v44 = vld [vmem:[%s1 + $0x34] sm:$0xf]
  %v45 = vld [vmem:[%s1 + $0x38] sm:$0xf]
  %v46 = vld [vmem:[%s1 + $0x3c] sm:$0xf]
  %v47 = vld [vmem:[%s1 + $0x40] sm:$0xf]
  %v48 = vld [vmem:[%s1 + $0x44] sm:$0xf]
  %v49 = vld [vmem:[%s1 + $0x48] sm:$0xf]
  %v50 = vld [vmem:[%s1 + $0x4c] sm:$0xf]
  %v51 = vld [vmem:[%s1 + $0x50] sm:$0xf]
  %v52 = vld [vmem:[%s1 + $0x54] sm:$0xf]
  %v53 = vld [vmem:[%s1 + $0x58] sm:$0xf]
  %v54 = vld [vmem:[%s1 + $0x5c] sm:$0xf]
  %v55 = vld [vmem:[%s1 + $0x60] sm:$0xf]
  %v56 = vld [vmem:[%s1 + $0x64] sm:$0xf]
  %v57 = vld [vmem:[%s1 + $0x68] sm:$0xf]
  %v58 = vld [vmem:[%s1 + $0x6c] sm:$0xf]
  %v59 = vld [vmem:[%s1 + $0x70] sm:$0xf]
  %v60 = vld [vmem:[%s1 + $0x74] sm:$0xf]
  %v61 = vld [vmem:[%s1 + $0x78] sm:$0xf]
  %v62 = vld [vmem:[%s1 + $0x7c] sm:$0xf]
  %v67 = vunpack.c.l.b16 %v27
  %v68 = vunpack.c.h.b16 %v27
  %v69 = vunpack.c.l.b16 %v28
  %v70 = vunpack.c.h.b16 %v28
  %v71 = vunpack.c.l.b16 %v29
  %v72 = vunpack.c.h.b16 %v29
  %v73 = vunpack.c.l.b16 %v30
  %v74 = vunpack.c.h.b16 %v30
  %v75 = vpack.c.b16 %v69, %v67
  %v76 = vpack.c.b16 %v70, %v68
  %v77 = vpack.c.b16 %v73, %v71
  %v78 = vpack.c.b16 %v74, %v72
  %v115 = vunpack.c.l.b16 %v31
  %v116 = vunpack.c.l.b16 %v32
  %v117 = vunpack.c.l.b16 %v33
  %v118 = vunpack.c.l.b16 %v34
  %v119 = vunpack.c.l.b16 %v35
  %v120 = vunpack.c.l.b16 %v36
  %v121 = vunpack.c.l.b16 %v37
  %v122 = vunpack.c.l.b16 %v38
  %v123 = vunpack.c.l.b16 %v39
  %v124 = vunpack.c.l.b16 %v40
  %v125 = vunpack.c.l.b16 %v41
  %v126 = vunpack.c.l.b16 %v42
  %v127 = vunpack.c.l.b16 %v43
  %v128 = vunpack.c.l.b16 %v44
  %v129 = vunpack.c.l.b16 %v45
  %v130 = vunpack.c.l.b16 %v46
  %v131 = vunpack.c.l.b16 %v47
  %v132 = vunpack.c.l.b16 %v48
  %v133 = vunpack.c.l.b16 %v49
  %v134 = vunpack.c.l.b16 %v50
  %v135 = vunpack.c.l.b16 %v51
  %v136 = vunpack.c.l.b16 %v52
  %v137 = vunpack.c.l.b16 %v53
  %v138 = vunpack.c.l.b16 %v54
  %v139 = vunpack.c.l.b16 %v55
  %v140 = vunpack.c.l.b16 %v56
  %v141 = vunpack.c.l.b16 %v57
  %v142 = vunpack.c.l.b16 %v58
  %v143 = vunpack.c.l.b16 %v59
  %v144 = vunpack.c.l.b16 %v60
  %v145 = vunpack.c.l.b16 %v61
  %v146 = vunpack.c.l.b16 %v62
  %v147 = vpack.c.b16 %v116, %v115
  %v148 = vpack.c.b16 %v118, %v117
  %v149 = vpack.c.b16 %v120, %v119
  %v150 = vpack.c.b16 %v122, %v121
  %v151 = vpack.c.b16 %v124, %v123
  %v152 = vpack.c.b16 %v126, %v125
  %v153 = vpack.c.b16 %v128, %v127
  %v154 = vpack.c.b16 %v130, %v129
  %v155 = vpack.c.b16 %v132, %v131
  %v156 = vpack.c.b16 %v134, %v133
  %v157 = vpack.c.b16 %v136, %v135
  %v158 = vpack.c.b16 %v138, %v137
  %v159 = vpack.c.b16 %v140, %v139
  %v160 = vpack.c.b16 %v142, %v141
  %v161 = vpack.c.b16 %v144, %v143
  %v162 = vpack.c.b16 %v146, %v145
  %179 = vmatprep.subr.bf16.mxu0 0
  %180 = vmatpush1.bf16.msra.mxu0 %v147
  %181 = vmatprep.subr.bf16.mxu0 0
  %182 = vmatpush1.bf16.msra.mxu0 %v148
  %183 = vmatprep.subr.bf16.mxu0 0
  %184 = vmatpush1.bf16.msra.mxu0 %v149
  %185 = vmatprep.subr.bf16.mxu0 0
  %186 = vmatpush1.bf16.msra.mxu0 %v150
  %187 = vmatprep.subr.bf16.mxu0 0
  %188 = vmatpush1.bf16.msra.mxu0 %v151
  %189 = vmatprep.subr.bf16.mxu0 0
  %190 = vmatpush1.bf16.msra.mxu0 %v152
  %191 = vmatprep.subr.bf16.mxu0 0
  %192 = vmatpush1.bf16.msra.mxu0 %v153
  %193 = vmatprep.subr.bf16.mxu0 0
  %194 = vmatpush1.bf16.msra.mxu0 %v154
  %195 = vmatprep.subr.bf16.mxu0 0
  %196 = vmatpush1.bf16.msra.mxu0 %v155
  %197 = vmatprep.subr.bf16.mxu0 0
  %198 = vmatpush1.bf16.msra.mxu0 %v156
  %199 = vmatprep.subr.bf16.mxu0 0
  %200 = vmatpush1.bf16.msra.mxu0 %v157
  %201 = vmatprep.subr.bf16.mxu0 0
  %202 = vmatpush1.bf16.msra.mxu0 %v158
  %203 = vmatprep.subr.bf16.mxu0 0
  %204 = vmatpush1.bf16.msra.mxu0 %v159
  %205 = vmatprep.subr.bf16.mxu0 0
  %206 = vmatpush1.bf16.msra.mxu0 %v160
  %207 = vmatprep.subr.bf16.mxu0 0
  %208 = vmatpush1.bf16.msra.mxu0 %v161
  %209 = vmatprep.subr.bf16.mxu0 0
  %210 = vmatpush1.bf16.msra.mxu0 %v162
  %211 = vmatprep.mubr.bf16.mxu0 %v76
  %212 = vmatmul.mubr.bf16.gmra.mrb[0].mxu0 %v75
  %v213 = vpop.f32.mrb[0].mxu0
  %v214 = vadd.f32 0.0, %v213
  %v215 = vpop.f32.mrb[0].mxu0
  %v216 = vpop.f32.mrb[0].mxu0
  %v217 = vadd.f32 0.0, %v216
  %v218 = vpop.f32.mrb[0].mxu0
  %219 = vmatprep.mubr.bf16.mxu0 %v78
  %220 = vmatmul.mubr.bf16.gmra.mrb[0].mxu0 %v77
  %v221 = vpop.f32.mrb[0].mxu0
  %v222 = vadd.f32 0.0, %v221
  %v223 = vpop.f32.mrb[0].mxu0
  %v224 = vpop.f32.mrb[0].mxu0
  %v225 = vadd.f32 0.0, %v224
  %v226 = vpop.f32.mrb[0].mxu0
  %227 = vdwg.mxu0
  %v228 = vadd.f32 %v23, %v214
  %v229 = vadd.f32 %v24, %v217
  %v230 = vadd.f32 %v25, %v222
  %v231 = vadd.f32 %v26, %v225
  %232 = vst [vmem:[#allocation2] sm:$0xff] %v228
  %233 = vst [vmem:[#allocation2 + $0x8] sm:$0xff] %v229
  %234 = vst [vmem:[#allocation2 + $0x10] sm:$0xff] %v230
  %235 = vst [vmem:[#allocation2 + $0x18] sm:$0xff] %v231
  // Predicated region
  $region14: #{resnet_generator_forward.42} parent=0 // pred_check
    %p236 = pneg %p15
  $region15: #{resnet_generator_forward.42} parent=0 // pred_check_branch
    %238 = sbr.rel (%p236) target = $region17
  $region16: #{resnet_generator_forward.42} parent=0 // pred_region
    %v239 = vld [vmem:[#allocation2] sm:$0xff]
    %v240 = vld [vmem:[#allocation2 + $0x8] sm:$0xff]
    %v241 = vld [vmem:[#allocation2 + $0x10] sm:$0xff]
    %v242 = vld [vmem:[#allocation2 + $0x18] sm:$0xff]
    %v243 = vpack.c.bf16 %v240, %v239
    %v244 = vpack.c.bf16 %v242, %v241
    %v247 = vunpack.c.l.b16 %v243
    %v248 = vunpack.c.h.b16 %v243
    %v249 = vunpack.c.l.b16 %v244
    %v250 = vunpack.c.h.b16 %v244
    %v251 = vpack.c.b16 %v247, %v247
    %v252 = vpack.c.b16 %v248, %v248
    %v253 = vpack.c.b16 %v249, %v249
    %v254 = vpack.c.b16 %v250, %v250
    %259 = vst [vmem:[%s2] sm:$0xf] %v251
    %260 = vst [vmem:[%s2 + $0x4] sm:$0xf] %v252
    %261 = vst [vmem:[%s2 + $0x8] sm:$0xf] %v253
    %262 = vst [vmem:[%s2 + $0xc] sm:$0xf] %v254
    %v263 = vadd.f32 %v239, %v240
    %v264 = vadd.f32 %v263, %v241
    %v265 = vadd.f32 %v264, %v242
    %v266 = vrot.slane %v265, 4
    %v267 = vadd.f32 %v265, %v266
    %v268 = vrot.slane %v267, 2
    %v269 = vadd.f32 %v267, %v268
    %v270 = vrot.slane %v269, 1
    %v271 = vadd.f32 %v269, %v270
    %v272 = vmul.f32 %v239, %v239
    %v273 = vmul.f32 %v240, %v240
    %v274 = vmul.f32 %v241, %v241
    %v275 = vmul.f32 %v242, %v242
    %v276 = vadd.f32 %v272, %v273
    %v277 = vadd.f32 %v276, %v274
    %v278 = vadd.f32 %v277, %v275
    %v279 = vrot.slane %v278, 4
    %v280 = vadd.f32 %v278, %v279
    %v281 = vrot.slane %v280, 2
    %v282 = vadd.f32 %v280, %v281
    %v283 = vrot.slane %v282, 1
    %v284 = vadd.f32 %v282, %v283
    %285 = vst [vmem:[%s3] sm:$0xff] %v271
    %286 = vst [vmem:[%s4] sm:$0xff] %v284
  $region17: #{resnet_generator_forward.42} parent=0 // pred_fallthru
    _
  // Predicated region
  $region18: #{resnet_generator_forward.42} parent=0 // pred_check
    _
  $region19: #{resnet_generator_forward.42} parent=0 // pred_check_branch
    %288 = sbr.rel (0) target = $region21
  $region20: #{resnet_generator_forward.42} parent=0 // pred_region
    _
  $region21: #{resnet_generator_forward.42} parent=0 // pred_fallthru
    _
  // Predicated region
  $region22: #{resnet_generator_forward.42} parent=0 // pred_check
    _
  $region23: #{resnet_generator_forward.42} parent=0 // pred_check_branch
    %290 = sbr.rel (0) target = $region25
  $region24: #{resnet_generator_forward.42} parent=0 // pred_region
    _
  $region25: #{resnet_generator_forward.42} parent=0 // pred_fallthru
    _
  // Predicated region
  $region26: #{resnet_generator_forward.42} parent=0 // pred_check
    _
  $region27: #{resnet_generator_forward.42} parent=0 // pred_check_branch
    %292 = sbr.rel (0) target = $region29
  $region28: #{resnet_generator_forward.42} parent=0 // pred_region
    _
  $region29: #{resnet_generator_forward.42} parent=0 // pred_fallthru
    _
  // Predicated region
  $region30: #{resnet_generator_forward.42} parent=0 // pred_check
    _
  $region31: #{resnet_generator_forward.42} parent=0 // pred_check_branch
    %294 = sbr.rel (0) target = $region33
  $region32: #{resnet_generator_forward.42} parent=0 // pred_region
    _
  $region33: #{resnet_generator_forward.42} parent=0 // pred_fallthru
    _
  // Predicated region
  $region34: #{resnet_generator_forward.42} parent=0 // pred_check
    _
  $region35: #{resnet_generator_forward.42} parent=0 // pred_check_branch
    %296 = sbr.rel (0) target = $region37
  $region36: #{resnet_generator_forward.42} parent=0 // pred_region
    _
  $region37: #{resnet_generator_forward.42} parent=0 // pred_fallthru
    _
  // Predicated region
  $region38: #{resnet_generator_forward.42} parent=0 // pred_check
    _
  $region39: #{resnet_generator_forward.42} parent=0 // pred_check_branch
    %298 = sbr.rel (0) target = $region41
  $region40: #{resnet_generator_forward.42} parent=0 // pred_region
    _
  $region41: #{resnet_generator_forward.42} parent=0 // pred_fallthru
    _

// kernel: resnet_generator_forward.47
$region0: #{resnet_generator_forward.47}
  #allocation0 [shape = 'u32[]', space=smem, size = 0x4, offset = 0x4, fixed_abs, tag = 'smem constant byte address 0x4 - core index']
  #allocation1 [shape = 'u32[144,128]{1,0:T(1,128)}', space=vmem, size = 0x12000, scoped, tag = 'internal scratch']
  #allocation2 [shape = 'f32[128,128]{1,0:T(8,128)}', space=vmem, size = 0x10000, scoped, tag = 'scratch operand']
  %s0 = inlined_call_operand.vmem [shape: bf16[128,128], index: 0, kind: input, shape index: {}]
  %s1 = inlined_call_operand.vmem [shape: bf16[128,128], index: 1, kind: input, shape index: {}]
  %s2 = inlined_call_operand.vmem [shape: bf16[128,128], index: 2, kind: output, shape index: {0}]
  %s3 = inlined_call_operand.vmem [shape: f32[8,128], index: 3, kind: output, shape index: {1}]
  %s4 = inlined_call_operand.vmem [shape: f32[8,128], index: 4, kind: output, shape index: {2}]
  %5 = xla_tuple %s2, %s3, %s4
  %s6 = sld [smem:[#allocation0]]
  $region42: #{resnet_generator_forward.47} parent=0
    _
  %s8 = ssub.s32 1, %s6
  %s9 = scalar_select 0, %s8, %s6
  // Predicated region
  $region2: #{resnet_generator_forward.47} parent=0 // pred_check
    _
  $region3: #{resnet_generator_forward.47} parent=0 // pred_check_branch
    %11 = sbr.rel (0) target = $region5
  $region4: #{resnet_generator_forward.47} parent=0 // pred_region
    _
  $region5: #{resnet_generator_forward.47} parent=0 // pred_fallthru
    _
  // Predicated region
  $region6: #{resnet_generator_forward.47} parent=0 // pred_check
    _
  $region7: #{resnet_generator_forward.47} parent=0 // pred_check_branch
    %13 = sbr.rel (0) target = $region9
  $region8: #{resnet_generator_forward.47} parent=0 // pred_region
    _
  $region9: #{resnet_generator_forward.47} parent=0 // pred_fallthru
    _
  %p15 = scmp.eq.s32.totalorder 0, 0
  // Predicated region
  $region10: #{resnet_generator_forward.47} parent=0 // pred_check
    %p16 = pneg %p15
  $region11: #{resnet_generator_forward.47} parent=0 // pred_check_branch
    %18 = sbr.rel (%p16) target = $region13
  $region12: #{resnet_generator_forward.47} parent=0 // pred_region
    %19 = vst [vmem:[#allocation2] sm:$0xff] 0.0
    %20 = vst [vmem:[#allocation2 + $0x8] sm:$0xff] 0.0
    %21 = vst [vmem:[#allocation2 + $0x10] sm:$0xff] 0.0
    %22 = vst [vmem:[#allocation2 + $0x18] sm:$0xff] 0.0
    %23 = vst [vmem:[#allocation2 + $0x20] sm:$0xff] 0.0
    %24 = vst [vmem:[#allocation2 + $0x28] sm:$0xff] 0.0
    %25 = vst [vmem:[#allocation2 + $0x30] sm:$0xff] 0.0
    %26 = vst [vmem:[#allocation2 + $0x38] sm:$0xff] 0.0
    %27 = vst [vmem:[#allocation2 + $0x40] sm:$0xff] 0.0
    %28 = vst [vmem:[#allocation2 + $0x48] sm:$0xff] 0.0
    %29 = vst [vmem:[#allocation2 + $0x50] sm:$0xff] 0.0
    %30 = vst [vmem:[#allocation2 + $0x58] sm:$0xff] 0.0
    %31 = vst [vmem:[#allocation2 + $0x60] sm:$0xff] 0.0
    %32 = vst [vmem:[#allocation2 + $0x68] sm:$0xff] 0.0
    %33 = vst [vmem:[#allocation2 + $0x70] sm:$0xff] 0.0
    %34 = vst [vmem:[#allocation2 + $0x78] sm:$0xff] 0.0
  $region13: #{resnet_generator_forward.47} parent=0 // pred_fallthru
    _
  %v35 = vld [vmem:[#allocation2] sm:$0xff]
  %v36 = vld [vmem:[#allocation2 + $0x8] sm:$0xff]
  %v37 = vld [vmem:[#allocation2 + $0x10] sm:$0xff]
  %v38 = vld [vmem:[#allocation2 + $0x18] sm:$0xff]
  %v39 = vld [vmem:[#allocation2 + $0x20] sm:$0xff]
  %v40 = vld [vmem:[#allocation2 + $0x28] sm:$0xff]
  %v41 = vld [vmem:[#allocation2 + $0x30] sm:$0xff]
  %v42 = vld [vmem:[#allocation2 + $0x38] sm:$0xff]
  %v43 = vld [vmem:[#allocation2 + $0x40] sm:$0xff]
  %v44 = vld [vmem:[#allocation2 + $0x48] sm:$0xff]
  %v45 = vld [vmem:[#allocation2 + $0x50] sm:$0xff]
  %v46 = vld [vmem:[#allocation2 + $0x58] sm:$0xff]
  %v47 = vld [vmem:[#allocation2 + $0x60] sm:$0xff]
  %v48 = vld [vmem:[#allocation2 + $0x68] sm:$0xff]
  %v49 = vld [vmem:[#allocation2 + $0x70] sm:$0xff]
  %v50 = vld [vmem:[#allocation2 + $0x78] sm:$0xff]
  %v51 = vld [vmem:[%s0] sm:$0xf]
  %v52 = vld [vmem:[%s0 + $0x4] sm:$0xf]
  %v53 = vld [vmem:[%s0 + $0x8] sm:$0xf]
  %v54 = vld [vmem:[%s0 + $0xc] sm:$0xf]
  %v55 = vld [vmem:[%s0 + $0x10] sm:$0xf]
  %v56 = vld [vmem:[%s0 + $0x14] sm:$0xf]
  %v57 = vld [vmem:[%s0 + $0x18] sm:$0xf]
  %v58 = vld [vmem:[%s0 + $0x1c] sm:$0xf]
  %v59 = vld [vmem:[%s0 + $0x20] sm:$0xf]
  %v60 = vld [vmem:[%s0 + $0x24] sm:$0xf]
  %v61 = vld [vmem:[%s0 + $0x28] sm:$0xf]
  %v62 = vld [vmem:[%s0 + $0x2c] sm:$0xf]
  %v63 = vld [vmem:[%s0 + $0x30] sm:$0xf]
  %v64 = vld [vmem:[%s0 + $0x34] sm:$0xf]
  %v65 = vld [vmem:[%s0 + $0x38] sm:$0xf]
  %v66 = vld [vmem:[%s0 + $0x3c] sm:$0xf]
  %v67 = vld [vmem:[%s1] sm:$0xf]
  %v68 = vld [vmem:[%s1 + $0x4] sm:$0xf]
  %v69 = vld [vmem:[%s1 + $0x8] sm:$0xf]
  %v70 = vld [vmem:[%s1 + $0xc] sm:$0xf]
  %v71 = vld [vmem:[%s1 + $0x10] sm:$0xf]
  %v72 = vld [vmem:[%s1 + $0x14] sm:$0xf]
  %v73 = vld [vmem:[%s1 + $0x18] sm:$0xf]
  %v74 = vld [vmem:[%s1 + $0x1c] sm:$0xf]
  %v75 = vld [vmem:[%s1 + $0x20] sm:$0xf]
  %v76 = vld [vmem:[%s1 + $0x24] sm:$0xf]
  %v77 = vld [vmem:[%s1 + $0x28] sm:$0xf]
  %v78 = vld [vmem:[%s1 + $0x2c] sm:$0xf]
  %v79 = vld [vmem:[%s1 + $0x30] sm:$0xf]
  %v80 = vld [vmem:[%s1 + $0x34] sm:$0xf]
  %v81 = vld [vmem:[%s1 + $0x38] sm:$0xf]
  %v82 = vld [vmem:[%s1 + $0x3c] sm:$0xf]
  %v99 = vunpack.c.l.b16 %v51
  %v100 = vunpack.c.l.b16 %v52
  %v101 = vunpack.c.l.b16 %v53
  %v102 = vunpack.c.l.b16 %v54
  %v103 = vunpack.c.l.b16 %v55
  %v104 = vunpack.c.l.b16 %v56
  %v105 = vunpack.c.l.b16 %v57
  %v106 = vunpack.c.l.b16 %v58
  %v107 = vunpack.c.l.b16 %v59
  %v108 = vunpack.c.l.b16 %v60
  %v109 = vunpack.c.l.b16 %v61
  %v110 = vunpack.c.l.b16 %v62
  %v111 = vunpack.c.l.b16 %v63
  %v112 = vunpack.c.l.b16 %v64
  %v113 = vunpack.c.l.b16 %v65
  %v114 = vunpack.c.l.b16 %v66
  %v115 = vpack.c.b16 %v100, %v99
  %v116 = vpack.c.b16 %v102, %v101
  %v117 = vpack.c.b16 %v104, %v103
  %v118 = vpack.c.b16 %v106, %v105
  %v119 = vpack.c.b16 %v108, %v107
  %v120 = vpack.c.b16 %v110, %v109
  %v121 = vpack.c.b16 %v112, %v111
  %v122 = vpack.c.b16 %v114, %v113
  %v147 = vunpack.c.l.b16 %v67
  %v148 = vunpack.c.l.b16 %v68
  %v149 = vunpack.c.l.b16 %v69
  %v150 = vunpack.c.l.b16 %v70
  %v151 = vunpack.c.l.b16 %v71
  %v152 = vunpack.c.l.b16 %v72
  %v153 = vunpack.c.l.b16 %v73
  %v154 = vunpack.c.l.b16 %v74
  %v155 = vunpack.c.l.b16 %v75
  %v156 = vunpack.c.l.b16 %v76
  %v157 = vunpack.c.l.b16 %v77
  %v158 = vunpack.c.l.b16 %v78
  %v159 = vunpack.c.l.b16 %v79
  %v160 = vunpack.c.l.b16 %v80
  %v161 = vunpack.c.l.b16 %v81
  %v162 = vunpack.c.l.b16 %v82
  %v163 = vpack.c.b16 %v148, %v147
  %v164 = vpack.c.b16 %v150, %v149
  %v165 = vpack.c.b16 %v152, %v151
  %v166 = vpack.c.b16 %v154, %v153
  %v167 = vpack.c.b16 %v156, %v155
  %v168 = vpack.c.b16 %v158, %v157
  %v169 = vpack.c.b16 %v160, %v159
  %v170 = vpack.c.b16 %v162, %v161
  %179 = vmatprep.subr.bf16.mxu0 0
  %180 = vmatpush1.bf16.msra.mxu0 %v163
  %181 = vmatprep.subr.bf16.mxu0 0
  %182 = vmatpush1.bf16.msra.mxu0 %v164
  %183 = vmatprep.subr.bf16.mxu0 0
  %184 = vmatpush1.bf16.msra.mxu0 %v165
  %185 = vmatprep.subr.bf16.mxu0 0
  %186 = vmatpush1.bf16.msra.mxu0 %v166
  %187 = vmatprep.subr.bf16.mxu0 0
  %188 = vmatpush1.bf16.msra.mxu0 %v167
  %189 = vmatprep.subr.bf16.mxu0 0
  %190 = vmatpush1.bf16.msra.mxu0 %v168
  %191 = vmatprep.subr.bf16.mxu0 0
  %192 = vmatpush1.bf16.msra.mxu0 %v169
  %193 = vmatprep.subr.bf16.mxu0 0
  %194 = vmatpush1.bf16.msra.mxu0 %v170
  %195 = vmatprep.subr.bf16.mxu0 0
  %196 = vmatpush1.bf16.msra.mxu0 0
  %197 = vmatprep.subr.bf16.mxu0 0
  %198 = vmatpush1.bf16.msra.mxu0 0
  %199 = vmatprep.subr.bf16.mxu0 0
  %200 = vmatpush1.bf16.msra.mxu0 0
  %201 = vmatprep.subr.bf16.mxu0 0
  %202 = vmatpush1.bf16.msra.mxu0 0
  %203 = vmatprep.subr.bf16.mxu0 0
  %204 = vmatpush1.bf16.msra.mxu0 0
  %205 = vmatprep.subr.bf16.mxu0 0
  %206 = vmatpush1.bf16.msra.mxu0 0
  %207 = vmatprep.subr.bf16.mxu0 0
  %208 = vmatpush1.bf16.msra.mxu0 0
  %209 = vmatprep.subr.bf16.mxu0 0
  %210 = vmatpush1.bf16.msra.mxu0 0
  %211 = vmatprep.mubr.bf16.mxu0 0
  %212 = vmatmul.mubr.bf16.gmra.mrb[0].mxu0 %v115
  %v213 = vpop.f32.mrb[0].mxu0
  %v214 = vadd.f32 0.0, %v213
  %v215 = vpop.f32.mrb[0].mxu0
  %v216 = vpop.f32.mrb[0].mxu0
  %v217 = vadd.f32 0.0, %v216
  %v218 = vpop.f32.mrb[0].mxu0
  %219 = vmatprep.mubr.bf16.mxu0 0
  %220 = vmatmul.mubr.bf16.gmra.mrb[0].mxu0 %v116
  %v221 = vpop.f32.mrb[0].mxu0
  %v222 = vadd.f32 0.0, %v221
  %v223 = vpop.f32.mrb[0].mxu0
  %v224 = vpop.f32.mrb[0].mxu0
  %v225 = vadd.f32 0.0, %v224
  %v226 = vpop.f32.mrb[0].mxu0
  %227 = vmatprep.mubr.bf16.mxu0 0
  %228 = vmatmul.mubr.bf16.gmra.mrb[0].mxu0 %v117
  %v229 = vpop.f32.mrb[0].mxu0
  %v230 = vadd.f32 0.0, %v229
  %v231 = vpop.f32.mrb[0].mxu0
  %v232 = vpop.f32.mrb[0].mxu0
  %v233 = vadd.f32 0.0, %v232
  %v234 = vpop.f32.mrb[0].mxu0
  %235 = vmatprep.mubr.bf16.mxu0 0
  %236 = vmatmul.mubr.bf16.gmra.mrb[0].mxu0 %v118
  %v237 = vpop.f32.mrb[0].mxu0
  %v238 = vadd.f32 0.0, %v237
  %v239 = vpop.f32.mrb[0].mxu0
  %v240 = vpop.f32.mrb[0].mxu0
  %v241 = vadd.f32 0.0, %v240
  %v242 = vpop.f32.mrb[0].mxu0
  %243 = vmatprep.mubr.bf16.mxu0 0
  %244 = vmatmul.mubr.bf16.gmra.mrb[0].mxu0 %v119
  %v245 = vpop.f32.mrb[0].mxu0
  %v246 = vadd.f32 0.0, %v245
  %v247 = vpop.f32.mrb[0].mxu0
  %v248 = vpop.f32.mrb[0].mxu0
  %v249 = vadd.f32 0.0, %v248
  %v250 = vpop.f32.mrb[0].mxu0
  %251 = vmatprep.mubr.bf16.mxu0 0
  %252 = vmatmul.mubr.bf16.gmra.mrb[0].mxu0 %v120
  %v253 = vpop.f32.mrb[0].mxu0
  %v254 = vadd.f32 0.0, %v253
  %v255 = vpop.f32.mrb[0].mxu0
  %v256 = vpop.f32.mrb[0].mxu0
  %v257 = vadd.f32 0.0, %v256
  %v258 = vpop.f32.mrb[0].mxu0
  %259 = vmatprep.mubr.bf16.mxu0 0
  %260 = vmatmul.mubr.bf16.gmra.mrb[0].mxu0 %v121
  %v261 = vpop.f32.mrb[0].mxu0
  %v262 = vadd.f32 0.0, %v261
  %v263 = vpop.f32.mrb[0].mxu0
  %v264 = vpop.f32.mrb[0].mxu0
  %v265 = vadd.f32 0.0, %v264
  %v266 = vpop.f32.mrb[0].mxu0
  %267 = vmatprep.mubr.bf16.mxu0 0
  %268 = vmatmul.mubr.bf16.gmra.mrb[0].mxu0 %v122
  %v269 = vpop.f32.mrb[0].mxu0
  %v270 = vadd.f32 0.0, %v269
  %v271 = vpop.f32.mrb[0].mxu0
  %v272 = vpop.f32.mrb[0].mxu0
  %v273 = vadd.f32 0.0, %v272
  %v274 = vpop.f32.mrb[0].mxu0
  %275 = vdwg.mxu0
  %v276 = vadd.f32 %v35, %v214
  %v277 = vadd.f32 %v36, %v217
  %v278 = vadd.f32 %v37, %v222
  %v279 = vadd.f32 %v38, %v225
  %v280 = vadd.f32 %v39, %v230
  %v281 = vadd.f32 %v40, %v233
  %v282 = vadd.f32 %v41, %v238
  %v283 = vadd.f32 %v42, %v241
  %v284 = vadd.f32 %v43, %v246
  %v285 = vadd.f32 %v44, %v249
  %v286 = vadd.f32 %v45, %v254
  %v287 = vadd.f32 %v46, %v257
  %v288 = vadd.f32 %v47, %v262
  %v289 = vadd.f32 %v48, %v265
  %v290 = vadd.f32 %v49, %v270
  %v291 = vadd.f32 %v50, %v273
  %292 = vst [vmem:[#allocation2] sm:$0xff] %v276
  %293 = vst [vmem:[#allocation2 + $0x8] sm:$0xff] %v277
  %294 = vst [vmem:[#allocation2 + $0x10] sm:$0xff] %v278
  %295 = vst [vmem:[#allocation2 + $0x18] sm:$0xff] %v279
  %296 = vst [vmem:[#allocation2 + $0x20] sm:$0xff] %v280
  %297 = vst [vmem:[#allocation2 + $0x28] sm:$0xff] %v281
  %298 = vst [vmem:[#allocation2 + $0x30] sm:$0xff] %v282
  %299 = vst [vmem:[#allocation2 + $0x38] sm:$0xff] %v283
  %300 = vst [vmem:[#allocation2 + $0x40] sm:$0xff] %v284
  %301 = vst [vmem:[#allocation2 + $0x48] sm:$0xff] %v285
  %302 = vst [vmem:[#allocation2 + $0x50] sm:$0xff] %v286
  %303 = vst [vmem:[#allocation2 + $0x58] sm:$0xff] %v287
  %304 = vst [vmem:[#allocation2 + $0x60] sm:$0xff] %v288
  %305 = vst [vmem:[#allocation2 + $0x68] sm:$0xff] %v289
  %306 = vst [vmem:[#allocation2 + $0x70] sm:$0xff] %v290
  %307 = vst [vmem:[#allocation2 + $0x78] sm:$0xff] %v291
  // Predicated region
  $region14: #{resnet_generator_forward.47} parent=0 // pred_check
    %p308 = pneg %p15
  $region15: #{resnet_generator_forward.47} parent=0 // pred_check_branch
    %310 = sbr.rel (%p308) target = $region17
  $region16: #{resnet_generator_forward.47} parent=0 // pred_region
    %v311 = vld [vmem:[#allocation2] sm:$0xff]
    %v312 = vld [vmem:[#allocation2 + $0x8] sm:$0xff]
    %v313 = vld [vmem:[#allocation2 + $0x10] sm:$0xff]
    %v314 = vld [vmem:[#allocation2 + $0x18] sm:$0xff]
    %v315 = vld [vmem:[#allocation2 + $0x20] sm:$0xff]
    %v316 = vld [vmem:[#allocation2 + $0x28] sm:$0xff]
    %v317 = vld [vmem:[#allocation2 + $0x30] sm:$0xff]
    %v318 = vld [vmem:[#allocation2 + $0x38] sm:$0xff]
    %v319 = vld [vmem:[#allocation2 + $0x40] sm:$0xff]
    %v320 = vld [vmem:[#allocation2 + $0x48] sm:$0xff]
    %v321 = vld [vmem:[#allocation2 + $0x50] sm:$0xff]
    %v322 = vld [vmem:[#allocation2 + $0x58] sm:$0xff]
    %v323 = vld [vmem:[#allocation2 + $0x60] sm:$0xff]
    %v324 = vld [vmem:[#allocation2 + $0x68] sm:$0xff]
    %v325 = vld [vmem:[#allocation2 + $0x70] sm:$0xff]
    %v326 = vld [vmem:[#allocation2 + $0x78] sm:$0xff]
    %v327 = vpack.c.bf16 %v312, %v311
    %v328 = vpack.c.bf16 %v314, %v313
    %v329 = vpack.c.bf16 %v316, %v315
    %v330 = vpack.c.bf16 %v318, %v317
    %v331 = vpack.c.bf16 %v320, %v319
    %v332 = vpack.c.bf16 %v322, %v321
    %v333 = vpack.c.bf16 %v324, %v323
    %v334 = vpack.c.bf16 %v326, %v325
    %v343 = vunpack.c.l.b16 %v327
    %v344 = vunpack.c.h.b16 %v327
    %v345 = vunpack.c.l.b16 %v328
    %v346 = vunpack.c.h.b16 %v328
    %v347 = vunpack.c.l.b16 %v329
    %v348 = vunpack.c.h.b16 %v329
    %v349 = vunpack.c.l.b16 %v330
    %v350 = vunpack.c.h.b16 %v330
    %v351 = vunpack.c.l.b16 %v331
    %v352 = vunpack.c.h.b16 %v331
    %v353 = vunpack.c.l.b16 %v332
    %v354 = vunpack.c.h.b16 %v332
    %v355 = vunpack.c.l.b16 %v333
    %v356 = vunpack.c.h.b16 %v333
    %v357 = vunpack.c.l.b16 %v334
    %v358 = vunpack.c.h.b16 %v334
    %v359 = vpack.c.b16 %v343, %v343
    %v360 = vpack.c.b16 %v344, %v344
    %v361 = vpack.c.b16 %v345, %v345
    %v362 = vpack.c.b16 %v346, %v346
    %v363 = vpack.c.b16 %v347, %v347
    %v364 = vpack.c.b16 %v348, %v348
    %v365 = vpack.c.b16 %v349, %v349
    %v366 = vpack.c.b16 %v350, %v350
    %v367 = vpack.c.b16 %v351, %v351
    %v368 = vpack.c.b16 %v352, %v352
    %v369 = vpack.c.b16 %v353, %v353
    %v370 = vpack.c.b16 %v354, %v354
    %v371 = vpack.c.b16 %v355, %v355
    %v372 = vpack.c.b16 %v356, %v356
    %v373 = vpack.c.b16 %v357, %v357
    %v374 = vpack.c.b16 %v358, %v358
    %391 = vst [vmem:[%s2] sm:$0xf] %v359
    %392 = vst [vmem:[%s2 + $0x4] sm:$0xf] %v360
    %393 = vst [vmem:[%s2 + $0x8] sm:$0xf] %v361
    %394 = vst [vmem:[%s2 + $0xc] sm:$0xf] %v362
    %395 = vst [vmem:[%s2 + $0x10] sm:$0xf] %v363
    %396 = vst [vmem:[%s2 + $0x14] sm:$0xf] %v364
    %397 = vst [vmem:[%s2 + $0x18] sm:$0xf] %v365
    %398 = vst [vmem:[%s2 + $0x1c] sm:$0xf] %v366
    %399 = vst [vmem:[%s2 + $0x20] sm:$0xf] %v367
    %400 = vst [vmem:[%s2 + $0x24] sm:$0xf] %v368
    %401 = vst [vmem:[%s2 + $0x28] sm:$0xf] %v369
    %402 = vst [vmem:[%s2 + $0x2c] sm:$0xf] %v370
    %403 = vst [vmem:[%s2 + $0x30] sm:$0xf] %v371
    %404 = vst [vmem:[%s2 + $0x34] sm:$0xf] %v372
    %405 = vst [vmem:[%s2 + $0x38] sm:$0xf] %v373
    %406 = vst [vmem:[%s2 + $0x3c] sm:$0xf] %v374
    %v407 = vadd.f32 %v311, %v312
    %v408 = vadd.f32 %v407, %v313
    %v409 = vadd.f32 %v408, %v314
    %v410 = vadd.f32 %v409, %v315
    %v411 = vadd.f32 %v410, %v316
    %v412 = vadd.f32 %v411, %v317
    %v413 = vadd.f32 %v412, %v318
    %v414 = vadd.f32 %v413, %v319
    %v415 = vadd.f32 %v414, %v320
    %v416 = vadd.f32 %v415, %v321
    %v417 = vadd.f32 %v416, %v322
    %v418 = vadd.f32 %v417, %v323
    %v419 = vadd.f32 %v418, %v324
    %v420 = vadd.f32 %v419, %v325
    %v421 = vadd.f32 %v420, %v326
    %v422 = vrot.slane %v421, 4
    %v423 = vadd.f32 %v421, %v422
    %v424 = vrot.slane %v423, 2
    %v425 = vadd.f32 %v423, %v424
    %v426 = vrot.slane %v425, 1
    %v427 = vadd.f32 %v425, %v426
    %v428 = vmul.f32 %v311, %v311
    %v429 = vmul.f32 %v312, %v312
    %v430 = vmul.f32 %v313, %v313
    %v431 = vmul.f32 %v314, %v314
    %v432 = vmul.f32 %v315, %v315
    %v433 = vmul.f32 %v316, %v316
    %v434 = vmul.f32 %v317, %v317
    %v435 = vmul.f32 %v318, %v318
    %v436 = vmul.f32 %v319, %v319
    %v437 = vmul.f32 %v320, %v320
    %v438 = vmul.f32 %v321, %v321
    %v439 = vmul.f32 %v322, %v322
    %v440 = vmul.f32 %v323, %v323
    %v441 = vmul.f32 %v324, %v324
    %v442 = vmul.f32 %v325, %v325
    %v443 = vmul.f32 %v326, %v326
    %v444 = vadd.f32 %v428, %v429
    %v445 = vadd.f32 %v444, %v430
    %v446 = vadd.f32 %v445, %v431
    %v447 = vadd.f32 %v446, %v432
    %v448 = vadd.f32 %v447, %v433
    %v449 = vadd.f32 %v448, %v434
    %v450 = vadd.f32 %v449, %v435
    %v451 = vadd.f32 %v450, %v436
    %v452 = vadd.f32 %v451, %v437
    %v453 = vadd.f32 %v452, %v438
    %v454 = vadd.f32 %v453, %v439
    %v455 = vadd.f32 %v454, %v440
    %v456 = vadd.f32 %v455, %v441
    %v457 = vadd.f32 %v456, %v442
    %v458 = vadd.f32 %v457, %v443
    %v459 = vrot.slane %v458, 4
    %v460 = vadd.f32 %v458, %v459
    %v461 = vrot.slane %v460, 2
    %v462 = vadd.f32 %v460, %v461
    %v463 = vrot.slane %v462, 1
    %v464 = vadd.f32 %v462, %v463
    %465 = vst [vmem:[%s3] sm:$0xff] %v427
    %466 = vst [vmem:[%s4] sm:$0xff] %v464
  $region17: #{resnet_generator_forward.47} parent=0 // pred_fallthru
    _
  // Predicated region
  $region18: #{resnet_generator_forward.47} parent=0 // pred_check
    _
  $region19: #{resnet_generator_forward.47} parent=0 // pred_check_branch
    %468 = sbr.rel (0) target = $region21
  $region20: #{resnet_generator_forward.47} parent=0 // pred_region
    _
  $region21: #{resnet_generator_forward.47} parent=0 // pred_fallthru
    _
  // Predicated region
  $region22: #{resnet_generator_forward.47} parent=0 // pred_check
    _
  $region23: #{resnet_generator_forward.47} parent=0 // pred_check_branch
    %470 = sbr.rel (0) target = $region25
  $region24: #{resnet_generator_forward.47} parent=0 // pred_region
    _
  $region25: #{resnet_generator_forward.47} parent=0 // pred_fallthru
    _
  // Predicated region
  $region26: #{resnet_generator_forward.47} parent=0 // pred_check
    _
  $region27: #{resnet_generator_forward.47} parent=0 // pred_check_branch
    %472 = sbr.rel (0) target = $region29
  $region28: #{resnet_generator_forward.47} parent=0 // pred_region
    _
  $region29: #{resnet_generator_forward.47} parent=0 // pred_fallthru
    _
  // Predicated region
  $region30: #{resnet_generator_forward.47} parent=0 // pred_check
    _
  $region31: #{resnet_generator_forward.47} parent=0 // pred_check_branch
    %474 = sbr.rel (0) target = $region33
  $region32: #{resnet_generator_forward.47} parent=0 // pred_region
    _
  $region33: #{resnet_generator_forward.47} parent=0 // pred_fallthru
    _
  // Predicated region
  $region34: #{resnet_generator_forward.47} parent=0 // pred_check
    _
  $region35: #{resnet_generator_forward.47} parent=0 // pred_check_branch
    %476 = sbr.rel (0) target = $region37
  $region36: #{resnet_generator_forward.47} parent=0 // pred_region
    _
  $region37: #{resnet_generator_forward.47} parent=0 // pred_fallthru
    _
  // Predicated region
  $region38: #{resnet_generator_forward.47} parent=0 // pred_check
    _
  $region39: #{resnet_generator_forward.47} parent=0 // pred_check_branch
    %478 = sbr.rel (0) target = $region41
  $region40: #{resnet_generator_forward.47} parent=0 // pred_region
    _
  $region41: #{resnet_generator_forward.47} parent=0 // pred_fallthru
    _

// kernel: resnet_generator_forward.49
$region0: #{resnet_generator_forward.49}
  #allocation0 [shape = 'u32[]', space=smem, size = 0x4, offset = 0x4, fixed_abs, tag = 'smem constant byte address 0x4 - core index']
  #allocation1 [shape = 'u32[144,128]{1,0:T(1,128)}', space=vmem, size = 0x12000, scoped, tag = 'internal scratch']
  #allocation2 [shape = 'f32[512,128]{1,0:T(8,128)}', space=vmem, size = 0x40000, scoped, tag = 'scratch operand']
  %s0 = inlined_call_operand.vmem [shape: bf16[512,896], index: 0, kind: input, shape index: {}]
  %s1 = inlined_call_operand.vmem [shape: bf16[896,128], index: 1, kind: input, shape index: {}]
  %s2 = inlined_call_operand.vmem [shape: f32[1,128], index: 2, kind: input, shape index: {}]
  %s3 = inlined_call_operand.vmem [shape: f32[512,128], index: 3, kind: output, shape index: {}]
  %s4 = sld [smem:[#allocation0]]
  $region94: #{resnet_generator_forward.49} parent=0
    _
  %s6 = ssub.s32 1, %s4
  %s7 = scalar_select 0, %s6, %s4
  $region1: #{resnet_generator_forward.49} parent=0
    #allocation3 [shape = 'u8[262144]{0}', space=vmem, size = 0x40000, scoped, tag = 'input window, operand 0']
    loop: start=0, step=1, limit=9
    $region2: #{resnet_generator_forward.49} parent=1 // loop_pre_header
      _
    $region3: #{resnet_generator_forward.49} parent=1 // loop_header
      %s9 = sphi 0, %s13
      %p10 = scmp.ge.s32.totalorder %s9, 9
      %s16 = sphi 0, %s35
      %s17 = sphi 0, %s31
      %s18 = sphi 0, %s27
      %s19 = sphi 0, %s16
      %s20 = sphi 0, %s17
      %s21 = sphi 0, %s18
      %s22 = sphi 0, %s19
      %s23 = sphi 0, %s20
      %s24 = sphi 0, %s21
      %s40 = sphi 0, %s42
      %s43 = sphi 0, %s40
      %s44 = sphi 0, %s43
      %s60 = sphi 0, %s44
      %s68 = sphi 0, %s70
      %s71 = sphi 0, %s68
      %s72 = sphi 0, %s71
      %s88 = sphi 0, %s72
      %s94 = sphi 0, %s96
      %s97 = sphi 0, %s94
      %s98 = sphi 0, %s97
      %s114 = sphi 0, %s98
      %s122 = sphi 0, %s124
      %s125 = sphi 0, %s122
      %s126 = sphi 0, %s125
      %s142 = sphi 0, %s126
    $region4: #{resnet_generator_forward.49} parent=1 // loop_header_branch
      %12 = sbr.rel (%p10) target = $region8
    $region5: #{resnet_generator_forward.49} parent=1 // loop_body
      %s14 = ssub.s32 %s9, 1
      %s15 = ssub.s32 %s9, 2
      %s25 = sadd.s32 1, %s18
      %p26 = scmp.ge.s32.totalorder %s25, 7
      %s27 = scalar_select %p26, 0, %s25
      %s28 = sadd.s32 1, %s17
      %s29 = scalar_select %p26, %s28, %s17
      %p30 = scmp.ge.s32.totalorder %s29, 1
      %s31 = scalar_select %p30, 0, %s29
      %s32 = sadd.s32 1, %s16
      %s33 = scalar_select %p30, %s32, %s16
      %p34 = scmp.ge.s32.totalorder %s33, 1
      %s35 = scalar_select %p34, 0, %s33
      %s36 = ssub.s32 %s16, %s35
      %s37 = ssub.s32 %s18, %s27
      %s38 = sor.u32 %s36, %s37
      %p39 = scmp.eq.s32.totalorder %s38, 0
      %s41 = sadd.s32 %s40, 1
      %s42 = scalar_select %p39, %s40, %s41
      %p45 = pneg %p39
      %p46 = scmp.eq.s32.totalorder %s9, 6
      %p47 = por %p45, %p46
      %p48 = scmp.ne.s32.totalorder %s40, %s43
      %p49 = scmp.eq.s32.totalorder %s9, 0
      %p50 = por %p48, %p49
      %p51 = scmp.ne.s32.totalorder %s40, %s43
      %p52 = scmp.eq.s32.totalorder %s14, 6
      %p53 = por %p51, %p52
      %p54 = scmp.ne.s32.totalorder %s43, %s44
      %p55 = scmp.eq.s32.totalorder %s14, 0
      %p56 = por %p54, %p55
      %p57 = scmp.ne.s32.totalorder %s43, %s44
      %p58 = scmp.eq.s32.totalorder %s15, 6
      %p59 = por %p57, %p58
      %p61 = scmp.ne.s32.totalorder %s44, %s60
      %p62 = scmp.eq.s32.totalorder %s15, 0
      %p63 = por %p61, %p62
      %s64 = ssub.s32 %s18, %s27
      %s65 = ssub.s32 %s17, %s31
      %s66 = sor.u32 %s64, %s65
      %p67 = scmp.eq.s32.totalorder %s66, 0
      %s69 = sadd.s32 %s68, 1
      %s70 = scalar_select %p67, %s68, %s69
      %p73 = pneg %p67
      %p74 = scmp.eq.s32.totalorder %s9, 6
      %p75 = por %p73, %p74
      %p76 = scmp.ne.s32.totalorder %s68, %s71
      %p77 = scmp.eq.s32.totalorder %s9, 0
      %p78 = por %p76, %p77
      %p79 = scmp.ne.s32.totalorder %s68, %s71
      %p80 = scmp.eq.s32.totalorder %s14, 6
      %p81 = por %p79, %p80
      %p82 = scmp.ne.s32.totalorder %s71, %s72
      %p83 = scmp.eq.s32.totalorder %s14, 0
      %p84 = por %p82, %p83
      %p85 = scmp.ne.s32.totalorder %s71, %s72
      %p86 = scmp.eq.s32.totalorder %s15, 6
      %p87 = por %p85, %p86
      %p89 = scmp.ne.s32.totalorder %s72, %s88
      %p90 = scmp.eq.s32.totalorder %s15, 0
      %p91 = por %p89, %p90
      %s92 = ssub.s32 %s17, %s31
      %p93 = scmp.eq.s32.totalorder %s92, 0
      %s95 = sadd.s32 %s94, 1
      %s96 = scalar_select %p93, %s94, %s95
      %p99 = pneg %p93
      %p100 = scmp.eq.s32.totalorder %s9, 6
      %p101 = por %p99, %p100
      %p102 = scmp.ne.s32.totalorder %s94, %s97
      %p103 = scmp.eq.s32.totalorder %s9, 0
      %p104 = por %p102, %p103
      %p105 = scmp.ne.s32.totalorder %s94, %s97
      %p106 = scmp.eq.s32.totalorder %s14, 6
      %p107 = por %p105, %p106
      %p108 = scmp.ne.s32.totalorder %s97, %s98
      %p109 = scmp.eq.s32.totalorder %s14, 0
      %p110 = por %p108, %p109
      %p111 = scmp.ne.s32.totalorder %s97, %s98
      %p112 = scmp.eq.s32.totalorder %s15, 6
      %p113 = por %p111, %p112
      %p115 = scmp.ne.s32.totalorder %s98, %s114
      %p116 = scmp.eq.s32.totalorder %s15, 0
      %p117 = por %p115, %p116
      %s118 = ssub.s32 %s16, %s35
      %s119 = ssub.s32 %s17, %s31
      %s120 = sor.u32 %s118, %s119
      %p121 = scmp.eq.s32.totalorder %s120, 0
      %s123 = sadd.s32 %s122, 1
      %s124 = scalar_select %p121, %s122, %s123
      %p127 = pneg %p121
      %p128 = scmp.eq.s32.totalorder %s9, 6
      %p129 = por %p127, %p128
      %p130 = scmp.ne.s32.totalorder %s122, %s125
      %p131 = scmp.eq.s32.totalorder %s9, 0
      %p132 = por %p130, %p131
      %p133 = scmp.ne.s32.totalorder %s122, %s125
      %p134 = scmp.eq.s32.totalorder %s14, 6
      %p135 = por %p133, %p134
      %p136 = scmp.ne.s32.totalorder %s125, %s126
      %p137 = scmp.eq.s32.totalorder %s14, 0
      %p138 = por %p136, %p137
      %p139 = scmp.ne.s32.totalorder %s125, %s126
      %p140 = scmp.eq.s32.totalorder %s15, 6
      %p141 = por %p139, %p140
      %p143 = scmp.ne.s32.totalorder %s126, %s142
      %p144 = scmp.eq.s32.totalorder %s15, 0
      %p145 = por %p143, %p144
      %p146 = scmp.le.s32.totalorder 1, %s9
      %p147 = scmp.lt.s32.totalorder %s9, 8
      %p148 = pnand %p146, %p147
      %p149 = pneg %p148
      // Predicated region
      $region9: #{resnet_generator_forward.49} parent=5 // pred_check
        _
      $region10: #{resnet_generator_forward.49} parent=5 // pred_check_branch
        %151 = sbr.rel (%p148) target = $region12
      $region11: #{resnet_generator_forward.49} parent=5 // pred_region
        %s152 = ssub.s32 %s9, 1
        // Predicated region
        $region13: #{resnet_generator_forward.49} parent=11 // pred_check
          %p153 = pneg %p110
        $region14: #{resnet_generator_forward.49} parent=11 // pred_check_branch
          %155 = sbr.rel (%p153) target = $region16
        $region15: #{resnet_generator_forward.49} parent=11 // pred_region
          %p156 = scmp.lt.s32.totalorder %s20, 0
          %s157 = scalar_select %p156, %s20, 0
          %s158 = scalar_lea.vmem %s2, %s157
        $region16: #{resnet_generator_forward.49} parent=11 // pred_fallthru
          _
      $region12: #{resnet_generator_forward.49} parent=5 // pred_fallthru
        _
      %p159 = scmp.lt.s32.totalorder %s9, 7
      // Predicated region
      $region17: #{resnet_generator_forward.49} parent=5 // pred_check
        %p160 = pneg %p159
      $region18: #{resnet_generator_forward.49} parent=5 // pred_check_branch
        %162 = sbr.rel (%p160) target = $region20
      $region19: #{resnet_generator_forward.49} parent=5 // pred_region
        // Predicated region
        $region21: #{resnet_generator_forward.49} parent=19 // pred_check
          %p163 = pneg %p50
        $region22: #{resnet_generator_forward.49} parent=19 // pred_check_branch
          %165 = sbr.rel (%p163) target = $region24
        $region23: #{resnet_generator_forward.49} parent=19 // pred_region
          %s166 = sand.u32 %s40, 1
          %s167 = sand.u32 %s40, 1
          %s168 = smul.addr %s167, 256
          %s169 = scalar_lea.vmem [#allocation3], %s168
          %s170 = smul.u32 64, %s16
          %s171 = smul.addr %s170, 7
          %s172 = sadd.s32 %s18, %s171
          %s173 = smul.addr %s172, 4
          %s174 = scalar_lea.vmem %s0, %s173
          // Predicated region
          $region25: #{resnet_generator_forward.49} parent=23 // pred_check
            _
          $region26: #{resnet_generator_forward.49} parent=23 // pred_check_branch
            %176 = sbr.rel (0) target = $region28
          $region27: #{resnet_generator_forward.49} parent=23 // pred_region
            // Predicated region
            $region29: #{resnet_generator_forward.49} parent=27 // pred_check
              _
            $region30: #{resnet_generator_forward.49} parent=27 // pred_check_branch
              %178 = sbr.rel target = $region32
            $region31: #{resnet_generator_forward.49} parent=27 // pred_region
              // Predicated region
              $region44: #{resnet_generator_forward.49} parent=31 // pred_check
                _
              $region45: #{resnet_generator_forward.49} parent=31 // pred_check_branch
                %319 = sbr.rel (0) target = $region47
              $region46: #{resnet_generator_forward.49} parent=31 // pred_region
                loop: start=0, step=1, limit=1
                $region48: #{resnet_generator_forward.49} parent=46 // loop_pre_header
                  _
                $region49: #{resnet_generator_forward.49} parent=46 // loop_header
                  %s321 = sphi 0, %s325
                  %p322 = scmp.ge.s32.totalorder %s321, 1
                  %s326 = sphi %s174, %s174
                  %s327 = sphi %s169, %s169
                $region50: #{resnet_generator_forward.49} parent=46 // loop_header_branch
                  %324 = sbr.rel (%p322) target = $region54
                $region51: #{resnet_generator_forward.49} parent=46 // loop_body
                  _
                $region52: #{resnet_generator_forward.49} parent=46 // loop_footer
                  %s325 = sadd.s32 1, %s321
                $region53: #{resnet_generator_forward.49} parent=46 // loop_footer_branch
                  %320 = sbr.rel target = $region49
                $region54: #{resnet_generator_forward.49} parent=46 // loop_exit
                  _
                loop: start=0, step=1, limit=1
                $region55: #{resnet_generator_forward.49} parent=46 // loop_pre_header
                  _
                $region56: #{resnet_generator_forward.49} parent=46 // loop_header
                  %s330 = sphi 0, %s334
                  %p331 = scmp.ge.s32.totalorder %s330, 1
                  %s335 = sphi %s174, %s174
                  %s336 = sphi %s169, %s169
                $region57: #{resnet_generator_forward.49} parent=46 // loop_header_branch
                  %333 = sbr.rel (%p331) target = $region61
                $region58: #{resnet_generator_forward.49} parent=46 // loop_body
                  %v337 = vld [vmem:[%s335] sm:$0xf]
                  %338 = vst [vmem:[%s336] sm:$0xf] %v337
                  %v339 = vld [vmem:[%s335 + $0x1c] sm:$0xf]
                  %340 = vst [vmem:[%s336 + $0x4] sm:$0xf] %v339
                  %v341 = vld [vmem:[%s335 + $0x38] sm:$0xf]
                  %342 = vst [vmem:[%s336 + $0x8] sm:$0xf] %v341
                  %v343 = vld [vmem:[%s335 + $0x54] sm:$0xf]
                  %344 = vst [vmem:[%s336 + $0xc] sm:$0xf] %v343
                  %v345 = vld [vmem:[%s335 + $0x70] sm:$0xf]
                  %346 = vst [vmem:[%s336 + $0x10] sm:$0xf] %v345
                  %v347 = vld [vmem:[%s335 + $0x8c] sm:$0xf]
                  %348 = vst [vmem:[%s336 + $0x14] sm:$0xf] %v347
                  %v349 = vld [vmem:[%s335 + $0xa8] sm:$0xf]
                  %350 = vst [vmem:[%s336 + $0x18] sm:$0xf] %v349
                  %v351 = vld [vmem:[%s335 + $0xc4] sm:$0xf]
                  %352 = vst [vmem:[%s336 + $0x1c] sm:$0xf] %v351
                  %v353 = vld [vmem:[%s335 + $0xe0] sm:$0xf]
                  %354 = vst [vmem:[%s336 + $0x20] sm:$0xf] %v353
                  %v355 = vld [vmem:[%s335 + $0xfc] sm:$0xf]
                  %356 = vst [vmem:[%s336 + $0x24] sm:$0xf] %v355
                  %v357 = vld [vmem:[%s335 + $0x118] sm:$0xf]
                  %358 = vst [vmem:[%s336 + $0x28] sm:$0xf] %v357
                  %v359 = vld [vmem:[%s335 + $0x134] sm:$0xf]
                  %360 = vst [vmem:[%s336 + $0x2c] sm:$0xf] %v359
                  %v361 = vld [vmem:[%s335 + $0x150] sm:$0xf]
                  %362 = vst [vmem:[%s336 + $0x30] sm:$0xf] %v361
                  %v363 = vld [vmem:[%s335 + $0x16c] sm:$0xf]
                  %364 = vst [vmem:[%s336 + $0x34] sm:$0xf] %v363
                  %v365 = vld [vmem:[%s335 + $0x188] sm:$0xf]
                  %366 = vst [vmem:[%s336 + $0x38] sm:$0xf] %v365
                  %v367 = vld [vmem:[%s335 + $0x1a4] sm:$0xf]
                  %368 = vst [vmem:[%s336 + $0x3c] sm:$0xf] %v367
                  %v369 = vld [vmem:[%s335 + $0x1c0] sm:$0xf]
                  %370 = vst [vmem:[%s336 + $0x40] sm:$0xf] %v369
                  %v371 = vld [vmem:[%s335 + $0x1dc] sm:$0xf]
                  %372 = vst [vmem:[%s336 + $0x44] sm:$0xf] %v371
                  %v373 = vld [vmem:[%s335 + $0x1f8] sm:$0xf]
                  %374 = vst [vmem:[%s336 + $0x48] sm:$0xf] %v373
                  %v375 = vld [vmem:[%s335 + $0x214] sm:$0xf]
                  %376 = vst [vmem:[%s336 + $0x4c] sm:$0xf] %v375
                  %v377 = vld [vmem:[%s335 + $0x230] sm:$0xf]
                  %378 = vst [vmem:[%s336 + $0x50] sm:$0xf] %v377
                  %v379 = vld [vmem:[%s335 + $0x24c] sm:$0xf]
                  %380 = vst [vmem:[%s336 + $0x54] sm:$0xf] %v379
                  %v381 = vld [vmem:[%s335 + $0x268] sm:$0xf]
                  %382 = vst [vmem:[%s336 + $0x58] sm:$0xf] %v381
                  %v383 = vld [vmem:[%s335 + $0x284] sm:$0xf]
                  %384 = vst [vmem:[%s336 + $0x5c] sm:$0xf] %v383
                  %v385 = vld [vmem:[%s335 + $0x2a0] sm:$0xf]
                  %386 = vst [vmem:[%s336 + $0x60] sm:$0xf] %v385
                  %v387 = vld [vmem:[%s335 + $0x2bc] sm:$0xf]
                  %388 = vst [vmem:[%s336 + $0x64] sm:$0xf] %v387
                  %v389 = vld [vmem:[%s335 + $0x2d8] sm:$0xf]
                  %390 = vst [vmem:[%s336 + $0x68] sm:$0xf] %v389
                  %v391 = vld [vmem:[%s335 + $0x2f4] sm:$0xf]
                  %392 = vst [vmem:[%s336 + $0x6c] sm:$0xf] %v391
                  %v393 = vld [vmem:[%s335 + $0x310] sm:$0xf]
                  %394 = vst [vmem:[%s336 + $0x70] sm:$0xf] %v393
                  %v395 = vld [vmem:[%s335 + $0x32c] sm:$0xf]
                  %396 = vst [vmem:[%s336 + $0x74] sm:$0xf] %v395
                  %v397 = vld [vmem:[%s335 + $0x348] sm:$0xf]
                  %398 = vst [vmem:[%s336 + $0x78] sm:$0xf] %v397
                  %v399 = vld [vmem:[%s335 + $0x364] sm:$0xf]
                  %400 = vst [vmem:[%s336 + $0x7c] sm:$0xf] %v399
                  %v401 = vld [vmem:[%s335 + $0x380] sm:$0xf]
                  %402 = vst [vmem:[%s336 + $0x80] sm:$0xf] %v401
                  %v403 = vld [vmem:[%s335 + $0x39c] sm:$0xf]
                  %404 = vst [vmem:[%s336 + $0x84] sm:$0xf] %v403
                  %v405 = vld [vmem:[%s335 + $0x3b8] sm:$0xf]
                  %406 = vst [vmem:[%s336 + $0x88] sm:$0xf] %v405
                  %v407 = vld [vmem:[%s335 + $0x3d4] sm:$0xf]
                  %408 = vst [vmem:[%s336 + $0x8c] sm:$0xf] %v407
                  %v409 = vld [vmem:[%s335 + $0x3f0] sm:$0xf]
                  %410 = vst [vmem:[%s336 + $0x90] sm:$0xf] %v409
                  %v411 = vld [vmem:[%s335 + $0x40c] sm:$0xf]
                  %412 = vst [vmem:[%s336 + $0x94] sm:$0xf] %v411
                  %v413 = vld [vmem:[%s335 + $0x428] sm:$0xf]
                  %414 = vst [vmem:[%s336 + $0x98] sm:$0xf] %v413
                  %v415 = vld [vmem:[%s335 + $0x444] sm:$0xf]
                  %416 = vst [vmem:[%s336 + $0x9c] sm:$0xf] %v415
                  %v417 = vld [vmem:[%s335 + $0x460] sm:$0xf]
                  %418 = vst [vmem:[%s336 + $0xa0] sm:$0xf] %v417
                  %v419 = vld [vmem:[%s335 + $0x47c] sm:$0xf]
                  %420 = vst [vmem:[%s336 + $0xa4] sm:$0xf] %v419
                  %v421 = vld [vmem:[%s335 + $0x498] sm:$0xf]
                  %422 = vst [vmem:[%s336 + $0xa8] sm:$0xf] %v421
                  %v423 = vld [vmem:[%s335 + $0x4b4] sm:$0xf]
                  %424 = vst [vmem:[%s336 + $0xac] sm:$0xf] %v423
                  %v425 = vld [vmem:[%s335 + $0x4d0] sm:$0xf]
                  %426 = vst [vmem:[%s336 + $0xb0] sm:$0xf] %v425
                  %v427 = vld [vmem:[%s335 + $0x4ec] sm:$0xf]
                  %428 = vst [vmem:[%s336 + $0xb4] sm:$0xf] %v427
                  %v429 = vld [vmem:[%s335 + $0x508] sm:$0xf]
                  %430 = vst [vmem:[%s336 + $0xb8] sm:$0xf] %v429
                  %v431 = vld [vmem:[%s335 + $0x524] sm:$0xf]
                  %432 = vst [vmem:[%s336 + $0xbc] sm:$0xf] %v431
                  %v433 = vld [vmem:[%s335 + $0x540] sm:$0xf]
                  %434 = vst [vmem:[%s336 + $0xc0] sm:$0xf] %v433
                  %v435 = vld [vmem:[%s335 + $0x55c] sm:$0xf]
                  %436 = vst [vmem:[%s336 + $0xc4] sm:$0xf] %v435
                  %v437 = vld [vmem:[%s335 + $0x578] sm:$0xf]
                  %438 = vst [vmem:[%s336 + $0xc8] sm:$0xf] %v437
                  %v439 = vld [vmem:[%s335 + $0x594] sm:$0xf]
                  %440 = vst [vmem:[%s336 + $0xcc] sm:$0xf] %v439
                  %v441 = vld [vmem:[%s335 + $0x5b0] sm:$0xf]
                  %442 = vst [vmem:[%s336 + $0xd0] sm:$0xf] %v441
                  %v443 = vld [vmem:[%s335 + $0x5cc] sm:$0xf]
                  %444 = vst [vmem:[%s336 + $0xd4] sm:$0xf] %v443
                  %v445 = vld [vmem:[%s335 + $0x5e8] sm:$0xf]
                  %446 = vst [vmem:[%s336 + $0xd8] sm:$0xf] %v445
                  %v447 = vld [vmem:[%s335 + $0x604] sm:$0xf]
                  %448 = vst [vmem:[%s336 + $0xdc] sm:$0xf] %v447
                  %v449 = vld [vmem:[%s335 + $0x620] sm:$0xf]
                  %450 = vst [vmem:[%s336 + $0xe0] sm:$0xf] %v449
                  %v451 = vld [vmem:[%s335 + $0x63c] sm:$0xf]
                  %452 = vst [vmem:[%s336 + $0xe4] sm:$0xf] %v451
                  %v453 = vld [vmem:[%s335 + $0x658] sm:$0xf]
                  %454 = vst [vmem:[%s336 + $0xe8] sm:$0xf] %v453
                  %v455 = vld [vmem:[%s335 + $0x674] sm:$0xf]
                  %456 = vst [vmem:[%s336 + $0xec] sm:$0xf] %v455
                  %v457 = vld [vmem:[%s335 + $0x690] sm:$0xf]
                  %458 = vst [vmem:[%s336 + $0xf0] sm:$0xf] %v457
                  %v459 = vld [vmem:[%s335 + $0x6ac] sm:$0xf]
                  %460 = vst [vmem:[%s336 + $0xf4] sm:$0xf] %v459
                  %v461 = vld [vmem:[%s335 + $0x6c8] sm:$0xf]
                  %462 = vst [vmem:[%s336 + $0xf8] sm:$0xf] %v461
                  %v463 = vld [vmem:[%s335 + $0x6e4] sm:$0xf]
                  %464 = vst [vmem:[%s336 + $0xfc] sm:$0xf] %v463
                $region59: #{resnet_generator_forward.49} parent=46 // loop_footer
                  %s334 = sadd.s32 1, %s330
                $region60: #{resnet_generator_forward.49} parent=46 // loop_footer_branch
                  %329 = sbr.rel target = $region56
                $region61: #{resnet_generator_forward.49} parent=46 // loop_exit
                  _
              $region47: #{resnet_generator_forward.49} parent=31 // pred_fallthru
                _
            $region32: #{resnet_generator_forward.49} parent=27 // pred_fallthru
              _
            // Predicated region
            $region33: #{resnet_generator_forward.49} parent=27 // pred_check
              _
            $region34: #{resnet_generator_forward.49} parent=27 // pred_check_branch
              %180 = sbr.rel (0) target = $region36
            $region35: #{resnet_generator_forward.49} parent=27 // pred_region
              loop: start=0, step=1, limit=1
              $region37: #{resnet_generator_forward.49} parent=35 // loop_pre_header
                _
              $region38: #{resnet_generator_forward.49} parent=35 // loop_header
                %s183 = sphi 0, %s187
                %p184 = scmp.ge.s32.totalorder %s183, 1
                %s188 = sphi %s174, %s174
                %s189 = sphi %s169, %s169
              $region39: #{resnet_generator_forward.49} parent=35 // loop_header_branch
                %186 = sbr.rel (%p184) target = $region43
              $region40: #{resnet_generator_forward.49} parent=35 // loop_body
                %v190 = vld [vmem:[%s188] sm:$0xf]
                %191 = vst [vmem:[%s189] sm:$0xf] %v190
                %v192 = vld [vmem:[%s188 + $0x1c] sm:$0xf]
                %193 = vst [vmem:[%s189 + $0x4] sm:$0xf] %v192
                %v194 = vld [vmem:[%s188 + $0x38] sm:$0xf]
                %195 = vst [vmem:[%s189 + $0x8] sm:$0xf] %v194
                %v196 = vld [vmem:[%s188 + $0x54] sm:$0xf]
                %197 = vst [vmem:[%s189 + $0xc] sm:$0xf] %v196
                %v198 = vld [vmem:[%s188 + $0x70] sm:$0xf]
                %199 = vst [vmem:[%s189 + $0x10] sm:$0xf] %v198
                %v200 = vld [vmem:[%s188 + $0x8c] sm:$0xf]
                %201 = vst [vmem:[%s189 + $0x14] sm:$0xf] %v200
                %v202 = vld [vmem:[%s188 + $0xa8] sm:$0xf]
                %203 = vst [vmem:[%s189 + $0x18] sm:$0xf] %v202
                %v204 = vld [vmem:[%s188 + $0xc4] sm:$0xf]
                %205 = vst [vmem:[%s189 + $0x1c] sm:$0xf] %v204
                %v206 = vld [vmem:[%s188 + $0xe0] sm:$0xf]
                %207 = vst [vmem:[%s189 + $0x20] sm:$0xf] %v206
                %v208 = vld [vmem:[%s188 + $0xfc] sm:$0xf]
                %209 = vst [vmem:[%s189 + $0x24] sm:$0xf] %v208
                %v210 = vld [vmem:[%s188 + $0x118] sm:$0xf]
                %211 = vst [vmem:[%s189 + $0x28] sm:$0xf] %v210
                %v212 = vld [vmem:[%s188 + $0x134] sm:$0xf]
                %213 = vst [vmem:[%s189 + $0x2c] sm:$0xf] %v212
                %v214 = vld [vmem:[%s188 + $0x150] sm:$0xf]
                %215 = vst [vmem:[%s189 + $0x30] sm:$0xf] %v214
                %v216 = vld [vmem:[%s188 + $0x16c] sm:$0xf]
                %217 = vst [vmem:[%s189 + $0x34] sm:$0xf] %v216
                %v218 = vld [vmem:[%s188 + $0x188] sm:$0xf]
                %219 = vst [vmem:[%s189 + $0x38] sm:$0xf] %v218
                %v220 = vld [vmem:[%s188 + $0x1a4] sm:$0xf]
                %221 = vst [vmem:[%s189 + $0x3c] sm:$0xf] %v220
                %v222 = vld [vmem:[%s188 + $0x1c0] sm:$0xf]
                %223 = vst [vmem:[%s189 + $0x40] sm:$0xf] %v222
                %v224 = vld [vmem:[%s188 + $0x1dc] sm:$0xf]
                %225 = vst [vmem:[%s189 + $0x44] sm:$0xf] %v224
                %v226 = vld [vmem:[%s188 + $0x1f8] sm:$0xf]
                %227 = vst [vmem:[%s189 + $0x48] sm:$0xf] %v226
                %v228 = vld [vmem:[%s188 + $0x214] sm:$0xf]
                %229 = vst [vmem:[%s189 + $0x4c] sm:$0xf] %v228
                %v230 = vld [vmem:[%s188 + $0x230] sm:$0xf]
                %231 = vst [vmem:[%s189 + $0x50] sm:$0xf] %v230
                %v232 = vld [vmem:[%s188 + $0x24c] sm:$0xf]
                %233 = vst [vmem:[%s189 + $0x54] sm:$0xf] %v232
                %v234 = vld [vmem:[%s188 + $0x268] sm:$0xf]
                %235 = vst [vmem:[%s189 + $0x58] sm:$0xf] %v234
                %v236 = vld [vmem:[%s188 + $0x284] sm:$0xf]
                %237 = vst [vmem:[%s189 + $0x5c] sm:$0xf] %v236
                %v238 = vld [vmem:[%s188 + $0x2a0] sm:$0xf]
                %239 = vst [vmem:[%s189 + $0x60] sm:$0xf] %v238
                %v240 = vld [vmem:[%s188 + $0x2bc] sm:$0xf]
                %241 = vst [vmem:[%s189 + $0x64] sm:$0xf] %v240
                %v242 = vld [vmem:[%s188 + $0x2d8] sm:$0xf]
                %243 = vst [vmem:[%s189 + $0x68] sm:$0xf] %v242
                %v244 = vld [vmem:[%s188 + $0x2f4] sm:$0xf]
                %245 = vst [vmem:[%s189 + $0x6c] sm:$0xf] %v244
                %v246 = vld [vmem:[%s188 + $0x310] sm:$0xf]
                %247 = vst [vmem:[%s189 + $0x70] sm:$0xf] %v246
                %v248 = vld [vmem:[%s188 + $0x32c] sm:$0xf]
                %249 = vst [vmem:[%s189 + $0x74] sm:$0xf] %v248
                %v250 = vld [vmem:[%s188 + $0x348] sm:$0xf]
                %251 = vst [vmem:[%s189 + $0x78] sm:$0xf] %v250
                %v252 = vld [vmem:[%s188 + $0x364] sm:$0xf]
                %253 = vst [vmem:[%s189 + $0x7c] sm:$0xf] %v252
                %v254 = vld [vmem:[%s188 + $0x380] sm:$0xf]
                %255 = vst [vmem:[%s189 + $0x80] sm:$0xf] %v254
                %v256 = vld [vmem:[%s188 + $0x39c] sm:$0xf]
                %257 = vst [vmem:[%s189 + $0x84] sm:$0xf] %v256
                %v258 = vld [vmem:[%s188 + $0x3b8] sm:$0xf]
                %259 = vst [vmem:[%s189 + $0x88] sm:$0xf] %v258
                %v260 = vld [vmem:[%s188 + $0x3d4] sm:$0xf]
                %261 = vst [vmem:[%s189 + $0x8c] sm:$0xf] %v260
                %v262 = vld [vmem:[%s188 + $0x3f0] sm:$0xf]
                %263 = vst [vmem:[%s189 + $0x90] sm:$0xf] %v262
                %v264 = vld [vmem:[%s188 + $0x40c] sm:$0xf]
                %265 = vst [vmem:[%s189 + $0x94] sm:$0xf] %v264
                %v266 = vld [vmem:[%s188 + $0x428] sm:$0xf]
                %267 = vst [vmem:[%s189 + $0x98] sm:$0xf] %v266
                %v268 = vld [vmem:[%s188 + $0x444] sm:$0xf]
                %269 = vst [vmem:[%s189 + $0x9c] sm:$0xf] %v268
                %v270 = vld [vmem:[%s188 + $0x460] sm:$0xf]
                %271 = vst [vmem:[%s189 + $0xa0] sm:$0xf] %v270
                %v272 = vld [vmem:[%s188 + $0x47c] sm:$0xf]
                %273 = vst [vmem:[%s189 + $0xa4] sm:$0xf] %v272
                %v274 = vld [vmem:[%s188 + $0x498] sm:$0xf]
                %275 = vst [vmem:[%s189 + $0xa8] sm:$0xf] %v274
                %v276 = vld [vmem:[%s188 + $0x4b4] sm:$0xf]
                %277 = vst [vmem:[%s189 + $0xac] sm:$0xf] %v276
                %v278 = vld [vmem:[%s188 + $0x4d0] sm:$0xf]
                %279 = vst [vmem:[%s189 + $0xb0] sm:$0xf] %v278
                %v280 = vld [vmem:[%s188 + $0x4ec] sm:$0xf]
                %281 = vst [vmem:[%s189 + $0xb4] sm:$0xf] %v280
                %v282 = vld [vmem:[%s188 + $0x508] sm:$0xf]
                %283 = vst [vmem:[%s189 + $0xb8] sm:$0xf] %v282
                %v284 = vld [vmem:[%s188 + $0x524] sm:$0xf]
                %285 = vst [vmem:[%s189 + $0xbc] sm:$0xf] %v284
                %v286 = vld [vmem:[%s188 + $0x540] sm:$0xf]
                %287 = vst [vmem:[%s189 + $0xc0] sm:$0xf] %v286
                %v288 = vld [vmem:[%s188 + $0x55c] sm:$0xf]
                %289 = vst [vmem:[%s189 + $0xc4] sm:$0xf] %v288
                %v290 = vld [vmem:[%s188 + $0x578] sm:$0xf]
                %291 = vst [vmem:[%s189 + $0xc8] sm:$0xf] %v290
                %v292 = vld [vmem:[%s188 + $0x594] sm:$0xf]
                %293 = vst [vmem:[%s189 + $0xcc] sm:$0xf] %v292
                %v294 = vld [vmem:[%s188 + $0x5b0] sm:$0xf]
                %295 = vst [vmem:[%s189 + $0xd0] sm:$0xf] %v294
                %v296 = vld [vmem:[%s188 + $0x5cc] sm:$0xf]
                %297 = vst [vmem:[%s189 + $0xd4] sm:$0xf] %v296
                %v298 = vld [vmem:[%s188 + $0x5e8] sm:$0xf]
                %299 = vst [vmem:[%s189 + $0xd8] sm:$0xf] %v298
                %v300 = vld [vmem:[%s188 + $0x604] sm:$0xf]
                %301 = vst [vmem:[%s189 + $0xdc] sm:$0xf] %v300
                %v302 = vld [vmem:[%s188 + $0x620] sm:$0xf]
                %303 = vst [vmem:[%s189 + $0xe0] sm:$0xf] %v302
                %v304 = vld [vmem:[%s188 + $0x63c] sm:$0xf]
                %305 = vst [vmem:[%s189 + $0xe4] sm:$0xf] %v304
                %v306 = vld [vmem:[%s188 + $0x658] sm:$0xf]
                %307 = vst [vmem:[%s189 + $0xe8] sm:$0xf] %v306
                %v308 = vld [vmem:[%s188 + $0x674] sm:$0xf]
                %309 = vst [vmem:[%s189 + $0xec] sm:$0xf] %v308
                %v310 = vld [vmem:[%s188 + $0x690] sm:$0xf]
                %311 = vst [vmem:[%s189 + $0xf0] sm:$0xf] %v310
                %v312 = vld [vmem:[%s188 + $0x6ac] sm:$0xf]
                %313 = vst [vmem:[%s189 + $0xf4] sm:$0xf] %v312
                %v314 = vld [vmem:[%s188 + $0x6c8] sm:$0xf]
                %315 = vst [vmem:[%s189 + $0xf8] sm:$0xf] %v314
                %v316 = vld [vmem:[%s188 + $0x6e4] sm:$0xf]
                %317 = vst [vmem:[%s189 + $0xfc] sm:$0xf] %v316
              $region41: #{resnet_generator_forward.49} parent=35 // loop_footer
                %s187 = sadd.s32 1, %s183
              $region42: #{resnet_generator_forward.49} parent=35 // loop_footer_branch
                %182 = sbr.rel target = $region38
              $region43: #{resnet_generator_forward.49} parent=35 // loop_exit
                _
            $region36: #{resnet_generator_forward.49} parent=27 // pred_fallthru
              _
          $region28: #{resnet_generator_forward.49} parent=23 // pred_fallthru
            _
          %465 = vnop
        $region24: #{resnet_generator_forward.49} parent=19 // pred_fallthru
          _
        // Predicated region
        $region62: #{resnet_generator_forward.49} parent=19 // pred_check
          %p466 = pneg %p78
        $region63: #{resnet_generator_forward.49} parent=19 // pred_check_branch
          %468 = sbr.rel (%p466) target = $region65
        $region64: #{resnet_generator_forward.49} parent=19 // pred_region
          %s469 = smul.u32 16, %s18
          %p470 = scmp.lt.s32.totalorder %s469, 111
          %s471 = scalar_select %p470, %s469, 111
          %p472 = scmp.lt.s32.totalorder %s17, 0
          %s473 = scalar_select %p472, %s17, 0
          %s474 = sadd.s32 %s473, %s471
          %s475 = smul.addr %s474, 4
          %s476 = scalar_lea.vmem %s1, %s475
          %s477 = smul.u32 16, %s18
        $region65: #{resnet_generator_forward.49} parent=19 // pred_fallthru
          _
      $region20: #{resnet_generator_forward.49} parent=5 // pred_fallthru
        _
      %p478 = scmp.le.s32.totalorder 1, %s9
      %p479 = scmp.lt.s32.totalorder %s9, 8
      %p480 = pnand %p478, %p479
      %p481 = pneg %p480
      // Predicated region
      $region66: #{resnet_generator_forward.49} parent=5 // pred_check
        _
      $region67: #{resnet_generator_forward.49} parent=5 // pred_check_branch
        %483 = sbr.rel (%p480) target = $region69
      $region68: #{resnet_generator_forward.49} parent=5 // pred_region
        %s484 = ssub.s32 %s9, 1
        %s485 = sand.u32 %s43, 1
        %s486 = sand.u32 %s43, 1
        %s487 = smul.addr %s486, 256
        %s488 = scalar_lea.vmem [#allocation3], %s487
        // Predicated region
        $region70: #{resnet_generator_forward.49} parent=68 // pred_check
          %p489 = pneg %p56
        $region71: #{resnet_generator_forward.49} parent=68 // pred_check_branch
          %491 = sbr.rel (%p489) target = $region73
        $region72: #{resnet_generator_forward.49} parent=68 // pred_region
          _
        $region73: #{resnet_generator_forward.49} parent=68 // pred_fallthru
          _
        %s492 = sand.u32 %s43, 1
        %s493 = sand.u32 %s43, 1
        %s494 = smul.addr %s493, 256
        %s495 = scalar_lea.vmem [#allocation3], %s494
        %p496 = pneg %p56
        %p497 = pneg %p53
        %s498 = smul.u32 16, %s21
        %p499 = scmp.lt.s32.totalorder %s498, 111
        %s500 = scalar_select %p499, %s498, 111
        %p501 = scmp.lt.s32.totalorder %s20, 0
        %s502 = scalar_select %p501, %s20, 0
        %s503 = sadd.s32 %s502, %s500
        %s504 = smul.addr %s503, 4
        %s505 = scalar_lea.vmem %s1, %s504
        %p506 = pneg %p84
        %p507 = pneg %p81
        %p508 = scmp.lt.s32.totalorder %s20, 0
        %s509 = scalar_select %p508, %s20, 0
        %s510 = scalar_lea.vmem %s2, %s509
        %p511 = pneg %p110
        %p512 = pneg %p107
        %p513 = pneg %p138
        %p514 = pneg %p135
        %s515 = smul.u32 64, %s19
        %p516 = scmp.lt.s32.totalorder %s515, 63
        %s517 = scalar_select %p516, %s515, 63
        %p518 = scmp.lt.s32.totalorder %s20, 0
        %s519 = scalar_select %p518, %s20, 0
        %s520 = sadd.s32 %s519, %s517
        %s521 = smul.addr %s520, 8
        %s522 = scalar_lea.vmem %s3, %s521
        %s523 = smul.u32 64, %s19
        %s524 = smul.u32 16, %s21
        %p525 = scmp.lt.s32.totalorder %s524, 111
        %s526 = scalar_select %p525, %s524, 111
        %p527 = scmp.lt.s32.totalorder %s20, 0
        %s528 = scalar_select %p527, %s20, 0
        %s529 = sadd.s32 %s528, %s526
        %s530 = smul.addr %s529, 4
        %s531 = scalar_lea.vmem %s1, %s530
        %s532 = smul.u32 16, %s21
        %p533 = scmp.lt.s32.totalorder %s20, 0
        %s534 = scalar_select %p533, %s20, 0
        %s535 = scalar_lea.vmem %s2, %s534
        %s536 = smul.u32 64, %s19
        %p537 = scmp.lt.s32.totalorder %s536, 63
        %s538 = scalar_select %p537, %s536, 63
        %p539 = scmp.lt.s32.totalorder %s20, 0
        %s540 = scalar_select %p539, %s20, 0
        %s541 = sadd.s32 %s540, %s538
        %s542 = smul.addr %s541, 8
        %s543 = scalar_lea.vmem %s3, %s542
        %s544 = smul.u32 64, %s19
        %p546 = scmp.eq.s32.totalorder %s21, 0
        // Predicated region
        $region74: #{resnet_generator_forward.49} parent=68 // pred_check
          %p547 = pneg %p546
        $region75: #{resnet_generator_forward.49} parent=68 // pred_check_branch
          %549 = sbr.rel (%p547) target = $region77
        $region76: #{resnet_generator_forward.49} parent=68 // pred_region
          %550 = vst [vmem:[#allocation2] sm:$0xff] 0.0
          %551 = vst [vmem:[#allocation2 + $0x8] sm:$0xff] 0.0
          %552 = vst [vmem:[#allocation2 + $0x10] sm:$0xff] 0.0
          %553 = vst [vmem:[#allocation2 + $0x18] sm:$0xff] 0.0
          %554 = vst [vmem:[#allocation2 + $0x20] sm:$0xff] 0.0
          %555 = vst [vmem:[#allocation2 + $0x28] sm:$0xff] 0.0
          %556 = vst [vmem:[#allocation2 + $0x30] sm:$0xff] 0.0
          %557 = vst [vmem:[#allocation2 + $0x38] sm:$0xff] 0.0
          %558 = vst [vmem:[#allocation2 + $0x40] sm:$0xff] 0.0
          %559 = vst [vmem:[#allocation2 + $0x48] sm:$0xff] 0.0
          %560 = vst [vmem:[#allocation2 + $0x50] sm:$0xff] 0.0
          %561 = vst [vmem:[#allocation2 + $0x58] sm:$0xff] 0.0
          %562 = vst [vmem:[#allocation2 + $0x60] sm:$0xff] 0.0
          %563 = vst [vmem:[#allocation2 + $0x68] sm:$0xff] 0.0
          %564 = vst [vmem:[#allocation2 + $0x70] sm:$0xff] 0.0
          %565 = vst [vmem:[#allocation2 + $0x78] sm:$0xff] 0.0
          %566 = vst [vmem:[#allocation2 + $0x80] sm:$0xff] 0.0
          %567 = vst [vmem:[#allocation2 + $0x88] sm:$0xff] 0.0
          %568 = vst [vmem:[#allocation2 + $0x90] sm:$0xff] 0.0
          %569 = vst [vmem:[#allocation2 + $0x98] sm:$0xff] 0.0
          %570 = vst [vmem:[#allocation2 + $0xa0] sm:$0xff] 0.0
          %571 = vst [vmem:[#allocation2 + $0xa8] sm:$0xff] 0.0
          %572 = vst [vmem:[#allocation2 + $0xb0] sm:$0xff] 0.0
          %573 = vst [vmem:[#allocation2 + $0xb8] sm:$0xff] 0.0
          %574 = vst [vmem:[#allocation2 + $0xc0] sm:$0xff] 0.0
          %575 = vst [vmem:[#allocation2 + $0xc8] sm:$0xff] 0.0
          %576 = vst [vmem:[#allocation2 + $0xd0] sm:$0xff] 0.0
          %577 = vst [vmem:[#allocation2 + $0xd8] sm:$0xff] 0.0
          %578 = vst [vmem:[#allocation2 + $0xe0] sm:$0xff] 0.0
          %579 = vst [vmem:[#allocation2 + $0xe8] sm:$0xff] 0.0
          %580 = vst [vmem:[#allocation2 + $0xf0] sm:$0xff] 0.0
          %581 = vst [vmem:[#allocation2 + $0xf8] sm:$0xff] 0.0
          %582 = vst [vmem:[#allocation2 + $0x100] sm:$0xff] 0.0
          %583 = vst [vmem:[#allocation2 + $0x108] sm:$0xff] 0.0
          %584 = vst [vmem:[#allocation2 + $0x110] sm:$0xff] 0.0
          %585 = vst [vmem:[#allocation2 + $0x118] sm:$0xff] 0.0
          %586 = vst [vmem:[#allocation2 + $0x120] sm:$0xff] 0.0
          %587 = vst [vmem:[#allocation2 + $0x128] sm:$0xff] 0.0
          %588 = vst [vmem:[#allocation2 + $0x130] sm:$0xff] 0.0
          %589 = vst [vmem:[#allocation2 + $0x138] sm:$0xff] 0.0
          %590 = vst [vmem:[#allocation2 + $0x140] sm:$0xff] 0.0
          %591 = vst [vmem:[#allocation2 + $0x148] sm:$0xff] 0.0
          %592 = vst [vmem:[#allocation2 + $0x150] sm:$0xff] 0.0
          %593 = vst [vmem:[#allocation2 + $0x158] sm:$0xff] 0.0
          %594 = vst [vmem:[#allocation2 + $0x160] sm:$0xff] 0.0
          %595 = vst [vmem:[#allocation2 + $0x168] sm:$0xff] 0.0
          %596 = vst [vmem:[#allocation2 + $0x170] sm:$0xff] 0.0
          %597 = vst [vmem:[#allocation2 + $0x178] sm:$0xff] 0.0
          %598 = vst [vmem:[#allocation2 + $0x180] sm:$0xff] 0.0
          %599 = vst [vmem:[#allocation2 + $0x188] sm:$0xff] 0.0
          %600 = vst [vmem:[#allocation2 + $0x190] sm:$0xff] 0.0
          %601 = vst [vmem:[#allocation2 + $0x198] sm:$0xff] 0.0
          %602 = vst [vmem:[#allocation2 + $0x1a0] sm:$0xff] 0.0
          %603 = vst [vmem:[#allocation2 + $0x1a8] sm:$0xff] 0.0
          %604 = vst [vmem:[#allocation2 + $0x1b0] sm:$0xff] 0.0
          %605 = vst [vmem:[#allocation2 + $0x1b8] sm:$0xff] 0.0
          %606 = vst [vmem:[#allocation2 + $0x1c0] sm:$0xff] 0.0
          %607 = vst [vmem:[#allocation2 + $0x1c8] sm:$0xff] 0.0
          %608 = vst [vmem:[#allocation2 + $0x1d0] sm:$0xff] 0.0
          %609 = vst [vmem:[#allocation2 + $0x1d8] sm:$0xff] 0.0
          %610 = vst [vmem:[#allocation2 + $0x1e0] sm:$0xff] 0.0
          %611 = vst [vmem:[#allocation2 + $0x1e8] sm:$0xff] 0.0
          %612 = vst [vmem:[#allocation2 + $0x1f0] sm:$0xff] 0.0
          %613 = vst [vmem:[#allocation2 + $0x1f8] sm:$0xff] 0.0
        $region77: #{resnet_generator_forward.49} parent=68 // pred_fallthru
          _
        %v614 = vld [vmem:[#allocation2] sm:$0xff]
        %v615 = vld [vmem:[#allocation2 + $0x8] sm:$0xff]
        %v616 = vld [vmem:[#allocation2 + $0x10] sm:$0xff]
        %v617 = vld [vmem:[#allocation2 + $0x18] sm:$0xff]
        %v618 = vld [vmem:[#allocation2 + $0x20] sm:$0xff]
        %v619 = vld [vmem:[#allocation2 + $0x28] sm:$0xff]
        %v620 = vld [vmem:[#allocation2 + $0x30] sm:$0xff]
        %v621 = vld [vmem:[#allocation2 + $0x38] sm:$0xff]
        %v622 = vld [vmem:[#allocation2 + $0x40] sm:$0xff]
        %v623 = vld [vmem:[#allocation2 + $0x48] sm:$0xff]
        %v624 = vld [vmem:[#allocation2 + $0x50] sm:$0xff]
        %v625 = vld [vmem:[#allocation2 + $0x58] sm:$0xff]
        %v626 = vld [vmem:[#allocation2 + $0x60] sm:$0xff]
        %v627 = vld [vmem:[#allocation2 + $0x68] sm:$0xff]
        %v628 = vld [vmem:[#allocation2 + $0x70] sm:$0xff]
        %v629 = vld [vmem:[#allocation2 + $0x78] sm:$0xff]
        %v630 = vld [vmem:[#allocation2 + $0x80] sm:$0xff]
        %v631 = vld [vmem:[#allocation2 + $0x88] sm:$0xff]
        %v632 = vld [vmem:[#allocation2 + $0x90] sm:$0xff]
        %v633 = vld [vmem:[#allocation2 + $0x98] sm:$0xff]
        %v634 = vld [vmem:[#allocation2 + $0xa0] sm:$0xff]
        %v635 = vld [vmem:[#allocation2 + $0xa8] sm:$0xff]
        %v636 = vld [vmem:[#allocation2 + $0xb0] sm:$0xff]
        %v637 = vld [vmem:[#allocation2 + $0xb8] sm:$0xff]
        %v638 = vld [vmem:[#allocation2 + $0xc0] sm:$0xff]
        %v639 = vld [vmem:[#allocation2 + $0xc8] sm:$0xff]
        %v640 = vld [vmem:[#allocation2 + $0xd0] sm:$0xff]
        %v641 = vld [vmem:[#allocation2 + $0xd8] sm:$0xff]
        %v642 = vld [vmem:[#allocation2 + $0xe0] sm:$0xff]
        %v643 = vld [vmem:[#allocation2 + $0xe8] sm:$0xff]
        %v644 = vld [vmem:[#allocation2 + $0xf0] sm:$0xff]
        %v645 = vld [vmem:[#allocation2 + $0xf8] sm:$0xff]
        %v646 = vld [vmem:[#allocation2 + $0x100] sm:$0xff]
        %v647 = vld [vmem:[#allocation2 + $0x108] sm:$0xff]
        %v648 = vld [vmem:[#allocation2 + $0x110] sm:$0xff]
        %v649 = vld [vmem:[#allocation2 + $0x118] sm:$0xff]
        %v650 = vld [vmem:[#allocation2 + $0x120] sm:$0xff]
        %v651 = vld [vmem:[#allocation2 + $0x128] sm:$0xff]
        %v652 = vld [vmem:[#allocation2 + $0x130] sm:$0xff]
        %v653 = vld [vmem:[#allocation2 + $0x138] sm:$0xff]
        %v654 = vld [vmem:[#allocation2 + $0x140] sm:$0xff]
        %v655 = vld [vmem:[#allocation2 + $0x148] sm:$0xff]
        %v656 = vld [vmem:[#allocation2 + $0x150] sm:$0xff]
        %v657 = vld [vmem:[#allocation2 + $0x158] sm:$0xff]
        %v658 = vld [vmem:[#allocation2 + $0x160] sm:$0xff]
        %v659 = vld [vmem:[#allocation2 + $0x168] sm:$0xff]
        %v660 = vld [vmem:[#allocation2 + $0x170] sm:$0xff]
        %v661 = vld [vmem:[#allocation2 + $0x178] sm:$0xff]
        %v662 = vld [vmem:[#allocation2 + $0x180] sm:$0xff]
        %v663 = vld [vmem:[#allocation2 + $0x188] sm:$0xff]
        %v664 = vld [vmem:[#allocation2 + $0x190] sm:$0xff]
        %v665 = vld [vmem:[#allocation2 + $0x198] sm:$0xff]
        %v666 = vld [vmem:[#allocation2 + $0x1a0] sm:$0xff]
        %v667 = vld [vmem:[#allocation2 + $0x1a8] sm:$0xff]
        %v668 = vld [vmem:[#allocation2 + $0x1b0] sm:$0xff]
        %v669 = vld [vmem:[#allocation2 + $0x1b8] sm:$0xff]
        %v670 = vld [vmem:[#allocation2 + $0x1c0] sm:$0xff]
        %v671 = vld [vmem:[#allocation2 + $0x1c8] sm:$0xff]
        %v672 = vld [vmem:[#allocation2 + $0x1d0] sm:$0xff]
        %v673 = vld [vmem:[#allocation2 + $0x1d8] sm:$0xff]
        %v674 = vld [vmem:[#allocation2 + $0x1e0] sm:$0xff]
        %v675 = vld [vmem:[#allocation2 + $0x1e8] sm:$0xff]
        %v676 = vld [vmem:[#allocation2 + $0x1f0] sm:$0xff]
        %v677 = vld [vmem:[#allocation2 + $0x1f8] sm:$0xff]
        %v678 = vld [vmem:[%s488] sm:$0xf]
        %v679 = vld [vmem:[%s488 + $0x4] sm:$0xf]
        %v680 = vld [vmem:[%s488 + $0x8] sm:$0xf]
        %v681 = vld [vmem:[%s488 + $0xc] sm:$0xf]
        %v682 = vld [vmem:[%s488 + $0x10] sm:$0xf]
        %v683 = vld [vmem:[%s488 + $0x14] sm:$0xf]
        %v684 = vld [vmem:[%s488 + $0x18] sm:$0xf]
        %v685 = vld [vmem:[%s488 + $0x1c] sm:$0xf]
        %v686 = vld [vmem:[%s488 + $0x20] sm:$0xf]
        %v687 = vld [vmem:[%s488 + $0x24] sm:$0xf]
        %v688 = vld [vmem:[%s488 + $0x28] sm:$0xf]
        %v689 = vld [vmem:[%s488 + $0x2c] sm:$0xf]
        %v690 = vld [vmem:[%s488 + $0x30] sm:$0xf]
        %v691 = vld [vmem:[%s488 + $0x34] sm:$0xf]
        %v692 = vld [vmem:[%s488 + $0x38] sm:$0xf]
        %v693 = vld [vmem:[%s488 + $0x3c] sm:$0xf]
        %v694 = vld [vmem:[%s488 + $0x40] sm:$0xf]
        %v695 = vld [vmem:[%s488 + $0x44] sm:$0xf]
        %v696 = vld [vmem:[%s488 + $0x48] sm:$0xf]
        %v697 = vld [vmem:[%s488 + $0x4c] sm:$0xf]
        %v698 = vld [vmem:[%s488 + $0x50] sm:$0xf]
        %v699 = vld [vmem:[%s488 + $0x54] sm:$0xf]
        %v700 = vld [vmem:[%s488 + $0x58] sm:$0xf]
        %v701 = vld [vmem:[%s488 + $0x5c] sm:$0xf]
        %v702 = vld [vmem:[%s488 + $0x60] sm:$0xf]
        %v703 = vld [vmem:[%s488 + $0x64] sm:$0xf]
        %v704 = vld [vmem:[%s488 + $0x68] sm:$0xf]
        %v705 = vld [vmem:[%s488 + $0x6c] sm:$0xf]
        %v706 = vld [vmem:[%s488 + $0x70] sm:$0xf]
        %v707 = vld [vmem:[%s488 + $0x74] sm:$0xf]
        %v708 = vld [vmem:[%s488 + $0x78] sm:$0xf]
        %v709 = vld [vmem:[%s488 + $0x7c] sm:$0xf]
        %v710 = vld [vmem:[%s488 + $0x80] sm:$0xf]
        %v711 = vld [vmem:[%s488 + $0x84] sm:$0xf]
        %v712 = vld [vmem:[%s488 + $0x88] sm:$0xf]
        %v713 = vld [vmem:[%s488 + $0x8c] sm:$0xf]
        %v714 = vld [vmem:[%s488 + $0x90] sm:$0xf]
        %v715 = vld [vmem:[%s488 + $0x94] sm:$0xf]
        %v716 = vld [vmem:[%s488 + $0x98] sm:$0xf]
        %v717 = vld [vmem:[%s488 + $0x9c] sm:$0xf]
        %v718 = vld [vmem:[%s488 + $0xa0] sm:$0xf]
        %v719 = vld [vmem:[%s488 + $0xa4] sm:$0xf]
        %v720 = vld [vmem:[%s488 + $0xa8] sm:$0xf]
        %v721 = vld [vmem:[%s488 + $0xac] sm:$0xf]
        %v722 = vld [vmem:[%s488 + $0xb0] sm:$0xf]
        %v723 = vld [vmem:[%s488 + $0xb4] sm:$0xf]
        %v724 = vld [vmem:[%s488 + $0xb8] sm:$0xf]
        %v725 = vld [vmem:[%s488 + $0xbc] sm:$0xf]
        %v726 = vld [vmem:[%s488 + $0xc0] sm:$0xf]
        %v727 = vld [vmem:[%s488 + $0xc4] sm:$0xf]
        %v728 = vld [vmem:[%s488 + $0xc8] sm:$0xf]
        %v729 = vld [vmem:[%s488 + $0xcc] sm:$0xf]
        %v730 = vld [vmem:[%s488 + $0xd0] sm:$0xf]
        %v731 = vld [vmem:[%s488 + $0xd4] sm:$0xf]
        %v732 = vld [vmem:[%s488 + $0xd8] sm:$0xf]
        %v733 = vld [vmem:[%s488 + $0xdc] sm:$0xf]
        %v734 = vld [vmem:[%s488 + $0xe0] sm:$0xf]
        %v735 = vld [vmem:[%s488 + $0xe4] sm:$0xf]
        %v736 = vld [vmem:[%s488 + $0xe8] sm:$0xf]
        %v737 = vld [vmem:[%s488 + $0xec] sm:$0xf]
        %v738 = vld [vmem:[%s488 + $0xf0] sm:$0xf]
        %v739 = vld [vmem:[%s488 + $0xf4] sm:$0xf]
        %v740 = vld [vmem:[%s488 + $0xf8] sm:$0xf]
        %v741 = vld [vmem:[%s488 + $0xfc] sm:$0xf]
        %v742 = vld [vmem:[%s531] sm:$0xf]
        %v743 = vld [vmem:[%s531 + $0x4] sm:$0xf]
        %v744 = vld [vmem:[%s531 + $0x8] sm:$0xf]
        %v745 = vld [vmem:[%s531 + $0xc] sm:$0xf]
        %v746 = vld [vmem:[%s531 + $0x10] sm:$0xf]
        %v747 = vld [vmem:[%s531 + $0x14] sm:$0xf]
        %v748 = vld [vmem:[%s531 + $0x18] sm:$0xf]
        %v749 = vld [vmem:[%s531 + $0x1c] sm:$0xf]
        %v750 = vld [vmem:[%s531 + $0x20] sm:$0xf]
        %v751 = vld [vmem:[%s531 + $0x24] sm:$0xf]
        %v752 = vld [vmem:[%s531 + $0x28] sm:$0xf]
        %v753 = vld [vmem:[%s531 + $0x2c] sm:$0xf]
        %v754 = vld [vmem:[%s531 + $0x30] sm:$0xf]
        %v755 = vld [vmem:[%s531 + $0x34] sm:$0xf]
        %v756 = vld [vmem:[%s531 + $0x38] sm:$0xf]
        %v757 = vld [vmem:[%s531 + $0x3c] sm:$0xf]
        %v822 = vunpack.c.l.b16 %v678
        %v823 = vunpack.c.l.b16 %v679
        %v824 = vunpack.c.l.b16 %v680
        %v825 = vunpack.c.l.b16 %v681
        %v826 = vunpack.c.l.b16 %v682
        %v827 = vunpack.c.l.b16 %v683
        %v828 = vunpack.c.l.b16 %v684
        %v829 = vunpack.c.l.b16 %v685
        %v830 = vunpack.c.l.b16 %v686
        %v831 = vunpack.c.l.b16 %v687
        %v832 = vunpack.c.l.b16 %v688
        %v833 = vunpack.c.l.b16 %v689
        %v834 = vunpack.c.l.b16 %v690
        %v835 = vunpack.c.l.b16 %v691
        %v836 = vunpack.c.l.b16 %v692
        %v837 = vunpack.c.l.b16 %v693
        %v838 = vunpack.c.l.b16 %v694
        %v839 = vunpack.c.l.b16 %v695
        %v840 = vunpack.c.l.b16 %v696
        %v841 = vunpack.c.l.b16 %v697
        %v842 = vunpack.c.l.b16 %v698
        %v843 = vunpack.c.l.b16 %v699
        %v844 = vunpack.c.l.b16 %v700
        %v845 = vunpack.c.l.b16 %v701
        %v846 = vunpack.c.l.b16 %v702
        %v847 = vunpack.c.l.b16 %v703
        %v848 = vunpack.c.l.b16 %v704
        %v849 = vunpack.c.l.b16 %v705
        %v850 = vunpack.c.l.b16 %v706
        %v851 = vunpack.c.l.b16 %v707
        %v852 = vunpack.c.l.b16 %v708
        %v853 = vunpack.c.l.b16 %v709
        %v854 = vunpack.c.l.b16 %v710
        %v855 = vunpack.c.l.b16 %v711
        %v856 = vunpack.c.l.b16 %v712
        %v857 = vunpack.c.l.b16 %v713
        %v858 = vunpack.c.l.b16 %v714
        %v859 = vunpack.c.l.b16 %v715
        %v860 = vunpack.c.l.b16 %v716
        %v861 = vunpack.c.l.b16 %v717
        %v862 = vunpack.c.l.b16 %v718
        %v863 = vunpack.c.l.b16 %v719
        %v864 = vunpack.c.l.b16 %v720
        %v865 = vunpack.c.l.b16 %v721
        %v866 = vunpack.c.l.b16 %v722
        %v867 = vunpack.c.l.b16 %v723
        %v868 = vunpack.c.l.b16 %v724
        %v869 = vunpack.c.l.b16 %v725
        %v870 = vunpack.c.l.b16 %v726
        %v871 = vunpack.c.l.b16 %v727
        %v872 = vunpack.c.l.b16 %v728
        %v873 = vunpack.c.l.b16 %v729
        %v874 = vunpack.c.l.b16 %v730
        %v875 = vunpack.c.l.b16 %v731
        %v876 = vunpack.c.l.b16 %v732
        %v877 = vunpack.c.l.b16 %v733
        %v878 = vunpack.c.l.b16 %v734
        %v879 = vunpack.c.l.b16 %v735
        %v880 = vunpack.c.l.b16 %v736
        %v881 = vunpack.c.l.b16 %v737
        %v882 = vunpack.c.l.b16 %v738
        %v883 = vunpack.c.l.b16 %v739
        %v884 = vunpack.c.l.b16 %v740
        %v885 = vunpack.c.l.b16 %v741
        %v886 = vpack.c.b16 %v823, %v822
        %v887 = vpack.c.b16 %v825, %v824
        %v888 = vpack.c.b16 %v827, %v826
        %v889 = vpack.c.b16 %v829, %v828
        %v890 = vpack.c.b16 %v831, %v830
        %v891 = vpack.c.b16 %v833, %v832
        %v892 = vpack.c.b16 %v835, %v834
        %v893 = vpack.c.b16 %v837, %v836
        %v894 = vpack.c.b16 %v839, %v838
        %v895 = vpack.c.b16 %v841, %v840
        %v896 = vpack.c.b16 %v843, %v842
        %v897 = vpack.c.b16 %v845, %v844
        %v898 = vpack.c.b16 %v847, %v846
        %v899 = vpack.c.b16 %v849, %v848
        %v900 = vpack.c.b16 %v851, %v850
        %v901 = vpack.c.b16 %v853, %v852
        %v902 = vpack.c.b16 %v855, %v854
        %v903 = vpack.c.b16 %v857, %v856
        %v904 = vpack.c.b16 %v859, %v858
        %v905 = vpack.c.b16 %v861, %v860
        %v906 = vpack.c.b16 %v863, %v862
        %v907 = vpack.c.b16 %v865, %v864
        %v908 = vpack.c.b16 %v867, %v866
        %v909 = vpack.c.b16 %v869, %v868
        %v910 = vpack.c.b16 %v871, %v870
        %v911 = vpack.c.b16 %v873, %v872
        %v912 = vpack.c.b16 %v875, %v874
        %v913 = vpack.c.b16 %v877, %v876
        %v914 = vpack.c.b16 %v879, %v878
        %v915 = vpack.c.b16 %v881, %v880
        %v916 = vpack.c.b16 %v883, %v882
        %v917 = vpack.c.b16 %v885, %v884
        %v966 = vunpack.c.l.b16 %v742
        %v967 = vunpack.c.l.b16 %v743
        %v968 = vunpack.c.l.b16 %v744
        %v969 = vunpack.c.l.b16 %v745
        %v970 = vunpack.c.l.b16 %v746
        %v971 = vunpack.c.l.b16 %v747
        %v972 = vunpack.c.l.b16 %v748
        %v973 = vunpack.c.l.b16 %v749
        %v974 = vunpack.c.l.b16 %v750
        %v975 = vunpack.c.l.b16 %v751
        %v976 = vunpack.c.l.b16 %v752
        %v977 = vunpack.c.l.b16 %v753
        %v978 = vunpack.c.l.b16 %v754
        %v979 = vunpack.c.l.b16 %v755
        %v980 = vunpack.c.l.b16 %v756
        %v981 = vunpack.c.l.b16 %v757
        %v982 = vpack.c.b16 %v967, %v966
        %v983 = vpack.c.b16 %v969, %v968
        %v984 = vpack.c.b16 %v971, %v970
        %v985 = vpack.c.b16 %v973, %v972
        %v986 = vpack.c.b16 %v975, %v974
        %v987 = vpack.c.b16 %v977, %v976
        %v988 = vpack.c.b16 %v979, %v978
        %v989 = vpack.c.b16 %v981, %v980
        %998 = vmatprep.subr.bf16.mxu0 0
        %999 = vmatpush1.bf16.msra.mxu0 %v982
        %1000 = vmatprep.subr.bf16.mxu0 0
        %1001 = vmatpush1.bf16.msra.mxu0 %v983
        %1002 = vmatprep.subr.bf16.mxu0 0
        %1003 = vmatpush1.bf16.msra.mxu0 %v984
        %1004 = vmatprep.subr.bf16.mxu0 0
        %1005 = vmatpush1.bf16.msra.mxu0 %v985
        %1006 = vmatprep.subr.bf16.mxu0 0
        %1007 = vmatpush1.bf16.msra.mxu0 %v986
        %1008 = vmatprep.subr.bf16.mxu0 0
        %1009 = vmatpush1.bf16.msra.mxu0 %v987
        %1010 = vmatprep.subr.bf16.mxu0 0
        %1011 = vmatpush1.bf16.msra.mxu0 %v988
        %1012 = vmatprep.subr.bf16.mxu0 0
        %1013 = vmatpush1.bf16.msra.mxu0 %v989
        %1014 = vmatprep.subr.bf16.mxu0 0
        %1015 = vmatpush1.bf16.msra.mxu0 0
        %1016 = vmatprep.subr.bf16.mxu0 0
        %1017 = vmatpush1.bf16.msra.mxu0 0
        %1018 = vmatprep.subr.bf16.mxu0 0
        %1019 = vmatpush1.bf16.msra.mxu0 0
        %1020 = vmatprep.subr.bf16.mxu0 0
        %1021 = vmatpush1.bf16.msra.mxu0 0
        %1022 = vmatprep.subr.bf16.mxu0 0
        %1023 = vmatpush1.bf16.msra.mxu0 0
        %1024 = vmatprep.subr.bf16.mxu0 0
        %1025 = vmatpush1.bf16.msra.mxu0 0
        %1026 = vmatprep.subr.bf16.mxu0 0
        %1027 = vmatpush1.bf16.msra.mxu0 0
        %1028 = vmatprep.subr.bf16.mxu0 0
        %1029 = vmatpush1.bf16.msra.mxu0 0
        %1030 = vmatprep.mubr.bf16.mxu0 0
        %1031 = vmatmul.mubr.bf16.gmra.mrb[0].mxu0 %v886
        %v1032 = vpop.f32.mrb[0].mxu0
        %v1033 = vadd.f32 0.0, %v1032
        %v1034 = vpop.f32.mrb[0].mxu0
        %v1035 = vpop.f32.mrb[0].mxu0
        %v1036 = vadd.f32 0.0, %v1035
        %v1037 = vpop.f32.mrb[0].mxu0
        %1038 = vmatprep.mubr.bf16.mxu0 0
        %1039 = vmatmul.mubr.bf16.gmra.mrb[0].mxu0 %v887
        %v1040 = vpop.f32.mrb[0].mxu0
        %v1041 = vadd.f32 0.0, %v1040
        %v1042 = vpop.f32.mrb[0].mxu0
        %v1043 = vpop.f32.mrb[0].mxu0
        %v1044 = vadd.f32 0.0, %v1043
        %v1045 = vpop.f32.mrb[0].mxu0
        %1046 = vmatprep.mubr.bf16.mxu0 0
        %1047 = vmatmul.mubr.bf16.gmra.mrb[0].mxu0 %v888
        %v1048 = vpop.f32.mrb[0].mxu0
        %v1049 = vadd.f32 0.0, %v1048
        %v1050 = vpop.f32.mrb[0].mxu0
        %v1051 = vpop.f32.mrb[0].mxu0
        %v1052 = vadd.f32 0.0, %v1051
        %v1053 = vpop.f32.mrb[0].mxu0
        %1054 = vmatprep.mubr.bf16.mxu0 0
        %1055 = vmatmul.mubr.bf16.gmra.mrb[0].mxu0 %v889
        %v1056 = vpop.f32.mrb[0].mxu0
        %v1057 = vadd.f32 0.0, %v1056
        %v1058 = vpop.f32.mrb[0].mxu0
        %v1059 = vpop.f32.mrb[0].mxu0
        %v1060 = vadd.f32 0.0, %v1059
        %v1061 = vpop.f32.mrb[0].mxu0
        %1062 = vmatprep.mubr.bf16.mxu0 0
        %1063 = vmatmul.mubr.bf16.gmra.mrb[0].mxu0 %v890
        %v1064 = vpop.f32.mrb[0].mxu0
        %v1065 = vadd.f32 0.0, %v1064
        %v1066 = vpop.f32.mrb[0].mxu0
        %v1067 = vpop.f32.mrb[0].mxu0
        %v1068 = vadd.f32 0.0, %v1067
        %v1069 = vpop.f32.mrb[0].mxu0
        %1070 = vmatprep.mubr.bf16.mxu0 0
        %1071 = vmatmul.mubr.bf16.gmra.mrb[0].mxu0 %v891
        %v1072 = vpop.f32.mrb[0].mxu0
        %v1073 = vadd.f32 0.0, %v1072
        %v1074 = vpop.f32.mrb[0].mxu0
        %v1075 = vpop.f32.mrb[0].mxu0
        %v1076 = vadd.f32 0.0, %v1075
        %v1077 = vpop.f32.mrb[0].mxu0
        %1078 = vmatprep.mubr.bf16.mxu0 0
        %1079 = vmatmul.mubr.bf16.gmra.mrb[0].mxu0 %v892
        %v1080 = vpop.f32.mrb[0].mxu0
        %v1081 = vadd.f32 0.0, %v1080
        %v1082 = vpop.f32.mrb[0].mxu0
        %v1083 = vpop.f32.mrb[0].mxu0
        %v1084 = vadd.f32 0.0, %v1083
        %v1085 = vpop.f32.mrb[0].mxu0
        %1086 = vmatprep.mubr.bf16.mxu0 0
        %1087 = vmatmul.mubr.bf16.gmra.mrb[0].mxu0 %v893
        %v1088 = vpop.f32.mrb[0].mxu0
        %v1089 = vadd.f32 0.0, %v1088
        %v1090 = vpop.f32.mrb[0].mxu0
        %v1091 = vpop.f32.mrb[0].mxu0
        %v1092 = vadd.f32 0.0, %v1091
        %v1093 = vpop.f32.mrb[0].mxu0
        %1094 = vmatprep.mubr.bf16.mxu0 0
        %1095 = vmatmul.mubr.bf16.gmra.mrb[0].mxu0 %v894
        %v1096 = vpop.f32.mrb[0].mxu0
        %v1097 = vadd.f32 0.0, %v1096
        %v1098 = vpop.f32.mrb[0].mxu0
        %v1099 = vpop.f32.mrb[0].mxu0
        %v1100 = vadd.f32 0.0, %v1099
        %v1101 = vpop.f32.mrb[0].mxu0
        %1102 = vmatprep.mubr.bf16.mxu0 0
        %1103 = vmatmul.mubr.bf16.gmra.mrb[0].mxu0 %v895
        %v1104 = vpop.f32.mrb[0].mxu0
        %v1105 = vadd.f32 0.0, %v1104
        %v1106 = vpop.f32.mrb[0].mxu0
        %v1107 = vpop.f32.mrb[0].mxu0
        %v1108 = vadd.f32 0.0, %v1107
        %v1109 = vpop.f32.mrb[0].mxu0
        %1110 = vmatprep.mubr.bf16.mxu0 0
        %1111 = vmatmul.mubr.bf16.gmra.mrb[0].mxu0 %v896
        %v1112 = vpop.f32.mrb[0].mxu0
        %v1113 = vadd.f32 0.0, %v1112
        %v1114 = vpop.f32.mrb[0].mxu0
        %v1115 = vpop.f32.mrb[0].mxu0
        %v1116 = vadd.f32 0.0, %v1115
        %v1117 = vpop.f32.mrb[0].mxu0
        %1118 = vmatprep.mubr.bf16.mxu0 0
        %1119 = vmatmul.mubr.bf16.gmra.mrb[0].mxu0 %v897
        %v1120 = vpop.f32.mrb[0].mxu0
        %v1121 = vadd.f32 0.0, %v1120
        %v1122 = vpop.f32.mrb[0].mxu0
        %v1123 = vpop.f32.mrb[0].mxu0
        %v1124 = vadd.f32 0.0, %v1123
        %v1125 = vpop.f32.mrb[0].mxu0
        %1126 = vmatprep.mubr.bf16.mxu0 0
        %1127 = vmatmul.mubr.bf16.gmra.mrb[0].mxu0 %v898
        %v1128 = vpop.f32.mrb[0].mxu0
        %v1129 = vadd.f32 0.0, %v1128
        %v1130 = vpop.f32.mrb[0].mxu0
        %v1131 = vpop.f32.mrb[0].mxu0
        %v1132 = vadd.f32 0.0, %v1131
        %v1133 = vpop.f32.mrb[0].mxu0
        %1134 = vmatprep.mubr.bf16.mxu0 0
        %1135 = vmatmul.mubr.bf16.gmra.mrb[0].mxu0 %v899
        %v1136 = vpop.f32.mrb[0].mxu0
        %v1137 = vadd.f32 0.0, %v1136
        %v1138 = vpop.f32.mrb[0].mxu0
        %v1139 = vpop.f32.mrb[0].mxu0
        %v1140 = vadd.f32 0.0, %v1139
        %v1141 = vpop.f32.mrb[0].mxu0
        %1142 = vmatprep.mubr.bf16.mxu0 0
        %1143 = vmatmul.mubr.bf16.gmra.mrb[0].mxu0 %v900
        %v1144 = vpop.f32.mrb[0].mxu0
        %v1145 = vadd.f32 0.0, %v1144
        %v1146 = vpop.f32.mrb[0].mxu0
        %v1147 = vpop.f32.mrb[0].mxu0
        %v1148 = vadd.f32 0.0, %v1147
        %v1149 = vpop.f32.mrb[0].mxu0
        %1150 = vmatprep.mubr.bf16.mxu0 0
        %1151 = vmatmul.mubr.bf16.gmra.mrb[0].mxu0 %v901
        %v1152 = vpop.f32.mrb[0].mxu0
        %v1153 = vadd.f32 0.0, %v1152
        %v1154 = vpop.f32.mrb[0].mxu0
        %v1155 = vpop.f32.mrb[0].mxu0
        %v1156 = vadd.f32 0.0, %v1155
        %v1157 = vpop.f32.mrb[0].mxu0
        %1158 = vmatprep.mubr.bf16.mxu0 0
        %1159 = vmatmul.mubr.bf16.gmra.mrb[0].mxu0 %v902
        %v1160 = vpop.f32.mrb[0].mxu0
        %v1161 = vadd.f32 0.0, %v1160
        %v1162 = vpop.f32.mrb[0].mxu0
        %v1163 = vpop.f32.mrb[0].mxu0
        %v1164 = vadd.f32 0.0, %v1163
        %v1165 = vpop.f32.mrb[0].mxu0
        %1166 = vmatprep.mubr.bf16.mxu0 0
        %1167 = vmatmul.mubr.bf16.gmra.mrb[0].mxu0 %v903
        %v1168 = vpop.f32.mrb[0].mxu0
        %v1169 = vadd.f32 0.0, %v1168
        %v1170 = vpop.f32.mrb[0].mxu0
        %v1171 = vpop.f32.mrb[0].mxu0
        %v1172 = vadd.f32 0.0, %v1171
        %v1173 = vpop.f32.mrb[0].mxu0
        %1174 = vmatprep.mubr.bf16.mxu0 0
        %1175 = vmatmul.mubr.bf16.gmra.mrb[0].mxu0 %v904
        %v1176 = vpop.f32.mrb[0].mxu0
        %v1177 = vadd.f32 0.0, %v1176
        %v1178 = vpop.f32.mrb[0].mxu0
        %v1179 = vpop.f32.mrb[0].mxu0
        %v1180 = vadd.f32 0.0, %v1179
        %v1181 = vpop.f32.mrb[0].mxu0
        %1182 = vmatprep.mubr.bf16.mxu0 0
        %1183 = vmatmul.mubr.bf16.gmra.mrb[0].mxu0 %v905
        %v1184 = vpop.f32.mrb[0].mxu0
        %v1185 = vadd.f32 0.0, %v1184
        %v1186 = vpop.f32.mrb[0].mxu0
        %v1187 = vpop.f32.mrb[0].mxu0
        %v1188 = vadd.f32 0.0, %v1187
        %v1189 = vpop.f32.mrb[0].mxu0
        %1190 = vmatprep.mubr.bf16.mxu0 0
        %1191 = vmatmul.mubr.bf16.gmra.mrb[0].mxu0 %v906
        %v1192 = vpop.f32.mrb[0].mxu0
        %v1193 = vadd.f32 0.0, %v1192
        %v1194 = vpop.f32.mrb[0].mxu0
        %v1195 = vpop.f32.mrb[0].mxu0
        %v1196 = vadd.f32 0.0, %v1195
        %v1197 = vpop.f32.mrb[0].mxu0
        %1198 = vmatprep.mubr.bf16.mxu0 0
        %1199 = vmatmul.mubr.bf16.gmra.mrb[0].mxu0 %v907
        %v1200 = vpop.f32.mrb[0].mxu0
        %v1201 = vadd.f32 0.0, %v1200
        %v1202 = vpop.f32.mrb[0].mxu0
        %v1203 = vpop.f32.mrb[0].mxu0
        %v1204 = vadd.f32 0.0, %v1203
        %v1205 = vpop.f32.mrb[0].mxu0
        %1206 = vmatprep.mubr.bf16.mxu0 0
        %1207 = vmatmul.mubr.bf16.gmra.mrb[0].mxu0 %v908
        %v1208 = vpop.f32.mrb[0].mxu0
        %v1209 = vadd.f32 0.0, %v1208
        %v1210 = vpop.f32.mrb[0].mxu0
        %v1211 = vpop.f32.mrb[0].mxu0
        %v1212 = vadd.f32 0.0, %v1211
        %v1213 = vpop.f32.mrb[0].mxu0
        %1214 = vmatprep.mubr.bf16.mxu0 0
        %1215 = vmatmul.mubr.bf16.gmra.mrb[0].mxu0 %v909
        %v1216 = vpop.f32.mrb[0].mxu0
        %v1217 = vadd.f32 0.0, %v1216
        %v1218 = vpop.f32.mrb[0].mxu0
        %v1219 = vpop.f32.mrb[0].mxu0
        %v1220 = vadd.f32 0.0, %v1219
        %v1221 = vpop.f32.mrb[0].mxu0
        %1222 = vmatprep.mubr.bf16.mxu0 0
        %1223 = vmatmul.mubr.bf16.gmra.mrb[0].mxu0 %v910
        %v1224 = vpop.f32.mrb[0].mxu0
        %v1225 = vadd.f32 0.0, %v1224
        %v1226 = vpop.f32.mrb[0].mxu0
        %v1227 = vpop.f32.mrb[0].mxu0
        %v1228 = vadd.f32 0.0, %v1227
        %v1229 = vpop.f32.mrb[0].mxu0
        %1230 = vmatprep.mubr.bf16.mxu0 0
        %1231 = vmatmul.mubr.bf16.gmra.mrb[0].mxu0 %v911
        %v1232 = vpop.f32.mrb[0].mxu0
        %v1233 = vadd.f32 0.0, %v1232
        %v1234 = vpop.f32.mrb[0].mxu0
        %v1235 = vpop.f32.mrb[0].mxu0
        %v1236 = vadd.f32 0.0, %v1235
        %v1237 = vpop.f32.mrb[0].mxu0
        %1238 = vmatprep.mubr.bf16.mxu0 0
        %1239 = vmatmul.mubr.bf16.gmra.mrb[0].mxu0 %v912
        %v1240 = vpop.f32.mrb[0].mxu0
        %v1241 = vadd.f32 0.0, %v1240
        %v1242 = vpop.f32.mrb[0].mxu0
        %v1243 = vpop.f32.mrb[0].mxu0
        %v1244 = vadd.f32 0.0, %v1243
        %v1245 = vpop.f32.mrb[0].mxu0
        %1246 = vmatprep.mubr.bf16.mxu0 0
        %1247 = vmatmul.mubr.bf16.gmra.mrb[0].mxu0 %v913
        %v1248 = vpop.f32.mrb[0].mxu0
        %v1249 = vadd.f32 0.0, %v1248
        %v1250 = vpop.f32.mrb[0].mxu0
        %v1251 = vpop.f32.mrb[0].mxu0
        %v1252 = vadd.f32 0.0, %v1251
        %v1253 = vpop.f32.mrb[0].mxu0
        %1254 = vmatprep.mubr.bf16.mxu0 0
        %1255 = vmatmul.mubr.bf16.gmra.mrb[0].mxu0 %v914
        %v1256 = vpop.f32.mrb[0].mxu0
        %v1257 = vadd.f32 0.0, %v1256
        %v1258 = vpop.f32.mrb[0].mxu0
        %v1259 = vpop.f32.mrb[0].mxu0
        %v1260 = vadd.f32 0.0, %v1259
        %v1261 = vpop.f32.mrb[0].mxu0
        %1262 = vmatprep.mubr.bf16.mxu0 0
        %1263 = vmatmul.mubr.bf16.gmra.mrb[0].mxu0 %v915
        %v1264 = vpop.f32.mrb[0].mxu0
        %v1265 = vadd.f32 0.0, %v1264
        %v1266 = vpop.f32.mrb[0].mxu0
        %v1267 = vpop.f32.mrb[0].mxu0
        %v1268 = vadd.f32 0.0, %v1267
        %v1269 = vpop.f32.mrb[0].mxu0
        %1270 = vmatprep.mubr.bf16.mxu0 0
        %1271 = vmatmul.mubr.bf16.gmra.mrb[0].mxu0 %v916
        %v1272 = vpop.f32.mrb[0].mxu0
        %v1273 = vadd.f32 0.0, %v1272
        %v1274 = vpop.f32.mrb[0].mxu0
        %v1275 = vpop.f32.mrb[0].mxu0
        %v1276 = vadd.f32 0.0, %v1275
        %v1277 = vpop.f32.mrb[0].mxu0
        %1278 = vmatprep.mubr.bf16.mxu0 0
        %1279 = vmatmul.mubr.bf16.gmra.mrb[0].mxu0 %v917
        %v1280 = vpop.f32.mrb[0].mxu0
        %v1281 = vadd.f32 0.0, %v1280
        %v1282 = vpop.f32.mrb[0].mxu0
        %v1283 = vpop.f32.mrb[0].mxu0
        %v1284 = vadd.f32 0.0, %v1283
        %v1285 = vpop.f32.mrb[0].mxu0
        %1286 = vdwg.mxu0
        %v1287 = vadd.f32 %v614, %v1033
        %v1288 = vadd.f32 %v615, %v1036
        %v1289 = vadd.f32 %v616, %v1041
        %v1290 = vadd.f32 %v617, %v1044
        %v1291 = vadd.f32 %v618, %v1049
        %v1292 = vadd.f32 %v619, %v1052
        %v1293 = vadd.f32 %v620, %v1057
        %v1294 = vadd.f32 %v621, %v1060
        %v1295 = vadd.f32 %v622, %v1065
        %v1296 = vadd.f32 %v623, %v1068
        %v1297 = vadd.f32 %v624, %v1073
        %v1298 = vadd.f32 %v625, %v1076
        %v1299 = vadd.f32 %v626, %v1081
        %v1300 = vadd.f32 %v627, %v1084
        %v1301 = vadd.f32 %v628, %v1089
        %v1302 = vadd.f32 %v629, %v1092
        %v1303 = vadd.f32 %v630, %v1097
        %v1304 = vadd.f32 %v631, %v1100
        %v1305 = vadd.f32 %v632, %v1105
        %v1306 = vadd.f32 %v633, %v1108
        %v1307 = vadd.f32 %v634, %v1113
        %v1308 = vadd.f32 %v635, %v1116
        %v1309 = vadd.f32 %v636, %v1121
        %v1310 = vadd.f32 %v637, %v1124
        %v1311 = vadd.f32 %v638, %v1129
        %v1312 = vadd.f32 %v639, %v1132
        %v1313 = vadd.f32 %v640, %v1137
        %v1314 = vadd.f32 %v641, %v1140
        %v1315 = vadd.f32 %v642, %v1145
        %v1316 = vadd.f32 %v643, %v1148
        %v1317 = vadd.f32 %v644, %v1153
        %v1318 = vadd.f32 %v645, %v1156
        %v1319 = vadd.f32 %v646, %v1161
        %v1320 = vadd.f32 %v647, %v1164
        %v1321 = vadd.f32 %v648, %v1169
        %v1322 = vadd.f32 %v649, %v1172
        %v1323 = vadd.f32 %v650, %v1177
        %v1324 = vadd.f32 %v651, %v1180
        %v1325 = vadd.f32 %v652, %v1185
        %v1326 = vadd.f32 %v653, %v1188
        %v1327 = vadd.f32 %v654, %v1193
        %v1328 = vadd.f32 %v655, %v1196
        %v1329 = vadd.f32 %v656, %v1201
        %v1330 = vadd.f32 %v657, %v1204
        %v1331 = vadd.f32 %v658, %v1209
        %v1332 = vadd.f32 %v659, %v1212
        %v1333 = vadd.f32 %v660, %v1217
        %v1334 = vadd.f32 %v661, %v1220
        %v1335 = vadd.f32 %v662, %v1225
        %v1336 = vadd.f32 %v663, %v1228
        %v1337 = vadd.f32 %v664, %v1233
        %v1338 = vadd.f32 %v665, %v1236
        %v1339 = vadd.f32 %v666, %v1241
        %v1340 = vadd.f32 %v667, %v1244
        %v1341 = vadd.f32 %v668, %v1249
        %v1342 = vadd.f32 %v669, %v1252
        %v1343 = vadd.f32 %v670, %v1257
        %v1344 = vadd.f32 %v671, %v1260
        %v1345 = vadd.f32 %v672, %v1265
        %v1346 = vadd.f32 %v673, %v1268
        %v1347 = vadd.f32 %v674, %v1273
        %v1348 = vadd.f32 %v675, %v1276
        %v1349 = vadd.f32 %v676, %v1281
        %v1350 = vadd.f32 %v677, %v1284
        %1351 = vst [vmem:[#allocation2] sm:$0xff] %v1287
        %1352 = vst [vmem:[#allocation2 + $0x8] sm:$0xff] %v1288
        %1353 = vst [vmem:[#allocation2 + $0x10] sm:$0xff] %v1289
        %1354 = vst [vmem:[#allocation2 + $0x18] sm:$0xff] %v1290
        %1355 = vst [vmem:[#allocation2 + $0x20] sm:$0xff] %v1291
        %1356 = vst [vmem:[#allocation2 + $0x28] sm:$0xff] %v1292
        %1357 = vst [vmem:[#allocation2 + $0x30] sm:$0xff] %v1293
        %1358 = vst [vmem:[#allocation2 + $0x38] sm:$0xff] %v1294
        %1359 = vst [vmem:[#allocation2 + $0x40] sm:$0xff] %v1295
        %1360 = vst [vmem:[#allocation2 + $0x48] sm:$0xff] %v1296
        %1361 = vst [vmem:[#allocation2 + $0x50] sm:$0xff] %v1297
        %1362 = vst [vmem:[#allocation2 + $0x58] sm:$0xff] %v1298
        %1363 = vst [vmem:[#allocation2 + $0x60] sm:$0xff] %v1299
        %1364 = vst [vmem:[#allocation2 + $0x68] sm:$0xff] %v1300
        %1365 = vst [vmem:[#allocation2 + $0x70] sm:$0xff] %v1301
        %1366 = vst [vmem:[#allocation2 + $0x78] sm:$0xff] %v1302
        %1367 = vst [vmem:[#allocation2 + $0x80] sm:$0xff] %v1303
        %1368 = vst [vmem:[#allocation2 + $0x88] sm:$0xff] %v1304
        %1369 = vst [vmem:[#allocation2 + $0x90] sm:$0xff] %v1305
        %1370 = vst [vmem:[#allocation2 + $0x98] sm:$0xff] %v1306
        %1371 = vst [vmem:[#allocation2 + $0xa0] sm:$0xff] %v1307
        %1372 = vst [vmem:[#allocation2 + $0xa8] sm:$0xff] %v1308
        %1373 = vst [vmem:[#allocation2 + $0xb0] sm:$0xff] %v1309
        %1374 = vst [vmem:[#allocation2 + $0xb8] sm:$0xff] %v1310
        %1375 = vst [vmem:[#allocation2 + $0xc0] sm:$0xff] %v1311
        %1376 = vst [vmem:[#allocation2 + $0xc8] sm:$0xff] %v1312
        %1377 = vst [vmem:[#allocation2 + $0xd0] sm:$0xff] %v1313
        %1378 = vst [vmem:[#allocation2 + $0xd8] sm:$0xff] %v1314
        %1379 = vst [vmem:[#allocation2 + $0xe0] sm:$0xff] %v1315
        %1380 = vst [vmem:[#allocation2 + $0xe8] sm:$0xff] %v1316
        %1381 = vst [vmem:[#allocation2 + $0xf0] sm:$0xff] %v1317
        %1382 = vst [vmem:[#allocation2 + $0xf8] sm:$0xff] %v1318
        %1383 = vst [vmem:[#allocation2 + $0x100] sm:$0xff] %v1319
        %1384 = vst [vmem:[#allocation2 + $0x108] sm:$0xff] %v1320
        %1385 = vst [vmem:[#allocation2 + $0x110] sm:$0xff] %v1321
        %1386 = vst [vmem:[#allocation2 + $0x118] sm:$0xff] %v1322
        %1387 = vst [vmem:[#allocation2 + $0x120] sm:$0xff] %v1323
        %1388 = vst [vmem:[#allocation2 + $0x128] sm:$0xff] %v1324
        %1389 = vst [vmem:[#allocation2 + $0x130] sm:$0xff] %v1325
        %1390 = vst [vmem:[#allocation2 + $0x138] sm:$0xff] %v1326
        %1391 = vst [vmem:[#allocation2 + $0x140] sm:$0xff] %v1327
        %1392 = vst [vmem:[#allocation2 + $0x148] sm:$0xff] %v1328
        %1393 = vst [vmem:[#allocation2 + $0x150] sm:$0xff] %v1329
        %1394 = vst [vmem:[#allocation2 + $0x158] sm:$0xff] %v1330
        %1395 = vst [vmem:[#allocation2 + $0x160] sm:$0xff] %v1331
        %1396 = vst [vmem:[#allocation2 + $0x168] sm:$0xff] %v1332
        %1397 = vst [vmem:[#allocation2 + $0x170] sm:$0xff] %v1333
        %1398 = vst [vmem:[#allocation2 + $0x178] sm:$0xff] %v1334
        %1399 = vst [vmem:[#allocation2 + $0x180] sm:$0xff] %v1335
        %1400 = vst [vmem:[#allocation2 + $0x188] sm:$0xff] %v1336
        %1401 = vst [vmem:[#allocation2 + $0x190] sm:$0xff] %v1337
        %1402 = vst [vmem:[#allocation2 + $0x198] sm:$0xff] %v1338
        %1403 = vst [vmem:[#allocation2 + $0x1a0] sm:$0xff] %v1339
        %1404 = vst [vmem:[#allocation2 + $0x1a8] sm:$0xff] %v1340
        %1405 = vst [vmem:[#allocation2 + $0x1b0] sm:$0xff] %v1341
        %1406 = vst [vmem:[#allocation2 + $0x1b8] sm:$0xff] %v1342
        %1407 = vst [vmem:[#allocation2 + $0x1c0] sm:$0xff] %v1343
        %1408 = vst [vmem:[#allocation2 + $0x1c8] sm:$0xff] %v1344
        %1409 = vst [vmem:[#allocation2 + $0x1d0] sm:$0xff] %v1345
        %1410 = vst [vmem:[#allocation2 + $0x1d8] sm:$0xff] %v1346
        %1411 = vst [vmem:[#allocation2 + $0x1e0] sm:$0xff] %v1347
        %1412 = vst [vmem:[#allocation2 + $0x1e8] sm:$0xff] %v1348
        %1413 = vst [vmem:[#allocation2 + $0x1f0] sm:$0xff] %v1349
        %1414 = vst [vmem:[#allocation2 + $0x1f8] sm:$0xff] %v1350
        %p1415 = scmp.eq.s32.totalorder %s21, 6
        // Predicated region
        $region78: #{resnet_generator_forward.49} parent=68 // pred_check
          %p1416 = pneg %p1415
        $region79: #{resnet_generator_forward.49} parent=68 // pred_check_branch
          %1418 = sbr.rel (%p1416) target = $region81
        $region80: #{resnet_generator_forward.49} parent=68 // pred_region
          %v1419 = vld [vmem:[#allocation2] sm:$0xff]
          %v1420 = vld [vmem:[#allocation2 + $0x8] sm:$0xff]
          %v1421 = vld [vmem:[#allocation2 + $0x10] sm:$0xff]
          %v1422 = vld [vmem:[#allocation2 + $0x18] sm:$0xff]
          %v1423 = vld [vmem:[#allocation2 + $0x20] sm:$0xff]
          %v1424 = vld [vmem:[#allocation2 + $0x28] sm:$0xff]
          %v1425 = vld [vmem:[#allocation2 + $0x30] sm:$0xff]
          %v1426 = vld [vmem:[#allocation2 + $0x38] sm:$0xff]
          %v1427 = vld [vmem:[#allocation2 + $0x40] sm:$0xff]
          %v1428 = vld [vmem:[#allocation2 + $0x48] sm:$0xff]
          %v1429 = vld [vmem:[#allocation2 + $0x50] sm:$0xff]
          %v1430 = vld [vmem:[#allocation2 + $0x58] sm:$0xff]
          %v1431 = vld [vmem:[#allocation2 + $0x60] sm:$0xff]
          %v1432 = vld [vmem:[#allocation2 + $0x68] sm:$0xff]
          %v1433 = vld [vmem:[#allocation2 + $0x70] sm:$0xff]
          %v1434 = vld [vmem:[#allocation2 + $0x78] sm:$0xff]
          %v1435 = vld [vmem:[#allocation2 + $0x80] sm:$0xff]
          %v1436 = vld [vmem:[#allocation2 + $0x88] sm:$0xff]
          %v1437 = vld [vmem:[#allocation2 + $0x90] sm:$0xff]
          %v1438 = vld [vmem:[#allocation2 + $0x98] sm:$0xff]
          %v1439 = vld [vmem:[#allocation2 + $0xa0] sm:$0xff]
          %v1440 = vld [vmem:[#allocation2 + $0xa8] sm:$0xff]
          %v1441 = vld [vmem:[#allocation2 + $0xb0] sm:$0xff]
          %v1442 = vld [vmem:[#allocation2 + $0xb8] sm:$0xff]
          %v1443 = vld [vmem:[#allocation2 + $0xc0] sm:$0xff]
          %v1444 = vld [vmem:[#allocation2 + $0xc8] sm:$0xff]
          %v1445 = vld [vmem:[#allocation2 + $0xd0] sm:$0xff]
          %v1446 = vld [vmem:[#allocation2 + $0xd8] sm:$0xff]
          %v1447 = vld [vmem:[#allocation2 + $0xe0] sm:$0xff]
          %v1448 = vld [vmem:[#allocation2 + $0xe8] sm:$0xff]
          %v1449 = vld [vmem:[#allocation2 + $0xf0] sm:$0xff]
          %v1450 = vld [vmem:[#allocation2 + $0xf8] sm:$0xff]
          %v1451 = vld [vmem:[#allocation2 + $0x100] sm:$0xff]
          %v1452 = vld [vmem:[#allocation2 + $0x108] sm:$0xff]
          %v1453 = vld [vmem:[#allocation2 + $0x110] sm:$0xff]
          %v1454 = vld [vmem:[#allocation2 + $0x118] sm:$0xff]
          %v1455 = vld [vmem:[#allocation2 + $0x120] sm:$0xff]
          %v1456 = vld [vmem:[#allocation2 + $0x128] sm:$0xff]
          %v1457 = vld [vmem:[#allocation2 + $0x130] sm:$0xff]
          %v1458 = vld [vmem:[#allocation2 + $0x138] sm:$0xff]
          %v1459 = vld [vmem:[#allocation2 + $0x140] sm:$0xff]
          %v1460 = vld [vmem:[#allocation2 + $0x148] sm:$0xff]
          %v1461 = vld [vmem:[#allocation2 + $0x150] sm:$0xff]
          %v1462 = vld [vmem:[#allocation2 + $0x158] sm:$0xff]
          %v1463 = vld [vmem:[#allocation2 + $0x160] sm:$0xff]
          %v1464 = vld [vmem:[#allocation2 + $0x168] sm:$0xff]
          %v1465 = vld [vmem:[#allocation2 + $0x170] sm:$0xff]
          %v1466 = vld [vmem:[#allocation2 + $0x178] sm:$0xff]
          %v1467 = vld [vmem:[#allocation2 + $0x180] sm:$0xff]
          %v1468 = vld [vmem:[#allocation2 + $0x188] sm:$0xff]
          %v1469 = vld [vmem:[#allocation2 + $0x190] sm:$0xff]
          %v1470 = vld [vmem:[#allocation2 + $0x198] sm:$0xff]
          %v1471 = vld [vmem:[#allocation2 + $0x1a0] sm:$0xff]
          %v1472 = vld [vmem:[#allocation2 + $0x1a8] sm:$0xff]
          %v1473 = vld [vmem:[#allocation2 + $0x1b0] sm:$0xff]
          %v1474 = vld [vmem:[#allocation2 + $0x1b8] sm:$0xff]
          %v1475 = vld [vmem:[#allocation2 + $0x1c0] sm:$0xff]
          %v1476 = vld [vmem:[#allocation2 + $0x1c8] sm:$0xff]
          %v1477 = vld [vmem:[#allocation2 + $0x1d0] sm:$0xff]
          %v1478 = vld [vmem:[#allocation2 + $0x1d8] sm:$0xff]
          %v1479 = vld [vmem:[#allocation2 + $0x1e0] sm:$0xff]
          %v1480 = vld [vmem:[#allocation2 + $0x1e8] sm:$0xff]
          %v1481 = vld [vmem:[#allocation2 + $0x1f0] sm:$0xff]
          %v1482 = vld [vmem:[#allocation2 + $0x1f8] sm:$0xff]
          %v1483 = vld [vmem:[%s535] sm:$0x1]
          %v1485 = vlaneseq
          %v1486 = vshrl.u32 %v1485, 7
          %v1487 = vsub.s32 0, %v1486
          %v1488 = vrot.slane %v1483, %v1487
          %v1490 = vadd.f32 %v1419, %v1488
          %v1491 = vadd.f32 %v1420, %v1488
          %v1492 = vadd.f32 %v1421, %v1488
          %v1493 = vadd.f32 %v1422, %v1488
          %v1494 = vadd.f32 %v1423, %v1488
          %v1495 = vadd.f32 %v1424, %v1488
          %v1496 = vadd.f32 %v1425, %v1488
          %v1497 = vadd.f32 %v1426, %v1488
          %v1498 = vadd.f32 %v1427, %v1488
          %v1499 = vadd.f32 %v1428, %v1488
          %v1500 = vadd.f32 %v1429, %v1488
          %v1501 = vadd.f32 %v1430, %v1488
          %v1502 = vadd.f32 %v1431, %v1488
          %v1503 = vadd.f32 %v1432, %v1488
          %v1504 = vadd.f32 %v1433, %v1488
          %v1505 = vadd.f32 %v1434, %v1488
          %v1506 = vadd.f32 %v1435, %v1488
          %v1507 = vadd.f32 %v1436, %v1488
          %v1508 = vadd.f32 %v1437, %v1488
          %v1509 = vadd.f32 %v1438, %v1488
          %v1510 = vadd.f32 %v1439, %v1488
          %v1511 = vadd.f32 %v1440, %v1488
          %v1512 = vadd.f32 %v1441, %v1488
          %v1513 = vadd.f32 %v1442, %v1488
          %v1514 = vadd.f32 %v1443, %v1488
          %v1515 = vadd.f32 %v1444, %v1488
          %v1516 = vadd.f32 %v1445, %v1488
          %v1517 = vadd.f32 %v1446, %v1488
          %v1518 = vadd.f32 %v1447, %v1488
          %v1519 = vadd.f32 %v1448, %v1488
          %v1520 = vadd.f32 %v1449, %v1488
          %v1521 = vadd.f32 %v1450, %v1488
          %v1522 = vadd.f32 %v1451, %v1488
          %v1523 = vadd.f32 %v1452, %v1488
          %v1524 = vadd.f32 %v1453, %v1488
          %v1525 = vadd.f32 %v1454, %v1488
          %v1526 = vadd.f32 %v1455, %v1488
          %v1527 = vadd.f32 %v1456, %v1488
          %v1528 = vadd.f32 %v1457, %v1488
          %v1529 = vadd.f32 %v1458, %v1488
          %v1530 = vadd.f32 %v1459, %v1488
          %v1531 = vadd.f32 %v1460, %v1488
          %v1532 = vadd.f32 %v1461, %v1488
          %v1533 = vadd.f32 %v1462, %v1488
          %v1534 = vadd.f32 %v1463, %v1488
          %v1535 = vadd.f32 %v1464, %v1488
          %v1536 = vadd.f32 %v1465, %v1488
          %v1537 = vadd.f32 %v1466, %v1488
          %v1538 = vadd.f32 %v1467, %v1488
          %v1539 = vadd.f32 %v1468, %v1488
          %v1540 = vadd.f32 %v1469, %v1488
          %v1541 = vadd.f32 %v1470, %v1488
          %v1542 = vadd.f32 %v1471, %v1488
          %v1543 = vadd.f32 %v1472, %v1488
          %v1544 = vadd.f32 %v1473, %v1488
          %v1545 = vadd.f32 %v1474, %v1488
          %v1546 = vadd.f32 %v1475, %v1488
          %v1547 = vadd.f32 %v1476, %v1488
          %v1548 = vadd.f32 %v1477, %v1488
          %v1549 = vadd.f32 %v1478, %v1488
          %v1550 = vadd.f32 %v1479, %v1488
          %v1551 = vadd.f32 %v1480, %v1488
          %v1552 = vadd.f32 %v1481, %v1488
          %v1553 = vadd.f32 %v1482, %v1488
          %v1554 = vtanh.pop %v1490
          %v1555 = vtanh.pop %v1491
          %v1556 = vtanh.pop %v1492
          %v1557 = vtanh.pop %v1493
          %v1558 = vtanh.pop %v1494
          %v1559 = vtanh.pop %v1495
          %v1560 = vtanh.pop %v1496
          %v1561 = vtanh.pop %v1497
          %v1562 = vtanh.pop %v1498
          %v1563 = vtanh.pop %v1499
          %v1564 = vtanh.pop %v1500
          %v1565 = vtanh.pop %v1501
          %v1566 = vtanh.pop %v1502
          %v1567 = vtanh.pop %v1503
          %v1568 = vtanh.pop %v1504
          %v1569 = vtanh.pop %v1505
          %v1570 = vtanh.pop %v1506
          %v1571 = vtanh.pop %v1507
          %v1572 = vtanh.pop %v1508
          %v1573 = vtanh.pop %v1509
          %v1574 = vtanh.pop %v1510
          %v1575 = vtanh.pop %v1511
          %v1576 = vtanh.pop %v1512
          %v1577 = vtanh.pop %v1513
          %v1578 = vtanh.pop %v1514
          %v1579 = vtanh.pop %v1515
          %v1580 = vtanh.pop %v1516
          %v1581 = vtanh.pop %v1517
          %v1582 = vtanh.pop %v1518
          %v1583 = vtanh.pop %v1519
          %v1584 = vtanh.pop %v1520
          %v1585 = vtanh.pop %v1521
          %v1586 = vtanh.pop %v1522
          %v1587 = vtanh.pop %v1523
          %v1588 = vtanh.pop %v1524
          %v1589 = vtanh.pop %v1525
          %v1590 = vtanh.pop %v1526
          %v1591 = vtanh.pop %v1527
          %v1592 = vtanh.pop %v1528
          %v1593 = vtanh.pop %v1529
          %v1594 = vtanh.pop %v1530
          %v1595 = vtanh.pop %v1531
          %v1596 = vtanh.pop %v1532
          %v1597 = vtanh.pop %v1533
          %v1598 = vtanh.pop %v1534
          %v1599 = vtanh.pop %v1535
          %v1600 = vtanh.pop %v1536
          %v1601 = vtanh.pop %v1537
          %v1602 = vtanh.pop %v1538
          %v1603 = vtanh.pop %v1539
          %v1604 = vtanh.pop %v1540
          %v1605 = vtanh.pop %v1541
          %v1606 = vtanh.pop %v1542
          %v1607 = vtanh.pop %v1543
          %v1608 = vtanh.pop %v1544
          %v1609 = vtanh.pop %v1545
          %v1610 = vtanh.pop %v1546
          %v1611 = vtanh.pop %v1547
          %v1612 = vtanh.pop %v1548
          %v1613 = vtanh.pop %v1549
          %v1614 = vtanh.pop %v1550
          %v1615 = vtanh.pop %v1551
          %v1616 = vtanh.pop %v1552
          %v1617 = vtanh.pop %v1553
          %1618 = vst [vmem:[%s543] sm:$0xff] %v1554
          %1619 = vst [vmem:[%s543 + $0x8] sm:$0xff] %v1555
          %1620 = vst [vmem:[%s543 + $0x10] sm:$0xff] %v1556
          %1621 = vst [vmem:[%s543 + $0x18] sm:$0xff] %v1557
          %1622 = vst [vmem:[%s543 + $0x20] sm:$0xff] %v1558
          %1623 = vst [vmem:[%s543 + $0x28] sm:$0xff] %v1559
          %1624 = vst [vmem:[%s543 + $0x30] sm:$0xff] %v1560
          %1625 = vst [vmem:[%s543 + $0x38] sm:$0xff] %v1561
          %1626 = vst [vmem:[%s543 + $0x40] sm:$0xff] %v1562
          %1627 = vst [vmem:[%s543 + $0x48] sm:$0xff] %v1563
          %1628 = vst [vmem:[%s543 + $0x50] sm:$0xff] %v1564
          %1629 = vst [vmem:[%s543 + $0x58] sm:$0xff] %v1565
          %1630 = vst [vmem:[%s543 + $0x60] sm:$0xff] %v1566
          %1631 = vst [vmem:[%s543 + $0x68] sm:$0xff] %v1567
          %1632 = vst [vmem:[%s543 + $0x70] sm:$0xff] %v1568
          %1633 = vst [vmem:[%s543 + $0x78] sm:$0xff] %v1569
          %1634 = vst [vmem:[%s543 + $0x80] sm:$0xff] %v1570
          %1635 = vst [vmem:[%s543 + $0x88] sm:$0xff] %v1571
          %1636 = vst [vmem:[%s543 + $0x90] sm:$0xff] %v1572
          %1637 = vst [vmem:[%s543 + $0x98] sm:$0xff] %v1573
          %1638 = vst [vmem:[%s543 + $0xa0] sm:$0xff] %v1574
          %1639 = vst [vmem:[%s543 + $0xa8] sm:$0xff] %v1575
          %1640 = vst [vmem:[%s543 + $0xb0] sm:$0xff] %v1576
          %1641 = vst [vmem:[%s543 + $0xb8] sm:$0xff] %v1577
          %1642 = vst [vmem:[%s543 + $0xc0] sm:$0xff] %v1578
          %1643 = vst [vmem:[%s543 + $0xc8] sm:$0xff] %v1579
          %1644 = vst [vmem:[%s543 + $0xd0] sm:$0xff] %v1580
          %1645 = vst [vmem:[%s543 + $0xd8] sm:$0xff] %v1581
          %1646 = vst [vmem:[%s543 + $0xe0] sm:$0xff] %v1582
          %1647 = vst [vmem:[%s543 + $0xe8] sm:$0xff] %v1583
          %1648 = vst [vmem:[%s543 + $0xf0] sm:$0xff] %v1584
          %1649 = vst [vmem:[%s543 + $0xf8] sm:$0xff] %v1585
          %1650 = vst [vmem:[%s543 + $0x100] sm:$0xff] %v1586
          %1651 = vst [vmem:[%s543 + $0x108] sm:$0xff] %v1587
          %1652 = vst [vmem:[%s543 + $0x110] sm:$0xff] %v1588
          %1653 = vst [vmem:[%s543 + $0x118] sm:$0xff] %v1589
          %1654 = vst [vmem:[%s543 + $0x120] sm:$0xff] %v1590
          %1655 = vst [vmem:[%s543 + $0x128] sm:$0xff] %v1591
          %1656 = vst [vmem:[%s543 + $0x130] sm:$0xff] %v1592
          %1657 = vst [vmem:[%s543 + $0x138] sm:$0xff] %v1593
          %1658 = vst [vmem:[%s543 + $0x140] sm:$0xff] %v1594
          %1659 = vst [vmem:[%s543 + $0x148] sm:$0xff] %v1595
          %1660 = vst [vmem:[%s543 + $0x150] sm:$0xff] %v1596
          %1661 = vst [vmem:[%s543 + $0x158] sm:$0xff] %v1597
          %1662 = vst [vmem:[%s543 + $0x160] sm:$0xff] %v1598
          %1663 = vst [vmem:[%s543 + $0x168] sm:$0xff] %v1599
          %1664 = vst [vmem:[%s543 + $0x170] sm:$0xff] %v1600
          %1665 = vst [vmem:[%s543 + $0x178] sm:$0xff] %v1601
          %1666 = vst [vmem:[%s543 + $0x180] sm:$0xff] %v1602
          %1667 = vst [vmem:[%s543 + $0x188] sm:$0xff] %v1603
          %1668 = vst [vmem:[%s543 + $0x190] sm:$0xff] %v1604
          %1669 = vst [vmem:[%s543 + $0x198] sm:$0xff] %v1605
          %1670 = vst [vmem:[%s543 + $0x1a0] sm:$0xff] %v1606
          %1671 = vst [vmem:[%s543 + $0x1a8] sm:$0xff] %v1607
          %1672 = vst [vmem:[%s543 + $0x1b0] sm:$0xff] %v1608
          %1673 = vst [vmem:[%s543 + $0x1b8] sm:$0xff] %v1609
          %1674 = vst [vmem:[%s543 + $0x1c0] sm:$0xff] %v1610
          %1675 = vst [vmem:[%s543 + $0x1c8] sm:$0xff] %v1611
          %1676 = vst [vmem:[%s543 + $0x1d0] sm:$0xff] %v1612
          %1677 = vst [vmem:[%s543 + $0x1d8] sm:$0xff] %v1613
          %1678 = vst [vmem:[%s543 + $0x1e0] sm:$0xff] %v1614
          %1679 = vst [vmem:[%s543 + $0x1e8] sm:$0xff] %v1615
          %1680 = vst [vmem:[%s543 + $0x1f0] sm:$0xff] %v1616
          %1681 = vst [vmem:[%s543 + $0x1f8] sm:$0xff] %v1617
        $region81: #{resnet_generator_forward.49} parent=68 // pred_fallthru
          _
        %s1682 = smul.u32 64, %s19
        %p1683 = scmp.lt.s32.totalorder %s1682, 63
        %s1684 = scalar_select %p1683, %s1682, 63
        %p1685 = scmp.lt.s32.totalorder %s20, 0
        %s1686 = scalar_select %p1685, %s20, 0
        %s1687 = sadd.s32 %s1686, %s1684
        %s1688 = smul.addr %s1687, 8
        %s1689 = scalar_lea.vmem %s3, %s1688
        // Predicated region
        $region82: #{resnet_generator_forward.49} parent=68 // pred_check
          %p1690 = pneg %p135
        $region83: #{resnet_generator_forward.49} parent=68 // pred_check_branch
          %1692 = sbr.rel (%p1690) target = $region85
        $region84: #{resnet_generator_forward.49} parent=68 // pred_region
          %s1693 = smul.u32 64, %s19
        $region85: #{resnet_generator_forward.49} parent=68 // pred_fallthru
          _
        // Predicated region
        $region86: #{resnet_generator_forward.49} parent=68 // pred_check
          %p1694 = pneg %p135
        $region87: #{resnet_generator_forward.49} parent=68 // pred_check_branch
          %1696 = sbr.rel (%p1694) target = $region89
        $region88: #{resnet_generator_forward.49} parent=68 // pred_region
          %s1697 = smul.u32 64, %s19
          %p1698 = scmp.lt.s32.totalorder %s1697, 63
          %s1699 = scalar_select %p1698, %s1697, 63
          %p1700 = scmp.lt.s32.totalorder %s20, 0
          %s1701 = scalar_select %p1700, %s20, 0
          %s1702 = sadd.s32 %s1701, %s1699
          %s1703 = smul.addr %s1702, 8
          %s1704 = scalar_lea.vmem %s3, %s1703
        $region89: #{resnet_generator_forward.49} parent=68 // pred_fallthru
          _
      $region69: #{resnet_generator_forward.49} parent=5 // pred_fallthru
        _
      %p1705 = scmp.le.s32.totalorder 2, %s9
      // Predicated region
      $region90: #{resnet_generator_forward.49} parent=5 // pred_check
        %p1706 = pneg %p1705
      $region91: #{resnet_generator_forward.49} parent=5 // pred_check_branch
        %1708 = sbr.rel (%p1706) target = $region93
      $region92: #{resnet_generator_forward.49} parent=5 // pred_region
        %s1709 = ssub.s32 %s9, 2
      $region93: #{resnet_generator_forward.49} parent=5 // pred_fallthru
        _
    $region6: #{resnet_generator_forward.49} parent=1 // loop_footer
      %s13 = sadd.s32 1, %s9
    $region7: #{resnet_generator_forward.49} parent=1 // loop_footer_branch
      %8 = sbr.rel target = $region3
    $region8: #{resnet_generator_forward.49} parent=1 // loop_exit
      _

</llo_original>
